<compile_context>
chip_gen: v7x
topology: tpu7x:2x2x1
jax: 0.10.0
libtpu: 0.0.40
codegen_flags: <defaults>
</compile_context>

<pallas_src>
import functools
import math

import jax
import jax.numpy as jnp
from jax.experimental import pallas as pl
from jax.experimental.pallas import tpu as pltpu

COMPUTE_DTYPE = jnp.bfloat16   # matmul-operand / activation-stream dtype


def _round_up(x, m):
    return ((x + m - 1) // m) * m


def _row_tile(m, tm_max):
    """Balanced row tile: full extent if it fits, else ~even multiple-of-8 tiles."""
    if m <= tm_max:
        return m
    n_tiles = -(-m // tm_max)
    return _round_up(-(-m // n_tiles), 8)


# Generation-aware scoped-VMEM limit (v7x has only 64 MiB physical VMEM).
try:
    _KIND = jax.devices()[0].device_kind.lower()
except Exception:              # pragma: no cover - backend init failure
    _KIND = ""
if "v7" in _KIND or "7x" in _KIND:
    _VMEM_LIMIT = 48 * 1024 * 1024
elif "v5" in _KIND or "v6" in _KIND:
    _VMEM_LIMIT = 96 * 1024 * 1024
else:
    _VMEM_LIMIT = 64 * 1024 * 1024


def _cp(*sems):
    return pltpu.CompilerParams(dimension_semantics=tuple(sems),
                                vmem_limit_bytes=_VMEM_LIMIT)


# ----------------------------------------------------------------------------
# Generic fused linear: y = act(x @ w + b)
# ----------------------------------------------------------------------------
def _linear_kernel(x_ref, w_ref, b_ref, o_ref, *, activation):
    acc = jnp.dot(x_ref[...].astype(w_ref.dtype), w_ref[...],
                  preferred_element_type=jnp.float32)
    acc = acc + b_ref[...]
    if activation == "relu":
        acc = jnp.maximum(acc, 0.0)
    elif activation == "gelu":
        acc = jax.nn.gelu(acc)
    o_ref[...] = acc.astype(o_ref.dtype)


def linear_pallas(x2d, w, b, activation=None, out_dtype=None, tm_max=512):
    """y = act(x2d @ w + b).  x2d: [M, K], w: [K, N] (bf16), b: [N] (f32)."""
    M, K = x2d.shape
    N = w.shape[1]
    if out_dtype is None:
        out_dtype = x2d.dtype
    tm = _row_tile(M, tm_max)
    b2 = b.reshape(1, N).astype(jnp.float32)
    return pl.pallas_call(
        functools.partial(_linear_kernel, activation=activation),
        out_shape=jax.ShapeDtypeStruct((M, N), out_dtype),
        grid=(pl.cdiv(M, tm),),
        in_specs=[
            pl.BlockSpec((tm, K), lambda i: (i, 0)),
            pl.BlockSpec((K, N), lambda i: (0, 0)),      # weight resident
            pl.BlockSpec((1, N), lambda i: (0, 0)),
        ],
        out_specs=pl.BlockSpec((tm, N), lambda i: (i, 0)),
        compiler_params=_cp("parallel"),
    )(x2d, w, b2)


# ----------------------------------------------------------------------------
# LayerNorm (last dim)
# ----------------------------------------------------------------------------
def _layernorm_kernel(x_ref, g_ref, b_ref, o_ref, *, eps):
    x = x_ref[...].astype(jnp.float32)
    mu = jnp.mean(x, axis=-1, keepdims=True)
    xc = x - mu
    var = jnp.mean(xc * xc, axis=-1, keepdims=True)
    o_ref[...] = (xc * jax.lax.rsqrt(var + eps) * g_ref[...]
                  + b_ref[...]).astype(o_ref.dtype)


def layernorm_pallas(x2d, gamma, beta, eps=1e-5, out_dtype=None, tm_max=1024):
    M, D = x2d.shape
    if out_dtype is None:
        out_dtype = x2d.dtype
    tm = _row_tile(M, tm_max)
    g2 = gamma.reshape(1, D).astype(jnp.float32)
    b2 = beta.reshape(1, D).astype(jnp.float32)
    return pl.pallas_call(
        functools.partial(_layernorm_kernel, eps=eps),
        out_shape=jax.ShapeDtypeStruct((M, D), out_dtype),
        grid=(pl.cdiv(M, tm),),
        in_specs=[
            pl.BlockSpec((tm, D), lambda i: (i, 0)),
            pl.BlockSpec((1, D), lambda i: (0, 0)),
            pl.BlockSpec((1, D), lambda i: (0, 0)),
        ],
        out_specs=pl.BlockSpec((tm, D), lambda i: (i, 0)),
        compiler_params=_cp("parallel"),
    )(x2d, g2, b2)


# ----------------------------------------------------------------------------
# Fused (QKV projection -> multi-head linear attention -> out-projection)
# One grid step per batch element; T chunked inside the kernel.
# ----------------------------------------------------------------------------
def _attn_kernel(x_ref, wqkv_ref, bqkv_ref, wo_ref, mask_ref, hm_ref, hmt_ref,
                 o_ref, qf_buf, kv_buf, kvm_buf, ks_buf,
                 *, D, tc, t_actual, padded):
    f32 = jnp.float32
    bf = jnp.bfloat16
    n_chunks = qf_buf.shape[0] // tc

    kv_buf[...] = jnp.zeros_like(kv_buf)
    ks_buf[...] = jnp.zeros_like(ks_buf)

    def feat(a):                                 # elu(a) + 1
        return jnp.where(a > 0, a + 1.0, jnp.exp(a))

    # ---- pass 1: project chunk -> accumulate kv, ksum; stage qf in VMEM ----
    def pass1(c, carry):
        off = pl.multiple_of(c * tc, tc)
        xc = x_ref[0, pl.ds(off, tc), :]                          # (tc, D) bf16
        qkv = jnp.dot(xc, wqkv_ref[...],
                      preferred_element_type=f32) + bqkv_ref[...]  # (tc, 3D)
        qf = feat(qkv[:, :D])
        kf = feat(qkv[:, D:2 * D])
        v = qkv[:, 2 * D:]
        if padded:       # zero the padded rows' contribution to kv / ksum
            rows = off + jax.lax.broadcasted_iota(jnp.int32, (tc, 1), 0)
            kf = kf * (rows < t_actual).astype(f32)
        # kv += kf^T @ v without materializing a transpose
        kv_buf[...] += jax.lax.dot_general(
            kf.astype(bf), v.astype(bf), (((0,), (0,)), ((), ())),
            preferred_element_type=f32)                           # (D, D)
        ks_buf[...] += jnp.sum(kf, axis=0, keepdims=True)         # (1, D)
        qf_buf[pl.ds(off, tc), :] = qf.astype(bf)
        return carry

    jax.lax.fori_loop(0, n_chunks, pass1, 0)

    # Masked (block-diagonal per head) kv, cast once for the MXU.
    kvm_buf[...] = (kv_buf[...] * mask_ref[...].astype(f32)).astype(bf)

    # ---- pass 2: numerator / denominator / out-projection per chunk ----
    def pass2(c, carry):
        off = pl.multiple_of(c * tc, tc)
        qfb = qf_buf[pl.ds(off, tc), :]                           # (tc, D) bf16
        num = jnp.dot(qfb, kvm_buf[...], preferred_element_type=f32)
        # denominator via two thin matmuls (D -> H -> D) instead of a second
        # full (D, D) masked matmul
        qks = (qfb.astype(f32) * ks_buf[...]).astype(bf)
        zh = jnp.dot(qks, hm_ref[...], preferred_element_type=f32)     # (tc, H)
        z = jnp.dot(zh.astype(bf), hmt_ref[...],
                    preferred_element_type=f32)                        # (tc, D)
        attn = (num * pl.reciprocal(z + 1e-6, approx=True)).astype(bf)
        # fused attention out-projection (bias added in the GCN kernel)
        o_ref[0, pl.ds(off, tc), :] = jnp.dot(
            attn, wo_ref[...], preferred_element_type=f32).astype(o_ref.dtype)
        return carry

    jax.lax.fori_loop(0, n_chunks, pass2, 0)


def attention_proj_pallas(x, wqkv, bqkv, wo, *, D, H, tc_max=512):
    """x: [B, T, D] (bf16).  Returns (linear_attention(x) @ wo), [B, T, D]."""
    B, T, _ = x.shape
    if T <= tc_max:
        tc = _round_up(T, 8)
    else:
        n_chunks = -(-T // tc_max)
        tc = _round_up(-(-T // n_chunks), 8)
    Tp = _round_up(T, tc)
    xp = x if Tp == T else jnp.pad(x, ((0, 0), (0, Tp - T), (0, 0)))

    Dh = D // H
    head = jnp.arange(D, dtype=jnp.int32) // Dh
    mask = (head[:, None] == head[None, :]).astype(COMPUTE_DTYPE)        # (D, D)
    hm = (head[:, None] ==
          jnp.arange(H, dtype=jnp.int32)[None, :]).astype(COMPUTE_DTYPE)  # (D, H)
    hmt = jnp.transpose(hm)                                               # (H, D)
    bqkv2 = bqkv.reshape(1, 3 * D).astype(jnp.float32)

    out = pl.pallas_call(
        functools.partial(_attn_kernel, D=D, tc=tc, t_actual=T,
                          padded=(Tp != T)),
        out_shape=jax.ShapeDtypeStruct((B, Tp, D), x.dtype),
        grid=(B,),
        in_specs=[
            pl.BlockSpec((1, Tp, D), lambda i: (i, 0, 0)),
            pl.BlockSpec((D, 3 * D), lambda i: (0, 0)),   # wqkv resident
            pl.BlockSpec((1, 3 * D), lambda i: (0, 0)),
            pl.BlockSpec((D, D), lambda i: (0, 0)),       # wo resident
            pl.BlockSpec((D, D), lambda i: (0, 0)),       # head mask resident
            pl.BlockSpec((D, H), lambda i: (0, 0)),
            pl.BlockSpec((H, D), lambda i: (0, 0)),
        ],
        out_specs=pl.BlockSpec((1, Tp, D), lambda i: (i, 0, 0)),
        scratch_shapes=[
            pltpu.VMEM((Tp, D), COMPUTE_DTYPE),   # staged qf
            pltpu.VMEM((D, D), jnp.float32),      # kv accumulator
            pltpu.VMEM((D, D), COMPUTE_DTYPE),    # masked kv (MXU operand)
            pltpu.VMEM((1, D), jnp.float32),      # ksum
        ],
        compiler_params=_cp("parallel"),
    )(xp, wqkv, bqkv2, wo, mask, hm, hmt)
    return out[:, :T] if Tp != T else out


# ----------------------------------------------------------------------------
# Graph diffusion + residual + LayerNorm1, fused (wo already applied upstream):
#   x1 = LN1( x + (I + support) @ (attn @ wo) + bo )
# ----------------------------------------------------------------------------
def _gcn_ln_kernel(ow_ref, x_ref, s1_ref, bo_ref, g_ref, b_ref, out_ref, *, eps):
    tb, N, _ = ow_ref.shape
    f32 = jnp.float32
    ow = ow_ref[...]                                              # (tb, N, D) bf16
    s1 = jnp.broadcast_to(s1_ref[...], (tb, N, N))                # (I + support)
    diff = jnp.einsum('tnm,tmd->tnd', s1, ow,
                      preferred_element_type=f32)                 # (tb, N, D)
    r = x_ref[...].astype(f32) + diff + bo_ref[...]               # residual + bias
    mu = jnp.mean(r, axis=-1, keepdims=True)
    xc = r - mu
    var = jnp.mean(xc * xc, axis=-1, keepdims=True)
    out_ref[...] = (xc * jax.lax.rsqrt(var + eps) * g_ref[...]
                    + b_ref[...]).astype(out_ref.dtype)


def gcn_residual_ln_pallas(ow, x, s1, bo, gamma, beta, *, eps=1e-5, tb_max=8):
    M, N, D = ow.shape                                            # M = B*L
    tb = min(tb_max, M)
    bo3 = bo.reshape(1, 1, D).astype(jnp.float32)
    g3 = gamma.reshape(1, 1, D).astype(jnp.float32)
    b3 = beta.reshape(1, 1, D).astype(jnp.float32)
    return pl.pallas_call(
        functools.partial(_gcn_ln_kernel, eps=eps),
        out_shape=jax.ShapeDtypeStruct((M, N, D), x.dtype),
        grid=(pl.cdiv(M, tb),),
        in_specs=[
            pl.BlockSpec((tb, N, D), lambda i: (i, 0, 0)),
            pl.BlockSpec((tb, N, D), lambda i: (i, 0, 0)),
            pl.BlockSpec((N, N), lambda i: (0, 0)),       # I+support resident
            pl.BlockSpec((1, 1, D), lambda i: (0, 0, 0)),
            pl.BlockSpec((1, 1, D), lambda i: (0, 0, 0)),
            pl.BlockSpec((1, 1, D), lambda i: (0, 0, 0)),
        ],
        out_specs=pl.BlockSpec((tb, N, D), lambda i: (i, 0, 0)),
        compiler_params=_cp("parallel"),
    )(ow, x, s1, bo3, g3, b3)


# ----------------------------------------------------------------------------
# FFN + residual + LayerNorm2, fused:  x2 = LN2( x + ff2(act(ff1(x))) )
# ----------------------------------------------------------------------------
def _ffn_kernel(x_ref, w1_ref, b1_ref, w2_ref, b2_ref, g_ref, bt_ref, o_ref,
                *, activation, eps):
    x = x_ref[...]
    h = jnp.dot(x.astype(w1_ref.dtype), w1_ref[...],
                preferred_element_type=jnp.float32) + b1_ref[...]
    h = jax.nn.gelu(h) if activation == "gelu" else jnp.maximum(h, 0.0)
    y = jnp.dot(h.astype(w2_ref.dtype), w2_ref[...],
                preferred_element_type=jnp.float32) + b2_ref[...]
    r = x.astype(jnp.float32) + y
    mu = jnp.mean(r, axis=-1, keepdims=True)
    xc = r - mu
    var = jnp.mean(xc * xc, axis=-1, keepdims=True)
    o_ref[...] = (xc * jax.lax.rsqrt(var + eps) * g_ref[...]
                  + bt_ref[...]).astype(o_ref.dtype)


def ffn_pallas(x2d, w1, b1, w2, b2, gamma, beta, *, activation, eps=1e-5,
               tm_max=256):
    M, D = x2d.shape
    F = w1.shape[1]
    tm = _row_tile(M, tm_max)
    b12 = b1.reshape(1, F).astype(jnp.float32)
    b22 = b2.reshape(1, D).astype(jnp.float32)
    g2 = gamma.reshape(1, D).astype(jnp.float32)
    bt2 = beta.reshape(1, D).astype(jnp.float32)
    return pl.pallas_call(
        functools.partial(_ffn_kernel, activation=activation, eps=eps),
        out_shape=jax.ShapeDtypeStruct((M, D), x2d.dtype),
        grid=(pl.cdiv(M, tm),),
        in_specs=[
            pl.BlockSpec((tm, D), lambda i: (i, 0)),
            pl.BlockSpec((D, F), lambda i: (0, 0)),       # ff1 resident
            pl.BlockSpec((1, F), lambda i: (0, 0)),
            pl.BlockSpec((F, D), lambda i: (0, 0)),       # ff2 resident
            pl.BlockSpec((1, D), lambda i: (0, 0)),
            pl.BlockSpec((1, D), lambda i: (0, 0)),
            pl.BlockSpec((1, D), lambda i: (0, 0)),
        ],
        out_specs=pl.BlockSpec((tm, D), lambda i: (i, 0)),
        compiler_params=_cp("parallel"),
    )(x2d, w1, b12, w2, b22, g2, bt2)


# ----------------------------------------------------------------------------
# end_conv1: contraction over the seq axis with (N*D) on lanes, + ReLU
# ----------------------------------------------------------------------------
def _endconv1_kernel(x_ref, w_ref, b_ref, o_ref):
    z = jnp.dot(w_ref[...], x_ref[0].astype(w_ref.dtype),
                preferred_element_type=jnp.float32) + b_ref[...]
    o_ref[0] = jnp.maximum(z, 0.0).astype(o_ref.dtype)


def endconv1_pallas(x3d, w1, b1):
    """x3d: [B, L, N*D] -> [B, O, N*D];  w1: [O, L], b1: [O]."""
    B, L, ND = x3d.shape
    O = w1.shape[0]
    b12 = b1.reshape(O, 1).astype(jnp.float32)
    return pl.pallas_call(
        _endconv1_kernel,
        out_shape=jax.ShapeDtypeStruct((B, O, ND), x3d.dtype),
        grid=(B,),
        in_specs=[
            pl.BlockSpec((1, L, ND), lambda i: (i, 0, 0)),
            pl.BlockSpec((O, L), lambda i: (0, 0)),
            pl.BlockSpec((O, 1), lambda i: (0, 0)),
        ],
        out_specs=pl.BlockSpec((1, O, ND), lambda i: (i, 0, 0)),
        compiler_params=_cp("parallel"),
    )(x3d, w1, b12)


# ----------------------------------------------------------------------------
# Model glue (only free reshapes / broadcasts in plain JAX)
# ----------------------------------------------------------------------------
def sinusoidal_pe(L, D):
    pos = jnp.arange(L, dtype=jnp.float32)[:, None]
    i = jnp.arange(0, D, 2, dtype=jnp.float32)[None, :]
    div = jnp.exp(-math.log(10000.0) * i / D)
    pe = jnp.zeros((L, D), jnp.float32)
    pe = pe.at[:, 0::2].set(jnp.sin(pos * div))
    pe = pe.at[:, 1::2].set(jnp.cos(pos * div))
    return pe


def polla_gcn_forward(params, x, x_mark, se, support, cfg):
    B, L, N, c_in = x.shape
    D = cfg["d_model"]
    H = cfg["n_heads"]
    O = cfg["out_len"]
    T = L * N
    cdt = COMPUTE_DTYPE

    # --- embeddings (summed in f32, residual stream stored in bf16) ---
    val = linear_pallas(x.reshape(-1, c_in).astype(cdt), params["val_w"],
                        params["val_b"], out_dtype=jnp.float32).reshape(B, L, N, D)
    tmp = linear_pallas(x_mark.reshape(-1, x_mark.shape[-1]).astype(cdt),
                        params["tmp_w"], params["tmp_b"],
                        out_dtype=jnp.float32).reshape(B, L, 1, D)
    spa = linear_pallas(se.astype(cdt), params["spa_w"], params["spa_b"],
                        out_dtype=jnp.float32).reshape(1, 1, N, D)
    pos = sinusoidal_pe(L, D).reshape(1, L, 1, D)
    out = (val + tmp + spa + pos).astype(cdt)                    # (B, L, N, D)

    s1 = (support + jnp.eye(N, dtype=support.dtype)).astype(cdt)  # I + support

    # --- encoder layers ---
    # TODO(synk): STAttentionLayer internals (diffusion order, exact mixing of
    # attention + GCN branches) are not given in the reference; order-1
    # diffusion + sum + out-proj is used.
    for lp in params["layers"]:
        # QKV proj + linear attention + out-proj fused (single HBM round trip)
        ow = attention_proj_pallas(out.reshape(B, T, D), lp["wqkv"], lp["bqkv"],
                                   lp["wo"], D=D, H=H)           # (B, T, D)
        # graph diffusion (I+S) @ ow + bias + residual + LayerNorm1, fused
        out = gcn_residual_ln_pallas(ow.reshape(B * L, N, D),
                                     out.reshape(B * L, N, D), s1,
                                     lp["bo"], lp["ln1_g"], lp["ln1_b"]
                                     ).reshape(B, L, N, D)
        # FFN (1x1 conv -> act -> 1x1 conv) + residual + LayerNorm2, fused
        out = ffn_pallas(out.reshape(-1, D), lp["ff1_w"], lp["ff1_b"],
                         lp["ff2_w"], lp["ff2_b"], lp["ln2_g"], lp["ln2_b"],
                         activation=cfg["activation"]).reshape(B, L, N, D)

    # encoder final LayerNorm
    out = layernorm_pallas(out.reshape(-1, D), params["enc_norm_g"],
                           params["enc_norm_b"]).reshape(B, L, N, D)

    # end_conv1 (1x1 conv over seq axis, in=L out=O) + ReLU, (N*D) on lanes
    z = endconv1_pallas(out.reshape(B, L, N * D), params["conv1_w"],
                        params["conv1_b"])                       # (B, O, N*D)

    # end_conv2 (1x1 conv over d_model -> c_out) as a plain matmul over D
    c_out = params["conv2_w"].shape[1]
    y = linear_pallas(z.reshape(-1, D), params["conv2_w"], params["conv2_b"],
                      out_dtype=jnp.float32)
    return y.reshape(B, O, N, c_out)                             # [B, out_len, N, c_out]


# ----------------------------------------------------------------------------
# Parameters
# ----------------------------------------------------------------------------
def init_params(key, *, c_in, c_out, d_mark, d_se, d_model, d_ff, n_layers,
                seq_len, out_len):
    keys = iter(jax.random.split(key, 128))

    def w(shape, scale=0.02):
        return scale * jax.random.normal(next(keys), shape, jnp.float32)

    def zeros(shape):
        return jnp.zeros(shape, jnp.float32)

    def ones(shape):
        return jnp.ones(shape, jnp.float32)

    params = {
        "val_w": w((c_in, d_model)), "val_b": zeros((d_model,)),
        "tmp_w": w((d_mark, d_model)), "tmp_b": zeros((d_model,)),
        "spa_w": w((d_se, d_model)), "spa_b": zeros((d_model,)),
        "enc_norm_g": ones((d_model,)), "enc_norm_b": zeros((d_model,)),
        "conv1_w": w((out_len, seq_len)), "conv1_b": zeros((out_len,)),
        "conv2_w": w((d_model, c_out)), "conv2_b": zeros((c_out,)),
        "layers": [],
    }
    for _ in range(n_layers):
        params["layers"].append({
            "wq": w((d_model, d_model)), "bq": zeros((d_model,)),
            "wk": w((d_model, d_model)), "bk": zeros((d_model,)),
            "wv": w((d_model, d_model)), "bv": zeros((d_model,)),
            "wo": w((d_model, d_model)), "bo": zeros((d_model,)),
            "ln1_g": ones((d_model,)), "ln1_b": zeros((d_model,)),
            "ln2_g": ones((d_model,)), "ln2_b": zeros((d_model,)),
            "ff1_w": w((d_model, d_ff)), "ff1_b": zeros((d_ff,)),
            "ff2_w": w((d_ff, d_model)), "ff2_b": zeros((d_model,)),
        })
    return params


def prepare_params(p, compute_dtype=COMPUTE_DTYPE):
    """Fuse Q/K/V weights and cast matmul operands to bf16 (biases/LN stay f32)."""
    cd = compute_dtype
    fp = {
        "val_w": p["val_w"].astype(cd), "val_b": p["val_b"],
        "tmp_w": p["tmp_w"].astype(cd), "tmp_b": p["tmp_b"],
        "spa_w": p["spa_w"].astype(cd), "spa_b": p["spa_b"],
        "enc_norm_g": p["enc_norm_g"], "enc_norm_b": p["enc_norm_b"],
        "conv1_w": p["conv1_w"].astype(cd), "conv1_b": p["conv1_b"],
        "conv2_w": p["conv2_w"].astype(cd), "conv2_b": p["conv2_b"],
        "layers": [],
    }
    for lp in p["layers"]:
        fp["layers"].append({
            "wqkv": jnp.concatenate([lp["wq"], lp["wk"], lp["wv"]],
                                    axis=1).astype(cd),
            "bqkv": jnp.concatenate([lp["bq"], lp["bk"], lp["bv"]]),
            "wo": lp["wo"].astype(cd), "bo": lp["bo"],
            "ln1_g": lp["ln1_g"], "ln1_b": lp["ln1_b"],
            "ln2_g": lp["ln2_g"], "ln2_b": lp["ln2_b"],
            "ff1_w": lp["ff1_w"].astype(cd), "ff1_b": lp["ff1_b"],
            "ff2_w": lp["ff2_w"].astype(cd), "ff2_b": lp["ff2_b"],
        })
    return fp


if __name__ == "__main__":
    # small, self-consistent shapes
    B, L, N = 2, 8, 16
    c_in, c_out = 4, 2
    d_model, n_heads, n_layers, d_ff = 32, 4, 2, 16
    out_len = 4
    d_mark, d_se = 5, 64

    cfg = {"d_model": d_model, "n_heads": n_heads, "out_len": out_len,
           "activation": "gelu"}

    key = jax.random.PRNGKey(0)
    k1, k2, k3, k4, kp = jax.random.split(key, 5)
    x = jax.random.normal(k1, (B, L, N, c_in), jnp.float32)
    x_mark = jax.random.normal(k2, (B, L, d_mark), jnp.float32)
    se = jax.random.normal(k3, (N, d_se), jnp.float32)
    adj = jax.random.uniform(k4, (N, N), jnp.float32)
    support = adj / jnp.sum(adj, axis=-1, keepdims=True)    # row-normalized

    params = prepare_params(init_params(
        kp, c_in=c_in, c_out=c_out, d_mark=d_mark, d_se=d_se, d_model=d_model,
        d_ff=d_ff, n_layers=n_layers, seq_len=L, out_len=out_len))

    fwd = jax.jit(functools.partial(polla_gcn_forward, cfg=cfg))
    out = fwd(params, x, x_mark, se, support)
    out = jax.block_until_ready(out)
    assert out.shape == (B, out_len, N, c_out), out.shape
    assert bool(jnp.all(jnp.isfinite(out.astype(jnp.float32))))
    print("KERNEL_OK")
</pallas_src>

<mosaic_0001>
module attributes {stable_mosaic.version = 11 : i64} {
  func.func @_linear_kernel(%arg0: i32, %arg1: memref<256x4xbf16, #tpu.memory_space<vmem>>, %arg2: memref<4x32xbf16, #tpu.memory_space<vmem>>, %arg3: memref<1x32xf32, #tpu.memory_space<vmem>>, %arg4: memref<256x32xf32, #tpu.memory_space<vmem>>) attributes {dimension_semantics = [#tpu.dimension_semantics<parallel>], iteration_bounds = array<i64: 1>, scalar_prefetch = 0 : i64, scratch_operands = 0 : i64, tpu.core_type = #tpu.core_type<tc>, window_params = [{transform_indices = @transform_0, window_bounds = array<i64: 256, 4>}, {pipeline_mode = #tpu.pipeline_mode<synchronous>, transform_indices = @transform_1, window_bounds = array<i64: 4, 32>}, {pipeline_mode = #tpu.pipeline_mode<synchronous>, transform_indices = @transform_2, window_bounds = array<i64: 1, 32>}, {transform_indices = @transform_3, window_bounds = array<i64: 256, 32>}]} {
    %c0 = arith.constant 0 : index
    %c0_0 = arith.constant 0 : index
    %0 = vector.load %arg1[%c0, %c0_0] : memref<256x4xbf16, #tpu.memory_space<vmem>>, vector<256x4xbf16>
    %c0_1 = arith.constant 0 : index
    %c0_2 = arith.constant 0 : index
    %1 = vector.load %arg2[%c0_1, %c0_2] : memref<4x32xbf16, #tpu.memory_space<vmem>>, vector<4x32xbf16>
    %cst = arith.constant dense<0.000000e+00> : vector<256x32xf32>
    %2 = tpu.matmul %0, %1, %cst {dimension_numbers = #tpu.dot_dimension_numbers<[1], [0], [0], [1], [0, 0, 1, 1], [], []>} : vector<256x4xbf16>, vector<4x32xbf16>, vector<256x32xf32> -> vector<256x32xf32>
    %c0_3 = arith.constant 0 : index
    %c0_4 = arith.constant 0 : index
    %3 = vector.load %arg3[%c0_3, %c0_4] : memref<1x32xf32, #tpu.memory_space<vmem>>, vector<1x32xf32>
    %4 = vector.broadcast %3 : vector<1x32xf32> to vector<256x32xf32>
    %5 = arith.addf %2, %4 : vector<256x32xf32>
    %c0_5 = arith.constant 0 : index
    %c0_6 = arith.constant 0 : index
    %6 = vector.load %arg4[%c0_5, %c0_6] : memref<256x32xf32, #tpu.memory_space<vmem>>, vector<256x32xf32>
    tpu.vector_store %arg4[%c0_5, %c0_6], %5 {strides = array<i32>} : memref<256x32xf32, #tpu.memory_space<vmem>>, vector<256x32xf32>,
    return
  }
  func.func @transform_0(%arg0: i32) -> (i32, i32) {
    %c0_i32 = arith.constant 0 : i32
    %c0_i32_0 = arith.constant 0 : i32
    return %arg0, %c0_i32 : i32, i32
  }
  func.func @transform_1(%arg0: i32) -> (i32, i32) {
    %c0_i32 = arith.constant 0 : i32
    %c0_i32_0 = arith.constant 0 : i32
    %c0_i32_1 = arith.constant 0 : i32
    return %c0_i32, %c0_i32_0 : i32, i32
  }
  func.func @transform_2(%arg0: i32) -> (i32, i32) {
    %c0_i32 = arith.constant 0 : i32
    %c0_i32_0 = arith.constant 0 : i32
    %c0_i32_1 = arith.constant 0 : i32
    return %c0_i32, %c0_i32_0 : i32, i32
  }
  func.func @transform_3(%arg0: i32) -> (i32, i32) {
    %c0_i32 = arith.constant 0 : i32
    %c0_i32_0 = arith.constant 0 : i32
    return %arg0, %c0_i32 : i32, i32
  }
}

module attributes {stable_mosaic.version = 11 : i64} {
  func.func @_linear_kernel(%arg0: i32, %arg1: memref<16x5xbf16, #tpu.memory_space<vmem>>, %arg2: memref<5x32xbf16, #tpu.memory_space<vmem>>, %arg3: memref<1x32xf32, #tpu.memory_space<vmem>>, %arg4: memref<16x32xf32, #tpu.memory_space<vmem>>) attributes {dimension_semantics = [#tpu.dimension_semantics<parallel>], iteration_bounds = array<i64: 1>, scalar_prefetch = 0 : i64, scratch_operands = 0 : i64, tpu.core_type = #tpu.core_type<tc>, window_params = [{transform_indices = @transform_0, window_bounds = array<i64: 16, 5>}, {pipeline_mode = #tpu.pipeline_mode<synchronous>, transform_indices = @transform_1, window_bounds = array<i64: 5, 32>}, {pipeline_mode = #tpu.pipeline_mode<synchronous>, transform_indices = @transform_2, window_bounds = array<i64: 1, 32>}, {transform_indices = @transform_3, window_bounds = array<i64: 16, 32>}]} {
    %c0 = arith.constant 0 : index
    %c0_0 = arith.constant 0 : index
    %0 = vector.load %arg1[%c0, %c0_0] : memref<16x5xbf16, #tpu.memory_space<vmem>>, vector<16x5xbf16>
    %c0_1 = arith.constant 0 : index
    %c0_2 = arith.constant 0 : index
    %1 = vector.load %arg2[%c0_1, %c0_2] : memref<5x32xbf16, #tpu.memory_space<vmem>>, vector<5x32xbf16>
    %cst = arith.constant dense<0.000000e+00> : vector<16x32xf32>
    %2 = tpu.matmul %0, %1, %cst {dimension_numbers = #tpu.dot_dimension_numbers<[1], [0], [0], [1], [0, 0, 1, 1], [], []>} : vector<16x5xbf16>, vector<5x32xbf16>, vector<16x32xf32> -> vector<16x32xf32>
    %c0_3 = arith.constant 0 : index
    %c0_4 = arith.constant 0 : index
    %3 = vector.load %arg3[%c0_3, %c0_4] : memref<1x32xf32, #tpu.memory_space<vmem>>, vector<1x32xf32>
    %4 = vector.broadcast %3 : vector<1x32xf32> to vector<16x32xf32>
    %5 = arith.addf %2, %4 : vector<16x32xf32>
    %c0_5 = arith.constant 0 : index
    %c0_6 = arith.constant 0 : index
    %6 = vector.load %arg4[%c0_5, %c0_6] : memref<16x32xf32, #tpu.memory_space<vmem>>, vector<16x32xf32>
    tpu.vector_store %arg4[%c0_5, %c0_6], %5 {strides = array<i32>} : memref<16x32xf32, #tpu.memory_space<vmem>>, vector<16x32xf32>,
    return
  }
  func.func @transform_0(%arg0: i32) -> (i32, i32) {
    %c0_i32 = arith.constant 0 : i32
    %c0_i32_0 = arith.constant 0 : i32
    return %arg0, %c0_i32 : i32, i32
  }
  func.func @transform_1(%arg0: i32) -> (i32, i32) {
    %c0_i32 = arith.constant 0 : i32
    %c0_i32_0 = arith.constant 0 : i32
    %c0_i32_1 = arith.constant 0 : i32
    return %c0_i32, %c0_i32_0 : i32, i32
  }
  func.func @transform_2(%arg0: i32) -> (i32, i32) {
    %c0_i32 = arith.constant 0 : i32
    %c0_i32_0 = arith.constant 0 : i32
    %c0_i32_1 = arith.constant 0 : i32
    return %c0_i32, %c0_i32_0 : i32, i32
  }
  func.func @transform_3(%arg0: i32) -> (i32, i32) {
    %c0_i32 = arith.constant 0 : i32
    %c0_i32_0 = arith.constant 0 : i32
    return %arg0, %c0_i32 : i32, i32
  }
}

module attributes {stable_mosaic.version = 11 : i64} {
  func.func @_linear_kernel(%arg0: i32, %arg1: memref<16x64xbf16, #tpu.memory_space<vmem>>, %arg2: memref<64x32xbf16, #tpu.memory_space<vmem>>, %arg3: memref<1x32xf32, #tpu.memory_space<vmem>>, %arg4: memref<16x32xf32, #tpu.memory_space<vmem>>) attributes {dimension_semantics = [#tpu.dimension_semantics<parallel>], iteration_bounds = array<i64: 1>, scalar_prefetch = 0 : i64, scratch_operands = 0 : i64, tpu.core_type = #tpu.core_type<tc>, window_params = [{transform_indices = @transform_0, window_bounds = array<i64: 16, 64>}, {pipeline_mode = #tpu.pipeline_mode<synchronous>, transform_indices = @transform_1, window_bounds = array<i64: 64, 32>}, {pipeline_mode = #tpu.pipeline_mode<synchronous>, transform_indices = @transform_2, window_bounds = array<i64: 1, 32>}, {transform_indices = @transform_3, window_bounds = array<i64: 16, 32>}]} {
    %c0 = arith.constant 0 : index
    %c0_0 = arith.constant 0 : index
    %0 = vector.load %arg1[%c0, %c0_0] : memref<16x64xbf16, #tpu.memory_space<vmem>>, vector<16x64xbf16>
    %c0_1 = arith.constant 0 : index
    %c0_2 = arith.constant 0 : index
    %1 = vector.load %arg2[%c0_1, %c0_2] : memref<64x32xbf16, #tpu.memory_space<vmem>>, vector<64x32xbf16>
    %cst = arith.constant dense<0.000000e+00> : vector<16x32xf32>
    %2 = tpu.matmul %0, %1, %cst {dimension_numbers = #tpu.dot_dimension_numbers<[1], [0], [0], [1], [0, 0, 1, 1], [], []>} : vector<16x64xbf16>, vector<64x32xbf16>, vector<16x32xf32> -> vector<16x32xf32>
    %c0_3 = arith.constant 0 : index
    %c0_4 = arith.constant 0 : index
    %3 = vector.load %arg3[%c0_3, %c0_4] : memref<1x32xf32, #tpu.memory_space<vmem>>, vector<1x32xf32>
    %4 = vector.broadcast %3 : vector<1x32xf32> to vector<16x32xf32>
    %5 = arith.addf %2, %4 : vector<16x32xf32>
    %c0_5 = arith.constant 0 : index
    %c0_6 = arith.constant 0 : index
    %6 = vector.load %arg4[%c0_5, %c0_6] : memref<16x32xf32, #tpu.memory_space<vmem>>, vector<16x32xf32>
    tpu.vector_store %arg4[%c0_5, %c0_6], %5 {strides = array<i32>} : memref<16x32xf32, #tpu.memory_space<vmem>>, vector<16x32xf32>,
    return
  }
  func.func @transform_0(%arg0: i32) -> (i32, i32) {
    %c0_i32 = arith.constant 0 : i32
    %c0_i32_0 = arith.constant 0 : i32
    return %arg0, %c0_i32 : i32, i32
  }
  func.func @transform_1(%arg0: i32) -> (i32, i32) {
    %c0_i32 = arith.constant 0 : i32
    %c0_i32_0 = arith.constant 0 : i32
    %c0_i32_1 = arith.constant 0 : i32
    return %c0_i32, %c0_i32_0 : i32, i32
  }
  func.func @transform_2(%arg0: i32) -> (i32, i32) {
    %c0_i32 = arith.constant 0 : i32
    %c0_i32_0 = arith.constant 0 : i32
    %c0_i32_1 = arith.constant 0 : i32
    return %c0_i32, %c0_i32_0 : i32, i32
  }
  func.func @transform_3(%arg0: i32) -> (i32, i32) {
    %c0_i32 = arith.constant 0 : i32
    %c0_i32_0 = arith.constant 0 : i32
    return %arg0, %c0_i32 : i32, i32
  }
}

module attributes {stable_mosaic.version = 11 : i64} {
  func.func @_gcn_ln_kernel(%arg0: i32, %arg1: memref<8x16x32xbf16, #tpu.memory_space<vmem>>, %arg2: memref<8x16x32xbf16, #tpu.memory_space<vmem>>, %arg3: memref<16x16xbf16, #tpu.memory_space<vmem>>, %arg4: memref<1x1x32xf32, #tpu.memory_space<vmem>>, %arg5: memref<1x1x32xf32, #tpu.memory_space<vmem>>, %arg6: memref<1x1x32xf32, #tpu.memory_space<vmem>>, %arg7: memref<8x16x32xbf16, #tpu.memory_space<vmem>>) attributes {dimension_semantics = [#tpu.dimension_semantics<parallel>], iteration_bounds = array<i64: 2>, scalar_prefetch = 0 : i64, scratch_operands = 0 : i64, tpu.core_type = #tpu.core_type<tc>, window_params = [{transform_indices = @transform_0, window_bounds = array<i64: 8, 16, 32>}, {transform_indices = @transform_1, window_bounds = array<i64: 8, 16, 32>}, {pipeline_mode = #tpu.pipeline_mode<synchronous>, transform_indices = @transform_2, window_bounds = array<i64: 16, 16>}, {pipeline_mode = #tpu.pipeline_mode<synchronous>, transform_indices = @transform_3, window_bounds = array<i64: 1, 1, 32>}, {pipeline_mode = #tpu.pipeline_mode<synchronous>, transform_indices = @transform_4, window_bounds = array<i64: 1, 1, 32>}, {pipeline_mode = #tpu.pipeline_mode<synchronous>, transform_indices = @transform_5, window_bounds = array<i64: 1, 1, 32>}, {transform_indices = @transform_6, window_bounds = array<i64: 8, 16, 32>}]} {
    %c0 = arith.constant 0 : index
    %c0_0 = arith.constant 0 : index
    %c0_1 = arith.constant 0 : index
    %0 = vector.load %arg1[%c0, %c0_0, %c0_1] : memref<8x16x32xbf16, #tpu.memory_space<vmem>>, vector<8x16x32xbf16>
    %c0_2 = arith.constant 0 : index
    %c0_3 = arith.constant 0 : index
    %1 = vector.load %arg3[%c0_2, %c0_3] : memref<16x16xbf16, #tpu.memory_space<vmem>>, vector<16x16xbf16>
    %2 = vector.shape_cast %1 : vector<16x16xbf16> to vector<1x16x16xbf16>
    %3 = vector.broadcast %2 : vector<1x16x16xbf16> to vector<8x16x16xbf16>
    "tpu.trace_start"() <{level = 10 : i32, message = "tnm,tmd->tnd"}> : () -> ()
    %cst = arith.constant dense<0.000000e+00> : vector<8x16x32xf32>
    %4 = tpu.matmul %3, %0, %cst {dimension_numbers = #tpu.dot_dimension_numbers<[2], [1], [1], [2], [0, 0, 0, 1, 1, 2], [0], [0]>} : vector<8x16x16xbf16>, vector<8x16x32xbf16>, vector<8x16x32xf32> -> vector<8x16x32xf32>
    "tpu.trace_stop"() : () -> ()
    %c0_4 = arith.constant 0 : index
    %c0_5 = arith.constant 0 : index
    %c0_6 = arith.constant 0 : index
    %5 = vector.load %arg2[%c0_4, %c0_5, %c0_6] : memref<8x16x32xbf16, #tpu.memory_space<vmem>>, vector<8x16x32xbf16>
    %6 = arith.extf %5 : vector<8x16x32xbf16> to vector<8x16x32xf32>
    %7 = arith.addf %6, %4 : vector<8x16x32xf32>
    %c0_7 = arith.constant 0 : index
    %c0_8 = arith.constant 0 : index
    %c0_9 = arith.constant 0 : index
    %8 = vector.load %arg4[%c0_7, %c0_8, %c0_9] : memref<1x1x32xf32, #tpu.memory_space<vmem>>, vector<1x1x32xf32>
    %9 = vector.broadcast %8 : vector<1x1x32xf32> to vector<8x16x32xf32>
    %10 = arith.addf %7, %9 : vector<8x16x32xf32>
    %cst_10 = arith.constant dense<0.000000e+00> : vector<8x16xf32>
    %11 = vector.multi_reduction <add>, %10, %cst_10 [2] : vector<8x16x32xf32> to vector<8x16xf32>
    %12 = vector.shape_cast %11 : vector<8x16xf32> to vector<8x16x1xf32>
    %cst_11 = arith.constant 3.200000e+01 : f32
    %13 = vector.broadcast %cst_11 : f32 to vector<8x16x1xf32>
    %14 = arith.divf %12, %13 : vector<8x16x1xf32>
    %15 = vector.broadcast %14 : vector<8x16x1xf32> to vector<8x16x32xf32>
    %16 = arith.subf %10, %15 : vector<8x16x32xf32>
    %17 = arith.mulf %16, %16 : vector<8x16x32xf32>
    %cst_12 = arith.constant dense<0.000000e+00> : vector<8x16xf32>
    %18 = vector.multi_reduction <add>, %17, %cst_12 [2] : vector<8x16x32xf32> to vector<8x16xf32>
    %19 = vector.shape_cast %18 : vector<8x16xf32> to vector<8x16x1xf32>
    %cst_13 = arith.constant 3.200000e+01 : f32
    %20 = vector.broadcast %cst_13 : f32 to vector<8x16x1xf32>
    %21 = arith.divf %19, %20 : vector<8x16x1xf32>
    %cst_14 = arith.constant 9.99999974E-6 : f32
    %22 = vector.broadcast %cst_14 : f32 to vector<8x16x1xf32>
    %23 = arith.addf %21, %22 : vector<8x16x1xf32>
    %24 = math.rsqrt %23 : vector<8x16x1xf32>
    %25 = vector.broadcast %24 : vector<8x16x1xf32> to vector<8x16x32xf32>
    %26 = arith.mulf %16, %25 : vector<8x16x32xf32>
    %c0_15 = arith.constant 0 : index
    %c0_16 = arith.constant 0 : index
    %c0_17 = arith.constant 0 : index
    %27 = vector.load %arg5[%c0_15, %c0_16, %c0_17] : memref<1x1x32xf32, #tpu.memory_space<vmem>>, vector<1x1x32xf32>
    %28 = vector.broadcast %27 : vector<1x1x32xf32> to vector<8x16x32xf32>
    %29 = arith.mulf %26, %28 : vector<8x16x32xf32>
    %c0_18 = arith.constant 0 : index
    %c0_19 = arith.constant 0 : index
    %c0_20 = arith.constant 0 : index
    %30 = vector.load %arg6[%c0_18, %c0_19, %c0_20] : memref<1x1x32xf32, #tpu.memory_space<vmem>>, vector<1x1x32xf32>
    %31 = vector.broadcast %30 : vector<1x1x32xf32> to vector<8x16x32xf32>
    %32 = arith.addf %29, %31 : vector<8x16x32xf32>
    %33 = arith.truncf %32 : vector<8x16x32xf32> to vector<8x16x32xbf16>
    %c0_21 = arith.constant 0 : index
    %c0_22 = arith.constant 0 : index
    %c0_23 = arith.constant 0 : index
    %34 = vector.load %arg7[%c0_21, %c0_22, %c0_23] : memref<8x16x32xbf16, #tpu.memory_space<vmem>>, vector<8x16x32xbf16>
    tpu.vector_store %arg7[%c0_21, %c0_22, %c0_23], %33 {strides = array<i32>} : memref<8x16x32xbf16, #tpu.memory_space<vmem>>, vector<8x16x32xbf16>,
    return
  }
  func.func @transform_0(%arg0: i32) -> (i32, i32, i32) {
    %c0_i32 = arith.constant 0 : i32
    %c0_i32_0 = arith.constant 0 : i32
    %c0_i32_1 = arith.constant 0 : i32
    return %arg0, %c0_i32, %c0_i32_0 : i32, i32, i32
  }
  func.func @transform_1(%arg0: i32) -> (i32, i32, i32) {
    %c0_i32 = arith.constant 0 : i32
    %c0_i32_0 = arith.constant 0 : i32
    %c0_i32_1 = arith.constant 0 : i32
    return %arg0, %c0_i32, %c0_i32_0 : i32, i32, i32
  }
  func.func @transform_2(%arg0: i32) -> (i32, i32) {
    %c0_i32 = arith.constant 0 : i32
    %c0_i32_0 = arith.constant 0 : i32
    %c0_i32_1 = arith.constant 0 : i32
    return %c0_i32, %c0_i32_0 : i32, i32
  }
  func.func @transform_3(%arg0: i32) -> (i32, i32, i32) {
    %c0_i32 = arith.constant 0 : i32
    %c0_i32_0 = arith.constant 0 : i32
    %c0_i32_1 = arith.constant 0 : i32
    %c0_i32_2 = arith.constant 0 : i32
    return %c0_i32, %c0_i32_0, %c0_i32_1 : i32, i32, i32
  }
  func.func @transform_4(%arg0: i32) -> (i32, i32, i32) {
    %c0_i32 = arith.constant 0 : i32
    %c0_i32_0 = arith.constant 0 : i32
    %c0_i32_1 = arith.constant 0 : i32
    %c0_i32_2 = arith.constant 0 : i32
    return %c0_i32, %c0_i32_0, %c0_i32_1 : i32, i32, i32
  }
  func.func @transform_5(%arg0: i32) -> (i32, i32, i32) {
    %c0_i32 = arith.constant 0 : i32
    %c0_i32_0 = arith.constant 0 : i32
    %c0_i32_1 = arith.constant 0 : i32
    %c0_i32_2 = arith.constant 0 : i32
    return %c0_i32, %c0_i32_0, %c0_i32_1 : i32, i32, i32
  }
  func.func @transform_6(%arg0: i32) -> (i32, i32, i32) {
    %c0_i32 = arith.constant 0 : i32
    %c0_i32_0 = arith.constant 0 : i32
    %c0_i32_1 = arith.constant 0 : i32
    return %arg0, %c0_i32, %c0_i32_0 : i32, i32, i32
  }
}

module attributes {stable_mosaic.version = 11 : i64} {
  func.func @_attn_kernel(%arg0: i32, %arg1: memref<1x128x32xbf16, #tpu.memory_space<vmem>>, %arg2: memref<32x96xbf16, #tpu.memory_space<vmem>>, %arg3: memref<1x96xf32, #tpu.memory_space<vmem>>, %arg4: memref<32x32xbf16, #tpu.memory_space<vmem>>, %arg5: memref<32x32xbf16, #tpu.memory_space<vmem>>, %arg6: memref<32x4xbf16, #tpu.memory_space<vmem>>, %arg7: memref<4x32xbf16, #tpu.memory_space<vmem>>, %arg8: memref<1x128x32xbf16, #tpu.memory_space<vmem>>, %arg9: memref<128x32xbf16, #tpu.memory_space<vmem>>, %arg10: memref<32x32xf32, #tpu.memory_space<vmem>>, %arg11: memref<32x32xbf16, #tpu.memory_space<vmem>>, %arg12: memref<1x32xf32, #tpu.memory_space<vmem>>) attributes {dimension_semantics = [#tpu.dimension_semantics<parallel>], iteration_bounds = array<i64: 2>, scalar_prefetch = 0 : i64, scratch_operands = 4 : i64, tpu.core_type = #tpu.core_type<tc>, window_params = [{transform_indices = @transform_0, window_bounds = array<i64: 1, 128, 32>}, {pipeline_mode = #tpu.pipeline_mode<synchronous>, transform_indices = @transform_1, window_bounds = array<i64: 32, 96>}, {pipeline_mode = #tpu.pipeline_mode<synchronous>, transform_indices = @transform_2, window_bounds = array<i64: 1, 96>}, {pipeline_mode = #tpu.pipeline_mode<synchronous>, transform_indices = @transform_3, window_bounds = array<i64: 32, 32>}, {pipeline_mode = #tpu.pipeline_mode<synchronous>, transform_indices = @transform_4, window_bounds = array<i64: 32, 32>}, {pipeline_mode = #tpu.pipeline_mode<synchronous>, transform_indices = @transform_5, window_bounds = array<i64: 32, 4>}, {pipeline_mode = #tpu.pipeline_mode<synchronous>, transform_indices = @transform_6, window_bounds = array<i64: 4, 32>}, {transform_indices = @transform_7, window_bounds = array<i64: 1, 128, 32>}]} {
    %cst = arith.constant 0.000000e+00 : f32
    %0 = vector.broadcast %cst : f32 to vector<32x32xf32>
    %c0 = arith.constant 0 : index
    %c0_0 = arith.constant 0 : index
    %1 = vector.load %arg10[%c0, %c0_0] : memref<32x32xf32, #tpu.memory_space<vmem>>, vector<32x32xf32>
    tpu.vector_store %arg10[%c0, %c0_0], %0 {strides = array<i32>} : memref<32x32xf32, #tpu.memory_space<vmem>>, vector<32x32xf32>,
    %cst_1 = arith.constant 0.000000e+00 : f32
    %2 = vector.broadcast %cst_1 : f32 to vector<1x32xf32>
    %c0_2 = arith.constant 0 : index
    %c0_3 = arith.constant 0 : index
    %3 = vector.load %arg12[%c0_2, %c0_3] : memref<1x32xf32, #tpu.memory_space<vmem>>, vector<1x32xf32>
    tpu.vector_store %arg12[%c0_2, %c0_3], %2 {strides = array<i32>} : memref<1x32xf32, #tpu.memory_space<vmem>>, vector<1x32xf32>,
    %c0_i32 = arith.constant 0 : i32
    %c128_i32 = arith.constant 128 : i32
    %4 = arith.muli %c0_i32, %c128_i32 : i32
    %5 = tpu.assume_multiple %4, 128 : i32
    %c0_4 = arith.constant 0 : index
    %6 = arith.index_cast %5 : i32 to index
    %c0_5 = arith.constant 0 : index
    %7 = vector.load %arg1[%c0_4, %6, %c0_5] : memref<1x128x32xbf16, #tpu.memory_space<vmem>>, vector<1x128x32xbf16>
    %8 = vector.shape_cast %7 : vector<1x128x32xbf16> to vector<128x32xbf16>
    %c0_6 = arith.constant 0 : index
    %c0_7 = arith.constant 0 : index
    %9 = vector.load %arg2[%c0_6, %c0_7] : memref<32x96xbf16, #tpu.memory_space<vmem>>, vector<32x96xbf16>
    %cst_8 = arith.constant dense<0.000000e+00> : vector<128x96xf32>
    %10 = tpu.matmul %8, %9, %cst_8 {dimension_numbers = #tpu.dot_dimension_numbers<[1], [0], [0], [1], [0, 0, 1, 1], [], []>} : vector<128x32xbf16>, vector<32x96xbf16>, vector<128x96xf32> -> vector<128x96xf32>
    %c0_9 = arith.constant 0 : index
    %c0_10 = arith.constant 0 : index
    %11 = vector.load %arg3[%c0_9, %c0_10] : memref<1x96xf32, #tpu.memory_space<vmem>>, vector<1x96xf32>
    %12 = vector.broadcast %11 : vector<1x96xf32> to vector<128x96xf32>
    %13 = arith.addf %10, %12 : vector<128x96xf32>
    %14 = vector.extract_strided_slice %13 {offsets = [0, 0], sizes = [128, 32], strides = [1, 1]} : vector<128x96xf32> to vector<128x32xf32>
    %cst_11 = arith.constant 0.000000e+00 : f32
    %15 = vector.broadcast %cst_11 : f32 to vector<128x32xf32>
    %16 = arith.cmpf ogt, %14, %15 : vector<128x32xf32>
    %cst_12 = arith.constant 1.000000e+00 : f32
    %17 = vector.broadcast %cst_12 : f32 to vector<128x32xf32>
    %18 = arith.addf %14, %17 : vector<128x32xf32>
    %19 = math.exp %14 : vector<128x32xf32>
    %20 = arith.select %16, %18, %19 : vector<128x32xi1>, vector<128x32xf32>
    %21 = vector.extract_strided_slice %13 {offsets = [0, 32], sizes = [128, 32], strides = [1, 1]} : vector<128x96xf32> to vector<128x32xf32>
    %cst_13 = arith.constant 0.000000e+00 : f32
    %22 = vector.broadcast %cst_13 : f32 to vector<128x32xf32>
    %23 = arith.cmpf ogt, %21, %22 : vector<128x32xf32>
    %cst_14 = arith.constant 1.000000e+00 : f32
    %24 = vector.broadcast %cst_14 : f32 to vector<128x32xf32>
    %25 = arith.addf %21, %24 : vector<128x32xf32>
    %26 = math.exp %21 : vector<128x32xf32>
    %27 = arith.select %23, %25, %26 : vector<128x32xi1>, vector<128x32xf32>
    %28 = vector.extract_strided_slice %13 {offsets = [0, 64], sizes = [128, 32], strides = [1, 1]} : vector<128x96xf32> to vector<128x32xf32>
    %c0_15 = arith.constant 0 : index
    %c0_16 = arith.constant 0 : index
    %29 = vector.load %arg10[%c0_15, %c0_16] : memref<32x32xf32, #tpu.memory_space<vmem>>, vector<32x32xf32>
    %30 = arith.truncf %27 : vector<128x32xf32> to vector<128x32xbf16>
    %31 = arith.truncf %28 : vector<128x32xf32> to vector<128x32xbf16>
    %cst_17 = arith.constant dense<0.000000e+00> : vector<32x32xf32>
    %32 = tpu.matmul %30, %31, %cst_17 {dimension_numbers = #tpu.dot_dimension_numbers<[0], [0], [1], [1], [0, 1, 1, 1], [], []>} : vector<128x32xbf16>, vector<128x32xbf16>, vector<32x32xf32> -> vector<32x32xf32>
    %33 = arith.addf %29, %32 : vector<32x32xf32>
    %c0_18 = arith.constant 0 : index
    %c0_19 = arith.constant 0 : index
    %34 = vector.load %arg10[%c0_18, %c0_19] : memref<32x32xf32, #tpu.memory_space<vmem>>, vector<32x32xf32>
    tpu.vector_store %arg10[%c0_18, %c0_19], %33 {strides = array<i32>} : memref<32x32xf32, #tpu.memory_space<vmem>>, vector<32x32xf32>,
    %c0_20 = arith.constant 0 : index
    %c0_21 = arith.constant 0 : index
    %35 = vector.load %arg12[%c0_20, %c0_21] : memref<1x32xf32, #tpu.memory_space<vmem>>, vector<1x32xf32>
    %cst_22 = arith.constant dense<0.000000e+00> : vector<32xf32>
    %36 = vector.multi_reduction <add>, %27, %cst_22 [0] : vector<128x32xf32> to vector<32xf32>
    %37 = vector.shape_cast %36 : vector<32xf32> to vector<1x32xf32>
    %38 = arith.addf %35, %37 : vector<1x32xf32>
    %c0_23 = arith.constant 0 : index
    %c0_24 = arith.constant 0 : index
    %39 = vector.load %arg12[%c0_23, %c0_24] : memref<1x32xf32, #tpu.memory_space<vmem>>, vector<1x32xf32>
    tpu.vector_store %arg12[%c0_23, %c0_24], %38 {strides = array<i32>} : memref<1x32xf32, #tpu.memory_space<vmem>>, vector<1x32xf32>,
    %40 = arith.truncf %20 : vector<128x32xf32> to vector<128x32xbf16>
    %41 = arith.index_cast %5 : i32 to index
    %c0_25 = arith.constant 0 : index
    %42 = vector.load %arg9[%41, %c0_25] : memref<128x32xbf16, #tpu.memory_space<vmem>>, vector<128x32xbf16>
    tpu.vector_store %arg9[%41, %c0_25], %40 {strides = array<i32>} : memref<128x32xbf16, #tpu.memory_space<vmem>>, vector<128x32xbf16>,
    %c1_i32 = arith.constant 1 : i32
    %c0_26 = arith.constant 0 : index
    %c0_27 = arith.constant 0 : index
    %43 = vector.load %arg10[%c0_26, %c0_27] : memref<32x32xf32, #tpu.memory_space<vmem>>, vector<32x32xf32>
    %c0_28 = arith.constant 0 : index
    %c0_29 = arith.constant 0 : index
    %44 = vector.load %arg5[%c0_28, %c0_29] : memref<32x32xbf16, #tpu.memory_space<vmem>>, vector<32x32xbf16>
    %45 = arith.extf %44 : vector<32x32xbf16> to vector<32x32xf32>
    %46 = arith.mulf %43, %45 : vector<32x32xf32>
    %47 = arith.truncf %46 : vector<32x32xf32> to vector<32x32xbf16>
    %c0_30 = arith.constant 0 : index
    %c0_31 = arith.constant 0 : index
    %48 = vector.load %arg11[%c0_30, %c0_31] : memref<32x32xbf16, #tpu.memory_space<vmem>>, vector<32x32xbf16>
    tpu.vector_store %arg11[%c0_30, %c0_31], %47 {strides = array<i32>} : memref<32x32xbf16, #tpu.memory_space<vmem>>, vector<32x32xbf16>,
    %c0_i32_32 = arith.constant 0 : i32
    %c128_i32_33 = arith.constant 128 : i32
    %49 = arith.muli %c0_i32_32, %c128_i32_33 : i32
    %50 = tpu.assume_multiple %49, 128 : i32
    %51 = arith.index_cast %50 : i32 to index
    %c0_34 = arith.constant 0 : index
    %52 = vector.load %arg9[%51, %c0_34] : memref<128x32xbf16, #tpu.memory_space<vmem>>, vector<128x32xbf16>
    %c0_35 = arith.constant 0 : index
    %c0_36 = arith.constant 0 : index
    %53 = vector.load %arg11[%c0_35, %c0_36] : memref<32x32xbf16, #tpu.memory_space<vmem>>, vector<32x32xbf16>
    %cst_37 = arith.constant dense<0.000000e+00> : vector<128x32xf32>
    %54 = tpu.matmul %52, %53, %cst_37 {dimension_numbers = #tpu.dot_dimension_numbers<[1], [0], [0], [1], [0, 0, 1, 1], [], []>} : vector<128x32xbf16>, vector<32x32xbf16>, vector<128x32xf32> -> vector<128x32xf32>
    %55 = arith.extf %52 : vector<128x32xbf16> to vector<128x32xf32>
    %c0_38 = arith.constant 0 : index
    %c0_39 = arith.constant 0 : index
    %56 = vector.load %arg12[%c0_38, %c0_39] : memref<1x32xf32, #tpu.memory_space<vmem>>, vector<1x32xf32>
    %57 = vector.broadcast %56 : vector<1x32xf32> to vector<128x32xf32>
    %58 = arith.mulf %55, %57 : vector<128x32xf32>
    %59 = arith.truncf %58 : vector<128x32xf32> to vector<128x32xbf16>
    %c0_40 = arith.constant 0 : index
    %c0_41 = arith.constant 0 : index
    %60 = vector.load %arg6[%c0_40, %c0_41] : memref<32x4xbf16, #tpu.memory_space<vmem>>, vector<32x4xbf16>
    %cst_42 = arith.constant dense<0.000000e+00> : vector<128x4xf32>
    %61 = tpu.matmul %59, %60, %cst_42 {dimension_numbers = #tpu.dot_dimension_numbers<[1], [0], [0], [1], [0, 0, 1, 1], [], []>} : vector<128x32xbf16>, vector<32x4xbf16>, vector<128x4xf32> -> vector<128x4xf32>
    %62 = arith.truncf %61 : vector<128x4xf32> to vector<128x4xbf16>
    %c0_43 = arith.constant 0 : index
    %c0_44 = arith.constant 0 : index
    %63 = vector.load %arg7[%c0_43, %c0_44] : memref<4x32xbf16, #tpu.memory_space<vmem>>, vector<4x32xbf16>
    %cst_45 = arith.constant dense<0.000000e+00> : vector<128x32xf32>
    %64 = tpu.matmul %62, %63, %cst_45 {dimension_numbers = #tpu.dot_dimension_numbers<[1], [0], [0], [1], [0, 0, 1, 1], [], []>} : vector<128x4xbf16>, vector<4x32xbf16>, vector<128x32xf32> -> vector<128x32xf32>
    %cst_46 = arith.constant 9.99999997E-7 : f32
    %65 = vector.broadcast %cst_46 : f32 to vector<128x32xf32>
    %66 = arith.addf %64, %65 : vector<128x32xf32>
    %67 = tpu.reciprocal %66 {approx = true} : vector<128x32xf32> -> vector<128x32xf32>
    %68 = arith.mulf %54, %67 : vector<128x32xf32>
    %69 = arith.truncf %68 : vector<128x32xf32> to vector<128x32xbf16>
    %c0_47 = arith.constant 0 : index
    %c0_48 = arith.constant 0 : index
    %70 = vector.load %arg4[%c0_47, %c0_48] : memref<32x32xbf16, #tpu.memory_space<vmem>>, vector<32x32xbf16>
    %cst_49 = arith.constant dense<0.000000e+00> : vector<128x32xf32>
    %71 = tpu.matmul %69, %70, %cst_49 {dimension_numbers = #tpu.dot_dimension_numbers<[1], [0], [0], [1], [0, 0, 1, 1], [], []>} : vector<128x32xbf16>, vector<32x32xbf16>, vector<128x32xf32> -> vector<128x32xf32>
    %72 = arith.truncf %71 : vector<128x32xf32> to vector<128x32xbf16>
    %c0_50 = arith.constant 0 : index
    %73 = arith.index_cast %50 : i32 to index
    %c0_51 = arith.constant 0 : index
    %74 = vector.load %arg8[%c0_50, %73, %c0_51] : memref<1x128x32xbf16, #tpu.memory_space<vmem>>, vector<1x128x32xbf16>
    %75 = vector.shape_cast %74 : vector<1x128x32xbf16> to vector<128x32xbf16>
    %76 = vector.shape_cast %72 : vector<128x32xbf16> to vector<1x128x32xbf16>
    tpu.vector_store %arg8[%c0_50, %73, %c0_51], %76 {strides = array<i32>} : memref<1x128x32xbf16, #tpu.memory_space<vmem>>, vector<1x128x32xbf16>,
    %c1_i32_52 = arith.constant 1 : i32
    return
  }
  func.func @transform_0(%arg0: i32) -> (i32, i32, i32) {
    %c0_i32 = arith.constant 0 : i32
    %c0_i32_0 = arith.constant 0 : i32
    %c0_i32_1 = arith.constant 0 : i32
    return %arg0, %c0_i32, %c0_i32_0 : i32, i32, i32
  }
  func.func @transform_1(%arg0: i32) -> (i32, i32) {
    %c0_i32 = arith.constant 0 : i32
    %c0_i32_0 = arith.constant 0 : i32
    %c0_i32_1 = arith.constant 0 : i32
    return %c0_i32, %c0_i32_0 : i32, i32
  }
  func.func @transform_2(%arg0: i32) -> (i32, i32) {
    %c0_i32 = arith.constant 0 : i32
    %c0_i32_0 = arith.constant 0 : i32
    %c0_i32_1 = arith.constant 0 : i32
    return %c0_i32, %c0_i32_0 : i32, i32
  }
  func.func @transform_3(%arg0: i32) -> (i32, i32) {
    %c0_i32 = arith.constant 0 : i32
    %c0_i32_0 = arith.constant 0 : i32
    %c0_i32_1 = arith.constant 0 : i32
    return %c0_i32, %c0_i32_0 : i32, i32
  }
  func.func @transform_4(%arg0: i32) -> (i32, i32) {
    %c0_i32 = arith.constant 0 : i32
    %c0_i32_0 = arith.constant 0 : i32
    %c0_i32_1 = arith.constant 0 : i32
    return %c0_i32, %c0_i32_0 : i32, i32
  }
  func.func @transform_5(%arg0: i32) -> (i32, i32) {
    %c0_i32 = arith.constant 0 : i32
    %c0_i32_0 = arith.constant 0 : i32
    %c0_i32_1 = arith.constant 0 : i32
    return %c0_i32, %c0_i32_0 : i32, i32
  }
  func.func @transform_6(%arg0: i32) -> (i32, i32) {
    %c0_i32 = arith.constant 0 : i32
    %c0_i32_0 = arith.constant 0 : i32
    %c0_i32_1 = arith.constant 0 : i32
    return %c0_i32, %c0_i32_0 : i32, i32
  }
  func.func @transform_7(%arg0: i32) -> (i32, i32, i32) {
    %c0_i32 = arith.constant 0 : i32
    %c0_i32_0 = arith.constant 0 : i32
    %c0_i32_1 = arith.constant 0 : i32
    return %arg0, %c0_i32, %c0_i32_0 : i32, i32, i32
  }
}

module attributes {stable_mosaic.version = 11 : i64} {
  func.func @_ffn_kernel(%arg0: i32, %arg1: memref<256x32xbf16, #tpu.memory_space<vmem>>, %arg2: memref<32x16xbf16, #tpu.memory_space<vmem>>, %arg3: memref<1x16xf32, #tpu.memory_space<vmem>>, %arg4: memref<16x32xbf16, #tpu.memory_space<vmem>>, %arg5: memref<1x32xf32, #tpu.memory_space<vmem>>, %arg6: memref<1x32xf32, #tpu.memory_space<vmem>>, %arg7: memref<1x32xf32, #tpu.memory_space<vmem>>, %arg8: memref<256x32xbf16, #tpu.memory_space<vmem>>) attributes {dimension_semantics = [#tpu.dimension_semantics<parallel>], iteration_bounds = array<i64: 1>, scalar_prefetch = 0 : i64, scratch_operands = 0 : i64, tpu.core_type = #tpu.core_type<tc>, window_params = [{transform_indices = @transform_0, window_bounds = array<i64: 256, 32>}, {pipeline_mode = #tpu.pipeline_mode<synchronous>, transform_indices = @transform_1, window_bounds = array<i64: 32, 16>}, {pipeline_mode = #tpu.pipeline_mode<synchronous>, transform_indices = @transform_2, window_bounds = array<i64: 1, 16>}, {pipeline_mode = #tpu.pipeline_mode<synchronous>, transform_indices = @transform_3, window_bounds = array<i64: 16, 32>}, {pipeline_mode = #tpu.pipeline_mode<synchronous>, transform_indices = @transform_4, window_bounds = array<i64: 1, 32>}, {pipeline_mode = #tpu.pipeline_mode<synchronous>, transform_indices = @transform_5, window_bounds = array<i64: 1, 32>}, {pipeline_mode = #tpu.pipeline_mode<synchronous>, transform_indices = @transform_6, window_bounds = array<i64: 1, 32>}, {transform_indices = @transform_7, window_bounds = array<i64: 256, 32>}]} {
    %c0 = arith.constant 0 : index
    %c0_0 = arith.constant 0 : index
    %0 = vector.load %arg1[%c0, %c0_0] : memref<256x32xbf16, #tpu.memory_space<vmem>>, vector<256x32xbf16>
    %c0_1 = arith.constant 0 : index
    %c0_2 = arith.constant 0 : index
    %1 = vector.load %arg2[%c0_1, %c0_2] : memref<32x16xbf16, #tpu.memory_space<vmem>>, vector<32x16xbf16>
    %cst = arith.constant dense<0.000000e+00> : vector<256x16xf32>
    %2 = tpu.matmul %0, %1, %cst {dimension_numbers = #tpu.dot_dimension_numbers<[1], [0], [0], [1], [0, 0, 1, 1], [], []>} : vector<256x32xbf16>, vector<32x16xbf16>, vector<256x16xf32> -> vector<256x16xf32>
    %c0_3 = arith.constant 0 : index
    %c0_4 = arith.constant 0 : index
    %3 = vector.load %arg3[%c0_3, %c0_4] : memref<1x16xf32, #tpu.memory_space<vmem>>, vector<1x16xf32>
    %4 = vector.broadcast %3 : vector<1x16xf32> to vector<256x16xf32>
    %5 = arith.addf %2, %4 : vector<256x16xf32>
    %6 = arith.mulf %5, %5 : vector<256x16xf32>
    %7 = arith.mulf %5, %6 : vector<256x16xf32>
    %cst_5 = arith.constant 4.471500e-02 : f32
    %8 = vector.broadcast %cst_5 : f32 to vector<256x16xf32>
    %9 = arith.mulf %8, %7 : vector<256x16xf32>
    %10 = arith.addf %5, %9 : vector<256x16xf32>
    %cst_6 = arith.constant 0.797884583 : f32
    %11 = vector.broadcast %cst_6 : f32 to vector<256x16xf32>
    %12 = arith.mulf %11, %10 : vector<256x16xf32>
    %13 = math.tanh %12 : vector<256x16xf32>
    %cst_7 = arith.constant 1.000000e+00 : f32
    %14 = vector.broadcast %cst_7 : f32 to vector<256x16xf32>
    %15 = arith.addf %14, %13 : vector<256x16xf32>
    %cst_8 = arith.constant 5.000000e-01 : f32
    %16 = vector.broadcast %cst_8 : f32 to vector<256x16xf32>
    %17 = arith.mulf %16, %15 : vector<256x16xf32>
    %18 = arith.mulf %5, %17 : vector<256x16xf32>
    %19 = arith.truncf %18 : vector<256x16xf32> to vector<256x16xbf16>
    %c0_9 = arith.constant 0 : index
    %c0_10 = arith.constant 0 : index
    %20 = vector.load %arg4[%c0_9, %c0_10] : memref<16x32xbf16, #tpu.memory_space<vmem>>, vector<16x32xbf16>
    %cst_11 = arith.constant dense<0.000000e+00> : vector<256x32xf32>
    %21 = tpu.matmul %19, %20, %cst_11 {dimension_numbers = #tpu.dot_dimension_numbers<[1], [0], [0], [1], [0, 0, 1, 1], [], []>} : vector<256x16xbf16>, vector<16x32xbf16>, vector<256x32xf32> -> vector<256x32xf32>
    %c0_12 = arith.constant 0 : index
    %c0_13 = arith.constant 0 : index
    %22 = vector.load %arg5[%c0_12, %c0_13] : memref<1x32xf32, #tpu.memory_space<vmem>>, vector<1x32xf32>
    %23 = vector.broadcast %22 : vector<1x32xf32> to vector<256x32xf32>
    %24 = arith.addf %21, %23 : vector<256x32xf32>
    %25 = arith.extf %0 : vector<256x32xbf16> to vector<256x32xf32>
    %26 = arith.addf %25, %24 : vector<256x32xf32>
    %cst_14 = arith.constant dense<0.000000e+00> : vector<256xf32>
    %27 = vector.multi_reduction <add>, %26, %cst_14 [1] : vector<256x32xf32> to vector<256xf32>
    %28 = vector.shape_cast %27 : vector<256xf32> to vector<256x1xf32>
    %cst_15 = arith.constant 3.200000e+01 : f32
    %29 = vector.broadcast %cst_15 : f32 to vector<256x1xf32>
    %30 = arith.divf %28, %29 : vector<256x1xf32>
    %31 = vector.broadcast %30 : vector<256x1xf32> to vector<256x32xf32>
    %32 = arith.subf %26, %31 : vector<256x32xf32>
    %33 = arith.mulf %32, %32 : vector<256x32xf32>
    %cst_16 = arith.constant dense<0.000000e+00> : vector<256xf32>
    %34 = vector.multi_reduction <add>, %33, %cst_16 [1] : vector<256x32xf32> to vector<256xf32>
    %35 = vector.shape_cast %34 : vector<256xf32> to vector<256x1xf32>
    %cst_17 = arith.constant 3.200000e+01 : f32
    %36 = vector.broadcast %cst_17 : f32 to vector<256x1xf32>
    %37 = arith.divf %35, %36 : vector<256x1xf32>
    %cst_18 = arith.constant 9.99999974E-6 : f32
    %38 = vector.broadcast %cst_18 : f32 to vector<256x1xf32>
    %39 = arith.addf %37, %38 : vector<256x1xf32>
    %40 = math.rsqrt %39 : vector<256x1xf32>
    %41 = vector.broadcast %40 : vector<256x1xf32> to vector<256x32xf32>
    %42 = arith.mulf %32, %41 : vector<256x32xf32>
    %c0_19 = arith.constant 0 : index
    %c0_20 = arith.constant 0 : index
    %43 = vector.load %arg6[%c0_19, %c0_20] : memref<1x32xf32, #tpu.memory_space<vmem>>, vector<1x32xf32>
    %44 = vector.broadcast %43 : vector<1x32xf32> to vector<256x32xf32>
    %45 = arith.mulf %42, %44 : vector<256x32xf32>
    %c0_21 = arith.constant 0 : index
    %c0_22 = arith.constant 0 : index
    %46 = vector.load %arg7[%c0_21, %c0_22] : memref<1x32xf32, #tpu.memory_space<vmem>>, vector<1x32xf32>
    %47 = vector.broadcast %46 : vector<1x32xf32> to vector<256x32xf32>
    %48 = arith.addf %45, %47 : vector<256x32xf32>
    %49 = arith.truncf %48 : vector<256x32xf32> to vector<256x32xbf16>
    %c0_23 = arith.constant 0 : index
    %c0_24 = arith.constant 0 : index
    %50 = vector.load %arg8[%c0_23, %c0_24] : memref<256x32xbf16, #tpu.memory_space<vmem>>, vector<256x32xbf16>
    tpu.vector_store %arg8[%c0_23, %c0_24], %49 {strides = array<i32>} : memref<256x32xbf16, #tpu.memory_space<vmem>>, vector<256x32xbf16>,
    return
  }
  func.func @transform_0(%arg0: i32) -> (i32, i32) {
    %c0_i32 = arith.constant 0 : i32
    %c0_i32_0 = arith.constant 0 : i32
    return %arg0, %c0_i32 : i32, i32
  }
  func.func @transform_1(%arg0: i32) -> (i32, i32) {
    %c0_i32 = arith.constant 0 : i32
    %c0_i32_0 = arith.constant 0 : i32
    %c0_i32_1 = arith.constant 0 : i32
    return %c0_i32, %c0_i32_0 : i32, i32
  }
  func.func @transform_2(%arg0: i32) -> (i32, i32) {
    %c0_i32 = arith.constant 0 : i32
    %c0_i32_0 = arith.constant 0 : i32
    %c0_i32_1 = arith.constant 0 : i32
    return %c0_i32, %c0_i32_0 : i32, i32
  }
  func.func @transform_3(%arg0: i32) -> (i32, i32) {
    %c0_i32 = arith.constant 0 : i32
    %c0_i32_0 = arith.constant 0 : i32
    %c0_i32_1 = arith.constant 0 : i32
    return %c0_i32, %c0_i32_0 : i32, i32
  }
  func.func @transform_4(%arg0: i32) -> (i32, i32) {
    %c0_i32 = arith.constant 0 : i32
    %c0_i32_0 = arith.constant 0 : i32
    %c0_i32_1 = arith.constant 0 : i32
    return %c0_i32, %c0_i32_0 : i32, i32
  }
  func.func @transform_5(%arg0: i32) -> (i32, i32) {
    %c0_i32 = arith.constant 0 : i32
    %c0_i32_0 = arith.constant 0 : i32
    %c0_i32_1 = arith.constant 0 : i32
    return %c0_i32, %c0_i32_0 : i32, i32
  }
  func.func @transform_6(%arg0: i32) -> (i32, i32) {
    %c0_i32 = arith.constant 0 : i32
    %c0_i32_0 = arith.constant 0 : i32
    %c0_i32_1 = arith.constant 0 : i32
    return %c0_i32, %c0_i32_0 : i32, i32
  }
  func.func @transform_7(%arg0: i32) -> (i32, i32) {
    %c0_i32 = arith.constant 0 : i32
    %c0_i32_0 = arith.constant 0 : i32
    return %arg0, %c0_i32 : i32, i32
  }
}

module attributes {stable_mosaic.version = 11 : i64} {
  func.func @_layernorm_kernel(%arg0: i32, %arg1: memref<256x32xbf16, #tpu.memory_space<vmem>>, %arg2: memref<1x32xf32, #tpu.memory_space<vmem>>, %arg3: memref<1x32xf32, #tpu.memory_space<vmem>>, %arg4: memref<256x32xbf16, #tpu.memory_space<vmem>>) attributes {dimension_semantics = [#tpu.dimension_semantics<parallel>], iteration_bounds = array<i64: 1>, scalar_prefetch = 0 : i64, scratch_operands = 0 : i64, tpu.core_type = #tpu.core_type<tc>, window_params = [{transform_indices = @transform_0, window_bounds = array<i64: 256, 32>}, {pipeline_mode = #tpu.pipeline_mode<synchronous>, transform_indices = @transform_1, window_bounds = array<i64: 1, 32>}, {pipeline_mode = #tpu.pipeline_mode<synchronous>, transform_indices = @transform_2, window_bounds = array<i64: 1, 32>}, {transform_indices = @transform_3, window_bounds = array<i64: 256, 32>}]} {
    %c0 = arith.constant 0 : index
    %c0_0 = arith.constant 0 : index
    %0 = vector.load %arg1[%c0, %c0_0] : memref<256x32xbf16, #tpu.memory_space<vmem>>, vector<256x32xbf16>
    %1 = arith.extf %0 : vector<256x32xbf16> to vector<256x32xf32>
    %cst = arith.constant dense<0.000000e+00> : vector<256xf32>
    %2 = vector.multi_reduction <add>, %1, %cst [1] : vector<256x32xf32> to vector<256xf32>
    %3 = vector.shape_cast %2 : vector<256xf32> to vector<256x1xf32>
    %cst_1 = arith.constant 3.200000e+01 : f32
    %4 = vector.broadcast %cst_1 : f32 to vector<256x1xf32>
    %5 = arith.divf %3, %4 : vector<256x1xf32>
    %6 = vector.broadcast %5 : vector<256x1xf32> to vector<256x32xf32>
    %7 = arith.subf %1, %6 : vector<256x32xf32>
    %8 = arith.mulf %7, %7 : vector<256x32xf32>
    %cst_2 = arith.constant dense<0.000000e+00> : vector<256xf32>
    %9 = vector.multi_reduction <add>, %8, %cst_2 [1] : vector<256x32xf32> to vector<256xf32>
    %10 = vector.shape_cast %9 : vector<256xf32> to vector<256x1xf32>
    %cst_3 = arith.constant 3.200000e+01 : f32
    %11 = vector.broadcast %cst_3 : f32 to vector<256x1xf32>
    %12 = arith.divf %10, %11 : vector<256x1xf32>
    %cst_4 = arith.constant 9.99999974E-6 : f32
    %13 = vector.broadcast %cst_4 : f32 to vector<256x1xf32>
    %14 = arith.addf %12, %13 : vector<256x1xf32>
    %15 = math.rsqrt %14 : vector<256x1xf32>
    %16 = vector.broadcast %15 : vector<256x1xf32> to vector<256x32xf32>
    %17 = arith.mulf %7, %16 : vector<256x32xf32>
    %c0_5 = arith.constant 0 : index
    %c0_6 = arith.constant 0 : index
    %18 = vector.load %arg2[%c0_5, %c0_6] : memref<1x32xf32, #tpu.memory_space<vmem>>, vector<1x32xf32>
    %19 = vector.broadcast %18 : vector<1x32xf32> to vector<256x32xf32>
    %20 = arith.mulf %17, %19 : vector<256x32xf32>
    %c0_7 = arith.constant 0 : index
    %c0_8 = arith.constant 0 : index
    %21 = vector.load %arg3[%c0_7, %c0_8] : memref<1x32xf32, #tpu.memory_space<vmem>>, vector<1x32xf32>
    %22 = vector.broadcast %21 : vector<1x32xf32> to vector<256x32xf32>
    %23 = arith.addf %20, %22 : vector<256x32xf32>
    %24 = arith.truncf %23 : vector<256x32xf32> to vector<256x32xbf16>
    %c0_9 = arith.constant 0 : index
    %c0_10 = arith.constant 0 : index
    %25 = vector.load %arg4[%c0_9, %c0_10] : memref<256x32xbf16, #tpu.memory_space<vmem>>, vector<256x32xbf16>
    tpu.vector_store %arg4[%c0_9, %c0_10], %24 {strides = array<i32>} : memref<256x32xbf16, #tpu.memory_space<vmem>>, vector<256x32xbf16>,
    return
  }
  func.func @transform_0(%arg0: i32) -> (i32, i32) {
    %c0_i32 = arith.constant 0 : i32
    %c0_i32_0 = arith.constant 0 : i32
    return %arg0, %c0_i32 : i32, i32
  }
  func.func @transform_1(%arg0: i32) -> (i32, i32) {
    %c0_i32 = arith.constant 0 : i32
    %c0_i32_0 = arith.constant 0 : i32
    %c0_i32_1 = arith.constant 0 : i32
    return %c0_i32, %c0_i32_0 : i32, i32
  }
  func.func @transform_2(%arg0: i32) -> (i32, i32) {
    %c0_i32 = arith.constant 0 : i32
    %c0_i32_0 = arith.constant 0 : i32
    %c0_i32_1 = arith.constant 0 : i32
    return %c0_i32, %c0_i32_0 : i32, i32
  }
  func.func @transform_3(%arg0: i32) -> (i32, i32) {
    %c0_i32 = arith.constant 0 : i32
    %c0_i32_0 = arith.constant 0 : i32
    return %arg0, %c0_i32 : i32, i32
  }
}

module attributes {stable_mosaic.version = 11 : i64} {
  func.func @_endconv1_kernel(%arg0: i32, %arg1: memref<1x8x512xbf16, #tpu.memory_space<vmem>>, %arg2: memref<4x8xbf16, #tpu.memory_space<vmem>>, %arg3: memref<4x1xf32, #tpu.memory_space<vmem>>, %arg4: memref<1x4x512xbf16, #tpu.memory_space<vmem>>) attributes {dimension_semantics = [#tpu.dimension_semantics<parallel>], iteration_bounds = array<i64: 2>, scalar_prefetch = 0 : i64, scratch_operands = 0 : i64, tpu.core_type = #tpu.core_type<tc>, window_params = [{transform_indices = @transform_0, window_bounds = array<i64: 1, 8, 512>}, {pipeline_mode = #tpu.pipeline_mode<synchronous>, transform_indices = @transform_1, window_bounds = array<i64: 4, 8>}, {pipeline_mode = #tpu.pipeline_mode<synchronous>, transform_indices = @transform_2, window_bounds = array<i64: 4, 1>}, {transform_indices = @transform_3, window_bounds = array<i64: 1, 4, 512>}]} {
    %c0 = arith.constant 0 : index
    %c0_0 = arith.constant 0 : index
    %0 = vector.load %arg2[%c0, %c0_0] : memref<4x8xbf16, #tpu.memory_space<vmem>>, vector<4x8xbf16>
    %c0_1 = arith.constant 0 : index
    %c0_2 = arith.constant 0 : index
    %c0_3 = arith.constant 0 : index
    %1 = vector.load %arg1[%c0_1, %c0_2, %c0_3] : memref<1x8x512xbf16, #tpu.memory_space<vmem>>, vector<1x8x512xbf16>
    %2 = vector.shape_cast %1 : vector<1x8x512xbf16> to vector<8x512xbf16>
    %cst = arith.constant dense<0.000000e+00> : vector<4x512xf32>
    %3 = tpu.matmul %0, %2, %cst {dimension_numbers = #tpu.dot_dimension_numbers<[1], [0], [0], [1], [0, 0, 1, 1], [], []>} : vector<4x8xbf16>, vector<8x512xbf16>, vector<4x512xf32> -> vector<4x512xf32>
    %c0_4 = arith.constant 0 : index
    %c0_5 = arith.constant 0 : index
    %4 = vector.load %arg3[%c0_4, %c0_5] : memref<4x1xf32, #tpu.memory_space<vmem>>, vector<4x1xf32>
    %5 = vector.broadcast %4 : vector<4x1xf32> to vector<4x512xf32>
    %6 = arith.addf %3, %5 : vector<4x512xf32>
    %cst_6 = arith.constant 0.000000e+00 : f32
    %7 = vector.broadcast %cst_6 : f32 to vector<4x512xf32>
    %8 = arith.maximumf %6, %7 : vector<4x512xf32>
    %9 = arith.truncf %8 : vector<4x512xf32> to vector<4x512xbf16>
    %c0_7 = arith.constant 0 : index
    %c0_8 = arith.constant 0 : index
    %c0_9 = arith.constant 0 : index
    %10 = vector.load %arg4[%c0_7, %c0_8, %c0_9] : memref<1x4x512xbf16, #tpu.memory_space<vmem>>, vector<1x4x512xbf16>
    %11 = vector.shape_cast %10 : vector<1x4x512xbf16> to vector<4x512xbf16>
    %12 = vector.shape_cast %9 : vector<4x512xbf16> to vector<1x4x512xbf16>
    tpu.vector_store %arg4[%c0_7, %c0_8, %c0_9], %12 {strides = array<i32>} : memref<1x4x512xbf16, #tpu.memory_space<vmem>>, vector<1x4x512xbf16>,
    return
  }
  func.func @transform_0(%arg0: i32) -> (i32, i32, i32) {
    %c0_i32 = arith.constant 0 : i32
    %c0_i32_0 = arith.constant 0 : i32
    %c0_i32_1 = arith.constant 0 : i32
    return %arg0, %c0_i32, %c0_i32_0 : i32, i32, i32
  }
  func.func @transform_1(%arg0: i32) -> (i32, i32) {
    %c0_i32 = arith.constant 0 : i32
    %c0_i32_0 = arith.constant 0 : i32
    %c0_i32_1 = arith.constant 0 : i32
    return %c0_i32, %c0_i32_0 : i32, i32
  }
  func.func @transform_2(%arg0: i32) -> (i32, i32) {
    %c0_i32 = arith.constant 0 : i32
    %c0_i32_0 = arith.constant 0 : i32
    %c0_i32_1 = arith.constant 0 : i32
    return %c0_i32, %c0_i32_0 : i32, i32
  }
  func.func @transform_3(%arg0: i32) -> (i32, i32, i32) {
    %c0_i32 = arith.constant 0 : i32
    %c0_i32_0 = arith.constant 0 : i32
    %c0_i32_1 = arith.constant 0 : i32
    return %arg0, %c0_i32, %c0_i32_0 : i32, i32, i32
  }
}

module attributes {stable_mosaic.version = 11 : i64} {
  func.func @_linear_kernel(%arg0: i32, %arg1: memref<128x32xbf16, #tpu.memory_space<vmem>>, %arg2: memref<32x2xbf16, #tpu.memory_space<vmem>>, %arg3: memref<1x2xf32, #tpu.memory_space<vmem>>, %arg4: memref<128x2xf32, #tpu.memory_space<vmem>>) attributes {dimension_semantics = [#tpu.dimension_semantics<parallel>], iteration_bounds = array<i64: 1>, scalar_prefetch = 0 : i64, scratch_operands = 0 : i64, tpu.core_type = #tpu.core_type<tc>, window_params = [{transform_indices = @transform_0, window_bounds = array<i64: 128, 32>}, {pipeline_mode = #tpu.pipeline_mode<synchronous>, transform_indices = @transform_1, window_bounds = array<i64: 32, 2>}, {pipeline_mode = #tpu.pipeline_mode<synchronous>, transform_indices = @transform_2, window_bounds = array<i64: 1, 2>}, {transform_indices = @transform_3, window_bounds = array<i64: 128, 2>}]} {
    %c0 = arith.constant 0 : index
    %c0_0 = arith.constant 0 : index
    %0 = vector.load %arg1[%c0, %c0_0] : memref<128x32xbf16, #tpu.memory_space<vmem>>, vector<128x32xbf16>
    %c0_1 = arith.constant 0 : index
    %c0_2 = arith.constant 0 : index
    %1 = vector.load %arg2[%c0_1, %c0_2] : memref<32x2xbf16, #tpu.memory_space<vmem>>, vector<32x2xbf16>
    %cst = arith.constant dense<0.000000e+00> : vector<128x2xf32>
    %2 = tpu.matmul %0, %1, %cst {dimension_numbers = #tpu.dot_dimension_numbers<[1], [0], [0], [1], [0, 0, 1, 1], [], []>} : vector<128x32xbf16>, vector<32x2xbf16>, vector<128x2xf32> -> vector<128x2xf32>
    %c0_3 = arith.constant 0 : index
    %c0_4 = arith.constant 0 : index
    %3 = vector.load %arg3[%c0_3, %c0_4] : memref<1x2xf32, #tpu.memory_space<vmem>>, vector<1x2xf32>
    %4 = vector.broadcast %3 : vector<1x2xf32> to vector<128x2xf32>
    %5 = arith.addf %2, %4 : vector<128x2xf32>
    %c0_5 = arith.constant 0 : index
    %c0_6 = arith.constant 0 : index
    %6 = vector.load %arg4[%c0_5, %c0_6] : memref<128x2xf32, #tpu.memory_space<vmem>>, vector<128x2xf32>
    tpu.vector_store %arg4[%c0_5, %c0_6], %5 {strides = array<i32>} : memref<128x2xf32, #tpu.memory_space<vmem>>, vector<128x2xf32>,
    return
  }
  func.func @transform_0(%arg0: i32) -> (i32, i32) {
    %c0_i32 = arith.constant 0 : i32
    %c0_i32_0 = arith.constant 0 : i32
    return %arg0, %c0_i32 : i32, i32
  }
  func.func @transform_1(%arg0: i32) -> (i32, i32) {
    %c0_i32 = arith.constant 0 : i32
    %c0_i32_0 = arith.constant 0 : i32
    %c0_i32_1 = arith.constant 0 : i32
    return %c0_i32, %c0_i32_0 : i32, i32
  }
  func.func @transform_2(%arg0: i32) -> (i32, i32) {
    %c0_i32 = arith.constant 0 : i32
    %c0_i32_0 = arith.constant 0 : i32
    %c0_i32_1 = arith.constant 0 : i32
    return %c0_i32, %c0_i32_0 : i32, i32
  }
  func.func @transform_3(%arg0: i32) -> (i32, i32) {
    %c0_i32 = arith.constant 0 : i32
    %c0_i32_0 = arith.constant 0 : i32
    return %arg0, %c0_i32 : i32, i32
  }
}

</mosaic_0001>

<llo_original>
// kernel: polla_gcn_forward.14
$region0: #{polla_gcn_forward.14}
  #allocation0 [shape = 'u32[]', space=smem, size = 0x4, offset = 0x4, fixed_abs, tag = 'smem constant byte address 0x4 - core index']
  #allocation1 [shape = 'u32[144,128]{1,0:T(1,128)}', space=vmem, size = 0x12000, scoped, tag = 'internal scratch']
  %s0 = inlined_call_operand.hbm [shape: bf16[16,64], index: 0, kind: input, shape index: {}]
  %s1 = inlined_call_operand.hbm [shape: bf16[64,32], index: 1, kind: input, shape index: {}]
  %s2 = inlined_call_operand.hbm [shape: f32[1,32], index: 2, kind: input, shape index: {}]
  %s3 = inlined_call_operand.hbm [shape: f32[16,32], index: 3, kind: output, shape index: {}]
  %s4 = sld [smem:[#allocation0]]
  $region34: #{polla_gcn_forward.14} parent=0
    _
  %s6 = ssub.s32 1, %s4
  %s7 = scalar_select 0, %s6, %s4
  $region1: #{polla_gcn_forward.14} parent=0
    #allocation2 [shape = 'u8[4096]{0}', space=vmem, size = 0x1000, scoped, tag = 'input window, operand 0, single buffered']
    #allocation3 [shape = 's32[1]{0}', space=sflag, size = 0x4, scoped, tag = 'scoped memory for polla_gcn_forward.14']
    #allocation4 [shape = 's32[1]{0}', space=sflag, size = 0x4, scoped, tag = 'scoped memory for polla_gcn_forward.14']
    #allocation5 [shape = 'u8[16384]{0}', space=vmem, size = 0x4000, scoped, tag = 'input window, operand 1, single buffered']
    #allocation6 [shape = 's32[1]{0}', space=sflag, size = 0x4, scoped, tag = 'scoped memory for polla_gcn_forward.14']
    #allocation7 [shape = 'u8[512]{0}', space=vmem, size = 0x400, scoped, tag = 'input window, operand 2, single buffered']
    #allocation8 [shape = 'u8[8192]{0}', space=vmem, size = 0x2000, scoped, tag = 'output window, operand 0, single buffered']
    %8 = vsyncpa [#allocation3], 0
    %9 = vsyncpa [#allocation6], 0
    %10 = vsyncpa [#allocation4], 0
    // Predicated region
    $region2: #{polla_gcn_forward.14} parent=1 // pred_check
      _
    $region3: #{polla_gcn_forward.14} parent=1 // pred_check_branch
      %12 = sbr.rel (0) target = $region5
    $region4: #{polla_gcn_forward.14} parent=1 // pred_region
      %s14 = ssub.s32 128, 128
      %15 = vsyncadd [#allocation3], %s14
      %s16 = sshll.u32 [#allocation2], 4
      %s17 = int_to_ptr.vmem [resolvable:$true] %s16
      %22 = dma.hbm_to_vmem [thread:$0]  %s0, 128, %s17, [#allocation3], 64, 64, 4
    $region5: #{polla_gcn_forward.14} parent=1 // pred_fallthru
      _
    // Predicated region
    $region6: #{polla_gcn_forward.14} parent=1 // pred_check
      _
    $region7: #{polla_gcn_forward.14} parent=1 // pred_check_branch
      %24 = sbr.rel (0) target = $region9
    $region8: #{polla_gcn_forward.14} parent=1 // pred_region
      %s26 = ssub.s32 512, 512
      %27 = vsyncadd [#allocation6], %s26
      %s28 = sshll.u32 [#allocation5], 4
      %s29 = int_to_ptr.vmem [resolvable:$true] %s28
      %34 = dma.hbm_to_vmem [thread:$0]  %s1, 512, %s29, [#allocation6], 64, 64, 4
    $region9: #{polla_gcn_forward.14} parent=1 // pred_fallthru
      _
    // Predicated region
    $region10: #{polla_gcn_forward.14} parent=1 // pred_check
      _
    $region11: #{polla_gcn_forward.14} parent=1 // pred_check_branch
      %36 = sbr.rel (0) target = $region13
    $region12: #{polla_gcn_forward.14} parent=1 // pred_region
      %s38 = ssub.s32 16, 16
      %39 = vsyncadd [#allocation6], %s38
      %s41 = sshll.u32 [#allocation7], 4
      %s42 = int_to_ptr.vmem [resolvable:$true] %s41
      %44 = dma.hbm_to_vmem [thread:$0]  %s2, 16, %s42, [#allocation6]
    $region13: #{polla_gcn_forward.14} parent=1 // pred_fallthru
      _
    // Predicated region
    $region14: #{polla_gcn_forward.14} parent=1 // pred_check
      _
    $region15: #{polla_gcn_forward.14} parent=1 // pred_check_branch
      %46 = sbr.rel (0) target = $region17
    $region16: #{polla_gcn_forward.14} parent=1 // pred_region
      %47 = dma.done [#allocation3], 128
    $region17: #{polla_gcn_forward.14} parent=1 // pred_fallthru
      _
    // Predicated region
    $region18: #{polla_gcn_forward.14} parent=1 // pred_check
      _
    $region19: #{polla_gcn_forward.14} parent=1 // pred_check_branch
      %49 = sbr.rel (0) target = $region21
    $region20: #{polla_gcn_forward.14} parent=1 // pred_region
      %50 = dma.done [#allocation6], 512
    $region21: #{polla_gcn_forward.14} parent=1 // pred_fallthru
      _
    // Predicated region
    $region22: #{polla_gcn_forward.14} parent=1 // pred_check
      _
    $region23: #{polla_gcn_forward.14} parent=1 // pred_check_branch
      %52 = sbr.rel (0) target = $region25
    $region24: #{polla_gcn_forward.14} parent=1 // pred_region
      %53 = dma.done [#allocation6], 16
    $region25: #{polla_gcn_forward.14} parent=1 // pred_fallthru
      _
    %v55 = vld [vmem:[#allocation2] sm:$0xf]
    %v56 = vld [vmem:[#allocation2 + $0x4] sm:$0xf]
    %v57 = vld [vmem:[#allocation5] sm:$0xf]
    %v58 = vld [vmem:[#allocation5 + $0x4] sm:$0xf]
    %v59 = vld [vmem:[#allocation5 + $0x8] sm:$0xf]
    %v60 = vld [vmem:[#allocation5 + $0xc] sm:$0xf]
    %v61 = vld [vmem:[#allocation5 + $0x10] sm:$0xf]
    %v62 = vld [vmem:[#allocation5 + $0x14] sm:$0xf]
    %v63 = vld [vmem:[#allocation5 + $0x18] sm:$0xf]
    %v64 = vld [vmem:[#allocation5 + $0x1c] sm:$0xf]
    %v65 = vld [vmem:[#allocation7] sm:$0x1]
    %v67 = vlaneseq
    %v68 = vshrl.u32 %v67, 7
    %v69 = vsub.s32 0, %v68
    %v70 = vrot.slane %v65, %v69
    %v74 = vunpack.c.l.b16 %v55
    %v75 = vunpack.c.l.b16 %v56
    %v76 = vpack.c.b16 %v75, %v74
    %v85 = vunpack.c.l.b16 %v57
    %v86 = vunpack.c.l.b16 %v58
    %v87 = vunpack.c.l.b16 %v59
    %v88 = vunpack.c.l.b16 %v60
    %v89 = vunpack.c.l.b16 %v61
    %v90 = vunpack.c.l.b16 %v62
    %v91 = vunpack.c.l.b16 %v63
    %v92 = vunpack.c.l.b16 %v64
    %v93 = vpack.c.b16 %v86, %v85
    %v94 = vpack.c.b16 %v88, %v87
    %v95 = vpack.c.b16 %v90, %v89
    %v96 = vpack.c.b16 %v92, %v91
    %vm101 = vcmask 523264
    %v103 = vsel %vm101, %v76, 0
    %105 = vmatprep.subr.bf16.mxu0 0
    %106 = vmatpush1.bf16.msra.mxu0 %v93
    %107 = vmatprep.subr.bf16.mxu0 0
    %108 = vmatpush1.bf16.msra.mxu0 %v94
    %109 = vmatprep.subr.bf16.mxu0 0
    %110 = vmatpush1.bf16.msra.mxu0 %v95
    %111 = vmatprep.subr.bf16.mxu0 0
    %112 = vmatpush1.bf16.msra.mxu0 %v96
    %113 = vmatprep.subr.bf16.mxu0 0
    %114 = vmatpush1.bf16.msra.mxu0 0
    %115 = vmatprep.subr.bf16.mxu0 0
    %116 = vmatpush1.bf16.msra.mxu0 0
    %117 = vmatprep.subr.bf16.mxu0 0
    %118 = vmatpush1.bf16.msra.mxu0 0
    %119 = vmatprep.subr.bf16.mxu0 0
    %120 = vmatpush1.bf16.msra.mxu0 0
    %121 = vmatprep.subr.bf16.mxu0 0
    %122 = vmatpush1.bf16.msra.mxu0 0
    %123 = vmatprep.subr.bf16.mxu0 0
    %124 = vmatpush1.bf16.msra.mxu0 0
    %125 = vmatprep.subr.bf16.mxu0 0
    %126 = vmatpush1.bf16.msra.mxu0 0
    %127 = vmatprep.subr.bf16.mxu0 0
    %128 = vmatpush1.bf16.msra.mxu0 0
    %129 = vmatprep.subr.bf16.mxu0 0
    %130 = vmatpush1.bf16.msra.mxu0 0
    %131 = vmatprep.subr.bf16.mxu0 0
    %132 = vmatpush1.bf16.msra.mxu0 0
    %133 = vmatprep.subr.bf16.mxu0 0
    %134 = vmatpush1.bf16.msra.mxu0 0
    %135 = vmatprep.subr.bf16.mxu0 0
    %136 = vmatpush1.bf16.msra.mxu0 0
    %137 = vmatprep.mubr.bf16.mxu0 0
    %138 = vmatmul.mubr.bf16.gmra.mrb[0].mxu0 %v103
    %v139 = vpop.f32.mrb[0].mxu0
    %v140 = vadd.f32 %v70, %v139
    %v141 = vpop.f32.mrb[0].mxu0
    %v142 = vpop.f32.mrb[0].mxu0
    %v143 = vadd.f32 %v70, %v142
    %v144 = vpop.f32.mrb[0].mxu0
    %145 = vdwg.mxu0
    %vm146 = vcmask 261120
    %147 = vst.msk [vmem:[#allocation8] sm:$0xff] %vm146, %v140
    %148 = vst.msk [vmem:[#allocation8 + $0x8] sm:$0xff] %vm146, %v143
    // Predicated region
    $region26: #{polla_gcn_forward.14} parent=1 // pred_check
      _
    $region27: #{polla_gcn_forward.14} parent=1 // pred_check_branch
      %150 = sbr.rel (0) target = $region29
    $region28: #{polla_gcn_forward.14} parent=1 // pred_region
      %s152 = ssub.s32 256, 256
      %153 = vsyncadd [#allocation4], %s152
      %s154 = sshll.u32 [#allocation8], 4
      %s155 = int_to_ptr.vmem [resolvable:$true] %s154
      %160 = dma.vmem_to_hbm [thread:$0]  %s155, 256, %s3, [#allocation4], 128, 128, 8
    $region29: #{polla_gcn_forward.14} parent=1 // pred_fallthru
      _
    // Predicated region
    $region30: #{polla_gcn_forward.14} parent=1 // pred_check
      _
    $region31: #{polla_gcn_forward.14} parent=1 // pred_check_branch
      %162 = sbr.rel (0) target = $region33
    $region32: #{polla_gcn_forward.14} parent=1 // pred_region
      %163 = dma.done [#allocation4], 256
    $region33: #{polla_gcn_forward.14} parent=1 // pred_fallthru
      _
    %164 = vsyncpa [#allocation3], 1
    %165 = vsyncpa [#allocation6], 1
    %166 = vsyncpa [#allocation4], 1

// kernel: polla_gcn_forward.13
$region0: #{polla_gcn_forward.13}
  #allocation0 [shape = 'u32[]', space=smem, size = 0x4, offset = 0x4, fixed_abs, tag = 'smem constant byte address 0x4 - core index']
  #allocation1 [shape = 'u32[144,128]{1,0:T(1,128)}', space=vmem, size = 0x12000, scoped, tag = 'internal scratch']
  %s0 = inlined_call_operand.hbm [shape: bf16[16,5], index: 0, kind: input, shape index: {}]
  %s1 = inlined_call_operand.hbm [shape: bf16[5,32], index: 1, kind: input, shape index: {}]
  %s2 = inlined_call_operand.hbm [shape: f32[1,32], index: 2, kind: input, shape index: {}]
  %s3 = inlined_call_operand.hbm [shape: f32[16,32], index: 3, kind: output, shape index: {}]
  %s4 = sld [smem:[#allocation0]]
  $region34: #{polla_gcn_forward.13} parent=0
    _
  %s6 = ssub.s32 1, %s4
  %s7 = scalar_select 0, %s6, %s4
  $region1: #{polla_gcn_forward.13} parent=0
    #allocation2 [shape = 'u8[4096]{0}', space=vmem, size = 0x1000, scoped, tag = 'input window, operand 0, single buffered']
    #allocation3 [shape = 's32[1]{0}', space=sflag, size = 0x4, scoped, tag = 'scoped memory for polla_gcn_forward.13']
    #allocation4 [shape = 's32[1]{0}', space=sflag, size = 0x4, scoped, tag = 'scoped memory for polla_gcn_forward.13']
    #allocation5 [shape = 'u8[2048]{0}', space=vmem, size = 0x800, scoped, tag = 'input window, operand 1, single buffered']
    #allocation6 [shape = 's32[1]{0}', space=sflag, size = 0x4, scoped, tag = 'scoped memory for polla_gcn_forward.13']
    #allocation7 [shape = 'u8[512]{0}', space=vmem, size = 0x400, scoped, tag = 'input window, operand 2, single buffered']
    #allocation8 [shape = 'u8[8192]{0}', space=vmem, size = 0x2000, scoped, tag = 'output window, operand 0, single buffered']
    %8 = vsyncpa [#allocation3], 0
    %9 = vsyncpa [#allocation6], 0
    %10 = vsyncpa [#allocation4], 0
    // Predicated region
    $region2: #{polla_gcn_forward.13} parent=1 // pred_check
      _
    $region3: #{polla_gcn_forward.13} parent=1 // pred_check_branch
      %12 = sbr.rel (0) target = $region5
    $region4: #{polla_gcn_forward.13} parent=1 // pred_region
      %s14 = ssub.s32 128, 128
      %15 = vsyncadd [#allocation3], %s14
      %s16 = sshll.u32 [#allocation2], 4
      %s17 = int_to_ptr.vmem [resolvable:$true] %s16
      %22 = dma.hbm_to_vmem [thread:$0]  %s0, 128, %s17, [#allocation3], 64, 64, 4
    $region5: #{polla_gcn_forward.13} parent=1 // pred_fallthru
      _
    // Predicated region
    $region6: #{polla_gcn_forward.13} parent=1 // pred_check
      _
    $region7: #{polla_gcn_forward.13} parent=1 // pred_check_branch
      %24 = sbr.rel (0) target = $region9
    $region8: #{polla_gcn_forward.13} parent=1 // pred_region
      %s26 = ssub.s32 64, 64
      %27 = vsyncadd [#allocation6], %s26
      %s29 = sshll.u32 [#allocation5], 4
      %s30 = int_to_ptr.vmem [resolvable:$true] %s29
      %32 = dma.hbm_to_vmem [thread:$0]  %s1, 64, %s30, [#allocation6]
    $region9: #{polla_gcn_forward.13} parent=1 // pred_fallthru
      _
    // Predicated region
    $region10: #{polla_gcn_forward.13} parent=1 // pred_check
      _
    $region11: #{polla_gcn_forward.13} parent=1 // pred_check_branch
      %34 = sbr.rel (0) target = $region13
    $region12: #{polla_gcn_forward.13} parent=1 // pred_region
      %s36 = ssub.s32 16, 16
      %37 = vsyncadd [#allocation6], %s36
      %s39 = sshll.u32 [#allocation7], 4
      %s40 = int_to_ptr.vmem [resolvable:$true] %s39
      %42 = dma.hbm_to_vmem [thread:$0]  %s2, 16, %s40, [#allocation6]
    $region13: #{polla_gcn_forward.13} parent=1 // pred_fallthru
      _
    // Predicated region
    $region14: #{polla_gcn_forward.13} parent=1 // pred_check
      _
    $region15: #{polla_gcn_forward.13} parent=1 // pred_check_branch
      %44 = sbr.rel (0) target = $region17
    $region16: #{polla_gcn_forward.13} parent=1 // pred_region
      %45 = dma.done [#allocation3], 128
    $region17: #{polla_gcn_forward.13} parent=1 // pred_fallthru
      _
    // Predicated region
    $region18: #{polla_gcn_forward.13} parent=1 // pred_check
      _
    $region19: #{polla_gcn_forward.13} parent=1 // pred_check_branch
      %47 = sbr.rel (0) target = $region21
    $region20: #{polla_gcn_forward.13} parent=1 // pred_region
      %48 = dma.done [#allocation6], 64
    $region21: #{polla_gcn_forward.13} parent=1 // pred_fallthru
      _
    // Predicated region
    $region22: #{polla_gcn_forward.13} parent=1 // pred_check
      _
    $region23: #{polla_gcn_forward.13} parent=1 // pred_check_branch
      %50 = sbr.rel (0) target = $region25
    $region24: #{polla_gcn_forward.13} parent=1 // pred_region
      %51 = dma.done [#allocation6], 16
    $region25: #{polla_gcn_forward.13} parent=1 // pred_fallthru
      _
    %v53 = vld [vmem:[#allocation2] sm:$0xf]
    %v54 = vld [vmem:[#allocation2 + $0x4] sm:$0xf]
    %v55 = vld [vmem:[#allocation5] sm:$0x7]
    %v56 = vld [vmem:[#allocation7] sm:$0x1]
    %v58 = vlaneseq
    %v59 = vshrl.u32 %v58, 7
    %v60 = vsub.s32 0, %v59
    %v61 = vrot.slane %v56, %v60
    %v65 = vunpack.c.l.b16 %v53
    %v66 = vunpack.c.l.b16 %v54
    %v67 = vpack.c.b16 %v66, %v65
    %vm68 = vcmask 39936
    %v70 = vsel %vm68, %v67, 0
    %vm72 = vcmask 1041408
    %vm73 = vcmask 1042432
    %v74 = vsel %vm72, 4294967295, 65535
    %v75 = vsel %vm73, %v74, 0
    %v77 = vand.u32 %v55, %v75
    %79 = vmatprep.subr.bf16.mxu0 0
    %80 = vmatpush1.bf16.msra.mxu0 %v77
    %81 = vmatprep.subr.bf16.mxu0 0
    %82 = vmatpush1.bf16.msra.mxu0 0
    %83 = vmatprep.subr.bf16.mxu0 0
    %84 = vmatpush1.bf16.msra.mxu0 0
    %85 = vmatprep.subr.bf16.mxu0 0
    %86 = vmatpush1.bf16.msra.mxu0 0
    %87 = vmatprep.subr.bf16.mxu0 0
    %88 = vmatpush1.bf16.msra.mxu0 0
    %89 = vmatprep.subr.bf16.mxu0 0
    %90 = vmatpush1.bf16.msra.mxu0 0
    %91 = vmatprep.subr.bf16.mxu0 0
    %92 = vmatpush1.bf16.msra.mxu0 0
    %93 = vmatprep.subr.bf16.mxu0 0
    %94 = vmatpush1.bf16.msra.mxu0 0
    %95 = vmatprep.subr.bf16.mxu0 0
    %96 = vmatpush1.bf16.msra.mxu0 0
    %97 = vmatprep.subr.bf16.mxu0 0
    %98 = vmatpush1.bf16.msra.mxu0 0
    %99 = vmatprep.subr.bf16.mxu0 0
    %100 = vmatpush1.bf16.msra.mxu0 0
    %101 = vmatprep.subr.bf16.mxu0 0
    %102 = vmatpush1.bf16.msra.mxu0 0
    %103 = vmatprep.subr.bf16.mxu0 0
    %104 = vmatpush1.bf16.msra.mxu0 0
    %105 = vmatprep.subr.bf16.mxu0 0
    %106 = vmatpush1.bf16.msra.mxu0 0
    %107 = vmatprep.subr.bf16.mxu0 0
    %108 = vmatpush1.bf16.msra.mxu0 0
    %109 = vmatprep.subr.bf16.mxu0 0
    %110 = vmatpush1.bf16.msra.mxu0 0
    %111 = vmatprep.mubr.bf16.mxu0 0
    %112 = vmatmul.mubr.bf16.gmra.mrb[0].mxu0 %v70
    %v113 = vpop.f32.mrb[0].mxu0
    %v114 = vadd.f32 %v61, %v113
    %v115 = vpop.f32.mrb[0].mxu0
    %v116 = vpop.f32.mrb[0].mxu0
    %v117 = vadd.f32 %v61, %v116
    %v118 = vpop.f32.mrb[0].mxu0
    %119 = vdwg.mxu0
    %vm120 = vcmask 261120
    %121 = vst.msk [vmem:[#allocation8] sm:$0xff] %vm120, %v114
    %122 = vst.msk [vmem:[#allocation8 + $0x8] sm:$0xff] %vm120, %v117
    // Predicated region
    $region26: #{polla_gcn_forward.13} parent=1 // pred_check
      _
    $region27: #{polla_gcn_forward.13} parent=1 // pred_check_branch
      %124 = sbr.rel (0) target = $region29
    $region28: #{polla_gcn_forward.13} parent=1 // pred_region
      %s126 = ssub.s32 256, 256
      %127 = vsyncadd [#allocation4], %s126
      %s128 = sshll.u32 [#allocation8], 4
      %s129 = int_to_ptr.vmem [resolvable:$true] %s128
      %134 = dma.vmem_to_hbm [thread:$0]  %s129, 256, %s3, [#allocation4], 128, 128, 8
    $region29: #{polla_gcn_forward.13} parent=1 // pred_fallthru
      _
    // Predicated region
    $region30: #{polla_gcn_forward.13} parent=1 // pred_check
      _
    $region31: #{polla_gcn_forward.13} parent=1 // pred_check_branch
      %136 = sbr.rel (0) target = $region33
    $region32: #{polla_gcn_forward.13} parent=1 // pred_region
      %137 = dma.done [#allocation4], 256
    $region33: #{polla_gcn_forward.13} parent=1 // pred_fallthru
      _
    %138 = vsyncpa [#allocation3], 1
    %139 = vsyncpa [#allocation6], 1
    %140 = vsyncpa [#allocation4], 1

// kernel: polla_gcn_forward.12
$region0: #{polla_gcn_forward.12}
  #allocation0 [shape = 'u32[]', space=smem, size = 0x4, offset = 0x4, fixed_abs, tag = 'smem constant byte address 0x4 - core index']
  #allocation1 [shape = 'u32[144,128]{1,0:T(1,128)}', space=vmem, size = 0x12000, scoped, tag = 'internal scratch']
  %s0 = inlined_call_operand.hbm [shape: bf16[256,4], index: 0, kind: input, shape index: {}]
  %s1 = inlined_call_operand.hbm [shape: bf16[4,32], index: 1, kind: input, shape index: {}]
  %s2 = inlined_call_operand.hbm [shape: f32[1,32], index: 2, kind: input, shape index: {}]
  %s3 = inlined_call_operand.hbm [shape: f32[256,32], index: 3, kind: output, shape index: {}]
  %s4 = sld [smem:[#allocation0]]
  $region34: #{polla_gcn_forward.12} parent=0
    _
  %s6 = ssub.s32 1, %s4
  %s7 = scalar_select 0, %s6, %s4
  $region1: #{polla_gcn_forward.12} parent=0
    #allocation2 [shape = 'u8[65536]{0}', space=vmem, size = 0x10000, scoped, tag = 'input window, operand 0, single buffered']
    #allocation3 [shape = 's32[1]{0}', space=sflag, size = 0x4, scoped, tag = 'scoped memory for polla_gcn_forward.12']
    #allocation4 [shape = 's32[1]{0}', space=sflag, size = 0x4, scoped, tag = 'scoped memory for polla_gcn_forward.12']
    #allocation5 [shape = 'u8[1024]{0}', space=vmem, size = 0x400, scoped, tag = 'input window, operand 1, single buffered']
    #allocation6 [shape = 's32[1]{0}', space=sflag, size = 0x4, scoped, tag = 'scoped memory for polla_gcn_forward.12']
    #allocation7 [shape = 'u8[512]{0}', space=vmem, size = 0x400, scoped, tag = 'input window, operand 2, single buffered']
    #allocation8 [shape = 'u8[131072]{0}', space=vmem, size = 0x20000, scoped, tag = 'output window, operand 0, single buffered']
    %8 = vsyncpa [#allocation3], 0
    %9 = vsyncpa [#allocation6], 0
    %10 = vsyncpa [#allocation4], 0
    // Predicated region
    $region2: #{polla_gcn_forward.12} parent=1 // pred_check
      _
    $region3: #{polla_gcn_forward.12} parent=1 // pred_check_branch
      %12 = sbr.rel (0) target = $region5
    $region4: #{polla_gcn_forward.12} parent=1 // pred_region
      %s14 = ssub.s32 2048, 2048
      %15 = vsyncadd [#allocation3], %s14
      %s16 = sshll.u32 [#allocation2], 4
      %s17 = int_to_ptr.vmem [resolvable:$true] %s16
      %22 = dma.hbm_to_vmem [thread:$0]  %s0, 2048, %s17, [#allocation3], 64, 64, 4
    $region5: #{polla_gcn_forward.12} parent=1 // pred_fallthru
      _
    // Predicated region
    $region6: #{polla_gcn_forward.12} parent=1 // pred_check
      _
    $region7: #{polla_gcn_forward.12} parent=1 // pred_check_branch
      %24 = sbr.rel (0) target = $region9
    $region8: #{polla_gcn_forward.12} parent=1 // pred_region
      %s26 = ssub.s32 32, 32
      %27 = vsyncadd [#allocation6], %s26
      %s29 = sshll.u32 [#allocation5], 4
      %s30 = int_to_ptr.vmem [resolvable:$true] %s29
      %32 = dma.hbm_to_vmem [thread:$0]  %s1, 32, %s30, [#allocation6]
    $region9: #{polla_gcn_forward.12} parent=1 // pred_fallthru
      _
    // Predicated region
    $region10: #{polla_gcn_forward.12} parent=1 // pred_check
      _
    $region11: #{polla_gcn_forward.12} parent=1 // pred_check_branch
      %34 = sbr.rel (0) target = $region13
    $region12: #{polla_gcn_forward.12} parent=1 // pred_region
      %s36 = ssub.s32 16, 16
      %37 = vsyncadd [#allocation6], %s36
      %s39 = sshll.u32 [#allocation7], 4
      %s40 = int_to_ptr.vmem [resolvable:$true] %s39
      %42 = dma.hbm_to_vmem [thread:$0]  %s2, 16, %s40, [#allocation6]
    $region13: #{polla_gcn_forward.12} parent=1 // pred_fallthru
      _
    // Predicated region
    $region14: #{polla_gcn_forward.12} parent=1 // pred_check
      _
    $region15: #{polla_gcn_forward.12} parent=1 // pred_check_branch
      %44 = sbr.rel (0) target = $region17
    $region16: #{polla_gcn_forward.12} parent=1 // pred_region
      %45 = dma.done [#allocation3], 2048
    $region17: #{polla_gcn_forward.12} parent=1 // pred_fallthru
      _
    // Predicated region
    $region18: #{polla_gcn_forward.12} parent=1 // pred_check
      _
    $region19: #{polla_gcn_forward.12} parent=1 // pred_check_branch
      %47 = sbr.rel (0) target = $region21
    $region20: #{polla_gcn_forward.12} parent=1 // pred_region
      %48 = dma.done [#allocation6], 32
    $region21: #{polla_gcn_forward.12} parent=1 // pred_fallthru
      _
    // Predicated region
    $region22: #{polla_gcn_forward.12} parent=1 // pred_check
      _
    $region23: #{polla_gcn_forward.12} parent=1 // pred_check_branch
      %50 = sbr.rel (0) target = $region25
    $region24: #{polla_gcn_forward.12} parent=1 // pred_region
      %51 = dma.done [#allocation6], 16
    $region25: #{polla_gcn_forward.12} parent=1 // pred_fallthru
      _
    %v53 = vld [vmem:[#allocation2] sm:$0xf]
    %v54 = vld [vmem:[#allocation2 + $0x4] sm:$0xf]
    %v55 = vld [vmem:[#allocation2 + $0x8] sm:$0xf]
    %v56 = vld [vmem:[#allocation2 + $0xc] sm:$0xf]
    %v57 = vld [vmem:[#allocation2 + $0x10] sm:$0xf]
    %v58 = vld [vmem:[#allocation2 + $0x14] sm:$0xf]
    %v59 = vld [vmem:[#allocation2 + $0x18] sm:$0xf]
    %v60 = vld [vmem:[#allocation2 + $0x1c] sm:$0xf]
    %v61 = vld [vmem:[#allocation2 + $0x20] sm:$0xf]
    %v62 = vld [vmem:[#allocation2 + $0x24] sm:$0xf]
    %v63 = vld [vmem:[#allocation2 + $0x28] sm:$0xf]
    %v64 = vld [vmem:[#allocation2 + $0x2c] sm:$0xf]
    %v65 = vld [vmem:[#allocation2 + $0x30] sm:$0xf]
    %v66 = vld [vmem:[#allocation2 + $0x34] sm:$0xf]
    %v67 = vld [vmem:[#allocation2 + $0x38] sm:$0xf]
    %v68 = vld [vmem:[#allocation2 + $0x3c] sm:$0xf]
    %v69 = vld [vmem:[#allocation2 + $0x40] sm:$0xf]
    %v70 = vld [vmem:[#allocation2 + $0x44] sm:$0xf]
    %v71 = vld [vmem:[#allocation2 + $0x48] sm:$0xf]
    %v72 = vld [vmem:[#allocation2 + $0x4c] sm:$0xf]
    %v73 = vld [vmem:[#allocation2 + $0x50] sm:$0xf]
    %v74 = vld [vmem:[#allocation2 + $0x54] sm:$0xf]
    %v75 = vld [vmem:[#allocation2 + $0x58] sm:$0xf]
    %v76 = vld [vmem:[#allocation2 + $0x5c] sm:$0xf]
    %v77 = vld [vmem:[#allocation2 + $0x60] sm:$0xf]
    %v78 = vld [vmem:[#allocation2 + $0x64] sm:$0xf]
    %v79 = vld [vmem:[#allocation2 + $0x68] sm:$0xf]
    %v80 = vld [vmem:[#allocation2 + $0x6c] sm:$0xf]
    %v81 = vld [vmem:[#allocation2 + $0x70] sm:$0xf]
    %v82 = vld [vmem:[#allocation2 + $0x74] sm:$0xf]
    %v83 = vld [vmem:[#allocation2 + $0x78] sm:$0xf]
    %v84 = vld [vmem:[#allocation2 + $0x7c] sm:$0xf]
    %v85 = vld [vmem:[#allocation5] sm:$0x3]
    %v86 = vld [vmem:[#allocation7] sm:$0x1]
    %v88 = vlaneseq
    %v89 = vshrl.u32 %v88, 7
    %v90 = vsub.s32 0, %v89
    %v91 = vrot.slane %v86, %v90
    %v125 = vunpack.c.l.b16 %v53
    %v126 = vunpack.c.l.b16 %v54
    %v127 = vunpack.c.l.b16 %v55
    %v128 = vunpack.c.l.b16 %v56
    %v129 = vunpack.c.l.b16 %v57
    %v130 = vunpack.c.l.b16 %v58
    %v131 = vunpack.c.l.b16 %v59
    %v132 = vunpack.c.l.b16 %v60
    %v133 = vunpack.c.l.b16 %v61
    %v134 = vunpack.c.l.b16 %v62
    %v135 = vunpack.c.l.b16 %v63
    %v136 = vunpack.c.l.b16 %v64
    %v137 = vunpack.c.l.b16 %v65
    %v138 = vunpack.c.l.b16 %v66
    %v139 = vunpack.c.l.b16 %v67
    %v140 = vunpack.c.l.b16 %v68
    %v141 = vunpack.c.l.b16 %v69
    %v142 = vunpack.c.l.b16 %v70
    %v143 = vunpack.c.l.b16 %v71
    %v144 = vunpack.c.l.b16 %v72
    %v145 = vunpack.c.l.b16 %v73
    %v146 = vunpack.c.l.b16 %v74
    %v147 = vunpack.c.l.b16 %v75
    %v148 = vunpack.c.l.b16 %v76
    %v149 = vunpack.c.l.b16 %v77
    %v150 = vunpack.c.l.b16 %v78
    %v151 = vunpack.c.l.b16 %v79
    %v152 = vunpack.c.l.b16 %v80
    %v153 = vunpack.c.l.b16 %v81
    %v154 = vunpack.c.l.b16 %v82
    %v155 = vunpack.c.l.b16 %v83
    %v156 = vunpack.c.l.b16 %v84
    %v157 = vpack.c.b16 %v126, %v125
    %v158 = vpack.c.b16 %v128, %v127
    %v159 = vpack.c.b16 %v130, %v129
    %v160 = vpack.c.b16 %v132, %v131
    %v161 = vpack.c.b16 %v134, %v133
    %v162 = vpack.c.b16 %v136, %v135
    %v163 = vpack.c.b16 %v138, %v137
    %v164 = vpack.c.b16 %v140, %v139
    %v165 = vpack.c.b16 %v142, %v141
    %v166 = vpack.c.b16 %v144, %v143
    %v167 = vpack.c.b16 %v146, %v145
    %v168 = vpack.c.b16 %v148, %v147
    %v169 = vpack.c.b16 %v150, %v149
    %v170 = vpack.c.b16 %v152, %v151
    %v171 = vpack.c.b16 %v154, %v153
    %v172 = vpack.c.b16 %v156, %v155
    %vm173 = vcmask 31744
    %v175 = vsel %vm173, %v157, 0
    %v178 = vsel %vm173, %v158, 0
    %v181 = vsel %vm173, %v159, 0
    %v184 = vsel %vm173, %v160, 0
    %v187 = vsel %vm173, %v161, 0
    %v190 = vsel %vm173, %v162, 0
    %v193 = vsel %vm173, %v163, 0
    %v196 = vsel %vm173, %v164, 0
    %v199 = vsel %vm173, %v165, 0
    %v202 = vsel %vm173, %v166, 0
    %v205 = vsel %vm173, %v167, 0
    %v208 = vsel %vm173, %v168, 0
    %v211 = vsel %vm173, %v169, 0
    %v214 = vsel %vm173, %v170, 0
    %v217 = vsel %vm173, %v171, 0
    %v220 = vsel %vm173, %v172, 0
    %vm222 = vcmask 1041408
    %v224 = vsel %vm222, %v85, 0
    %226 = vmatprep.subr.bf16.mxu0 0
    %227 = vmatpush1.bf16.msra.mxu0 %v224
    %228 = vmatprep.subr.bf16.mxu0 0
    %229 = vmatpush1.bf16.msra.mxu0 0
    %230 = vmatprep.subr.bf16.mxu0 0
    %231 = vmatpush1.bf16.msra.mxu0 0
    %232 = vmatprep.subr.bf16.mxu0 0
    %233 = vmatpush1.bf16.msra.mxu0 0
    %234 = vmatprep.subr.bf16.mxu0 0
    %235 = vmatpush1.bf16.msra.mxu0 0
    %236 = vmatprep.subr.bf16.mxu0 0
    %237 = vmatpush1.bf16.msra.mxu0 0
    %238 = vmatprep.subr.bf16.mxu0 0
    %239 = vmatpush1.bf16.msra.mxu0 0
    %240 = vmatprep.subr.bf16.mxu0 0
    %241 = vmatpush1.bf16.msra.mxu0 0
    %242 = vmatprep.subr.bf16.mxu0 0
    %243 = vmatpush1.bf16.msra.mxu0 0
    %244 = vmatprep.subr.bf16.mxu0 0
    %245 = vmatpush1.bf16.msra.mxu0 0
    %246 = vmatprep.subr.bf16.mxu0 0
    %247 = vmatpush1.bf16.msra.mxu0 0
    %248 = vmatprep.subr.bf16.mxu0 0
    %249 = vmatpush1.bf16.msra.mxu0 0
    %250 = vmatprep.subr.bf16.mxu0 0
    %251 = vmatpush1.bf16.msra.mxu0 0
    %252 = vmatprep.subr.bf16.mxu0 0
    %253 = vmatpush1.bf16.msra.mxu0 0
    %254 = vmatprep.subr.bf16.mxu0 0
    %255 = vmatpush1.bf16.msra.mxu0 0
    %256 = vmatprep.subr.bf16.mxu0 0
    %257 = vmatpush1.bf16.msra.mxu0 0
    %258 = vmatprep.mubr.bf16.mxu0 0
    %259 = vmatmul.mubr.bf16.gmra.mrb[0].mxu0 %v175
    %v260 = vpop.f32.mrb[0].mxu0
    %v261 = vadd.f32 %v91, %v260
    %v262 = vpop.f32.mrb[0].mxu0
    %v263 = vpop.f32.mrb[0].mxu0
    %v264 = vadd.f32 %v91, %v263
    %v265 = vpop.f32.mrb[0].mxu0
    %266 = vmatprep.mubr.bf16.mxu0 0
    %267 = vmatmul.mubr.bf16.gmra.mrb[0].mxu0 %v178
    %v268 = vpop.f32.mrb[0].mxu0
    %v269 = vadd.f32 %v91, %v268
    %v270 = vpop.f32.mrb[0].mxu0
    %v271 = vpop.f32.mrb[0].mxu0
    %v272 = vadd.f32 %v91, %v271
    %v273 = vpop.f32.mrb[0].mxu0
    %274 = vmatprep.mubr.bf16.mxu0 0
    %275 = vmatmul.mubr.bf16.gmra.mrb[0].mxu0 %v181
    %v276 = vpop.f32.mrb[0].mxu0
    %v277 = vadd.f32 %v91, %v276
    %v278 = vpop.f32.mrb[0].mxu0
    %v279 = vpop.f32.mrb[0].mxu0
    %v280 = vadd.f32 %v91, %v279
    %v281 = vpop.f32.mrb[0].mxu0
    %282 = vmatprep.mubr.bf16.mxu0 0
    %283 = vmatmul.mubr.bf16.gmra.mrb[0].mxu0 %v184
    %v284 = vpop.f32.mrb[0].mxu0
    %v285 = vadd.f32 %v91, %v284
    %v286 = vpop.f32.mrb[0].mxu0
    %v287 = vpop.f32.mrb[0].mxu0
    %v288 = vadd.f32 %v91, %v287
    %v289 = vpop.f32.mrb[0].mxu0
    %290 = vmatprep.mubr.bf16.mxu0 0
    %291 = vmatmul.mubr.bf16.gmra.mrb[0].mxu0 %v187
    %v292 = vpop.f32.mrb[0].mxu0
    %v293 = vadd.f32 %v91, %v292
    %v294 = vpop.f32.mrb[0].mxu0
    %v295 = vpop.f32.mrb[0].mxu0
    %v296 = vadd.f32 %v91, %v295
    %v297 = vpop.f32.mrb[0].mxu0
    %298 = vmatprep.mubr.bf16.mxu0 0
    %299 = vmatmul.mubr.bf16.gmra.mrb[0].mxu0 %v190
    %v300 = vpop.f32.mrb[0].mxu0
    %v301 = vadd.f32 %v91, %v300
    %v302 = vpop.f32.mrb[0].mxu0
    %v303 = vpop.f32.mrb[0].mxu0
    %v304 = vadd.f32 %v91, %v303
    %v305 = vpop.f32.mrb[0].mxu0
    %306 = vmatprep.mubr.bf16.mxu0 0
    %307 = vmatmul.mubr.bf16.gmra.mrb[0].mxu0 %v193
    %v308 = vpop.f32.mrb[0].mxu0
    %v309 = vadd.f32 %v91, %v308
    %v310 = vpop.f32.mrb[0].mxu0
    %v311 = vpop.f32.mrb[0].mxu0
    %v312 = vadd.f32 %v91, %v311
    %v313 = vpop.f32.mrb[0].mxu0
    %314 = vmatprep.mubr.bf16.mxu0 0
    %315 = vmatmul.mubr.bf16.gmra.mrb[0].mxu0 %v196
    %v316 = vpop.f32.mrb[0].mxu0
    %v317 = vadd.f32 %v91, %v316
    %v318 = vpop.f32.mrb[0].mxu0
    %v319 = vpop.f32.mrb[0].mxu0
    %v320 = vadd.f32 %v91, %v319
    %v321 = vpop.f32.mrb[0].mxu0
    %322 = vmatprep.mubr.bf16.mxu0 0
    %323 = vmatmul.mubr.bf16.gmra.mrb[0].mxu0 %v199
    %v324 = vpop.f32.mrb[0].mxu0
    %v325 = vadd.f32 %v91, %v324
    %v326 = vpop.f32.mrb[0].mxu0
    %v327 = vpop.f32.mrb[0].mxu0
    %v328 = vadd.f32 %v91, %v327
    %v329 = vpop.f32.mrb[0].mxu0
    %330 = vmatprep.mubr.bf16.mxu0 0
    %331 = vmatmul.mubr.bf16.gmra.mrb[0].mxu0 %v202
    %v332 = vpop.f32.mrb[0].mxu0
    %v333 = vadd.f32 %v91, %v332
    %v334 = vpop.f32.mrb[0].mxu0
    %v335 = vpop.f32.mrb[0].mxu0
    %v336 = vadd.f32 %v91, %v335
    %v337 = vpop.f32.mrb[0].mxu0
    %338 = vmatprep.mubr.bf16.mxu0 0
    %339 = vmatmul.mubr.bf16.gmra.mrb[0].mxu0 %v205
    %v340 = vpop.f32.mrb[0].mxu0
    %v341 = vadd.f32 %v91, %v340
    %v342 = vpop.f32.mrb[0].mxu0
    %v343 = vpop.f32.mrb[0].mxu0
    %v344 = vadd.f32 %v91, %v343
    %v345 = vpop.f32.mrb[0].mxu0
    %346 = vmatprep.mubr.bf16.mxu0 0
    %347 = vmatmul.mubr.bf16.gmra.mrb[0].mxu0 %v208
    %v348 = vpop.f32.mrb[0].mxu0
    %v349 = vadd.f32 %v91, %v348
    %v350 = vpop.f32.mrb[0].mxu0
    %v351 = vpop.f32.mrb[0].mxu0
    %v352 = vadd.f32 %v91, %v351
    %v353 = vpop.f32.mrb[0].mxu0
    %354 = vmatprep.mubr.bf16.mxu0 0
    %355 = vmatmul.mubr.bf16.gmra.mrb[0].mxu0 %v211
    %v356 = vpop.f32.mrb[0].mxu0
    %v357 = vadd.f32 %v91, %v356
    %v358 = vpop.f32.mrb[0].mxu0
    %v359 = vpop.f32.mrb[0].mxu0
    %v360 = vadd.f32 %v91, %v359
    %v361 = vpop.f32.mrb[0].mxu0
    %362 = vmatprep.mubr.bf16.mxu0 0
    %363 = vmatmul.mubr.bf16.gmra.mrb[0].mxu0 %v214
    %v364 = vpop.f32.mrb[0].mxu0
    %v365 = vadd.f32 %v91, %v364
    %v366 = vpop.f32.mrb[0].mxu0
    %v367 = vpop.f32.mrb[0].mxu0
    %v368 = vadd.f32 %v91, %v367
    %v369 = vpop.f32.mrb[0].mxu0
    %370 = vmatprep.mubr.bf16.mxu0 0
    %371 = vmatmul.mubr.bf16.gmra.mrb[0].mxu0 %v217
    %v372 = vpop.f32.mrb[0].mxu0
    %v373 = vadd.f32 %v91, %v372
    %v374 = vpop.f32.mrb[0].mxu0
    %v375 = vpop.f32.mrb[0].mxu0
    %v376 = vadd.f32 %v91, %v375
    %v377 = vpop.f32.mrb[0].mxu0
    %378 = vmatprep.mubr.bf16.mxu0 0
    %379 = vmatmul.mubr.bf16.gmra.mrb[0].mxu0 %v220
    %v380 = vpop.f32.mrb[0].mxu0
    %v381 = vadd.f32 %v91, %v380
    %v382 = vpop.f32.mrb[0].mxu0
    %v383 = vpop.f32.mrb[0].mxu0
    %v384 = vadd.f32 %v91, %v383
    %v385 = vpop.f32.mrb[0].mxu0
    %386 = vdwg.mxu0
    %vm387 = vcmask 261120
    %388 = vst.msk [vmem:[#allocation8] sm:$0xff] %vm387, %v261
    %389 = vst.msk [vmem:[#allocation8 + $0x8] sm:$0xff] %vm387, %v264
    %390 = vst.msk [vmem:[#allocation8 + $0x10] sm:$0xff] %vm387, %v269
    %391 = vst.msk [vmem:[#allocation8 + $0x18] sm:$0xff] %vm387, %v272
    %392 = vst.msk [vmem:[#allocation8 + $0x20] sm:$0xff] %vm387, %v277
    %393 = vst.msk [vmem:[#allocation8 + $0x28] sm:$0xff] %vm387, %v280
    %394 = vst.msk [vmem:[#allocation8 + $0x30] sm:$0xff] %vm387, %v285
    %395 = vst.msk [vmem:[#allocation8 + $0x38] sm:$0xff] %vm387, %v288
    %396 = vst.msk [vmem:[#allocation8 + $0x40] sm:$0xff] %vm387, %v293
    %397 = vst.msk [vmem:[#allocation8 + $0x48] sm:$0xff] %vm387, %v296
    %398 = vst.msk [vmem:[#allocation8 + $0x50] sm:$0xff] %vm387, %v301
    %399 = vst.msk [vmem:[#allocation8 + $0x58] sm:$0xff] %vm387, %v304
    %400 = vst.msk [vmem:[#allocation8 + $0x60] sm:$0xff] %vm387, %v309
    %401 = vst.msk [vmem:[#allocation8 + $0x68] sm:$0xff] %vm387, %v312
    %402 = vst.msk [vmem:[#allocation8 + $0x70] sm:$0xff] %vm387, %v317
    %403 = vst.msk [vmem:[#allocation8 + $0x78] sm:$0xff] %vm387, %v320
    %404 = vst.msk [vmem:[#allocation8 + $0x80] sm:$0xff] %vm387, %v325
    %405 = vst.msk [vmem:[#allocation8 + $0x88] sm:$0xff] %vm387, %v328
    %406 = vst.msk [vmem:[#allocation8 + $0x90] sm:$0xff] %vm387, %v333
    %407 = vst.msk [vmem:[#allocation8 + $0x98] sm:$0xff] %vm387, %v336
    %408 = vst.msk [vmem:[#allocation8 + $0xa0] sm:$0xff] %vm387, %v341
    %409 = vst.msk [vmem:[#allocation8 + $0xa8] sm:$0xff] %vm387, %v344
    %410 = vst.msk [vmem:[#allocation8 + $0xb0] sm:$0xff] %vm387, %v349
    %411 = vst.msk [vmem:[#allocation8 + $0xb8] sm:$0xff] %vm387, %v352
    %412 = vst.msk [vmem:[#allocation8 + $0xc0] sm:$0xff] %vm387, %v357
    %413 = vst.msk [vmem:[#allocation8 + $0xc8] sm:$0xff] %vm387, %v360
    %414 = vst.msk [vmem:[#allocation8 + $0xd0] sm:$0xff] %vm387, %v365
    %415 = vst.msk [vmem:[#allocation8 + $0xd8] sm:$0xff] %vm387, %v368
    %416 = vst.msk [vmem:[#allocation8 + $0xe0] sm:$0xff] %vm387, %v373
    %417 = vst.msk [vmem:[#allocation8 + $0xe8] sm:$0xff] %vm387, %v376
    %418 = vst.msk [vmem:[#allocation8 + $0xf0] sm:$0xff] %vm387, %v381
    %419 = vst.msk [vmem:[#allocation8 + $0xf8] sm:$0xff] %vm387, %v384
    // Predicated region
    $region26: #{polla_gcn_forward.12} parent=1 // pred_check
      _
    $region27: #{polla_gcn_forward.12} parent=1 // pred_check_branch
      %421 = sbr.rel (0) target = $region29
    $region28: #{polla_gcn_forward.12} parent=1 // pred_region
      %s423 = ssub.s32 4096, 4096
      %424 = vsyncadd [#allocation4], %s423
      %s425 = sshll.u32 [#allocation8], 4
      %s426 = int_to_ptr.vmem [resolvable:$true] %s425
      %431 = dma.vmem_to_hbm [thread:$0]  %s426, 4096, %s3, [#allocation4], 128, 128, 8
    $region29: #{polla_gcn_forward.12} parent=1 // pred_fallthru
      _
    // Predicated region
    $region30: #{polla_gcn_forward.12} parent=1 // pred_check
      _
    $region31: #{polla_gcn_forward.12} parent=1 // pred_check_branch
      %433 = sbr.rel (0) target = $region33
    $region32: #{polla_gcn_forward.12} parent=1 // pred_region
      %434 = dma.done [#allocation4], 4096
    $region33: #{polla_gcn_forward.12} parent=1 // pred_fallthru
      _
    %435 = vsyncpa [#allocation3], 1
    %436 = vsyncpa [#allocation6], 1
    %437 = vsyncpa [#allocation4], 1

// kernel: polla_gcn_forward.16
$region0: #{polla_gcn_forward.16}
  #allocation0 [shape = 'u32[]', space=smem, size = 0x4, offset = 0x4, fixed_abs, tag = 'smem constant byte address 0x4 - core index']
  #allocation1 [shape = 'u32[144,128]{1,0:T(1,128)}', space=vmem, size = 0x12000, scoped, tag = 'internal scratch']
  %s0 = inlined_call_operand.hbm [shape: bf16[16,16,32], index: 0, kind: input, shape index: {}]
  %s1 = inlined_call_operand.hbm [shape: bf16[16,16,32], index: 1, kind: input, shape index: {}]
  %s2 = inlined_call_operand.hbm [shape: bf16[16,16], index: 2, kind: input, shape index: {}]
  %s3 = inlined_call_operand.hbm [shape: f32[1,1,32], index: 3, kind: input, shape index: {}]
  %s4 = inlined_call_operand.hbm [shape: f32[1,1,32], index: 4, kind: input, shape index: {}]
  %s5 = inlined_call_operand.hbm [shape: f32[1,1,32], index: 5, kind: input, shape index: {}]
  %s6 = inlined_call_operand.hbm [shape: bf16[16,16,32], index: 6, kind: output, shape index: {}]
  %s7 = sld [smem:[#allocation0]]
  $region81: #{polla_gcn_forward.16} parent=0
    _
  %s9 = ssub.s32 1, %s7
  %s10 = scalar_select 0, %s9, %s7
  $region1: #{polla_gcn_forward.16} parent=0
    #allocation2 [shape = 'u8[65536]{0}', space=vmem, size = 0x10000, scoped, tag = 'input window, operand 0']
    #allocation3 [shape = 's32[2]{0}', space=sflag, size = 0x8, scoped, tag = 'scoped memory for polla_gcn_forward.16']
    #allocation4 [shape = 's32[2]{0}', space=sflag, size = 0x8, scoped, tag = 'scoped memory for polla_gcn_forward.16']
    #allocation5 [shape = 'u8[65536]{0}', space=vmem, size = 0x10000, scoped, tag = 'input window, operand 1']
    #allocation6 [shape = 's32[2]{0}', space=sflag, size = 0x8, scoped, tag = 'scoped memory for polla_gcn_forward.16']
    #allocation7 [shape = 'u8[4096]{0}', space=vmem, size = 0x1000, scoped, tag = 'input window, operand 2, single buffered']
    #allocation8 [shape = 'u8[512]{0}', space=vmem, size = 0x400, scoped, tag = 'input window, operand 3, single buffered']
    #allocation9 [shape = 's32[1]{0}', space=sflag, size = 0x4, scoped, tag = 'scoped memory for polla_gcn_forward.16']
    #allocation10 [shape = 'u8[512]{0}', space=vmem, size = 0x400, scoped, tag = 'input window, operand 4, single buffered']
    #allocation11 [shape = 'u8[512]{0}', space=vmem, size = 0x400, scoped, tag = 'input window, operand 5, single buffered']
    #allocation12 [shape = 's32[1]{0}', space=sflag, size = 0x4, scoped, tag = 'scoped memory for polla_gcn_forward.16']
    #allocation13 [shape = 'u8[65536]{0}', space=vmem, size = 0x10000, scoped, tag = 'output window, operand 0']
    %11 = vsyncpa [#allocation3], 0
    %s12 = scalar_lea.sflag [#allocation3], 1
    %13 = vsyncpa %s12, 0
    %14 = vsyncpa [#allocation6], 0
    %s15 = scalar_lea.sflag [#allocation6], 1
    %16 = vsyncpa %s15, 0
    %17 = vsyncpa [#allocation9], 0
    %18 = vsyncpa [#allocation12], 0
    %19 = vsyncpa [#allocation4], 0
    %s20 = scalar_lea.sflag [#allocation4], 1
    %21 = vsyncpa %s20, 0
    loop: start=0, step=1, limit=4
    $region2: #{polla_gcn_forward.16} parent=1 // loop_pre_header
      _
    $region3: #{polla_gcn_forward.16} parent=1 // loop_header
      %s23 = sphi 0, %s27
      %p24 = scmp.ge.s32.totalorder %s23, 4
      %s33 = sphi 0, %s35
      %s36 = sphi 0, %s33
      %s37 = sphi 0, %s36
      %s53 = sphi 0, %s37
      %s59 = sphi 0, %s61
      %s62 = sphi 0, %s59
      %s63 = sphi 0, %s62
      %s79 = sphi 0, %s63
      %s83 = sphi 0, %s83
      %s85 = sphi 0, %s83
      %s86 = sphi 0, %s85
      %s100 = sphi 0, %s86
      %s104 = sphi 0, %s104
      %s106 = sphi 0, %s104
      %s107 = sphi 0, %s106
      %s121 = sphi 0, %s107
      %s125 = sphi 0, %s125
      %s127 = sphi 0, %s125
      %s128 = sphi 0, %s127
      %s142 = sphi 0, %s128
      %s146 = sphi 0, %s146
      %s148 = sphi 0, %s146
      %s149 = sphi 0, %s148
      %s163 = sphi 0, %s149
      %s169 = sphi 0, %s171
      %s172 = sphi 0, %s169
      %s173 = sphi 0, %s172
      %s189 = sphi 0, %s173
    $region4: #{polla_gcn_forward.16} parent=1 // loop_header_branch
      %26 = sbr.rel (%p24) target = $region8
    $region5: #{polla_gcn_forward.16} parent=1 // loop_body
      %s28 = ssub.s32 %s23, 1
      %s29 = ssub.s32 %s23, 2
      %s30 = sadd.s32 %s23, 1
      %s31 = ssub.s32 %s23, %s30
      %p32 = scmp.eq.s32.totalorder %s31, 0
      %s34 = sadd.s32 %s33, 1
      %s35 = scalar_select %p32, %s33, %s34
      %p38 = pneg %p32
      %p39 = scmp.eq.s32.totalorder %s23, 1
      %p40 = por %p38, %p39
      %p41 = scmp.ne.s32.totalorder %s33, %s36
      %p42 = scmp.eq.s32.totalorder %s23, 0
      %p43 = por %p41, %p42
      %p44 = scmp.ne.s32.totalorder %s33, %s36
      %p45 = scmp.eq.s32.totalorder %s28, 1
      %p46 = por %p44, %p45
      %p47 = scmp.ne.s32.totalorder %s36, %s37
      %p48 = scmp.eq.s32.totalorder %s28, 0
      %p49 = por %p47, %p48
      %p50 = scmp.ne.s32.totalorder %s36, %s37
      %p51 = scmp.eq.s32.totalorder %s29, 1
      %p52 = por %p50, %p51
      %p54 = scmp.ne.s32.totalorder %s37, %s53
      %p55 = scmp.eq.s32.totalorder %s29, 0
      %p56 = por %p54, %p55
      %s57 = ssub.s32 %s23, %s30
      %p58 = scmp.eq.s32.totalorder %s57, 0
      %s60 = sadd.s32 %s59, 1
      %s61 = scalar_select %p58, %s59, %s60
      %p64 = pneg %p58
      %p65 = scmp.eq.s32.totalorder %s23, 1
      %p66 = por %p64, %p65
      %p67 = scmp.ne.s32.totalorder %s59, %s62
      %p68 = scmp.eq.s32.totalorder %s23, 0
      %p69 = por %p67, %p68
      %p70 = scmp.ne.s32.totalorder %s59, %s62
      %p71 = scmp.eq.s32.totalorder %s28, 1
      %p72 = por %p70, %p71
      %p73 = scmp.ne.s32.totalorder %s62, %s63
      %p74 = scmp.eq.s32.totalorder %s28, 0
      %p75 = por %p73, %p74
      %p76 = scmp.ne.s32.totalorder %s62, %s63
      %p77 = scmp.eq.s32.totalorder %s29, 1
      %p78 = por %p76, %p77
      %p80 = scmp.ne.s32.totalorder %s63, %s79
      %p81 = scmp.eq.s32.totalorder %s29, 0
      %p82 = por %p80, %p81
      %s84 = sadd.s32 %s83, 1
      %p87 = scmp.eq.s32.totalorder %s23, 1
      %p88 = scmp.ne.s32.totalorder %s83, %s85
      %p89 = scmp.eq.s32.totalorder %s23, 0
      %p90 = por %p88, %p89
      %p91 = scmp.ne.s32.totalorder %s83, %s85
      %p92 = scmp.eq.s32.totalorder %s28, 1
      %p93 = por %p91, %p92
      %p94 = scmp.ne.s32.totalorder %s85, %s86
      %p95 = scmp.eq.s32.totalorder %s28, 0
      %p96 = por %p94, %p95
      %p97 = scmp.ne.s32.totalorder %s85, %s86
      %p98 = scmp.eq.s32.totalorder %s29, 1
      %p99 = por %p97, %p98
      %p101 = scmp.ne.s32.totalorder %s86, %s100
      %p102 = scmp.eq.s32.totalorder %s29, 0
      %p103 = por %p101, %p102
      %s105 = sadd.s32 %s104, 1
      %p108 = scmp.eq.s32.totalorder %s23, 1
      %p109 = scmp.ne.s32.totalorder %s104, %s106
      %p110 = scmp.eq.s32.totalorder %s23, 0
      %p111 = por %p109, %p110
      %p112 = scmp.ne.s32.totalorder %s104, %s106
      %p113 = scmp.eq.s32.totalorder %s28, 1
      %p114 = por %p112, %p113
      %p115 = scmp.ne.s32.totalorder %s106, %s107
      %p116 = scmp.eq.s32.totalorder %s28, 0
      %p117 = por %p115, %p116
      %p118 = scmp.ne.s32.totalorder %s106, %s107
      %p119 = scmp.eq.s32.totalorder %s29, 1
      %p120 = por %p118, %p119
      %p122 = scmp.ne.s32.totalorder %s107, %s121
      %p123 = scmp.eq.s32.totalorder %s29, 0
      %p124 = por %p122, %p123
      %s126 = sadd.s32 %s125, 1
      %p129 = scmp.eq.s32.totalorder %s23, 1
      %p130 = scmp.ne.s32.totalorder %s125, %s127
      %p131 = scmp.eq.s32.totalorder %s23, 0
      %p132 = por %p130, %p131
      %p133 = scmp.ne.s32.totalorder %s125, %s127
      %p134 = scmp.eq.s32.totalorder %s28, 1
      %p135 = por %p133, %p134
      %p136 = scmp.ne.s32.totalorder %s127, %s128
      %p137 = scmp.eq.s32.totalorder %s28, 0
      %p138 = por %p136, %p137
      %p139 = scmp.ne.s32.totalorder %s127, %s128
      %p140 = scmp.eq.s32.totalorder %s29, 1
      %p141 = por %p139, %p140
      %p143 = scmp.ne.s32.totalorder %s128, %s142
      %p144 = scmp.eq.s32.totalorder %s29, 0
      %p145 = por %p143, %p144
      %s147 = sadd.s32 %s146, 1
      %p150 = scmp.eq.s32.totalorder %s23, 1
      %p151 = scmp.ne.s32.totalorder %s146, %s148
      %p152 = scmp.eq.s32.totalorder %s23, 0
      %p153 = por %p151, %p152
      %p154 = scmp.ne.s32.totalorder %s146, %s148
      %p155 = scmp.eq.s32.totalorder %s28, 1
      %p156 = por %p154, %p155
      %p157 = scmp.ne.s32.totalorder %s148, %s149
      %p158 = scmp.eq.s32.totalorder %s28, 0
      %p159 = por %p157, %p158
      %p160 = scmp.ne.s32.totalorder %s148, %s149
      %p161 = scmp.eq.s32.totalorder %s29, 1
      %p162 = por %p160, %p161
      %p164 = scmp.ne.s32.totalorder %s149, %s163
      %p165 = scmp.eq.s32.totalorder %s29, 0
      %p166 = por %p164, %p165
      %s167 = ssub.s32 %s23, %s30
      %p168 = scmp.eq.s32.totalorder %s167, 0
      %s170 = sadd.s32 %s169, 1
      %s171 = scalar_select %p168, %s169, %s170
      %p174 = pneg %p168
      %p175 = scmp.eq.s32.totalorder %s23, 1
      %p176 = por %p174, %p175
      %p177 = scmp.ne.s32.totalorder %s169, %s172
      %p178 = scmp.eq.s32.totalorder %s23, 0
      %p179 = por %p177, %p178
      %p180 = scmp.ne.s32.totalorder %s169, %s172
      %p181 = scmp.eq.s32.totalorder %s28, 1
      %p182 = por %p180, %p181
      %p183 = scmp.ne.s32.totalorder %s172, %s173
      %p184 = scmp.eq.s32.totalorder %s28, 0
      %p185 = por %p183, %p184
      %p186 = scmp.ne.s32.totalorder %s172, %s173
      %p187 = scmp.eq.s32.totalorder %s29, 1
      %p188 = por %p186, %p187
      %p190 = scmp.ne.s32.totalorder %s173, %s189
      %p191 = scmp.eq.s32.totalorder %s29, 0
      %p192 = por %p190, %p191
      %p193 = scmp.le.s32.totalorder 1, %s23
      %p194 = scmp.lt.s32.totalorder %s23, 3
      %p195 = pnand %p193, %p194
      %p196 = pneg %p195
      // Predicated region
      $region9: #{polla_gcn_forward.16} parent=5 // pred_check
        _
      $region10: #{polla_gcn_forward.16} parent=5 // pred_check_branch
        %198 = sbr.rel (%p195) target = $region12
      $region11: #{polla_gcn_forward.16} parent=5 // pred_region
        %s199 = ssub.s32 %s23, 1
        // Predicated region
        $region13: #{polla_gcn_forward.16} parent=11 // pred_check
          %p200 = pneg %p96
        $region14: #{polla_gcn_forward.16} parent=11 // pred_check_branch
          %202 = sbr.rel (%p200) target = $region16
        $region15: #{polla_gcn_forward.16} parent=11 // pred_region
          %s204 = ssub.s32 128, 128
          %205 = vsyncadd [#allocation6], %s204
          %s206 = sshll.u32 [#allocation7], 4
          %s207 = int_to_ptr.vmem [resolvable:$true] %s206
          %212 = dma.hbm_to_vmem [thread:$0]  %s2, 128, %s207, [#allocation6], 64, 64, 4
        $region16: #{polla_gcn_forward.16} parent=11 // pred_fallthru
          _
        // Predicated region
        $region17: #{polla_gcn_forward.16} parent=11 // pred_check
          %p213 = pneg %p117
        $region18: #{polla_gcn_forward.16} parent=11 // pred_check_branch
          %215 = sbr.rel (%p213) target = $region20
        $region19: #{polla_gcn_forward.16} parent=11 // pred_region
          %s217 = ssub.s32 16, 16
          %218 = vsyncadd [#allocation9], %s217
          %s220 = sshll.u32 [#allocation8], 4
          %s221 = int_to_ptr.vmem [resolvable:$true] %s220
          %223 = dma.hbm_to_vmem [thread:$0]  %s3, 16, %s221, [#allocation9]
        $region20: #{polla_gcn_forward.16} parent=11 // pred_fallthru
          _
        // Predicated region
        $region21: #{polla_gcn_forward.16} parent=11 // pred_check
          %p224 = pneg %p138
        $region22: #{polla_gcn_forward.16} parent=11 // pred_check_branch
          %226 = sbr.rel (%p224) target = $region24
        $region23: #{polla_gcn_forward.16} parent=11 // pred_region
          %s228 = ssub.s32 16, 16
          %229 = vsyncadd [#allocation9], %s228
          %s231 = sshll.u32 [#allocation10], 4
          %s232 = int_to_ptr.vmem [resolvable:$true] %s231
          %234 = dma.hbm_to_vmem [thread:$0]  %s4, 16, %s232, [#allocation9]
        $region24: #{polla_gcn_forward.16} parent=11 // pred_fallthru
          _
        // Predicated region
        $region25: #{polla_gcn_forward.16} parent=11 // pred_check
          %p235 = pneg %p159
        $region26: #{polla_gcn_forward.16} parent=11 // pred_check_branch
          %237 = sbr.rel (%p235) target = $region28
        $region27: #{polla_gcn_forward.16} parent=11 // pred_region
          %s239 = ssub.s32 16, 16
          %240 = vsyncadd [#allocation12], %s239
          %s242 = sshll.u32 [#allocation11], 4
          %s243 = int_to_ptr.vmem [resolvable:$true] %s242
          %245 = dma.hbm_to_vmem [thread:$0]  %s5, 16, %s243, [#allocation12]
        $region28: #{polla_gcn_forward.16} parent=11 // pred_fallthru
          _
      $region12: #{polla_gcn_forward.16} parent=5 // pred_fallthru
        _
      %p246 = scmp.lt.s32.totalorder %s23, 2
      // Predicated region
      $region29: #{polla_gcn_forward.16} parent=5 // pred_check
        %p247 = pneg %p246
      $region30: #{polla_gcn_forward.16} parent=5 // pred_check_branch
        %249 = sbr.rel (%p247) target = $region32
      $region31: #{polla_gcn_forward.16} parent=5 // pred_region
        // Predicated region
        $region33: #{polla_gcn_forward.16} parent=31 // pred_check
          %p250 = pneg %p43
        $region34: #{polla_gcn_forward.16} parent=31 // pred_check_branch
          %252 = sbr.rel (%p250) target = $region36
        $region35: #{polla_gcn_forward.16} parent=31 // pred_region
          %s253 = sand.u32 %s33, 1
          %s254 = scalar_lea.sflag [#allocation3], %s253
          %s255 = sand.u32 %s33, 1
          %s256 = smul.addr %s255, 64
          %s257 = scalar_lea.vmem [#allocation2], %s256
          %s258 = smul.u32 8, %s23
          %s260 = ssub.s32 1024, 1024
          %261 = vsyncadd %s254, %s260
          %s262 = smul.addr %s258, 2
          %s263 = smul.addr %s262, 64
          %s264 = scalar_lea.hbm %s0, %s263
          %s265 = sshll.u32 %s257, 4
          %s266 = int_to_ptr.vmem [resolvable:$true] %s265
          %271 = dma.hbm_to_vmem [thread:$0]  %s264, 1024, %s266, %s254, 64, 64, 4
        $region36: #{polla_gcn_forward.16} parent=31 // pred_fallthru
          _
        // Predicated region
        $region37: #{polla_gcn_forward.16} parent=31 // pred_check
          %p272 = pneg %p69
        $region38: #{polla_gcn_forward.16} parent=31 // pred_check_branch
          %274 = sbr.rel (%p272) target = $region40
        $region39: #{polla_gcn_forward.16} parent=31 // pred_region
          %s275 = sand.u32 %s23, 1
          %s276 = scalar_lea.sflag [#allocation6], %s275
          %s277 = sand.u32 %s59, 1
          %s278 = smul.addr %s277, 64
          %s279 = scalar_lea.vmem [#allocation5], %s278
          %s280 = smul.u32 8, %s23
          %s282 = ssub.s32 1024, 1024
          %283 = vsyncadd %s276, %s282
          %s284 = smul.addr %s280, 2
          %s285 = smul.addr %s284, 64
          %s286 = scalar_lea.hbm %s1, %s285
          %s287 = sshll.u32 %s279, 4
          %s288 = int_to_ptr.vmem [resolvable:$true] %s287
          %293 = dma.hbm_to_vmem [thread:$0]  %s286, 1024, %s288, %s276, 64, 64, 4
        $region40: #{polla_gcn_forward.16} parent=31 // pred_fallthru
          _
      $region32: #{polla_gcn_forward.16} parent=5 // pred_fallthru
        _
      %p294 = scmp.le.s32.totalorder 1, %s23
      %p295 = scmp.lt.s32.totalorder %s23, 3
      %p296 = pnand %p294, %p295
      %p297 = pneg %p296
      // Predicated region
      $region41: #{polla_gcn_forward.16} parent=5 // pred_check
        _
      $region42: #{polla_gcn_forward.16} parent=5 // pred_check_branch
        %299 = sbr.rel (%p296) target = $region44
      $region43: #{polla_gcn_forward.16} parent=5 // pred_region
        %s300 = ssub.s32 %s23, 1
        %s301 = sand.u32 %s36, 1
        %s302 = scalar_lea.sflag [#allocation3], %s301
        %s303 = sand.u32 %s36, 1
        %s304 = smul.addr %s303, 64
        %s305 = scalar_lea.vmem [#allocation2], %s304
        // Predicated region
        $region45: #{polla_gcn_forward.16} parent=43 // pred_check
          %p306 = pneg %p49
        $region46: #{polla_gcn_forward.16} parent=43 // pred_check_branch
          %308 = sbr.rel (%p306) target = $region48
        $region47: #{polla_gcn_forward.16} parent=43 // pred_region
          %309 = dma.done %s302, 1024
        $region48: #{polla_gcn_forward.16} parent=43 // pred_fallthru
          _
        %s310 = sand.u32 %s28, 1
        %s311 = scalar_lea.sflag [#allocation6], %s310
        %s312 = sand.u32 %s62, 1
        %s313 = smul.addr %s312, 64
        %s314 = scalar_lea.vmem [#allocation5], %s313
        // Predicated region
        $region49: #{polla_gcn_forward.16} parent=43 // pred_check
          %p315 = pneg %p75
        $region50: #{polla_gcn_forward.16} parent=43 // pred_check_branch
          %317 = sbr.rel (%p315) target = $region52
        $region51: #{polla_gcn_forward.16} parent=43 // pred_region
          %318 = dma.done %s311, 1024
        $region52: #{polla_gcn_forward.16} parent=43 // pred_fallthru
          _
        // Predicated region
        $region53: #{polla_gcn_forward.16} parent=43 // pred_check
          %p319 = pneg %p96
        $region54: #{polla_gcn_forward.16} parent=43 // pred_check_branch
          %321 = sbr.rel (%p319) target = $region56
        $region55: #{polla_gcn_forward.16} parent=43 // pred_region
          %322 = dma.done [#allocation6], 128
        $region56: #{polla_gcn_forward.16} parent=43 // pred_fallthru
          _
        // Predicated region
        $region57: #{polla_gcn_forward.16} parent=43 // pred_check
          %p323 = pneg %p117
        $region58: #{polla_gcn_forward.16} parent=43 // pred_check_branch
          %325 = sbr.rel (%p323) target = $region60
        $region59: #{polla_gcn_forward.16} parent=43 // pred_region
          %326 = dma.done [#allocation9], 16
        $region60: #{polla_gcn_forward.16} parent=43 // pred_fallthru
          _
        // Predicated region
        $region61: #{polla_gcn_forward.16} parent=43 // pred_check
          %p327 = pneg %p138
        $region62: #{polla_gcn_forward.16} parent=43 // pred_check_branch
          %329 = sbr.rel (%p327) target = $region64
        $region63: #{polla_gcn_forward.16} parent=43 // pred_region
          %330 = dma.done [#allocation9], 16
        $region64: #{polla_gcn_forward.16} parent=43 // pred_fallthru
          _
        // Predicated region
        $region65: #{polla_gcn_forward.16} parent=43 // pred_check
          %p331 = pneg %p159
        $region66: #{polla_gcn_forward.16} parent=43 // pred_check_branch
          %333 = sbr.rel (%p331) target = $region68
        $region67: #{polla_gcn_forward.16} parent=43 // pred_region
          %334 = dma.done [#allocation12], 16
        $region68: #{polla_gcn_forward.16} parent=43 // pred_fallthru
          _
        %s335 = sand.u32 %s36, 1
        %s336 = scalar_lea.sflag [#allocation3], %s335
        %s337 = sand.u32 %s36, 1
        %s338 = smul.addr %s337, 64
        %s339 = scalar_lea.vmem [#allocation2], %s338
        %p340 = pneg %p49
        %p341 = pneg %p46
        %s342 = sand.u32 %s28, 1
        %s343 = scalar_lea.sflag [#allocation6], %s342
        %s344 = sand.u32 %s62, 1
        %s345 = smul.addr %s344, 64
        %s346 = scalar_lea.vmem [#allocation5], %s345
        %p347 = pneg %p75
        %p348 = pneg %p72
        %p349 = pneg %p96
        %p350 = pneg %p93
        %p351 = pneg %p117
        %p352 = pneg %p114
        %p353 = pneg %p138
        %p354 = pneg %p135
        %p355 = pneg %p159
        %p356 = pneg %p156
        %p357 = pneg %p185
        %p358 = pneg %p182
        %s359 = sand.u32 %s172, 1
        %s360 = scalar_lea.sflag [#allocation4], %s359
        %s361 = sand.u32 %s172, 1
        %s362 = smul.addr %s361, 64
        %s363 = scalar_lea.vmem [#allocation13], %s362
        %s364 = smul.u32 8, %s28
        %s365 = smul.u32 8, %s28
        %s366 = smul.u32 8, %s28
        %v368 = vld [vmem:[%s305] sm:$0xf]
        %v369 = vld [vmem:[%s305 + $0x4] sm:$0xf]
        %v370 = vld [vmem:[%s305 + $0x8] sm:$0xf]
        %v371 = vld [vmem:[%s305 + $0xc] sm:$0xf]
        %v372 = vld [vmem:[%s305 + $0x10] sm:$0xf]
        %v373 = vld [vmem:[%s305 + $0x14] sm:$0xf]
        %v374 = vld [vmem:[%s305 + $0x18] sm:$0xf]
        %v375 = vld [vmem:[%s305 + $0x1c] sm:$0xf]
        %v376 = vld [vmem:[%s305 + $0x20] sm:$0xf]
        %v377 = vld [vmem:[%s305 + $0x24] sm:$0xf]
        %v378 = vld [vmem:[%s305 + $0x28] sm:$0xf]
        %v379 = vld [vmem:[%s305 + $0x2c] sm:$0xf]
        %v380 = vld [vmem:[%s305 + $0x30] sm:$0xf]
        %v381 = vld [vmem:[%s305 + $0x34] sm:$0xf]
        %v382 = vld [vmem:[%s305 + $0x38] sm:$0xf]
        %v383 = vld [vmem:[%s305 + $0x3c] sm:$0xf]
        %v384 = vld [vmem:[#allocation7] sm:$0xf]
        %v385 = vld [vmem:[#allocation7 + $0x4] sm:$0xf]
        %v388 = vunpack.c.l.b16 %v384
        %v389 = vunpack.c.l.b16 %v385
        %v390 = vpack.c.b16 %v389, %v388
        %v393 = vunpack.c.l.b16 %v368
        %v394 = vunpack.c.l.b16 %v369
        %v395 = vpack.c.b16 %v394, %v393
        %vm397 = vcmask 130048
        %v399 = vsel %vm397, %v390, 0
        %401 = vmatprep.subr.bf16.mxu0 0
        %402 = vmatpush1.bf16.msra.mxu0 %v395
        %403 = vmatprep.subr.bf16.mxu0 0
        %404 = vmatpush1.bf16.msra.mxu0 0
        %405 = vmatprep.subr.bf16.mxu0 0
        %406 = vmatpush1.bf16.msra.mxu0 0
        %407 = vmatprep.subr.bf16.mxu0 0
        %408 = vmatpush1.bf16.msra.mxu0 0
        %409 = vmatprep.subr.bf16.mxu0 0
        %410 = vmatpush1.bf16.msra.mxu0 0
        %411 = vmatprep.subr.bf16.mxu0 0
        %412 = vmatpush1.bf16.msra.mxu0 0
        %413 = vmatprep.subr.bf16.mxu0 0
        %414 = vmatpush1.bf16.msra.mxu0 0
        %415 = vmatprep.subr.bf16.mxu0 0
        %416 = vmatpush1.bf16.msra.mxu0 0
        %417 = vmatprep.subr.bf16.mxu0 0
        %418 = vmatpush1.bf16.msra.mxu0 0
        %419 = vmatprep.subr.bf16.mxu0 0
        %420 = vmatpush1.bf16.msra.mxu0 0
        %421 = vmatprep.subr.bf16.mxu0 0
        %422 = vmatpush1.bf16.msra.mxu0 0
        %423 = vmatprep.subr.bf16.mxu0 0
        %424 = vmatpush1.bf16.msra.mxu0 0
        %425 = vmatprep.subr.bf16.mxu0 0
        %426 = vmatpush1.bf16.msra.mxu0 0
        %427 = vmatprep.subr.bf16.mxu0 0
        %428 = vmatpush1.bf16.msra.mxu0 0
        %429 = vmatprep.subr.bf16.mxu0 0
        %430 = vmatpush1.bf16.msra.mxu0 0
        %431 = vmatprep.subr.bf16.mxu0 0
        %432 = vmatpush1.bf16.msra.mxu0 0
        %433 = vmatprep.mubr.bf16.mxu0 0
        %434 = vmatmul.mubr.bf16.gmra.mrb[0].mxu0 %v399
        %v435 = vpop.f32.mrb[0].mxu0
        %v436 = vadd.f32 0.0, %v435
        %v437 = vpop.f32.mrb[0].mxu0
        %v438 = vpop.f32.mrb[0].mxu0
        %v439 = vadd.f32 0.0, %v438
        %v440 = vpop.f32.mrb[0].mxu0
        %441 = vdwg.mxu0
        %v444 = vunpack.c.l.b16 %v370
        %v445 = vunpack.c.l.b16 %v371
        %v446 = vpack.c.b16 %v445, %v444
        %448 = vmatprep.subr.bf16.mxu0 0
        %449 = vmatpush1.bf16.msra.mxu0 %v446
        %450 = vmatprep.subr.bf16.mxu0 0
        %451 = vmatpush1.bf16.msra.mxu0 0
        %452 = vmatprep.subr.bf16.mxu0 0
        %453 = vmatpush1.bf16.msra.mxu0 0
        %454 = vmatprep.subr.bf16.mxu0 0
        %455 = vmatpush1.bf16.msra.mxu0 0
        %456 = vmatprep.subr.bf16.mxu0 0
        %457 = vmatpush1.bf16.msra.mxu0 0
        %458 = vmatprep.subr.bf16.mxu0 0
        %459 = vmatpush1.bf16.msra.mxu0 0
        %460 = vmatprep.subr.bf16.mxu0 0
        %461 = vmatpush1.bf16.msra.mxu0 0
        %462 = vmatprep.subr.bf16.mxu0 0
        %463 = vmatpush1.bf16.msra.mxu0 0
        %464 = vmatprep.subr.bf16.mxu0 0
        %465 = vmatpush1.bf16.msra.mxu0 0
        %466 = vmatprep.subr.bf16.mxu0 0
        %467 = vmatpush1.bf16.msra.mxu0 0
        %468 = vmatprep.subr.bf16.mxu0 0
        %469 = vmatpush1.bf16.msra.mxu0 0
        %470 = vmatprep.subr.bf16.mxu0 0
        %471 = vmatpush1.bf16.msra.mxu0 0
        %472 = vmatprep.subr.bf16.mxu0 0
        %473 = vmatpush1.bf16.msra.mxu0 0
        %474 = vmatprep.subr.bf16.mxu0 0
        %475 = vmatpush1.bf16.msra.mxu0 0
        %476 = vmatprep.subr.bf16.mxu0 0
        %477 = vmatpush1.bf16.msra.mxu0 0
        %478 = vmatprep.subr.bf16.mxu0 0
        %479 = vmatpush1.bf16.msra.mxu0 0
        %480 = vmatprep.mubr.bf16.mxu0 0
        %481 = vmatmul.mubr.bf16.gmra.mrb[0].mxu0 %v399
        %v482 = vpop.f32.mrb[0].mxu0
        %v483 = vadd.f32 0.0, %v482
        %v484 = vpop.f32.mrb[0].mxu0
        %v485 = vpop.f32.mrb[0].mxu0
        %v486 = vadd.f32 0.0, %v485
        %v487 = vpop.f32.mrb[0].mxu0
        %488 = vdwg.mxu0
        %v491 = vunpack.c.l.b16 %v372
        %v492 = vunpack.c.l.b16 %v373
        %v493 = vpack.c.b16 %v492, %v491
        %495 = vmatprep.subr.bf16.mxu0 0
        %496 = vmatpush1.bf16.msra.mxu0 %v493
        %497 = vmatprep.subr.bf16.mxu0 0
        %498 = vmatpush1.bf16.msra.mxu0 0
        %499 = vmatprep.subr.bf16.mxu0 0
        %500 = vmatpush1.bf16.msra.mxu0 0
        %501 = vmatprep.subr.bf16.mxu0 0
        %502 = vmatpush1.bf16.msra.mxu0 0
        %503 = vmatprep.subr.bf16.mxu0 0
        %504 = vmatpush1.bf16.msra.mxu0 0
        %505 = vmatprep.subr.bf16.mxu0 0
        %506 = vmatpush1.bf16.msra.mxu0 0
        %507 = vmatprep.subr.bf16.mxu0 0
        %508 = vmatpush1.bf16.msra.mxu0 0
        %509 = vmatprep.subr.bf16.mxu0 0
        %510 = vmatpush1.bf16.msra.mxu0 0
        %511 = vmatprep.subr.bf16.mxu0 0
        %512 = vmatpush1.bf16.msra.mxu0 0
        %513 = vmatprep.subr.bf16.mxu0 0
        %514 = vmatpush1.bf16.msra.mxu0 0
        %515 = vmatprep.subr.bf16.mxu0 0
        %516 = vmatpush1.bf16.msra.mxu0 0
        %517 = vmatprep.subr.bf16.mxu0 0
        %518 = vmatpush1.bf16.msra.mxu0 0
        %519 = vmatprep.subr.bf16.mxu0 0
        %520 = vmatpush1.bf16.msra.mxu0 0
        %521 = vmatprep.subr.bf16.mxu0 0
        %522 = vmatpush1.bf16.msra.mxu0 0
        %523 = vmatprep.subr.bf16.mxu0 0
        %524 = vmatpush1.bf16.msra.mxu0 0
        %525 = vmatprep.subr.bf16.mxu0 0
        %526 = vmatpush1.bf16.msra.mxu0 0
        %527 = vmatprep.mubr.bf16.mxu0 0
        %528 = vmatmul.mubr.bf16.gmra.mrb[0].mxu0 %v399
        %v529 = vpop.f32.mrb[0].mxu0
        %v530 = vadd.f32 0.0, %v529
        %v531 = vpop.f32.mrb[0].mxu0
        %v532 = vpop.f32.mrb[0].mxu0
        %v533 = vadd.f32 0.0, %v532
        %v534 = vpop.f32.mrb[0].mxu0
        %535 = vdwg.mxu0
        %v538 = vunpack.c.l.b16 %v374
        %v539 = vunpack.c.l.b16 %v375
        %v540 = vpack.c.b16 %v539, %v538
        %542 = vmatprep.subr.bf16.mxu0 0
        %543 = vmatpush1.bf16.msra.mxu0 %v540
        %544 = vmatprep.subr.bf16.mxu0 0
        %545 = vmatpush1.bf16.msra.mxu0 0
        %546 = vmatprep.subr.bf16.mxu0 0
        %547 = vmatpush1.bf16.msra.mxu0 0
        %548 = vmatprep.subr.bf16.mxu0 0
        %549 = vmatpush1.bf16.msra.mxu0 0
        %550 = vmatprep.subr.bf16.mxu0 0
        %551 = vmatpush1.bf16.msra.mxu0 0
        %552 = vmatprep.subr.bf16.mxu0 0
        %553 = vmatpush1.bf16.msra.mxu0 0
        %554 = vmatprep.subr.bf16.mxu0 0
        %555 = vmatpush1.bf16.msra.mxu0 0
        %556 = vmatprep.subr.bf16.mxu0 0
        %557 = vmatpush1.bf16.msra.mxu0 0
        %558 = vmatprep.subr.bf16.mxu0 0
        %559 = vmatpush1.bf16.msra.mxu0 0
        %560 = vmatprep.subr.bf16.mxu0 0
        %561 = vmatpush1.bf16.msra.mxu0 0
        %562 = vmatprep.subr.bf16.mxu0 0
        %563 = vmatpush1.bf16.msra.mxu0 0
        %564 = vmatprep.subr.bf16.mxu0 0
        %565 = vmatpush1.bf16.msra.mxu0 0
        %566 = vmatprep.subr.bf16.mxu0 0
        %567 = vmatpush1.bf16.msra.mxu0 0
        %568 = vmatprep.subr.bf16.mxu0 0
        %569 = vmatpush1.bf16.msra.mxu0 0
        %570 = vmatprep.subr.bf16.mxu0 0
        %571 = vmatpush1.bf16.msra.mxu0 0
        %572 = vmatprep.subr.bf16.mxu0 0
        %573 = vmatpush1.bf16.msra.mxu0 0
        %574 = vmatprep.mubr.bf16.mxu0 0
        %575 = vmatmul.mubr.bf16.gmra.mrb[0].mxu0 %v399
        %v576 = vpop.f32.mrb[0].mxu0
        %v577 = vadd.f32 0.0, %v576
        %v578 = vpop.f32.mrb[0].mxu0
        %v579 = vpop.f32.mrb[0].mxu0
        %v580 = vadd.f32 0.0, %v579
        %v581 = vpop.f32.mrb[0].mxu0
        %582 = vdwg.mxu0
        %v585 = vunpack.c.l.b16 %v376
        %v586 = vunpack.c.l.b16 %v377
        %v587 = vpack.c.b16 %v586, %v585
        %589 = vmatprep.subr.bf16.mxu0 0
        %590 = vmatpush1.bf16.msra.mxu0 %v587
        %591 = vmatprep.subr.bf16.mxu0 0
        %592 = vmatpush1.bf16.msra.mxu0 0
        %593 = vmatprep.subr.bf16.mxu0 0
        %594 = vmatpush1.bf16.msra.mxu0 0
        %595 = vmatprep.subr.bf16.mxu0 0
        %596 = vmatpush1.bf16.msra.mxu0 0
        %597 = vmatprep.subr.bf16.mxu0 0
        %598 = vmatpush1.bf16.msra.mxu0 0
        %599 = vmatprep.subr.bf16.mxu0 0
        %600 = vmatpush1.bf16.msra.mxu0 0
        %601 = vmatprep.subr.bf16.mxu0 0
        %602 = vmatpush1.bf16.msra.mxu0 0
        %603 = vmatprep.subr.bf16.mxu0 0
        %604 = vmatpush1.bf16.msra.mxu0 0
        %605 = vmatprep.subr.bf16.mxu0 0
        %606 = vmatpush1.bf16.msra.mxu0 0
        %607 = vmatprep.subr.bf16.mxu0 0
        %608 = vmatpush1.bf16.msra.mxu0 0
        %609 = vmatprep.subr.bf16.mxu0 0
        %610 = vmatpush1.bf16.msra.mxu0 0
        %611 = vmatprep.subr.bf16.mxu0 0
        %612 = vmatpush1.bf16.msra.mxu0 0
        %613 = vmatprep.subr.bf16.mxu0 0
        %614 = vmatpush1.bf16.msra.mxu0 0
        %615 = vmatprep.subr.bf16.mxu0 0
        %616 = vmatpush1.bf16.msra.mxu0 0
        %617 = vmatprep.subr.bf16.mxu0 0
        %618 = vmatpush1.bf16.msra.mxu0 0
        %619 = vmatprep.subr.bf16.mxu0 0
        %620 = vmatpush1.bf16.msra.mxu0 0
        %621 = vmatprep.mubr.bf16.mxu0 0
        %622 = vmatmul.mubr.bf16.gmra.mrb[0].mxu0 %v399
        %v623 = vpop.f32.mrb[0].mxu0
        %v624 = vadd.f32 0.0, %v623
        %v625 = vpop.f32.mrb[0].mxu0
        %v626 = vpop.f32.mrb[0].mxu0
        %v627 = vadd.f32 0.0, %v626
        %v628 = vpop.f32.mrb[0].mxu0
        %629 = vdwg.mxu0
        %v632 = vunpack.c.l.b16 %v378
        %v633 = vunpack.c.l.b16 %v379
        %v634 = vpack.c.b16 %v633, %v632
        %636 = vmatprep.subr.bf16.mxu0 0
        %637 = vmatpush1.bf16.msra.mxu0 %v634
        %638 = vmatprep.subr.bf16.mxu0 0
        %639 = vmatpush1.bf16.msra.mxu0 0
        %640 = vmatprep.subr.bf16.mxu0 0
        %641 = vmatpush1.bf16.msra.mxu0 0
        %642 = vmatprep.subr.bf16.mxu0 0
        %643 = vmatpush1.bf16.msra.mxu0 0
        %644 = vmatprep.subr.bf16.mxu0 0
        %645 = vmatpush1.bf16.msra.mxu0 0
        %646 = vmatprep.subr.bf16.mxu0 0
        %647 = vmatpush1.bf16.msra.mxu0 0
        %648 = vmatprep.subr.bf16.mxu0 0
        %649 = vmatpush1.bf16.msra.mxu0 0
        %650 = vmatprep.subr.bf16.mxu0 0
        %651 = vmatpush1.bf16.msra.mxu0 0
        %652 = vmatprep.subr.bf16.mxu0 0
        %653 = vmatpush1.bf16.msra.mxu0 0
        %654 = vmatprep.subr.bf16.mxu0 0
        %655 = vmatpush1.bf16.msra.mxu0 0
        %656 = vmatprep.subr.bf16.mxu0 0
        %657 = vmatpush1.bf16.msra.mxu0 0
        %658 = vmatprep.subr.bf16.mxu0 0
        %659 = vmatpush1.bf16.msra.mxu0 0
        %660 = vmatprep.subr.bf16.mxu0 0
        %661 = vmatpush1.bf16.msra.mxu0 0
        %662 = vmatprep.subr.bf16.mxu0 0
        %663 = vmatpush1.bf16.msra.mxu0 0
        %664 = vmatprep.subr.bf16.mxu0 0
        %665 = vmatpush1.bf16.msra.mxu0 0
        %666 = vmatprep.subr.bf16.mxu0 0
        %667 = vmatpush1.bf16.msra.mxu0 0
        %668 = vmatprep.mubr.bf16.mxu0 0
        %669 = vmatmul.mubr.bf16.gmra.mrb[0].mxu0 %v399
        %v670 = vpop.f32.mrb[0].mxu0
        %v671 = vadd.f32 0.0, %v670
        %v672 = vpop.f32.mrb[0].mxu0
        %v673 = vpop.f32.mrb[0].mxu0
        %v674 = vadd.f32 0.0, %v673
        %v675 = vpop.f32.mrb[0].mxu0
        %676 = vdwg.mxu0
        %v679 = vunpack.c.l.b16 %v380
        %v680 = vunpack.c.l.b16 %v381
        %v681 = vpack.c.b16 %v680, %v679
        %683 = vmatprep.subr.bf16.mxu0 0
        %684 = vmatpush1.bf16.msra.mxu0 %v681
        %685 = vmatprep.subr.bf16.mxu0 0
        %686 = vmatpush1.bf16.msra.mxu0 0
        %687 = vmatprep.subr.bf16.mxu0 0
        %688 = vmatpush1.bf16.msra.mxu0 0
        %689 = vmatprep.subr.bf16.mxu0 0
        %690 = vmatpush1.bf16.msra.mxu0 0
        %691 = vmatprep.subr.bf16.mxu0 0
        %692 = vmatpush1.bf16.msra.mxu0 0
        %693 = vmatprep.subr.bf16.mxu0 0
        %694 = vmatpush1.bf16.msra.mxu0 0
        %695 = vmatprep.subr.bf16.mxu0 0
        %696 = vmatpush1.bf16.msra.mxu0 0
        %697 = vmatprep.subr.bf16.mxu0 0
        %698 = vmatpush1.bf16.msra.mxu0 0
        %699 = vmatprep.subr.bf16.mxu0 0
        %700 = vmatpush1.bf16.msra.mxu0 0
        %701 = vmatprep.subr.bf16.mxu0 0
        %702 = vmatpush1.bf16.msra.mxu0 0
        %703 = vmatprep.subr.bf16.mxu0 0
        %704 = vmatpush1.bf16.msra.mxu0 0
        %705 = vmatprep.subr.bf16.mxu0 0
        %706 = vmatpush1.bf16.msra.mxu0 0
        %707 = vmatprep.subr.bf16.mxu0 0
        %708 = vmatpush1.bf16.msra.mxu0 0
        %709 = vmatprep.subr.bf16.mxu0 0
        %710 = vmatpush1.bf16.msra.mxu0 0
        %711 = vmatprep.subr.bf16.mxu0 0
        %712 = vmatpush1.bf16.msra.mxu0 0
        %713 = vmatprep.subr.bf16.mxu0 0
        %714 = vmatpush1.bf16.msra.mxu0 0
        %715 = vmatprep.mubr.bf16.mxu0 0
        %716 = vmatmul.mubr.bf16.gmra.mrb[0].mxu0 %v399
        %v717 = vpop.f32.mrb[0].mxu0
        %v718 = vadd.f32 0.0, %v717
        %v719 = vpop.f32.mrb[0].mxu0
        %v720 = vpop.f32.mrb[0].mxu0
        %v721 = vadd.f32 0.0, %v720
        %v722 = vpop.f32.mrb[0].mxu0
        %723 = vdwg.mxu0
        %v726 = vunpack.c.l.b16 %v382
        %v727 = vunpack.c.l.b16 %v383
        %v728 = vpack.c.b16 %v727, %v726
        %730 = vmatprep.subr.bf16.mxu0 0
        %731 = vmatpush1.bf16.msra.mxu0 %v728
        %732 = vmatprep.subr.bf16.mxu0 0
        %733 = vmatpush1.bf16.msra.mxu0 0
        %734 = vmatprep.subr.bf16.mxu0 0
        %735 = vmatpush1.bf16.msra.mxu0 0
        %736 = vmatprep.subr.bf16.mxu0 0
        %737 = vmatpush1.bf16.msra.mxu0 0
        %738 = vmatprep.subr.bf16.mxu0 0
        %739 = vmatpush1.bf16.msra.mxu0 0
        %740 = vmatprep.subr.bf16.mxu0 0
        %741 = vmatpush1.bf16.msra.mxu0 0
        %742 = vmatprep.subr.bf16.mxu0 0
        %743 = vmatpush1.bf16.msra.mxu0 0
        %744 = vmatprep.subr.bf16.mxu0 0
        %745 = vmatpush1.bf16.msra.mxu0 0
        %746 = vmatprep.subr.bf16.mxu0 0
        %747 = vmatpush1.bf16.msra.mxu0 0
        %748 = vmatprep.subr.bf16.mxu0 0
        %749 = vmatpush1.bf16.msra.mxu0 0
        %750 = vmatprep.subr.bf16.mxu0 0
        %751 = vmatpush1.bf16.msra.mxu0 0
        %752 = vmatprep.subr.bf16.mxu0 0
        %753 = vmatpush1.bf16.msra.mxu0 0
        %754 = vmatprep.subr.bf16.mxu0 0
        %755 = vmatpush1.bf16.msra.mxu0 0
        %756 = vmatprep.subr.bf16.mxu0 0
        %757 = vmatpush1.bf16.msra.mxu0 0
        %758 = vmatprep.subr.bf16.mxu0 0
        %759 = vmatpush1.bf16.msra.mxu0 0
        %760 = vmatprep.subr.bf16.mxu0 0
        %761 = vmatpush1.bf16.msra.mxu0 0
        %762 = vmatprep.mubr.bf16.mxu0 0
        %763 = vmatmul.mubr.bf16.gmra.mrb[0].mxu0 %v399
        %v764 = vpop.f32.mrb[0].mxu0
        %v765 = vadd.f32 0.0, %v764
        %v766 = vpop.f32.mrb[0].mxu0
        %v767 = vpop.f32.mrb[0].mxu0
        %v768 = vadd.f32 0.0, %v767
        %v769 = vpop.f32.mrb[0].mxu0
        %770 = vdwg.mxu0
        %v771 = vld [vmem:[%s314] sm:$0xf]
        %v772 = vld [vmem:[%s314 + $0x4] sm:$0xf]
        %v773 = vld [vmem:[%s314 + $0x8] sm:$0xf]
        %v774 = vld [vmem:[%s314 + $0xc] sm:$0xf]
        %v775 = vld [vmem:[%s314 + $0x10] sm:$0xf]
        %v776 = vld [vmem:[%s314 + $0x14] sm:$0xf]
        %v777 = vld [vmem:[%s314 + $0x18] sm:$0xf]
        %v778 = vld [vmem:[%s314 + $0x1c] sm:$0xf]
        %v779 = vld [vmem:[%s314 + $0x20] sm:$0xf]
        %v780 = vld [vmem:[%s314 + $0x24] sm:$0xf]
        %v781 = vld [vmem:[%s314 + $0x28] sm:$0xf]
        %v782 = vld [vmem:[%s314 + $0x2c] sm:$0xf]
        %v783 = vld [vmem:[%s314 + $0x30] sm:$0xf]
        %v784 = vld [vmem:[%s314 + $0x34] sm:$0xf]
        %v785 = vld [vmem:[%s314 + $0x38] sm:$0xf]
        %v786 = vld [vmem:[%s314 + $0x3c] sm:$0xf]
        %v787 = vunpack.c.l.bf16 %v771
        %v788 = vunpack.c.l.bf16 %v772
        %v789 = vunpack.c.l.bf16 %v773
        %v790 = vunpack.c.l.bf16 %v774
        %v791 = vunpack.c.l.bf16 %v775
        %v792 = vunpack.c.l.bf16 %v776
        %v793 = vunpack.c.l.bf16 %v777
        %v794 = vunpack.c.l.bf16 %v778
        %v795 = vunpack.c.l.bf16 %v779
        %v796 = vunpack.c.l.bf16 %v780
        %v797 = vunpack.c.l.bf16 %v781
        %v798 = vunpack.c.l.bf16 %v782
        %v799 = vunpack.c.l.bf16 %v783
        %v800 = vunpack.c.l.bf16 %v784
        %v801 = vunpack.c.l.bf16 %v785
        %v802 = vunpack.c.l.bf16 %v786
        %v803 = vadd.f32 %v787, %v436
        %v804 = vadd.f32 %v788, %v439
        %v805 = vadd.f32 %v789, %v483
        %v806 = vadd.f32 %v790, %v486
        %v807 = vadd.f32 %v791, %v530
        %v808 = vadd.f32 %v792, %v533
        %v809 = vadd.f32 %v793, %v577
        %v810 = vadd.f32 %v794, %v580
        %v811 = vadd.f32 %v795, %v624
        %v812 = vadd.f32 %v796, %v627
        %v813 = vadd.f32 %v797, %v671
        %v814 = vadd.f32 %v798, %v674
        %v815 = vadd.f32 %v799, %v718
        %v816 = vadd.f32 %v800, %v721
        %v817 = vadd.f32 %v801, %v765
        %v818 = vadd.f32 %v802, %v768
        %v819 = vld [vmem:[#allocation8] sm:$0x1]
        %v821 = vlaneseq
        %v822 = vshrl.u32 %v821, 7
        %v823 = vsub.s32 0, %v822
        %v824 = vrot.slane %v819, %v823
        %v826 = vadd.f32 %v803, %v824
        %v827 = vadd.f32 %v804, %v824
        %v828 = vadd.f32 %v805, %v824
        %v829 = vadd.f32 %v806, %v824
        %v830 = vadd.f32 %v807, %v824
        %v831 = vadd.f32 %v808, %v824
        %v832 = vadd.f32 %v809, %v824
        %v833 = vadd.f32 %v810, %v824
        %v834 = vadd.f32 %v811, %v824
        %v835 = vadd.f32 %v812, %v824
        %v836 = vadd.f32 %v813, %v824
        %v837 = vadd.f32 %v814, %v824
        %v838 = vadd.f32 %v815, %v824
        %v839 = vadd.f32 %v816, %v824
        %v840 = vadd.f32 %v817, %v824
        %v841 = vadd.f32 %v818, %v824
        %vm842 = vcmask 261120
        %v843 = vsel %vm842, %v826, 0.0
        %844 = vadd.xlane.f32.xlu0 %v843
        %v845 = vpop.xlane.xlu0 %844
        %v846 = vsel %vm842, %v827, 0.0
        %847 = vadd.xlane.f32.xlu0 %v846
        %v848 = vpop.xlane.xlu0 %847
        %v849 = vsel %vm842, %v828, 0.0
        %850 = vadd.xlane.f32.xlu0 %v849
        %v851 = vpop.xlane.xlu0 %850
        %v852 = vsel %vm842, %v829, 0.0
        %853 = vadd.xlane.f32.xlu0 %v852
        %v854 = vpop.xlane.xlu0 %853
        %v855 = vsel %vm842, %v830, 0.0
        %856 = vadd.xlane.f32.xlu0 %v855
        %v857 = vpop.xlane.xlu0 %856
        %v858 = vsel %vm842, %v831, 0.0
        %859 = vadd.xlane.f32.xlu0 %v858
        %v860 = vpop.xlane.xlu0 %859
        %v861 = vsel %vm842, %v832, 0.0
        %862 = vadd.xlane.f32.xlu0 %v861
        %v863 = vpop.xlane.xlu0 %862
        %v864 = vsel %vm842, %v833, 0.0
        %865 = vadd.xlane.f32.xlu0 %v864
        %v866 = vpop.xlane.xlu0 %865
        %v867 = vsel %vm842, %v834, 0.0
        %868 = vadd.xlane.f32.xlu0 %v867
        %v869 = vpop.xlane.xlu0 %868
        %v870 = vsel %vm842, %v835, 0.0
        %871 = vadd.xlane.f32.xlu0 %v870
        %v872 = vpop.xlane.xlu0 %871
        %v873 = vsel %vm842, %v836, 0.0
        %874 = vadd.xlane.f32.xlu0 %v873
        %v875 = vpop.xlane.xlu0 %874
        %v876 = vsel %vm842, %v837, 0.0
        %877 = vadd.xlane.f32.xlu0 %v876
        %v878 = vpop.xlane.xlu0 %877
        %v879 = vsel %vm842, %v838, 0.0
        %880 = vadd.xlane.f32.xlu0 %v879
        %v881 = vpop.xlane.xlu0 %880
        %v882 = vsel %vm842, %v839, 0.0
        %883 = vadd.xlane.f32.xlu0 %v882
        %v884 = vpop.xlane.xlu0 %883
        %v885 = vsel %vm842, %v840, 0.0
        %886 = vadd.xlane.f32.xlu0 %v885
        %v887 = vpop.xlane.xlu0 %886
        %v888 = vsel %vm842, %v841, 0.0
        %889 = vadd.xlane.f32.xlu0 %v888
        %v890 = vpop.xlane.xlu0 %889
        %v891 = vrcp.pop 32.0
        %v892 = vmul.f32 %v845, %v891
        %v893 = vmul.f32 %v848, %v891
        %v894 = vmul.f32 %v851, %v891
        %v895 = vmul.f32 %v854, %v891
        %v896 = vmul.f32 %v857, %v891
        %v897 = vmul.f32 %v860, %v891
        %v898 = vmul.f32 %v863, %v891
        %v899 = vmul.f32 %v866, %v891
        %v900 = vmul.f32 %v869, %v891
        %v901 = vmul.f32 %v872, %v891
        %v902 = vmul.f32 %v875, %v891
        %v903 = vmul.f32 %v878, %v891
        %v904 = vmul.f32 %v881, %v891
        %v905 = vmul.f32 %v884, %v891
        %v906 = vmul.f32 %v887, %v891
        %v907 = vmul.f32 %v890, %v891
        %v908 = vsub.f32 %v826, %v892
        %v909 = vsub.f32 %v827, %v893
        %v910 = vsub.f32 %v828, %v894
        %v911 = vsub.f32 %v829, %v895
        %v912 = vsub.f32 %v830, %v896
        %v913 = vsub.f32 %v831, %v897
        %v914 = vsub.f32 %v832, %v898
        %v915 = vsub.f32 %v833, %v899
        %v916 = vsub.f32 %v834, %v900
        %v917 = vsub.f32 %v835, %v901
        %v918 = vsub.f32 %v836, %v902
        %v919 = vsub.f32 %v837, %v903
        %v920 = vsub.f32 %v838, %v904
        %v921 = vsub.f32 %v839, %v905
        %v922 = vsub.f32 %v840, %v906
        %v923 = vsub.f32 %v841, %v907
        %v924 = vmul.f32 %v908, %v908
        %v925 = vmul.f32 %v909, %v909
        %v926 = vmul.f32 %v910, %v910
        %v927 = vmul.f32 %v911, %v911
        %v928 = vmul.f32 %v912, %v912
        %v929 = vmul.f32 %v913, %v913
        %v930 = vmul.f32 %v914, %v914
        %v931 = vmul.f32 %v915, %v915
        %v932 = vmul.f32 %v916, %v916
        %v933 = vmul.f32 %v917, %v917
        %v934 = vmul.f32 %v918, %v918
        %v935 = vmul.f32 %v919, %v919
        %v936 = vmul.f32 %v920, %v920
        %v937 = vmul.f32 %v921, %v921
        %v938 = vmul.f32 %v922, %v922
        %v939 = vmul.f32 %v923, %v923
        %v940 = vsel %vm842, %v924, 0.0
        %941 = vadd.xlane.f32.xlu0 %v940
        %v942 = vpop.xlane.xlu0 %941
        %v943 = vsel %vm842, %v925, 0.0
        %944 = vadd.xlane.f32.xlu0 %v943
        %v945 = vpop.xlane.xlu0 %944
        %v946 = vsel %vm842, %v926, 0.0
        %947 = vadd.xlane.f32.xlu0 %v946
        %v948 = vpop.xlane.xlu0 %947
        %v949 = vsel %vm842, %v927, 0.0
        %950 = vadd.xlane.f32.xlu0 %v949
        %v951 = vpop.xlane.xlu0 %950
        %v952 = vsel %vm842, %v928, 0.0
        %953 = vadd.xlane.f32.xlu0 %v952
        %v954 = vpop.xlane.xlu0 %953
        %v955 = vsel %vm842, %v929, 0.0
        %956 = vadd.xlane.f32.xlu0 %v955
        %v957 = vpop.xlane.xlu0 %956
        %v958 = vsel %vm842, %v930, 0.0
        %959 = vadd.xlane.f32.xlu0 %v958
        %v960 = vpop.xlane.xlu0 %959
        %v961 = vsel %vm842, %v931, 0.0
        %962 = vadd.xlane.f32.xlu0 %v961
        %v963 = vpop.xlane.xlu0 %962
        %v964 = vsel %vm842, %v932, 0.0
        %965 = vadd.xlane.f32.xlu0 %v964
        %v966 = vpop.xlane.xlu0 %965
        %v967 = vsel %vm842, %v933, 0.0
        %968 = vadd.xlane.f32.xlu0 %v967
        %v969 = vpop.xlane.xlu0 %968
        %v970 = vsel %vm842, %v934, 0.0
        %971 = vadd.xlane.f32.xlu0 %v970
        %v972 = vpop.xlane.xlu0 %971
        %v973 = vsel %vm842, %v935, 0.0
        %974 = vadd.xlane.f32.xlu0 %v973
        %v975 = vpop.xlane.xlu0 %974
        %v976 = vsel %vm842, %v936, 0.0
        %977 = vadd.xlane.f32.xlu0 %v976
        %v978 = vpop.xlane.xlu0 %977
        %v979 = vsel %vm842, %v937, 0.0
        %980 = vadd.xlane.f32.xlu0 %v979
        %v981 = vpop.xlane.xlu0 %980
        %v982 = vsel %vm842, %v938, 0.0
        %983 = vadd.xlane.f32.xlu0 %v982
        %v984 = vpop.xlane.xlu0 %983
        %v985 = vsel %vm842, %v939, 0.0
        %986 = vadd.xlane.f32.xlu0 %v985
        %v987 = vpop.xlane.xlu0 %986
        %v988 = vmul.f32 %v942, %v891
        %v989 = vmul.f32 %v945, %v891
        %v990 = vmul.f32 %v948, %v891
        %v991 = vmul.f32 %v951, %v891
        %v992 = vmul.f32 %v954, %v891
        %v993 = vmul.f32 %v957, %v891
        %v994 = vmul.f32 %v960, %v891
        %v995 = vmul.f32 %v963, %v891
        %v996 = vmul.f32 %v966, %v891
        %v997 = vmul.f32 %v969, %v891
        %v998 = vmul.f32 %v972, %v891
        %v999 = vmul.f32 %v975, %v891
        %v1000 = vmul.f32 %v978, %v891
        %v1001 = vmul.f32 %v981, %v891
        %v1002 = vmul.f32 %v984, %v891
        %v1003 = vmul.f32 %v987, %v891
        %v1004 = vadd.f32 %v988, 1e-05
        %v1005 = vadd.f32 %v989, 1e-05
        %v1006 = vadd.f32 %v990, 1e-05
        %v1007 = vadd.f32 %v991, 1e-05
        %v1008 = vadd.f32 %v992, 1e-05
        %v1009 = vadd.f32 %v993, 1e-05
        %v1010 = vadd.f32 %v994, 1e-05
        %v1011 = vadd.f32 %v995, 1e-05
        %v1012 = vadd.f32 %v996, 1e-05
        %v1013 = vadd.f32 %v997, 1e-05
        %v1014 = vadd.f32 %v998, 1e-05
        %v1015 = vadd.f32 %v999, 1e-05
        %v1016 = vadd.f32 %v1000, 1e-05
        %v1017 = vadd.f32 %v1001, 1e-05
        %v1018 = vadd.f32 %v1002, 1e-05
        %v1019 = vadd.f32 %v1003, 1e-05
        %v1020 = vrsqrt.pop %v1004
        %v1021 = vrsqrt.pop %v1005
        %v1022 = vrsqrt.pop %v1006
        %v1023 = vrsqrt.pop %v1007
        %v1024 = vrsqrt.pop %v1008
        %v1025 = vrsqrt.pop %v1009
        %v1026 = vrsqrt.pop %v1010
        %v1027 = vrsqrt.pop %v1011
        %v1028 = vrsqrt.pop %v1012
        %v1029 = vrsqrt.pop %v1013
        %v1030 = vrsqrt.pop %v1014
        %v1031 = vrsqrt.pop %v1015
        %v1032 = vrsqrt.pop %v1016
        %v1033 = vrsqrt.pop %v1017
        %v1034 = vrsqrt.pop %v1018
        %v1035 = vrsqrt.pop %v1019
        %v1036 = vmul.f32 %v908, %v1020
        %v1037 = vmul.f32 %v909, %v1021
        %v1038 = vmul.f32 %v910, %v1022
        %v1039 = vmul.f32 %v911, %v1023
        %v1040 = vmul.f32 %v912, %v1024
        %v1041 = vmul.f32 %v913, %v1025
        %v1042 = vmul.f32 %v914, %v1026
        %v1043 = vmul.f32 %v915, %v1027
        %v1044 = vmul.f32 %v916, %v1028
        %v1045 = vmul.f32 %v917, %v1029
        %v1046 = vmul.f32 %v918, %v1030
        %v1047 = vmul.f32 %v919, %v1031
        %v1048 = vmul.f32 %v920, %v1032
        %v1049 = vmul.f32 %v921, %v1033
        %v1050 = vmul.f32 %v922, %v1034
        %v1051 = vmul.f32 %v923, %v1035
        %v1052 = vld [vmem:[#allocation10] sm:$0x1]
        %v1054 = vlaneseq
        %v1055 = vshrl.u32 %v1054, 7
        %v1056 = vsub.s32 0, %v1055
        %v1057 = vrot.slane %v1052, %v1056
        %v1059 = vmul.f32 %v1036, %v1057
        %v1060 = vmul.f32 %v1037, %v1057
        %v1061 = vmul.f32 %v1038, %v1057
        %v1062 = vmul.f32 %v1039, %v1057
        %v1063 = vmul.f32 %v1040, %v1057
        %v1064 = vmul.f32 %v1041, %v1057
        %v1065 = vmul.f32 %v1042, %v1057
        %v1066 = vmul.f32 %v1043, %v1057
        %v1067 = vmul.f32 %v1044, %v1057
        %v1068 = vmul.f32 %v1045, %v1057
        %v1069 = vmul.f32 %v1046, %v1057
        %v1070 = vmul.f32 %v1047, %v1057
        %v1071 = vmul.f32 %v1048, %v1057
        %v1072 = vmul.f32 %v1049, %v1057
        %v1073 = vmul.f32 %v1050, %v1057
        %v1074 = vmul.f32 %v1051, %v1057
        %v1075 = vld [vmem:[#allocation11] sm:$0x1]
        %v1077 = vlaneseq
        %v1078 = vshrl.u32 %v1077, 7
        %v1079 = vsub.s32 0, %v1078
        %v1080 = vrot.slane %v1075, %v1079
        %v1082 = vadd.f32 %v1059, %v1080
        %v1083 = vadd.f32 %v1060, %v1080
        %v1084 = vadd.f32 %v1061, %v1080
        %v1085 = vadd.f32 %v1062, %v1080
        %v1086 = vadd.f32 %v1063, %v1080
        %v1087 = vadd.f32 %v1064, %v1080
        %v1088 = vadd.f32 %v1065, %v1080
        %v1089 = vadd.f32 %v1066, %v1080
        %v1090 = vadd.f32 %v1067, %v1080
        %v1091 = vadd.f32 %v1068, %v1080
        %v1092 = vadd.f32 %v1069, %v1080
        %v1093 = vadd.f32 %v1070, %v1080
        %v1094 = vadd.f32 %v1071, %v1080
        %v1095 = vadd.f32 %v1072, %v1080
        %v1096 = vadd.f32 %v1073, %v1080
        %v1097 = vadd.f32 %v1074, %v1080
        %v1098 = vpack.c.bf16 %v1083, %v1082
        %v1099 = vpack.c.bf16 %v1085, %v1084
        %v1100 = vpack.c.bf16 %v1087, %v1086
        %v1101 = vpack.c.bf16 %v1089, %v1088
        %v1102 = vpack.c.bf16 %v1091, %v1090
        %v1103 = vpack.c.bf16 %v1093, %v1092
        %v1104 = vpack.c.bf16 %v1095, %v1094
        %v1105 = vpack.c.bf16 %v1097, %v1096
        %v1114 = vunpack.c.l.b16 %v1098
        %v1115 = vunpack.c.h.b16 %v1098
        %v1116 = vunpack.c.l.b16 %v1099
        %v1117 = vunpack.c.h.b16 %v1099
        %v1118 = vunpack.c.l.b16 %v1100
        %v1119 = vunpack.c.h.b16 %v1100
        %v1120 = vunpack.c.l.b16 %v1101
        %v1121 = vunpack.c.h.b16 %v1101
        %v1122 = vunpack.c.l.b16 %v1102
        %v1123 = vunpack.c.h.b16 %v1102
        %v1124 = vunpack.c.l.b16 %v1103
        %v1125 = vunpack.c.h.b16 %v1103
        %v1126 = vunpack.c.l.b16 %v1104
        %v1127 = vunpack.c.h.b16 %v1104
        %v1128 = vunpack.c.l.b16 %v1105
        %v1129 = vunpack.c.h.b16 %v1105
        %v1130 = vpack.c.b16 %v1114, %v1114
        %v1131 = vpack.c.b16 %v1115, %v1115
        %v1132 = vpack.c.b16 %v1116, %v1116
        %v1133 = vpack.c.b16 %v1117, %v1117
        %v1134 = vpack.c.b16 %v1118, %v1118
        %v1135 = vpack.c.b16 %v1119, %v1119
        %v1136 = vpack.c.b16 %v1120, %v1120
        %v1137 = vpack.c.b16 %v1121, %v1121
        %v1138 = vpack.c.b16 %v1122, %v1122
        %v1139 = vpack.c.b16 %v1123, %v1123
        %v1140 = vpack.c.b16 %v1124, %v1124
        %v1141 = vpack.c.b16 %v1125, %v1125
        %v1142 = vpack.c.b16 %v1126, %v1126
        %v1143 = vpack.c.b16 %v1127, %v1127
        %v1144 = vpack.c.b16 %v1128, %v1128
        %v1145 = vpack.c.b16 %v1129, %v1129
        %vm1162 = vcmask 257024
        %1163 = vst.msk [vmem:[%s363] sm:$0xf] %vm1162, %v1130
        %1164 = vst.msk [vmem:[%s363 + $0x4] sm:$0xf] %vm1162, %v1131
        %1165 = vst.msk [vmem:[%s363 + $0x8] sm:$0xf] %vm1162, %v1132
        %1166 = vst.msk [vmem:[%s363 + $0xc] sm:$0xf] %vm1162, %v1133
        %1167 = vst.msk [vmem:[%s363 + $0x10] sm:$0xf] %vm1162, %v1134
        %1168 = vst.msk [vmem:[%s363 + $0x14] sm:$0xf] %vm1162, %v1135
        %1169 = vst.msk [vmem:[%s363 + $0x18] sm:$0xf] %vm1162, %v1136
        %1170 = vst.msk [vmem:[%s363 + $0x1c] sm:$0xf] %vm1162, %v1137
        %1171 = vst.msk [vmem:[%s363 + $0x20] sm:$0xf] %vm1162, %v1138
        %1172 = vst.msk [vmem:[%s363 + $0x24] sm:$0xf] %vm1162, %v1139
        %1173 = vst.msk [vmem:[%s363 + $0x28] sm:$0xf] %vm1162, %v1140
        %1174 = vst.msk [vmem:[%s363 + $0x2c] sm:$0xf] %vm1162, %v1141
        %1175 = vst.msk [vmem:[%s363 + $0x30] sm:$0xf] %vm1162, %v1142
        %1176 = vst.msk [vmem:[%s363 + $0x34] sm:$0xf] %vm1162, %v1143
        %1177 = vst.msk [vmem:[%s363 + $0x38] sm:$0xf] %vm1162, %v1144
        %1178 = vst.msk [vmem:[%s363 + $0x3c] sm:$0xf] %vm1162, %v1145
        %s1179 = sand.u32 %s172, 1
        %s1180 = scalar_lea.sflag [#allocation4], %s1179
        %s1181 = sand.u32 %s172, 1
        %s1182 = smul.addr %s1181, 64
        %s1183 = scalar_lea.vmem [#allocation13], %s1182
        // Predicated region
        $region69: #{polla_gcn_forward.16} parent=43 // pred_check
          %p1184 = pneg %p182
        $region70: #{polla_gcn_forward.16} parent=43 // pred_check_branch
          %1186 = sbr.rel (%p1184) target = $region72
        $region71: #{polla_gcn_forward.16} parent=43 // pred_region
          %s1187 = smul.u32 8, %s28
          %s1189 = ssub.s32 1024, 1024
          %1190 = vsyncadd %s1180, %s1189
          %s1191 = smul.addr %s1187, 2
          %s1192 = smul.addr %s1191, 64
          %s1193 = scalar_lea.hbm %s6, %s1192
          %s1194 = sshll.u32 %s1183, 4
          %s1195 = int_to_ptr.vmem [resolvable:$true] %s1194
          %1200 = dma.vmem_to_hbm [thread:$0]  %s1195, 1024, %s1193, %s1180, 64, 64, 4
        $region72: #{polla_gcn_forward.16} parent=43 // pred_fallthru
          _
      $region44: #{polla_gcn_forward.16} parent=5 // pred_fallthru
        _
      %p1201 = scmp.le.s32.totalorder 2, %s23
      // Predicated region
      $region73: #{polla_gcn_forward.16} parent=5 // pred_check
        %p1202 = pneg %p1201
      $region74: #{polla_gcn_forward.16} parent=5 // pred_check_branch
        %1204 = sbr.rel (%p1202) target = $region76
      $region75: #{polla_gcn_forward.16} parent=5 // pred_region
        %s1205 = ssub.s32 %s23, 2
        // Predicated region
        $region77: #{polla_gcn_forward.16} parent=75 // pred_check
          %p1206 = pneg %p188
        $region78: #{polla_gcn_forward.16} parent=75 // pred_check_branch
          %1208 = sbr.rel (%p1206) target = $region80
        $region79: #{polla_gcn_forward.16} parent=75 // pred_region
          %s1209 = sand.u32 %s173, 1
          %s1210 = scalar_lea.sflag [#allocation4], %s1209
          %s1211 = sand.u32 %s173, 1
          %s1212 = smul.addr %s1211, 64
          %s1213 = scalar_lea.vmem [#allocation13], %s1212
          %1214 = dma.done %s1210, 1024
        $region80: #{polla_gcn_forward.16} parent=75 // pred_fallthru
          _
      $region76: #{polla_gcn_forward.16} parent=5 // pred_fallthru
        _
    $region6: #{polla_gcn_forward.16} parent=1 // loop_footer
      %s27 = sadd.s32 1, %s23
    $region7: #{polla_gcn_forward.16} parent=1 // loop_footer_branch
      %22 = sbr.rel target = $region3
    $region8: #{polla_gcn_forward.16} parent=1 // loop_exit
      _
    %1215 = vsyncpa [#allocation3], 1
    %s1216 = scalar_lea.sflag [#allocation3], 1
    %1217 = vsyncpa %s1216, 1
    %1218 = vsyncpa [#allocation6], 1
    %s1219 = scalar_lea.sflag [#allocation6], 1
    %1220 = vsyncpa %s1219, 1
    %1221 = vsyncpa [#allocation9], 1
    %1222 = vsyncpa [#allocation12], 1
    %1223 = vsyncpa [#allocation4], 1
    %s1224 = scalar_lea.sflag [#allocation4], 1
    %1225 = vsyncpa %s1224, 1

// kernel: polla_gcn_forward.21
$region0: #{polla_gcn_forward.21}
  #allocation0 [shape = 'u32[]', space=smem, size = 0x4, offset = 0x4, fixed_abs, tag = 'smem constant byte address 0x4 - core index']
  #allocation1 [shape = 'u32[144,128]{1,0:T(1,128)}', space=vmem, size = 0x12000, scoped, tag = 'internal scratch']
  %s0 = inlined_call_operand.hbm [shape: bf16[256,32], index: 0, kind: input, shape index: {}]
  %s1 = inlined_call_operand.hbm [shape: f32[1,32], index: 1, kind: input, shape index: {}]
  %s2 = inlined_call_operand.hbm [shape: f32[1,32], index: 2, kind: input, shape index: {}]
  %s3 = inlined_call_operand.hbm [shape: bf16[256,32], index: 3, kind: output, shape index: {}]
  %s4 = sld [smem:[#allocation0]]
  $region34: #{polla_gcn_forward.21} parent=0
    _
  %s6 = ssub.s32 1, %s4
  %s7 = scalar_select 0, %s6, %s4
  $region1: #{polla_gcn_forward.21} parent=0
    #allocation2 [shape = 'u8[65536]{0}', space=vmem, size = 0x10000, scoped, tag = 'input window, operand 0, single buffered']
    #allocation3 [shape = 's32[1]{0}', space=sflag, size = 0x4, scoped, tag = 'scoped memory for polla_gcn_forward.21']
    #allocation4 [shape = 's32[1]{0}', space=sflag, size = 0x4, scoped, tag = 'scoped memory for polla_gcn_forward.21']
    #allocation5 [shape = 'u8[512]{0}', space=vmem, size = 0x400, scoped, tag = 'input window, operand 1, single buffered']
    #allocation6 [shape = 's32[1]{0}', space=sflag, size = 0x4, scoped, tag = 'scoped memory for polla_gcn_forward.21']
    #allocation7 [shape = 'u8[512]{0}', space=vmem, size = 0x400, scoped, tag = 'input window, operand 2, single buffered']
    #allocation8 [shape = 'u8[65536]{0}', space=vmem, size = 0x10000, scoped, tag = 'output window, operand 0, single buffered']
    %8 = vsyncpa [#allocation3], 0
    %9 = vsyncpa [#allocation6], 0
    %10 = vsyncpa [#allocation4], 0
    // Predicated region
    $region2: #{polla_gcn_forward.21} parent=1 // pred_check
      _
    $region3: #{polla_gcn_forward.21} parent=1 // pred_check_branch
      %12 = sbr.rel (0) target = $region5
    $region4: #{polla_gcn_forward.21} parent=1 // pred_region
      %s14 = ssub.s32 2048, 2048
      %15 = vsyncadd [#allocation3], %s14
      %s16 = sshll.u32 [#allocation2], 4
      %s17 = int_to_ptr.vmem [resolvable:$true] %s16
      %22 = dma.hbm_to_vmem [thread:$0]  %s0, 2048, %s17, [#allocation3], 64, 64, 4
    $region5: #{polla_gcn_forward.21} parent=1 // pred_fallthru
      _
    // Predicated region
    $region6: #{polla_gcn_forward.21} parent=1 // pred_check
      _
    $region7: #{polla_gcn_forward.21} parent=1 // pred_check_branch
      %24 = sbr.rel (0) target = $region9
    $region8: #{polla_gcn_forward.21} parent=1 // pred_region
      %s26 = ssub.s32 16, 16
      %27 = vsyncadd [#allocation6], %s26
      %s29 = sshll.u32 [#allocation5], 4
      %s30 = int_to_ptr.vmem [resolvable:$true] %s29
      %32 = dma.hbm_to_vmem [thread:$0]  %s1, 16, %s30, [#allocation6]
    $region9: #{polla_gcn_forward.21} parent=1 // pred_fallthru
      _
    // Predicated region
    $region10: #{polla_gcn_forward.21} parent=1 // pred_check
      _
    $region11: #{polla_gcn_forward.21} parent=1 // pred_check_branch
      %34 = sbr.rel (0) target = $region13
    $region12: #{polla_gcn_forward.21} parent=1 // pred_region
      %s36 = ssub.s32 16, 16
      %37 = vsyncadd [#allocation6], %s36
      %s39 = sshll.u32 [#allocation7], 4
      %s40 = int_to_ptr.vmem [resolvable:$true] %s39
      %42 = dma.hbm_to_vmem [thread:$0]  %s2, 16, %s40, [#allocation6]
    $region13: #{polla_gcn_forward.21} parent=1 // pred_fallthru
      _
    // Predicated region
    $region14: #{polla_gcn_forward.21} parent=1 // pred_check
      _
    $region15: #{polla_gcn_forward.21} parent=1 // pred_check_branch
      %44 = sbr.rel (0) target = $region17
    $region16: #{polla_gcn_forward.21} parent=1 // pred_region
      %45 = dma.done [#allocation3], 2048
    $region17: #{polla_gcn_forward.21} parent=1 // pred_fallthru
      _
    // Predicated region
    $region18: #{polla_gcn_forward.21} parent=1 // pred_check
      _
    $region19: #{polla_gcn_forward.21} parent=1 // pred_check_branch
      %47 = sbr.rel (0) target = $region21
    $region20: #{polla_gcn_forward.21} parent=1 // pred_region
      %48 = dma.done [#allocation6], 16
    $region21: #{polla_gcn_forward.21} parent=1 // pred_fallthru
      _
    // Predicated region
    $region22: #{polla_gcn_forward.21} parent=1 // pred_check
      _
    $region23: #{polla_gcn_forward.21} parent=1 // pred_check_branch
      %50 = sbr.rel (0) target = $region25
    $region24: #{polla_gcn_forward.21} parent=1 // pred_region
      %51 = dma.done [#allocation6], 16
    $region25: #{polla_gcn_forward.21} parent=1 // pred_fallthru
      _
    %v52 = vld [vmem:[#allocation2] sm:$0xf]
    %v53 = vld [vmem:[#allocation2 + $0x4] sm:$0xf]
    %v54 = vld [vmem:[#allocation2 + $0x8] sm:$0xf]
    %v55 = vld [vmem:[#allocation2 + $0xc] sm:$0xf]
    %v56 = vld [vmem:[#allocation2 + $0x10] sm:$0xf]
    %v57 = vld [vmem:[#allocation2 + $0x14] sm:$0xf]
    %v58 = vld [vmem:[#allocation2 + $0x18] sm:$0xf]
    %v59 = vld [vmem:[#allocation2 + $0x1c] sm:$0xf]
    %v60 = vld [vmem:[#allocation2 + $0x20] sm:$0xf]
    %v61 = vld [vmem:[#allocation2 + $0x24] sm:$0xf]
    %v62 = vld [vmem:[#allocation2 + $0x28] sm:$0xf]
    %v63 = vld [vmem:[#allocation2 + $0x2c] sm:$0xf]
    %v64 = vld [vmem:[#allocation2 + $0x30] sm:$0xf]
    %v65 = vld [vmem:[#allocation2 + $0x34] sm:$0xf]
    %v66 = vld [vmem:[#allocation2 + $0x38] sm:$0xf]
    %v67 = vld [vmem:[#allocation2 + $0x3c] sm:$0xf]
    %v68 = vld [vmem:[#allocation2 + $0x40] sm:$0xf]
    %v69 = vld [vmem:[#allocation2 + $0x44] sm:$0xf]
    %v70 = vld [vmem:[#allocation2 + $0x48] sm:$0xf]
    %v71 = vld [vmem:[#allocation2 + $0x4c] sm:$0xf]
    %v72 = vld [vmem:[#allocation2 + $0x50] sm:$0xf]
    %v73 = vld [vmem:[#allocation2 + $0x54] sm:$0xf]
    %v74 = vld [vmem:[#allocation2 + $0x58] sm:$0xf]
    %v75 = vld [vmem:[#allocation2 + $0x5c] sm:$0xf]
    %v76 = vld [vmem:[#allocation2 + $0x60] sm:$0xf]
    %v77 = vld [vmem:[#allocation2 + $0x64] sm:$0xf]
    %v78 = vld [vmem:[#allocation2 + $0x68] sm:$0xf]
    %v79 = vld [vmem:[#allocation2 + $0x6c] sm:$0xf]
    %v80 = vld [vmem:[#allocation2 + $0x70] sm:$0xf]
    %v81 = vld [vmem:[#allocation2 + $0x74] sm:$0xf]
    %v82 = vld [vmem:[#allocation2 + $0x78] sm:$0xf]
    %v83 = vld [vmem:[#allocation2 + $0x7c] sm:$0xf]
    %v84 = vunpack.c.l.bf16 %v52
    %v85 = vunpack.c.l.bf16 %v53
    %v86 = vunpack.c.l.bf16 %v54
    %v87 = vunpack.c.l.bf16 %v55
    %v88 = vunpack.c.l.bf16 %v56
    %v89 = vunpack.c.l.bf16 %v57
    %v90 = vunpack.c.l.bf16 %v58
    %v91 = vunpack.c.l.bf16 %v59
    %v92 = vunpack.c.l.bf16 %v60
    %v93 = vunpack.c.l.bf16 %v61
    %v94 = vunpack.c.l.bf16 %v62
    %v95 = vunpack.c.l.bf16 %v63
    %v96 = vunpack.c.l.bf16 %v64
    %v97 = vunpack.c.l.bf16 %v65
    %v98 = vunpack.c.l.bf16 %v66
    %v99 = vunpack.c.l.bf16 %v67
    %v100 = vunpack.c.l.bf16 %v68
    %v101 = vunpack.c.l.bf16 %v69
    %v102 = vunpack.c.l.bf16 %v70
    %v103 = vunpack.c.l.bf16 %v71
    %v104 = vunpack.c.l.bf16 %v72
    %v105 = vunpack.c.l.bf16 %v73
    %v106 = vunpack.c.l.bf16 %v74
    %v107 = vunpack.c.l.bf16 %v75
    %v108 = vunpack.c.l.bf16 %v76
    %v109 = vunpack.c.l.bf16 %v77
    %v110 = vunpack.c.l.bf16 %v78
    %v111 = vunpack.c.l.bf16 %v79
    %v112 = vunpack.c.l.bf16 %v80
    %v113 = vunpack.c.l.bf16 %v81
    %v114 = vunpack.c.l.bf16 %v82
    %v115 = vunpack.c.l.bf16 %v83
    %vm116 = vcmask 261120
    %v117 = vsel %vm116, %v84, 0.0
    %118 = vadd.xlane.f32.xlu0 %v117
    %v119 = vpop.xlane.xlu0 %118
    %v120 = vsel %vm116, %v85, 0.0
    %121 = vadd.xlane.f32.xlu0 %v120
    %v122 = vpop.xlane.xlu0 %121
    %v123 = vsel %vm116, %v86, 0.0
    %124 = vadd.xlane.f32.xlu0 %v123
    %v125 = vpop.xlane.xlu0 %124
    %v126 = vsel %vm116, %v87, 0.0
    %127 = vadd.xlane.f32.xlu0 %v126
    %v128 = vpop.xlane.xlu0 %127
    %v129 = vsel %vm116, %v88, 0.0
    %130 = vadd.xlane.f32.xlu0 %v129
    %v131 = vpop.xlane.xlu0 %130
    %v132 = vsel %vm116, %v89, 0.0
    %133 = vadd.xlane.f32.xlu0 %v132
    %v134 = vpop.xlane.xlu0 %133
    %v135 = vsel %vm116, %v90, 0.0
    %136 = vadd.xlane.f32.xlu0 %v135
    %v137 = vpop.xlane.xlu0 %136
    %v138 = vsel %vm116, %v91, 0.0
    %139 = vadd.xlane.f32.xlu0 %v138
    %v140 = vpop.xlane.xlu0 %139
    %v141 = vsel %vm116, %v92, 0.0
    %142 = vadd.xlane.f32.xlu0 %v141
    %v143 = vpop.xlane.xlu0 %142
    %v144 = vsel %vm116, %v93, 0.0
    %145 = vadd.xlane.f32.xlu0 %v144
    %v146 = vpop.xlane.xlu0 %145
    %v147 = vsel %vm116, %v94, 0.0
    %148 = vadd.xlane.f32.xlu0 %v147
    %v149 = vpop.xlane.xlu0 %148
    %v150 = vsel %vm116, %v95, 0.0
    %151 = vadd.xlane.f32.xlu0 %v150
    %v152 = vpop.xlane.xlu0 %151
    %v153 = vsel %vm116, %v96, 0.0
    %154 = vadd.xlane.f32.xlu0 %v153
    %v155 = vpop.xlane.xlu0 %154
    %v156 = vsel %vm116, %v97, 0.0
    %157 = vadd.xlane.f32.xlu0 %v156
    %v158 = vpop.xlane.xlu0 %157
    %v159 = vsel %vm116, %v98, 0.0
    %160 = vadd.xlane.f32.xlu0 %v159
    %v161 = vpop.xlane.xlu0 %160
    %v162 = vsel %vm116, %v99, 0.0
    %163 = vadd.xlane.f32.xlu0 %v162
    %v164 = vpop.xlane.xlu0 %163
    %v165 = vsel %vm116, %v100, 0.0
    %166 = vadd.xlane.f32.xlu0 %v165
    %v167 = vpop.xlane.xlu0 %166
    %v168 = vsel %vm116, %v101, 0.0
    %169 = vadd.xlane.f32.xlu0 %v168
    %v170 = vpop.xlane.xlu0 %169
    %v171 = vsel %vm116, %v102, 0.0
    %172 = vadd.xlane.f32.xlu0 %v171
    %v173 = vpop.xlane.xlu0 %172
    %v174 = vsel %vm116, %v103, 0.0
    %175 = vadd.xlane.f32.xlu0 %v174
    %v176 = vpop.xlane.xlu0 %175
    %v177 = vsel %vm116, %v104, 0.0
    %178 = vadd.xlane.f32.xlu0 %v177
    %v179 = vpop.xlane.xlu0 %178
    %v180 = vsel %vm116, %v105, 0.0
    %181 = vadd.xlane.f32.xlu0 %v180
    %v182 = vpop.xlane.xlu0 %181
    %v183 = vsel %vm116, %v106, 0.0
    %184 = vadd.xlane.f32.xlu0 %v183
    %v185 = vpop.xlane.xlu0 %184
    %v186 = vsel %vm116, %v107, 0.0
    %187 = vadd.xlane.f32.xlu0 %v186
    %v188 = vpop.xlane.xlu0 %187
    %v189 = vsel %vm116, %v108, 0.0
    %190 = vadd.xlane.f32.xlu0 %v189
    %v191 = vpop.xlane.xlu0 %190
    %v192 = vsel %vm116, %v109, 0.0
    %193 = vadd.xlane.f32.xlu0 %v192
    %v194 = vpop.xlane.xlu0 %193
    %v195 = vsel %vm116, %v110, 0.0
    %196 = vadd.xlane.f32.xlu0 %v195
    %v197 = vpop.xlane.xlu0 %196
    %v198 = vsel %vm116, %v111, 0.0
    %199 = vadd.xlane.f32.xlu0 %v198
    %v200 = vpop.xlane.xlu0 %199
    %v201 = vsel %vm116, %v112, 0.0
    %202 = vadd.xlane.f32.xlu0 %v201
    %v203 = vpop.xlane.xlu0 %202
    %v204 = vsel %vm116, %v113, 0.0
    %205 = vadd.xlane.f32.xlu0 %v204
    %v206 = vpop.xlane.xlu0 %205
    %v207 = vsel %vm116, %v114, 0.0
    %208 = vadd.xlane.f32.xlu0 %v207
    %v209 = vpop.xlane.xlu0 %208
    %v210 = vsel %vm116, %v115, 0.0
    %211 = vadd.xlane.f32.xlu0 %v210
    %v212 = vpop.xlane.xlu0 %211
    %v213 = vrcp.pop 32.0
    %v214 = vmul.f32 %v119, %v213
    %v215 = vmul.f32 %v122, %v213
    %v216 = vmul.f32 %v125, %v213
    %v217 = vmul.f32 %v128, %v213
    %v218 = vmul.f32 %v131, %v213
    %v219 = vmul.f32 %v134, %v213
    %v220 = vmul.f32 %v137, %v213
    %v221 = vmul.f32 %v140, %v213
    %v222 = vmul.f32 %v143, %v213
    %v223 = vmul.f32 %v146, %v213
    %v224 = vmul.f32 %v149, %v213
    %v225 = vmul.f32 %v152, %v213
    %v226 = vmul.f32 %v155, %v213
    %v227 = vmul.f32 %v158, %v213
    %v228 = vmul.f32 %v161, %v213
    %v229 = vmul.f32 %v164, %v213
    %v230 = vmul.f32 %v167, %v213
    %v231 = vmul.f32 %v170, %v213
    %v232 = vmul.f32 %v173, %v213
    %v233 = vmul.f32 %v176, %v213
    %v234 = vmul.f32 %v179, %v213
    %v235 = vmul.f32 %v182, %v213
    %v236 = vmul.f32 %v185, %v213
    %v237 = vmul.f32 %v188, %v213
    %v238 = vmul.f32 %v191, %v213
    %v239 = vmul.f32 %v194, %v213
    %v240 = vmul.f32 %v197, %v213
    %v241 = vmul.f32 %v200, %v213
    %v242 = vmul.f32 %v203, %v213
    %v243 = vmul.f32 %v206, %v213
    %v244 = vmul.f32 %v209, %v213
    %v245 = vmul.f32 %v212, %v213
    %v246 = vsub.f32 %v84, %v214
    %v247 = vsub.f32 %v85, %v215
    %v248 = vsub.f32 %v86, %v216
    %v249 = vsub.f32 %v87, %v217
    %v250 = vsub.f32 %v88, %v218
    %v251 = vsub.f32 %v89, %v219
    %v252 = vsub.f32 %v90, %v220
    %v253 = vsub.f32 %v91, %v221
    %v254 = vsub.f32 %v92, %v222
    %v255 = vsub.f32 %v93, %v223
    %v256 = vsub.f32 %v94, %v224
    %v257 = vsub.f32 %v95, %v225
    %v258 = vsub.f32 %v96, %v226
    %v259 = vsub.f32 %v97, %v227
    %v260 = vsub.f32 %v98, %v228
    %v261 = vsub.f32 %v99, %v229
    %v262 = vsub.f32 %v100, %v230
    %v263 = vsub.f32 %v101, %v231
    %v264 = vsub.f32 %v102, %v232
    %v265 = vsub.f32 %v103, %v233
    %v266 = vsub.f32 %v104, %v234
    %v267 = vsub.f32 %v105, %v235
    %v268 = vsub.f32 %v106, %v236
    %v269 = vsub.f32 %v107, %v237
    %v270 = vsub.f32 %v108, %v238
    %v271 = vsub.f32 %v109, %v239
    %v272 = vsub.f32 %v110, %v240
    %v273 = vsub.f32 %v111, %v241
    %v274 = vsub.f32 %v112, %v242
    %v275 = vsub.f32 %v113, %v243
    %v276 = vsub.f32 %v114, %v244
    %v277 = vsub.f32 %v115, %v245
    %v278 = vmul.f32 %v246, %v246
    %v279 = vmul.f32 %v247, %v247
    %v280 = vmul.f32 %v248, %v248
    %v281 = vmul.f32 %v249, %v249
    %v282 = vmul.f32 %v250, %v250
    %v283 = vmul.f32 %v251, %v251
    %v284 = vmul.f32 %v252, %v252
    %v285 = vmul.f32 %v253, %v253
    %v286 = vmul.f32 %v254, %v254
    %v287 = vmul.f32 %v255, %v255
    %v288 = vmul.f32 %v256, %v256
    %v289 = vmul.f32 %v257, %v257
    %v290 = vmul.f32 %v258, %v258
    %v291 = vmul.f32 %v259, %v259
    %v292 = vmul.f32 %v260, %v260
    %v293 = vmul.f32 %v261, %v261
    %v294 = vmul.f32 %v262, %v262
    %v295 = vmul.f32 %v263, %v263
    %v296 = vmul.f32 %v264, %v264
    %v297 = vmul.f32 %v265, %v265
    %v298 = vmul.f32 %v266, %v266
    %v299 = vmul.f32 %v267, %v267
    %v300 = vmul.f32 %v268, %v268
    %v301 = vmul.f32 %v269, %v269
    %v302 = vmul.f32 %v270, %v270
    %v303 = vmul.f32 %v271, %v271
    %v304 = vmul.f32 %v272, %v272
    %v305 = vmul.f32 %v273, %v273
    %v306 = vmul.f32 %v274, %v274
    %v307 = vmul.f32 %v275, %v275
    %v308 = vmul.f32 %v276, %v276
    %v309 = vmul.f32 %v277, %v277
    %v310 = vsel %vm116, %v278, 0.0
    %311 = vadd.xlane.f32.xlu0 %v310
    %v312 = vpop.xlane.xlu0 %311
    %v313 = vsel %vm116, %v279, 0.0
    %314 = vadd.xlane.f32.xlu0 %v313
    %v315 = vpop.xlane.xlu0 %314
    %v316 = vsel %vm116, %v280, 0.0
    %317 = vadd.xlane.f32.xlu0 %v316
    %v318 = vpop.xlane.xlu0 %317
    %v319 = vsel %vm116, %v281, 0.0
    %320 = vadd.xlane.f32.xlu0 %v319
    %v321 = vpop.xlane.xlu0 %320
    %v322 = vsel %vm116, %v282, 0.0
    %323 = vadd.xlane.f32.xlu0 %v322
    %v324 = vpop.xlane.xlu0 %323
    %v325 = vsel %vm116, %v283, 0.0
    %326 = vadd.xlane.f32.xlu0 %v325
    %v327 = vpop.xlane.xlu0 %326
    %v328 = vsel %vm116, %v284, 0.0
    %329 = vadd.xlane.f32.xlu0 %v328
    %v330 = vpop.xlane.xlu0 %329
    %v331 = vsel %vm116, %v285, 0.0
    %332 = vadd.xlane.f32.xlu0 %v331
    %v333 = vpop.xlane.xlu0 %332
    %v334 = vsel %vm116, %v286, 0.0
    %335 = vadd.xlane.f32.xlu0 %v334
    %v336 = vpop.xlane.xlu0 %335
    %v337 = vsel %vm116, %v287, 0.0
    %338 = vadd.xlane.f32.xlu0 %v337
    %v339 = vpop.xlane.xlu0 %338
    %v340 = vsel %vm116, %v288, 0.0
    %341 = vadd.xlane.f32.xlu0 %v340
    %v342 = vpop.xlane.xlu0 %341
    %v343 = vsel %vm116, %v289, 0.0
    %344 = vadd.xlane.f32.xlu0 %v343
    %v345 = vpop.xlane.xlu0 %344
    %v346 = vsel %vm116, %v290, 0.0
    %347 = vadd.xlane.f32.xlu0 %v346
    %v348 = vpop.xlane.xlu0 %347
    %v349 = vsel %vm116, %v291, 0.0
    %350 = vadd.xlane.f32.xlu0 %v349
    %v351 = vpop.xlane.xlu0 %350
    %v352 = vsel %vm116, %v292, 0.0
    %353 = vadd.xlane.f32.xlu0 %v352
    %v354 = vpop.xlane.xlu0 %353
    %v355 = vsel %vm116, %v293, 0.0
    %356 = vadd.xlane.f32.xlu0 %v355
    %v357 = vpop.xlane.xlu0 %356
    %v358 = vsel %vm116, %v294, 0.0
    %359 = vadd.xlane.f32.xlu0 %v358
    %v360 = vpop.xlane.xlu0 %359
    %v361 = vsel %vm116, %v295, 0.0
    %362 = vadd.xlane.f32.xlu0 %v361
    %v363 = vpop.xlane.xlu0 %362
    %v364 = vsel %vm116, %v296, 0.0
    %365 = vadd.xlane.f32.xlu0 %v364
    %v366 = vpop.xlane.xlu0 %365
    %v367 = vsel %vm116, %v297, 0.0
    %368 = vadd.xlane.f32.xlu0 %v367
    %v369 = vpop.xlane.xlu0 %368
    %v370 = vsel %vm116, %v298, 0.0
    %371 = vadd.xlane.f32.xlu0 %v370
    %v372 = vpop.xlane.xlu0 %371
    %v373 = vsel %vm116, %v299, 0.0
    %374 = vadd.xlane.f32.xlu0 %v373
    %v375 = vpop.xlane.xlu0 %374
    %v376 = vsel %vm116, %v300, 0.0
    %377 = vadd.xlane.f32.xlu0 %v376
    %v378 = vpop.xlane.xlu0 %377
    %v379 = vsel %vm116, %v301, 0.0
    %380 = vadd.xlane.f32.xlu0 %v379
    %v381 = vpop.xlane.xlu0 %380
    %v382 = vsel %vm116, %v302, 0.0
    %383 = vadd.xlane.f32.xlu0 %v382
    %v384 = vpop.xlane.xlu0 %383
    %v385 = vsel %vm116, %v303, 0.0
    %386 = vadd.xlane.f32.xlu0 %v385
    %v387 = vpop.xlane.xlu0 %386
    %v388 = vsel %vm116, %v304, 0.0
    %389 = vadd.xlane.f32.xlu0 %v388
    %v390 = vpop.xlane.xlu0 %389
    %v391 = vsel %vm116, %v305, 0.0
    %392 = vadd.xlane.f32.xlu0 %v391
    %v393 = vpop.xlane.xlu0 %392
    %v394 = vsel %vm116, %v306, 0.0
    %395 = vadd.xlane.f32.xlu0 %v394
    %v396 = vpop.xlane.xlu0 %395
    %v397 = vsel %vm116, %v307, 0.0
    %398 = vadd.xlane.f32.xlu0 %v397
    %v399 = vpop.xlane.xlu0 %398
    %v400 = vsel %vm116, %v308, 0.0
    %401 = vadd.xlane.f32.xlu0 %v400
    %v402 = vpop.xlane.xlu0 %401
    %v403 = vsel %vm116, %v309, 0.0
    %404 = vadd.xlane.f32.xlu0 %v403
    %v405 = vpop.xlane.xlu0 %404
    %v406 = vmul.f32 %v312, %v213
    %v407 = vmul.f32 %v315, %v213
    %v408 = vmul.f32 %v318, %v213
    %v409 = vmul.f32 %v321, %v213
    %v410 = vmul.f32 %v324, %v213
    %v411 = vmul.f32 %v327, %v213
    %v412 = vmul.f32 %v330, %v213
    %v413 = vmul.f32 %v333, %v213
    %v414 = vmul.f32 %v336, %v213
    %v415 = vmul.f32 %v339, %v213
    %v416 = vmul.f32 %v342, %v213
    %v417 = vmul.f32 %v345, %v213
    %v418 = vmul.f32 %v348, %v213
    %v419 = vmul.f32 %v351, %v213
    %v420 = vmul.f32 %v354, %v213
    %v421 = vmul.f32 %v357, %v213
    %v422 = vmul.f32 %v360, %v213
    %v423 = vmul.f32 %v363, %v213
    %v424 = vmul.f32 %v366, %v213
    %v425 = vmul.f32 %v369, %v213
    %v426 = vmul.f32 %v372, %v213
    %v427 = vmul.f32 %v375, %v213
    %v428 = vmul.f32 %v378, %v213
    %v429 = vmul.f32 %v381, %v213
    %v430 = vmul.f32 %v384, %v213
    %v431 = vmul.f32 %v387, %v213
    %v432 = vmul.f32 %v390, %v213
    %v433 = vmul.f32 %v393, %v213
    %v434 = vmul.f32 %v396, %v213
    %v435 = vmul.f32 %v399, %v213
    %v436 = vmul.f32 %v402, %v213
    %v437 = vmul.f32 %v405, %v213
    %v438 = vadd.f32 %v406, 1e-05
    %v439 = vadd.f32 %v407, 1e-05
    %v440 = vadd.f32 %v408, 1e-05
    %v441 = vadd.f32 %v409, 1e-05
    %v442 = vadd.f32 %v410, 1e-05
    %v443 = vadd.f32 %v411, 1e-05
    %v444 = vadd.f32 %v412, 1e-05
    %v445 = vadd.f32 %v413, 1e-05
    %v446 = vadd.f32 %v414, 1e-05
    %v447 = vadd.f32 %v415, 1e-05
    %v448 = vadd.f32 %v416, 1e-05
    %v449 = vadd.f32 %v417, 1e-05
    %v450 = vadd.f32 %v418, 1e-05
    %v451 = vadd.f32 %v419, 1e-05
    %v452 = vadd.f32 %v420, 1e-05
    %v453 = vadd.f32 %v421, 1e-05
    %v454 = vadd.f32 %v422, 1e-05
    %v455 = vadd.f32 %v423, 1e-05
    %v456 = vadd.f32 %v424, 1e-05
    %v457 = vadd.f32 %v425, 1e-05
    %v458 = vadd.f32 %v426, 1e-05
    %v459 = vadd.f32 %v427, 1e-05
    %v460 = vadd.f32 %v428, 1e-05
    %v461 = vadd.f32 %v429, 1e-05
    %v462 = vadd.f32 %v430, 1e-05
    %v463 = vadd.f32 %v431, 1e-05
    %v464 = vadd.f32 %v432, 1e-05
    %v465 = vadd.f32 %v433, 1e-05
    %v466 = vadd.f32 %v434, 1e-05
    %v467 = vadd.f32 %v435, 1e-05
    %v468 = vadd.f32 %v436, 1e-05
    %v469 = vadd.f32 %v437, 1e-05
    %v470 = vrsqrt.pop %v438
    %v471 = vrsqrt.pop %v439
    %v472 = vrsqrt.pop %v440
    %v473 = vrsqrt.pop %v441
    %v474 = vrsqrt.pop %v442
    %v475 = vrsqrt.pop %v443
    %v476 = vrsqrt.pop %v444
    %v477 = vrsqrt.pop %v445
    %v478 = vrsqrt.pop %v446
    %v479 = vrsqrt.pop %v447
    %v480 = vrsqrt.pop %v448
    %v481 = vrsqrt.pop %v449
    %v482 = vrsqrt.pop %v450
    %v483 = vrsqrt.pop %v451
    %v484 = vrsqrt.pop %v452
    %v485 = vrsqrt.pop %v453
    %v486 = vrsqrt.pop %v454
    %v487 = vrsqrt.pop %v455
    %v488 = vrsqrt.pop %v456
    %v489 = vrsqrt.pop %v457
    %v490 = vrsqrt.pop %v458
    %v491 = vrsqrt.pop %v459
    %v492 = vrsqrt.pop %v460
    %v493 = vrsqrt.pop %v461
    %v494 = vrsqrt.pop %v462
    %v495 = vrsqrt.pop %v463
    %v496 = vrsqrt.pop %v464
    %v497 = vrsqrt.pop %v465
    %v498 = vrsqrt.pop %v466
    %v499 = vrsqrt.pop %v467
    %v500 = vrsqrt.pop %v468
    %v501 = vrsqrt.pop %v469
    %v502 = vmul.f32 %v246, %v470
    %v503 = vmul.f32 %v247, %v471
    %v504 = vmul.f32 %v248, %v472
    %v505 = vmul.f32 %v249, %v473
    %v506 = vmul.f32 %v250, %v474
    %v507 = vmul.f32 %v251, %v475
    %v508 = vmul.f32 %v252, %v476
    %v509 = vmul.f32 %v253, %v477
    %v510 = vmul.f32 %v254, %v478
    %v511 = vmul.f32 %v255, %v479
    %v512 = vmul.f32 %v256, %v480
    %v513 = vmul.f32 %v257, %v481
    %v514 = vmul.f32 %v258, %v482
    %v515 = vmul.f32 %v259, %v483
    %v516 = vmul.f32 %v260, %v484
    %v517 = vmul.f32 %v261, %v485
    %v518 = vmul.f32 %v262, %v486
    %v519 = vmul.f32 %v263, %v487
    %v520 = vmul.f32 %v264, %v488
    %v521 = vmul.f32 %v265, %v489
    %v522 = vmul.f32 %v266, %v490
    %v523 = vmul.f32 %v267, %v491
    %v524 = vmul.f32 %v268, %v492
    %v525 = vmul.f32 %v269, %v493
    %v526 = vmul.f32 %v270, %v494
    %v527 = vmul.f32 %v271, %v495
    %v528 = vmul.f32 %v272, %v496
    %v529 = vmul.f32 %v273, %v497
    %v530 = vmul.f32 %v274, %v498
    %v531 = vmul.f32 %v275, %v499
    %v532 = vmul.f32 %v276, %v500
    %v533 = vmul.f32 %v277, %v501
    %v534 = vld [vmem:[#allocation5] sm:$0x1]
    %v536 = vlaneseq
    %v537 = vshrl.u32 %v536, 7
    %v538 = vsub.s32 0, %v537
    %v539 = vrot.slane %v534, %v538
    %v541 = vmul.f32 %v502, %v539
    %v542 = vmul.f32 %v503, %v539
    %v543 = vmul.f32 %v504, %v539
    %v544 = vmul.f32 %v505, %v539
    %v545 = vmul.f32 %v506, %v539
    %v546 = vmul.f32 %v507, %v539
    %v547 = vmul.f32 %v508, %v539
    %v548 = vmul.f32 %v509, %v539
    %v549 = vmul.f32 %v510, %v539
    %v550 = vmul.f32 %v511, %v539
    %v551 = vmul.f32 %v512, %v539
    %v552 = vmul.f32 %v513, %v539
    %v553 = vmul.f32 %v514, %v539
    %v554 = vmul.f32 %v515, %v539
    %v555 = vmul.f32 %v516, %v539
    %v556 = vmul.f32 %v517, %v539
    %v557 = vmul.f32 %v518, %v539
    %v558 = vmul.f32 %v519, %v539
    %v559 = vmul.f32 %v520, %v539
    %v560 = vmul.f32 %v521, %v539
    %v561 = vmul.f32 %v522, %v539
    %v562 = vmul.f32 %v523, %v539
    %v563 = vmul.f32 %v524, %v539
    %v564 = vmul.f32 %v525, %v539
    %v565 = vmul.f32 %v526, %v539
    %v566 = vmul.f32 %v527, %v539
    %v567 = vmul.f32 %v528, %v539
    %v568 = vmul.f32 %v529, %v539
    %v569 = vmul.f32 %v530, %v539
    %v570 = vmul.f32 %v531, %v539
    %v571 = vmul.f32 %v532, %v539
    %v572 = vmul.f32 %v533, %v539
    %v573 = vld [vmem:[#allocation7] sm:$0x1]
    %v575 = vlaneseq
    %v576 = vshrl.u32 %v575, 7
    %v577 = vsub.s32 0, %v576
    %v578 = vrot.slane %v573, %v577
    %v580 = vadd.f32 %v541, %v578
    %v581 = vadd.f32 %v542, %v578
    %v582 = vadd.f32 %v543, %v578
    %v583 = vadd.f32 %v544, %v578
    %v584 = vadd.f32 %v545, %v578
    %v585 = vadd.f32 %v546, %v578
    %v586 = vadd.f32 %v547, %v578
    %v587 = vadd.f32 %v548, %v578
    %v588 = vadd.f32 %v549, %v578
    %v589 = vadd.f32 %v550, %v578
    %v590 = vadd.f32 %v551, %v578
    %v591 = vadd.f32 %v552, %v578
    %v592 = vadd.f32 %v553, %v578
    %v593 = vadd.f32 %v554, %v578
    %v594 = vadd.f32 %v555, %v578
    %v595 = vadd.f32 %v556, %v578
    %v596 = vadd.f32 %v557, %v578
    %v597 = vadd.f32 %v558, %v578
    %v598 = vadd.f32 %v559, %v578
    %v599 = vadd.f32 %v560, %v578
    %v600 = vadd.f32 %v561, %v578
    %v601 = vadd.f32 %v562, %v578
    %v602 = vadd.f32 %v563, %v578
    %v603 = vadd.f32 %v564, %v578
    %v604 = vadd.f32 %v565, %v578
    %v605 = vadd.f32 %v566, %v578
    %v606 = vadd.f32 %v567, %v578
    %v607 = vadd.f32 %v568, %v578
    %v608 = vadd.f32 %v569, %v578
    %v609 = vadd.f32 %v570, %v578
    %v610 = vadd.f32 %v571, %v578
    %v611 = vadd.f32 %v572, %v578
    %v612 = vpack.c.bf16 %v581, %v580
    %v613 = vpack.c.bf16 %v583, %v582
    %v614 = vpack.c.bf16 %v585, %v584
    %v615 = vpack.c.bf16 %v587, %v586
    %v616 = vpack.c.bf16 %v589, %v588
    %v617 = vpack.c.bf16 %v591, %v590
    %v618 = vpack.c.bf16 %v593, %v592
    %v619 = vpack.c.bf16 %v595, %v594
    %v620 = vpack.c.bf16 %v597, %v596
    %v621 = vpack.c.bf16 %v599, %v598
    %v622 = vpack.c.bf16 %v601, %v600
    %v623 = vpack.c.bf16 %v603, %v602
    %v624 = vpack.c.bf16 %v605, %v604
    %v625 = vpack.c.bf16 %v607, %v606
    %v626 = vpack.c.bf16 %v609, %v608
    %v627 = vpack.c.bf16 %v611, %v610
    %v644 = vunpack.c.l.b16 %v612
    %v645 = vunpack.c.h.b16 %v612
    %v646 = vunpack.c.l.b16 %v613
    %v647 = vunpack.c.h.b16 %v613
    %v648 = vunpack.c.l.b16 %v614
    %v649 = vunpack.c.h.b16 %v614
    %v650 = vunpack.c.l.b16 %v615
    %v651 = vunpack.c.h.b16 %v615
    %v652 = vunpack.c.l.b16 %v616
    %v653 = vunpack.c.h.b16 %v616
    %v654 = vunpack.c.l.b16 %v617
    %v655 = vunpack.c.h.b16 %v617
    %v656 = vunpack.c.l.b16 %v618
    %v657 = vunpack.c.h.b16 %v618
    %v658 = vunpack.c.l.b16 %v619
    %v659 = vunpack.c.h.b16 %v619
    %v660 = vunpack.c.l.b16 %v620
    %v661 = vunpack.c.h.b16 %v620
    %v662 = vunpack.c.l.b16 %v621
    %v663 = vunpack.c.h.b16 %v621
    %v664 = vunpack.c.l.b16 %v622
    %v665 = vunpack.c.h.b16 %v622
    %v666 = vunpack.c.l.b16 %v623
    %v667 = vunpack.c.h.b16 %v623
    %v668 = vunpack.c.l.b16 %v624
    %v669 = vunpack.c.h.b16 %v624
    %v670 = vunpack.c.l.b16 %v625
    %v671 = vunpack.c.h.b16 %v625
    %v672 = vunpack.c.l.b16 %v626
    %v673 = vunpack.c.h.b16 %v626
    %v674 = vunpack.c.l.b16 %v627
    %v675 = vunpack.c.h.b16 %v627
    %v676 = vpack.c.b16 %v644, %v644
    %v677 = vpack.c.b16 %v645, %v645
    %v678 = vpack.c.b16 %v646, %v646
    %v679 = vpack.c.b16 %v647, %v647
    %v680 = vpack.c.b16 %v648, %v648
    %v681 = vpack.c.b16 %v649, %v649
    %v682 = vpack.c.b16 %v650, %v650
    %v683 = vpack.c.b16 %v651, %v651
    %v684 = vpack.c.b16 %v652, %v652
    %v685 = vpack.c.b16 %v653, %v653
    %v686 = vpack.c.b16 %v654, %v654
    %v687 = vpack.c.b16 %v655, %v655
    %v688 = vpack.c.b16 %v656, %v656
    %v689 = vpack.c.b16 %v657, %v657
    %v690 = vpack.c.b16 %v658, %v658
    %v691 = vpack.c.b16 %v659, %v659
    %v692 = vpack.c.b16 %v660, %v660
    %v693 = vpack.c.b16 %v661, %v661
    %v694 = vpack.c.b16 %v662, %v662
    %v695 = vpack.c.b16 %v663, %v663
    %v696 = vpack.c.b16 %v664, %v664
    %v697 = vpack.c.b16 %v665, %v665
    %v698 = vpack.c.b16 %v666, %v666
    %v699 = vpack.c.b16 %v667, %v667
    %v700 = vpack.c.b16 %v668, %v668
    %v701 = vpack.c.b16 %v669, %v669
    %v702 = vpack.c.b16 %v670, %v670
    %v703 = vpack.c.b16 %v671, %v671
    %v704 = vpack.c.b16 %v672, %v672
    %v705 = vpack.c.b16 %v673, %v673
    %v706 = vpack.c.b16 %v674, %v674
    %v707 = vpack.c.b16 %v675, %v675
    %vm740 = vcmask 257024
    %741 = vst.msk [vmem:[#allocation8] sm:$0xf] %vm740, %v676
    %742 = vst.msk [vmem:[#allocation8 + $0x4] sm:$0xf] %vm740, %v677
    %743 = vst.msk [vmem:[#allocation8 + $0x8] sm:$0xf] %vm740, %v678
    %744 = vst.msk [vmem:[#allocation8 + $0xc] sm:$0xf] %vm740, %v679
    %745 = vst.msk [vmem:[#allocation8 + $0x10] sm:$0xf] %vm740, %v680
    %746 = vst.msk [vmem:[#allocation8 + $0x14] sm:$0xf] %vm740, %v681
    %747 = vst.msk [vmem:[#allocation8 + $0x18] sm:$0xf] %vm740, %v682
    %748 = vst.msk [vmem:[#allocation8 + $0x1c] sm:$0xf] %vm740, %v683
    %749 = vst.msk [vmem:[#allocation8 + $0x20] sm:$0xf] %vm740, %v684
    %750 = vst.msk [vmem:[#allocation8 + $0x24] sm:$0xf] %vm740, %v685
    %751 = vst.msk [vmem:[#allocation8 + $0x28] sm:$0xf] %vm740, %v686
    %752 = vst.msk [vmem:[#allocation8 + $0x2c] sm:$0xf] %vm740, %v687
    %753 = vst.msk [vmem:[#allocation8 + $0x30] sm:$0xf] %vm740, %v688
    %754 = vst.msk [vmem:[#allocation8 + $0x34] sm:$0xf] %vm740, %v689
    %755 = vst.msk [vmem:[#allocation8 + $0x38] sm:$0xf] %vm740, %v690
    %756 = vst.msk [vmem:[#allocation8 + $0x3c] sm:$0xf] %vm740, %v691
    %757 = vst.msk [vmem:[#allocation8 + $0x40] sm:$0xf] %vm740, %v692
    %758 = vst.msk [vmem:[#allocation8 + $0x44] sm:$0xf] %vm740, %v693
    %759 = vst.msk [vmem:[#allocation8 + $0x48] sm:$0xf] %vm740, %v694
    %760 = vst.msk [vmem:[#allocation8 + $0x4c] sm:$0xf] %vm740, %v695
    %761 = vst.msk [vmem:[#allocation8 + $0x50] sm:$0xf] %vm740, %v696
    %762 = vst.msk [vmem:[#allocation8 + $0x54] sm:$0xf] %vm740, %v697
    %763 = vst.msk [vmem:[#allocation8 + $0x58] sm:$0xf] %vm740, %v698
    %764 = vst.msk [vmem:[#allocation8 + $0x5c] sm:$0xf] %vm740, %v699
    %765 = vst.msk [vmem:[#allocation8 + $0x60] sm:$0xf] %vm740, %v700
    %766 = vst.msk [vmem:[#allocation8 + $0x64] sm:$0xf] %vm740, %v701
    %767 = vst.msk [vmem:[#allocation8 + $0x68] sm:$0xf] %vm740, %v702
    %768 = vst.msk [vmem:[#allocation8 + $0x6c] sm:$0xf] %vm740, %v703
    %769 = vst.msk [vmem:[#allocation8 + $0x70] sm:$0xf] %vm740, %v704
    %770 = vst.msk [vmem:[#allocation8 + $0x74] sm:$0xf] %vm740, %v705
    %771 = vst.msk [vmem:[#allocation8 + $0x78] sm:$0xf] %vm740, %v706
    %772 = vst.msk [vmem:[#allocation8 + $0x7c] sm:$0xf] %vm740, %v707
    // Predicated region
    $region26: #{polla_gcn_forward.21} parent=1 // pred_check
      _
    $region27: #{polla_gcn_forward.21} parent=1 // pred_check_branch
      %774 = sbr.rel (0) target = $region29
    $region28: #{polla_gcn_forward.21} parent=1 // pred_region
      %s776 = ssub.s32 2048, 2048
      %777 = vsyncadd [#allocation4], %s776
      %s778 = sshll.u32 [#allocation8], 4
      %s779 = int_to_ptr.vmem [resolvable:$true] %s778
      %784 = dma.vmem_to_hbm [thread:$0]  %s779, 2048, %s3, [#allocation4], 64, 64, 4
    $region29: #{polla_gcn_forward.21} parent=1 // pred_fallthru
      _
    // Predicated region
    $region30: #{polla_gcn_forward.21} parent=1 // pred_check
      _
    $region31: #{polla_gcn_forward.21} parent=1 // pred_check_branch
      %786 = sbr.rel (0) target = $region33
    $region32: #{polla_gcn_forward.21} parent=1 // pred_region
      %787 = dma.done [#allocation4], 2048
    $region33: #{polla_gcn_forward.21} parent=1 // pred_fallthru
      _
    %788 = vsyncpa [#allocation3], 1
    %789 = vsyncpa [#allocation6], 1
    %790 = vsyncpa [#allocation4], 1

// kernel: polla_gcn_forward.15
$region0: #{polla_gcn_forward.15}
  #allocation0 [shape = 'u32[]', space=smem, size = 0x4, offset = 0x4, fixed_abs, tag = 'smem constant byte address 0x4 - core index']
  #allocation1 [shape = 'u32[144,128]{1,0:T(1,128)}', space=vmem, size = 0x12000, scoped, tag = 'internal scratch']
  #allocation2 [shape = 'bf16[128,32]{1,0:T(16,128)(2,1)}', space=vmem, size = 0x8000, scoped, tag = 'scratch operand']
  #allocation3 [shape = 'f32[32,32]{1,0:T(8,128)}', space=vmem, size = 0x4000, scoped, tag = 'scratch operand']
  #allocation4 [shape = 'bf16[32,32]{1,0:T(16,128)(2,1)}', space=vmem, size = 0x2000, scoped, tag = 'scratch operand']
  #allocation5 [shape = 'f32[1,32]{1,0:T(1,128)}', space=vmem, size = 0x200, scoped, tag = 'scratch operand']
  %s0 = inlined_call_operand.hbm [shape: bf16[2,128,32], index: 0, kind: input, shape index: {}]
  %s1 = inlined_call_operand.hbm [shape: bf16[32,96], index: 1, kind: input, shape index: {}]
  %s2 = inlined_call_operand.hbm [shape: f32[1,96], index: 2, kind: input, shape index: {}]
  %s3 = inlined_call_operand.hbm [shape: bf16[32,32], index: 3, kind: input, shape index: {}]
  %s4 = inlined_call_operand.hbm [shape: bf16[32,32], index: 4, kind: input, shape index: {}]
  %s5 = inlined_call_operand.hbm [shape: bf16[32,4], index: 5, kind: input, shape index: {}]
  %s6 = inlined_call_operand.hbm [shape: bf16[4,32], index: 6, kind: input, shape index: {}]
  %s7 = inlined_call_operand.hbm [shape: bf16[2,128,32], index: 7, kind: output, shape index: {}]
  %s8 = sld [smem:[#allocation0]]
  $region89: #{polla_gcn_forward.15} parent=0
    _
  %s10 = ssub.s32 1, %s8
  %s11 = scalar_select 0, %s10, %s8
  $region1: #{polla_gcn_forward.15} parent=0
    #allocation6 [shape = 'u8[65536]{0}', space=vmem, size = 0x10000, scoped, tag = 'input window, operand 0']
    #allocation7 [shape = 's32[2]{0}', space=sflag, size = 0x8, scoped, tag = 'scoped memory for polla_gcn_forward.15']
    #allocation8 [shape = 's32[2]{0}', space=sflag, size = 0x8, scoped, tag = 'scoped memory for polla_gcn_forward.15']
    #allocation9 [shape = 'u8[8192]{0}', space=vmem, size = 0x2000, scoped, tag = 'input window, operand 1, single buffered']
    #allocation10 [shape = 's32[1]{0}', space=sflag, size = 0x4, scoped, tag = 'scoped memory for polla_gcn_forward.15']
    #allocation11 [shape = 'u8[512]{0}', space=vmem, size = 0x400, scoped, tag = 'input window, operand 2, single buffered']
    #allocation12 [shape = 'u8[8192]{0}', space=vmem, size = 0x2000, scoped, tag = 'input window, operand 3, single buffered']
    #allocation13 [shape = 's32[1]{0}', space=sflag, size = 0x4, scoped, tag = 'scoped memory for polla_gcn_forward.15']
    #allocation14 [shape = 'u8[8192]{0}', space=vmem, size = 0x2000, scoped, tag = 'input window, operand 4, single buffered']
    #allocation15 [shape = 'u8[8192]{0}', space=vmem, size = 0x2000, scoped, tag = 'input window, operand 5, single buffered']
    #allocation16 [shape = 's32[1]{0}', space=sflag, size = 0x4, scoped, tag = 'scoped memory for polla_gcn_forward.15']
    #allocation17 [shape = 'u8[1024]{0}', space=vmem, size = 0x400, scoped, tag = 'input window, operand 6, single buffered']
    #allocation18 [shape = 'u8[65536]{0}', space=vmem, size = 0x10000, scoped, tag = 'output window, operand 0']
    %12 = vsyncpa [#allocation7], 0
    %s13 = scalar_lea.sflag [#allocation7], 1
    %14 = vsyncpa %s13, 0
    %15 = vsyncpa [#allocation10], 0
    %16 = vsyncpa [#allocation13], 0
    %17 = vsyncpa [#allocation16], 0
    %18 = vsyncpa [#allocation8], 0
    %s19 = scalar_lea.sflag [#allocation8], 1
    %20 = vsyncpa %s19, 0
    loop: start=0, step=1, limit=4
    $region2: #{polla_gcn_forward.15} parent=1 // loop_pre_header
      _
    $region3: #{polla_gcn_forward.15} parent=1 // loop_header
      %s22 = sphi 0, %s26
      %p23 = scmp.ge.s32.totalorder %s22, 4
      %s32 = sphi 0, %s34
      %s35 = sphi 0, %s32
      %s36 = sphi 0, %s35
      %s52 = sphi 0, %s36
      %s56 = sphi 0, %s56
      %s58 = sphi 0, %s56
      %s59 = sphi 0, %s58
      %s73 = sphi 0, %s59
      %s77 = sphi 0, %s77
      %s79 = sphi 0, %s77
      %s80 = sphi 0, %s79
      %s94 = sphi 0, %s80
      %s98 = sphi 0, %s98
      %s100 = sphi 0, %s98
      %s101 = sphi 0, %s100
      %s115 = sphi 0, %s101
      %s119 = sphi 0, %s119
      %s121 = sphi 0, %s119
      %s122 = sphi 0, %s121
      %s136 = sphi 0, %s122
      %s140 = sphi 0, %s140
      %s142 = sphi 0, %s140
      %s143 = sphi 0, %s142
      %s157 = sphi 0, %s143
      %s161 = sphi 0, %s161
      %s163 = sphi 0, %s161
      %s164 = sphi 0, %s163
      %s178 = sphi 0, %s164
      %s184 = sphi 0, %s186
      %s187 = sphi 0, %s184
      %s188 = sphi 0, %s187
      %s204 = sphi 0, %s188
    $region4: #{polla_gcn_forward.15} parent=1 // loop_header_branch
      %25 = sbr.rel (%p23) target = $region8
    $region5: #{polla_gcn_forward.15} parent=1 // loop_body
      %s27 = ssub.s32 %s22, 1
      %s28 = ssub.s32 %s22, 2
      %s29 = sadd.s32 %s22, 1
      %s30 = ssub.s32 %s22, %s29
      %p31 = scmp.eq.s32.totalorder %s30, 0
      %s33 = sadd.s32 %s32, 1
      %s34 = scalar_select %p31, %s32, %s33
      %p37 = pneg %p31
      %p38 = scmp.eq.s32.totalorder %s22, 1
      %p39 = por %p37, %p38
      %p40 = scmp.ne.s32.totalorder %s32, %s35
      %p41 = scmp.eq.s32.totalorder %s22, 0
      %p42 = por %p40, %p41
      %p43 = scmp.ne.s32.totalorder %s32, %s35
      %p44 = scmp.eq.s32.totalorder %s27, 1
      %p45 = por %p43, %p44
      %p46 = scmp.ne.s32.totalorder %s35, %s36
      %p47 = scmp.eq.s32.totalorder %s27, 0
      %p48 = por %p46, %p47
      %p49 = scmp.ne.s32.totalorder %s35, %s36
      %p50 = scmp.eq.s32.totalorder %s28, 1
      %p51 = por %p49, %p50
      %p53 = scmp.ne.s32.totalorder %s36, %s52
      %p54 = scmp.eq.s32.totalorder %s28, 0
      %p55 = por %p53, %p54
      %s57 = sadd.s32 %s56, 1
      %p60 = scmp.eq.s32.totalorder %s22, 1
      %p61 = scmp.ne.s32.totalorder %s56, %s58
      %p62 = scmp.eq.s32.totalorder %s22, 0
      %p63 = por %p61, %p62
      %p64 = scmp.ne.s32.totalorder %s56, %s58
      %p65 = scmp.eq.s32.totalorder %s27, 1
      %p66 = por %p64, %p65
      %p67 = scmp.ne.s32.totalorder %s58, %s59
      %p68 = scmp.eq.s32.totalorder %s27, 0
      %p69 = por %p67, %p68
      %p70 = scmp.ne.s32.totalorder %s58, %s59
      %p71 = scmp.eq.s32.totalorder %s28, 1
      %p72 = por %p70, %p71
      %p74 = scmp.ne.s32.totalorder %s59, %s73
      %p75 = scmp.eq.s32.totalorder %s28, 0
      %p76 = por %p74, %p75
      %s78 = sadd.s32 %s77, 1
      %p81 = scmp.eq.s32.totalorder %s22, 1
      %p82 = scmp.ne.s32.totalorder %s77, %s79
      %p83 = scmp.eq.s32.totalorder %s22, 0
      %p84 = por %p82, %p83
      %p85 = scmp.ne.s32.totalorder %s77, %s79
      %p86 = scmp.eq.s32.totalorder %s27, 1
      %p87 = por %p85, %p86
      %p88 = scmp.ne.s32.totalorder %s79, %s80
      %p89 = scmp.eq.s32.totalorder %s27, 0
      %p90 = por %p88, %p89
      %p91 = scmp.ne.s32.totalorder %s79, %s80
      %p92 = scmp.eq.s32.totalorder %s28, 1
      %p93 = por %p91, %p92
      %p95 = scmp.ne.s32.totalorder %s80, %s94
      %p96 = scmp.eq.s32.totalorder %s28, 0
      %p97 = por %p95, %p96
      %s99 = sadd.s32 %s98, 1
      %p102 = scmp.eq.s32.totalorder %s22, 1
      %p103 = scmp.ne.s32.totalorder %s98, %s100
      %p104 = scmp.eq.s32.totalorder %s22, 0
      %p105 = por %p103, %p104
      %p106 = scmp.ne.s32.totalorder %s98, %s100
      %p107 = scmp.eq.s32.totalorder %s27, 1
      %p108 = por %p106, %p107
      %p109 = scmp.ne.s32.totalorder %s100, %s101
      %p110 = scmp.eq.s32.totalorder %s27, 0
      %p111 = por %p109, %p110
      %p112 = scmp.ne.s32.totalorder %s100, %s101
      %p113 = scmp.eq.s32.totalorder %s28, 1
      %p114 = por %p112, %p113
      %p116 = scmp.ne.s32.totalorder %s101, %s115
      %p117 = scmp.eq.s32.totalorder %s28, 0
      %p118 = por %p116, %p117
      %s120 = sadd.s32 %s119, 1
      %p123 = scmp.eq.s32.totalorder %s22, 1
      %p124 = scmp.ne.s32.totalorder %s119, %s121
      %p125 = scmp.eq.s32.totalorder %s22, 0
      %p126 = por %p124, %p125
      %p127 = scmp.ne.s32.totalorder %s119, %s121
      %p128 = scmp.eq.s32.totalorder %s27, 1
      %p129 = por %p127, %p128
      %p130 = scmp.ne.s32.totalorder %s121, %s122
      %p131 = scmp.eq.s32.totalorder %s27, 0
      %p132 = por %p130, %p131
      %p133 = scmp.ne.s32.totalorder %s121, %s122
      %p134 = scmp.eq.s32.totalorder %s28, 1
      %p135 = por %p133, %p134
      %p137 = scmp.ne.s32.totalorder %s122, %s136
      %p138 = scmp.eq.s32.totalorder %s28, 0
      %p139 = por %p137, %p138
      %s141 = sadd.s32 %s140, 1
      %p144 = scmp.eq.s32.totalorder %s22, 1
      %p145 = scmp.ne.s32.totalorder %s140, %s142
      %p146 = scmp.eq.s32.totalorder %s22, 0
      %p147 = por %p145, %p146
      %p148 = scmp.ne.s32.totalorder %s140, %s142
      %p149 = scmp.eq.s32.totalorder %s27, 1
      %p150 = por %p148, %p149
      %p151 = scmp.ne.s32.totalorder %s142, %s143
      %p152 = scmp.eq.s32.totalorder %s27, 0
      %p153 = por %p151, %p152
      %p154 = scmp.ne.s32.totalorder %s142, %s143
      %p155 = scmp.eq.s32.totalorder %s28, 1
      %p156 = por %p154, %p155
      %p158 = scmp.ne.s32.totalorder %s143, %s157
      %p159 = scmp.eq.s32.totalorder %s28, 0
      %p160 = por %p158, %p159
      %s162 = sadd.s32 %s161, 1
      %p165 = scmp.eq.s32.totalorder %s22, 1
      %p166 = scmp.ne.s32.totalorder %s161, %s163
      %p167 = scmp.eq.s32.totalorder %s22, 0
      %p168 = por %p166, %p167
      %p169 = scmp.ne.s32.totalorder %s161, %s163
      %p170 = scmp.eq.s32.totalorder %s27, 1
      %p171 = por %p169, %p170
      %p172 = scmp.ne.s32.totalorder %s163, %s164
      %p173 = scmp.eq.s32.totalorder %s27, 0
      %p174 = por %p172, %p173
      %p175 = scmp.ne.s32.totalorder %s163, %s164
      %p176 = scmp.eq.s32.totalorder %s28, 1
      %p177 = por %p175, %p176
      %p179 = scmp.ne.s32.totalorder %s164, %s178
      %p180 = scmp.eq.s32.totalorder %s28, 0
      %p181 = por %p179, %p180
      %s182 = ssub.s32 %s22, %s29
      %p183 = scmp.eq.s32.totalorder %s182, 0
      %s185 = sadd.s32 %s184, 1
      %s186 = scalar_select %p183, %s184, %s185
      %p189 = pneg %p183
      %p190 = scmp.eq.s32.totalorder %s22, 1
      %p191 = por %p189, %p190
      %p192 = scmp.ne.s32.totalorder %s184, %s187
      %p193 = scmp.eq.s32.totalorder %s22, 0
      %p194 = por %p192, %p193
      %p195 = scmp.ne.s32.totalorder %s184, %s187
      %p196 = scmp.eq.s32.totalorder %s27, 1
      %p197 = por %p195, %p196
      %p198 = scmp.ne.s32.totalorder %s187, %s188
      %p199 = scmp.eq.s32.totalorder %s27, 0
      %p200 = por %p198, %p199
      %p201 = scmp.ne.s32.totalorder %s187, %s188
      %p202 = scmp.eq.s32.totalorder %s28, 1
      %p203 = por %p201, %p202
      %p205 = scmp.ne.s32.totalorder %s188, %s204
      %p206 = scmp.eq.s32.totalorder %s28, 0
      %p207 = por %p205, %p206
      %p208 = scmp.le.s32.totalorder 1, %s22
      %p209 = scmp.lt.s32.totalorder %s22, 3
      %p210 = pnand %p208, %p209
      %p211 = pneg %p210
      // Predicated region
      $region9: #{polla_gcn_forward.15} parent=5 // pred_check
        _
      $region10: #{polla_gcn_forward.15} parent=5 // pred_check_branch
        %213 = sbr.rel (%p210) target = $region12
      $region11: #{polla_gcn_forward.15} parent=5 // pred_region
        %s214 = ssub.s32 %s22, 1
        // Predicated region
        $region13: #{polla_gcn_forward.15} parent=11 // pred_check
          %p215 = pneg %p69
        $region14: #{polla_gcn_forward.15} parent=11 // pred_check_branch
          %217 = sbr.rel (%p215) target = $region16
        $region15: #{polla_gcn_forward.15} parent=11 // pred_region
          %s219 = ssub.s32 256, 256
          %220 = vsyncadd [#allocation10], %s219
          %s221 = sshll.u32 [#allocation9], 4
          %s222 = int_to_ptr.vmem [resolvable:$true] %s221
          %227 = dma.hbm_to_vmem [thread:$0]  %s1, 256, %s222, [#allocation10], 64, 64, 4
        $region16: #{polla_gcn_forward.15} parent=11 // pred_fallthru
          _
        // Predicated region
        $region17: #{polla_gcn_forward.15} parent=11 // pred_check
          %p228 = pneg %p90
        $region18: #{polla_gcn_forward.15} parent=11 // pred_check_branch
          %230 = sbr.rel (%p228) target = $region20
        $region19: #{polla_gcn_forward.15} parent=11 // pred_region
          %s232 = ssub.s32 16, 16
          %233 = vsyncadd [#allocation10], %s232
          %s235 = sshll.u32 [#allocation11], 4
          %s236 = int_to_ptr.vmem [resolvable:$true] %s235
          %238 = dma.hbm_to_vmem [thread:$0]  %s2, 16, %s236, [#allocation10]
        $region20: #{polla_gcn_forward.15} parent=11 // pred_fallthru
          _
        // Predicated region
        $region21: #{polla_gcn_forward.15} parent=11 // pred_check
          %p239 = pneg %p111
        $region22: #{polla_gcn_forward.15} parent=11 // pred_check_branch
          %241 = sbr.rel (%p239) target = $region24
        $region23: #{polla_gcn_forward.15} parent=11 // pred_region
          %s243 = ssub.s32 256, 256
          %244 = vsyncadd [#allocation13], %s243
          %s245 = sshll.u32 [#allocation12], 4
          %s246 = int_to_ptr.vmem [resolvable:$true] %s245
          %251 = dma.hbm_to_vmem [thread:$0]  %s3, 256, %s246, [#allocation13], 64, 64, 4
        $region24: #{polla_gcn_forward.15} parent=11 // pred_fallthru
          _
        // Predicated region
        $region25: #{polla_gcn_forward.15} parent=11 // pred_check
          %p252 = pneg %p132
        $region26: #{polla_gcn_forward.15} parent=11 // pred_check_branch
          %254 = sbr.rel (%p252) target = $region28
        $region27: #{polla_gcn_forward.15} parent=11 // pred_region
          %s256 = ssub.s32 256, 256
          %257 = vsyncadd [#allocation13], %s256
          %s258 = sshll.u32 [#allocation14], 4
          %s259 = int_to_ptr.vmem [resolvable:$true] %s258
          %264 = dma.hbm_to_vmem [thread:$0]  %s4, 256, %s259, [#allocation13], 64, 64, 4
        $region28: #{polla_gcn_forward.15} parent=11 // pred_fallthru
          _
        // Predicated region
        $region29: #{polla_gcn_forward.15} parent=11 // pred_check
          %p265 = pneg %p153
        $region30: #{polla_gcn_forward.15} parent=11 // pred_check_branch
          %267 = sbr.rel (%p265) target = $region32
        $region31: #{polla_gcn_forward.15} parent=11 // pred_region
          %s269 = ssub.s32 256, 256
          %270 = vsyncadd [#allocation16], %s269
          %s271 = sshll.u32 [#allocation15], 4
          %s272 = int_to_ptr.vmem [resolvable:$true] %s271
          %277 = dma.hbm_to_vmem [thread:$0]  %s5, 256, %s272, [#allocation16], 64, 64, 4
        $region32: #{polla_gcn_forward.15} parent=11 // pred_fallthru
          _
        // Predicated region
        $region33: #{polla_gcn_forward.15} parent=11 // pred_check
          %p278 = pneg %p174
        $region34: #{polla_gcn_forward.15} parent=11 // pred_check_branch
          %280 = sbr.rel (%p278) target = $region36
        $region35: #{polla_gcn_forward.15} parent=11 // pred_region
          %s282 = ssub.s32 32, 32
          %283 = vsyncadd [#allocation16], %s282
          %s285 = sshll.u32 [#allocation17], 4
          %s286 = int_to_ptr.vmem [resolvable:$true] %s285
          %288 = dma.hbm_to_vmem [thread:$0]  %s6, 32, %s286, [#allocation16]
        $region36: #{polla_gcn_forward.15} parent=11 // pred_fallthru
          _
      $region12: #{polla_gcn_forward.15} parent=5 // pred_fallthru
        _
      %p289 = scmp.lt.s32.totalorder %s22, 2
      // Predicated region
      $region37: #{polla_gcn_forward.15} parent=5 // pred_check
        %p290 = pneg %p289
      $region38: #{polla_gcn_forward.15} parent=5 // pred_check_branch
        %292 = sbr.rel (%p290) target = $region40
      $region39: #{polla_gcn_forward.15} parent=5 // pred_region
        // Predicated region
        $region41: #{polla_gcn_forward.15} parent=39 // pred_check
          %p293 = pneg %p42
        $region42: #{polla_gcn_forward.15} parent=39 // pred_check_branch
          %295 = sbr.rel (%p293) target = $region44
        $region43: #{polla_gcn_forward.15} parent=39 // pred_region
          %s296 = sand.u32 %s32, 1
          %s297 = scalar_lea.sflag [#allocation7], %s296
          %s298 = sand.u32 %s32, 1
          %s299 = smul.addr %s298, 64
          %s300 = scalar_lea.vmem [#allocation6], %s299
          %s302 = ssub.s32 1024, 1024
          %303 = vsyncadd %s297, %s302
          %s304 = smul.addr %s22, 16
          %s305 = smul.addr %s304, 64
          %s306 = scalar_lea.hbm %s0, %s305
          %s307 = sshll.u32 %s300, 4
          %s308 = int_to_ptr.vmem [resolvable:$true] %s307
          %313 = dma.hbm_to_vmem [thread:$0]  %s306, 1024, %s308, %s297, 64, 64, 4
        $region44: #{polla_gcn_forward.15} parent=39 // pred_fallthru
          _
      $region40: #{polla_gcn_forward.15} parent=5 // pred_fallthru
        _
      %p314 = scmp.le.s32.totalorder 1, %s22
      %p315 = scmp.lt.s32.totalorder %s22, 3
      %p316 = pnand %p314, %p315
      %p317 = pneg %p316
      // Predicated region
      $region45: #{polla_gcn_forward.15} parent=5 // pred_check
        _
      $region46: #{polla_gcn_forward.15} parent=5 // pred_check_branch
        %319 = sbr.rel (%p316) target = $region48
      $region47: #{polla_gcn_forward.15} parent=5 // pred_region
        %s320 = ssub.s32 %s22, 1
        %s321 = sand.u32 %s35, 1
        %s322 = scalar_lea.sflag [#allocation7], %s321
        %s323 = sand.u32 %s35, 1
        %s324 = smul.addr %s323, 64
        %s325 = scalar_lea.vmem [#allocation6], %s324
        // Predicated region
        $region49: #{polla_gcn_forward.15} parent=47 // pred_check
          %p326 = pneg %p48
        $region50: #{polla_gcn_forward.15} parent=47 // pred_check_branch
          %328 = sbr.rel (%p326) target = $region52
        $region51: #{polla_gcn_forward.15} parent=47 // pred_region
          %329 = dma.done %s322, 1024
        $region52: #{polla_gcn_forward.15} parent=47 // pred_fallthru
          _
        // Predicated region
        $region53: #{polla_gcn_forward.15} parent=47 // pred_check
          %p330 = pneg %p69
        $region54: #{polla_gcn_forward.15} parent=47 // pred_check_branch
          %332 = sbr.rel (%p330) target = $region56
        $region55: #{polla_gcn_forward.15} parent=47 // pred_region
          %333 = dma.done [#allocation10], 256
        $region56: #{polla_gcn_forward.15} parent=47 // pred_fallthru
          _
        // Predicated region
        $region57: #{polla_gcn_forward.15} parent=47 // pred_check
          %p334 = pneg %p90
        $region58: #{polla_gcn_forward.15} parent=47 // pred_check_branch
          %336 = sbr.rel (%p334) target = $region60
        $region59: #{polla_gcn_forward.15} parent=47 // pred_region
          %337 = dma.done [#allocation10], 16
        $region60: #{polla_gcn_forward.15} parent=47 // pred_fallthru
          _
        // Predicated region
        $region61: #{polla_gcn_forward.15} parent=47 // pred_check
          %p338 = pneg %p111
        $region62: #{polla_gcn_forward.15} parent=47 // pred_check_branch
          %340 = sbr.rel (%p338) target = $region64
        $region63: #{polla_gcn_forward.15} parent=47 // pred_region
          %341 = dma.done [#allocation13], 256
        $region64: #{polla_gcn_forward.15} parent=47 // pred_fallthru
          _
        // Predicated region
        $region65: #{polla_gcn_forward.15} parent=47 // pred_check
          %p342 = pneg %p132
        $region66: #{polla_gcn_forward.15} parent=47 // pred_check_branch
          %344 = sbr.rel (%p342) target = $region68
        $region67: #{polla_gcn_forward.15} parent=47 // pred_region
          %345 = dma.done [#allocation13], 256
        $region68: #{polla_gcn_forward.15} parent=47 // pred_fallthru
          _
        // Predicated region
        $region69: #{polla_gcn_forward.15} parent=47 // pred_check
          %p346 = pneg %p153
        $region70: #{polla_gcn_forward.15} parent=47 // pred_check_branch
          %348 = sbr.rel (%p346) target = $region72
        $region71: #{polla_gcn_forward.15} parent=47 // pred_region
          %349 = dma.done [#allocation16], 256
        $region72: #{polla_gcn_forward.15} parent=47 // pred_fallthru
          _
        // Predicated region
        $region73: #{polla_gcn_forward.15} parent=47 // pred_check
          %p350 = pneg %p174
        $region74: #{polla_gcn_forward.15} parent=47 // pred_check_branch
          %352 = sbr.rel (%p350) target = $region76
        $region75: #{polla_gcn_forward.15} parent=47 // pred_region
          %353 = dma.done [#allocation16], 32
        $region76: #{polla_gcn_forward.15} parent=47 // pred_fallthru
          _
        %s354 = sand.u32 %s35, 1
        %s355 = scalar_lea.sflag [#allocation7], %s354
        %s356 = sand.u32 %s35, 1
        %s357 = smul.addr %s356, 64
        %s358 = scalar_lea.vmem [#allocation6], %s357
        %p359 = pneg %p48
        %p360 = pneg %p45
        %p361 = pneg %p69
        %p362 = pneg %p66
        %p363 = pneg %p90
        %p364 = pneg %p87
        %p365 = pneg %p111
        %p366 = pneg %p108
        %p367 = pneg %p132
        %p368 = pneg %p129
        %p369 = pneg %p153
        %p370 = pneg %p150
        %p371 = pneg %p174
        %p372 = pneg %p171
        %p373 = pneg %p200
        %p374 = pneg %p197
        %s375 = sand.u32 %s187, 1
        %s376 = scalar_lea.sflag [#allocation8], %s375
        %s377 = sand.u32 %s187, 1
        %s378 = smul.addr %s377, 64
        %s379 = scalar_lea.vmem [#allocation18], %s378
        %vm381 = vcmask 261120
        %382 = vst.msk [vmem:[#allocation3] sm:$0xff] %vm381, 0.0
        %383 = vst.msk [vmem:[#allocation3 + $0x8] sm:$0xff] %vm381, 0.0
        %384 = vst.msk [vmem:[#allocation3 + $0x10] sm:$0xff] %vm381, 0.0
        %385 = vst.msk [vmem:[#allocation3 + $0x18] sm:$0xff] %vm381, 0.0
        %vm386 = vcmask 253952
        %387 = vst.msk [vmem:[#allocation5] sm:$0x1] %vm386, 0.0
        %v388 = vld [vmem:[%s325] sm:$0xf]
        %v389 = vld [vmem:[%s325 + $0x4] sm:$0xf]
        %v390 = vld [vmem:[%s325 + $0x8] sm:$0xf]
        %v391 = vld [vmem:[%s325 + $0xc] sm:$0xf]
        %v392 = vld [vmem:[%s325 + $0x10] sm:$0xf]
        %v393 = vld [vmem:[%s325 + $0x14] sm:$0xf]
        %v394 = vld [vmem:[%s325 + $0x18] sm:$0xf]
        %v395 = vld [vmem:[%s325 + $0x1c] sm:$0xf]
        %v396 = vld [vmem:[%s325 + $0x20] sm:$0xf]
        %v397 = vld [vmem:[%s325 + $0x24] sm:$0xf]
        %v398 = vld [vmem:[%s325 + $0x28] sm:$0xf]
        %v399 = vld [vmem:[%s325 + $0x2c] sm:$0xf]
        %v400 = vld [vmem:[%s325 + $0x30] sm:$0xf]
        %v401 = vld [vmem:[%s325 + $0x34] sm:$0xf]
        %v402 = vld [vmem:[%s325 + $0x38] sm:$0xf]
        %v403 = vld [vmem:[%s325 + $0x3c] sm:$0xf]
        %v404 = vld [vmem:[#allocation9] sm:$0xf]
        %v405 = vld [vmem:[#allocation9 + $0x4] sm:$0xf]
        %v406 = vld [vmem:[#allocation9 + $0x8] sm:$0xf]
        %v407 = vld [vmem:[#allocation9 + $0xc] sm:$0xf]
        %v408 = vld [vmem:[#allocation11] sm:$0x1]
        %v410 = vlaneseq
        %v411 = vshrl.u32 %v410, 7
        %v412 = vsub.s32 0, %v411
        %v413 = vrot.slane %v408, %v412
        %v431 = vunpack.c.l.b16 %v388
        %v432 = vunpack.c.l.b16 %v389
        %v433 = vunpack.c.l.b16 %v390
        %v434 = vunpack.c.l.b16 %v391
        %v435 = vunpack.c.l.b16 %v392
        %v436 = vunpack.c.l.b16 %v393
        %v437 = vunpack.c.l.b16 %v394
        %v438 = vunpack.c.l.b16 %v395
        %v439 = vunpack.c.l.b16 %v396
        %v440 = vunpack.c.l.b16 %v397
        %v441 = vunpack.c.l.b16 %v398
        %v442 = vunpack.c.l.b16 %v399
        %v443 = vunpack.c.l.b16 %v400
        %v444 = vunpack.c.l.b16 %v401
        %v445 = vunpack.c.l.b16 %v402
        %v446 = vunpack.c.l.b16 %v403
        %v447 = vpack.c.b16 %v432, %v431
        %v448 = vpack.c.b16 %v434, %v433
        %v449 = vpack.c.b16 %v436, %v435
        %v450 = vpack.c.b16 %v438, %v437
        %v451 = vpack.c.b16 %v440, %v439
        %v452 = vpack.c.b16 %v442, %v441
        %v453 = vpack.c.b16 %v444, %v443
        %v454 = vpack.c.b16 %v446, %v445
        %v459 = vunpack.c.l.b16 %v404
        %v460 = vunpack.c.l.b16 %v405
        %v461 = vunpack.c.l.b16 %v406
        %v462 = vunpack.c.l.b16 %v407
        %v463 = vpack.c.b16 %v460, %v459
        %v464 = vpack.c.b16 %v462, %v461
        %v468 = vsel %vm381, %v447, 0
        %v471 = vsel %vm381, %v448, 0
        %v474 = vsel %vm381, %v449, 0
        %v477 = vsel %vm381, %v450, 0
        %v480 = vsel %vm381, %v451, 0
        %v483 = vsel %vm381, %v452, 0
        %v486 = vsel %vm381, %v453, 0
        %v489 = vsel %vm381, %v454, 0
        %491 = vmatprep.subr.bf16.mxu0 0
        %492 = vmatpush1.bf16.msra.mxu0 %v463
        %493 = vmatprep.subr.bf16.mxu0 0
        %494 = vmatpush1.bf16.msra.mxu0 %v464
        %495 = vmatprep.subr.bf16.mxu0 0
        %496 = vmatpush1.bf16.msra.mxu0 0
        %497 = vmatprep.subr.bf16.mxu0 0
        %498 = vmatpush1.bf16.msra.mxu0 0
        %499 = vmatprep.subr.bf16.mxu0 0
        %500 = vmatpush1.bf16.msra.mxu0 0
        %501 = vmatprep.subr.bf16.mxu0 0
        %502 = vmatpush1.bf16.msra.mxu0 0
        %503 = vmatprep.subr.bf16.mxu0 0
        %504 = vmatpush1.bf16.msra.mxu0 0
        %505 = vmatprep.subr.bf16.mxu0 0
        %506 = vmatpush1.bf16.msra.mxu0 0
        %507 = vmatprep.subr.bf16.mxu0 0
        %508 = vmatpush1.bf16.msra.mxu0 0
        %509 = vmatprep.subr.bf16.mxu0 0
        %510 = vmatpush1.bf16.msra.mxu0 0
        %511 = vmatprep.subr.bf16.mxu0 0
        %512 = vmatpush1.bf16.msra.mxu0 0
        %513 = vmatprep.subr.bf16.mxu0 0
        %514 = vmatpush1.bf16.msra.mxu0 0
        %515 = vmatprep.subr.bf16.mxu0 0
        %516 = vmatpush1.bf16.msra.mxu0 0
        %517 = vmatprep.subr.bf16.mxu0 0
        %518 = vmatpush1.bf16.msra.mxu0 0
        %519 = vmatprep.subr.bf16.mxu0 0
        %520 = vmatpush1.bf16.msra.mxu0 0
        %521 = vmatprep.subr.bf16.mxu0 0
        %522 = vmatpush1.bf16.msra.mxu0 0
        %523 = vmatprep.mubr.bf16.mxu0 0
        %524 = vmatmul.mubr.bf16.gmra.mrb[0].mxu0 %v468
        %v525 = vpop.f32.mrb[0].mxu0
        %v526 = vadd.f32 %v413, %v525
        %v527 = vpop.f32.mrb[0].mxu0
        %v528 = vpop.f32.mrb[0].mxu0
        %v529 = vadd.f32 %v413, %v528
        %v530 = vpop.f32.mrb[0].mxu0
        %531 = vmatprep.mubr.bf16.mxu0 0
        %532 = vmatmul.mubr.bf16.gmra.mrb[0].mxu0 %v471
        %v533 = vpop.f32.mrb[0].mxu0
        %v534 = vadd.f32 %v413, %v533
        %v535 = vpop.f32.mrb[0].mxu0
        %v536 = vpop.f32.mrb[0].mxu0
        %v537 = vadd.f32 %v413, %v536
        %v538 = vpop.f32.mrb[0].mxu0
        %539 = vmatprep.mubr.bf16.mxu0 0
        %540 = vmatmul.mubr.bf16.gmra.mrb[0].mxu0 %v474
        %v541 = vpop.f32.mrb[0].mxu0
        %v542 = vadd.f32 %v413, %v541
        %v543 = vpop.f32.mrb[0].mxu0
        %v544 = vpop.f32.mrb[0].mxu0
        %v545 = vadd.f32 %v413, %v544
        %v546 = vpop.f32.mrb[0].mxu0
        %547 = vmatprep.mubr.bf16.mxu0 0
        %548 = vmatmul.mubr.bf16.gmra.mrb[0].mxu0 %v477
        %v549 = vpop.f32.mrb[0].mxu0
        %v550 = vadd.f32 %v413, %v549
        %v551 = vpop.f32.mrb[0].mxu0
        %v552 = vpop.f32.mrb[0].mxu0
        %v553 = vadd.f32 %v413, %v552
        %v554 = vpop.f32.mrb[0].mxu0
        %555 = vmatprep.mubr.bf16.mxu0 0
        %556 = vmatmul.mubr.bf16.gmra.mrb[0].mxu0 %v480
        %v557 = vpop.f32.mrb[0].mxu0
        %v558 = vadd.f32 %v413, %v557
        %v559 = vpop.f32.mrb[0].mxu0
        %v560 = vpop.f32.mrb[0].mxu0
        %v561 = vadd.f32 %v413, %v560
        %v562 = vpop.f32.mrb[0].mxu0
        %563 = vmatprep.mubr.bf16.mxu0 0
        %564 = vmatmul.mubr.bf16.gmra.mrb[0].mxu0 %v483
        %v565 = vpop.f32.mrb[0].mxu0
        %v566 = vadd.f32 %v413, %v565
        %v567 = vpop.f32.mrb[0].mxu0
        %v568 = vpop.f32.mrb[0].mxu0
        %v569 = vadd.f32 %v413, %v568
        %v570 = vpop.f32.mrb[0].mxu0
        %571 = vmatprep.mubr.bf16.mxu0 0
        %572 = vmatmul.mubr.bf16.gmra.mrb[0].mxu0 %v486
        %v573 = vpop.f32.mrb[0].mxu0
        %v574 = vadd.f32 %v413, %v573
        %v575 = vpop.f32.mrb[0].mxu0
        %v576 = vpop.f32.mrb[0].mxu0
        %v577 = vadd.f32 %v413, %v576
        %v578 = vpop.f32.mrb[0].mxu0
        %579 = vmatprep.mubr.bf16.mxu0 0
        %580 = vmatmul.mubr.bf16.gmra.mrb[0].mxu0 %v489
        %v581 = vpop.f32.mrb[0].mxu0
        %v582 = vadd.f32 %v413, %v581
        %v583 = vpop.f32.mrb[0].mxu0
        %v584 = vpop.f32.mrb[0].mxu0
        %v585 = vadd.f32 %v413, %v584
        %v586 = vpop.f32.mrb[0].mxu0
        %587 = vdwg.mxu0
        %vm588 = vcmp.gt.f32.partialorder %v526, 0.0
        %vm589 = vcmp.gt.f32.partialorder %v529, 0.0
        %vm590 = vcmp.gt.f32.partialorder %v534, 0.0
        %vm591 = vcmp.gt.f32.partialorder %v537, 0.0
        %vm592 = vcmp.gt.f32.partialorder %v542, 0.0
        %vm593 = vcmp.gt.f32.partialorder %v545, 0.0
        %vm594 = vcmp.gt.f32.partialorder %v550, 0.0
        %vm595 = vcmp.gt.f32.partialorder %v553, 0.0
        %vm596 = vcmp.gt.f32.partialorder %v558, 0.0
        %vm597 = vcmp.gt.f32.partialorder %v561, 0.0
        %vm598 = vcmp.gt.f32.partialorder %v566, 0.0
        %vm599 = vcmp.gt.f32.partialorder %v569, 0.0
        %vm600 = vcmp.gt.f32.partialorder %v574, 0.0
        %vm601 = vcmp.gt.f32.partialorder %v577, 0.0
        %vm602 = vcmp.gt.f32.partialorder %v582, 0.0
        %vm603 = vcmp.gt.f32.partialorder %v585, 0.0
        %v604 = vadd.f32 %v526, 1.0
        %v605 = vadd.f32 %v529, 1.0
        %v606 = vadd.f32 %v534, 1.0
        %v607 = vadd.f32 %v537, 1.0
        %v608 = vadd.f32 %v542, 1.0
        %v609 = vadd.f32 %v545, 1.0
        %v610 = vadd.f32 %v550, 1.0
        %v611 = vadd.f32 %v553, 1.0
        %v612 = vadd.f32 %v558, 1.0
        %v613 = vadd.f32 %v561, 1.0
        %v614 = vadd.f32 %v566, 1.0
        %v615 = vadd.f32 %v569, 1.0
        %v616 = vadd.f32 %v574, 1.0
        %v617 = vadd.f32 %v577, 1.0
        %v618 = vadd.f32 %v582, 1.0
        %v619 = vadd.f32 %v585, 1.0
        %v620 = vmul.f32 %v526, 1.442695
        %v621 = vpow.pop %v620
        %v622 = vmul.f32 %v529, 1.442695
        %v623 = vpow.pop %v622
        %v624 = vmul.f32 %v534, 1.442695
        %v625 = vpow.pop %v624
        %v626 = vmul.f32 %v537, 1.442695
        %v627 = vpow.pop %v626
        %v628 = vmul.f32 %v542, 1.442695
        %v629 = vpow.pop %v628
        %v630 = vmul.f32 %v545, 1.442695
        %v631 = vpow.pop %v630
        %v632 = vmul.f32 %v550, 1.442695
        %v633 = vpow.pop %v632
        %v634 = vmul.f32 %v553, 1.442695
        %v635 = vpow.pop %v634
        %v636 = vmul.f32 %v558, 1.442695
        %v637 = vpow.pop %v636
        %v638 = vmul.f32 %v561, 1.442695
        %v639 = vpow.pop %v638
        %v640 = vmul.f32 %v566, 1.442695
        %v641 = vpow.pop %v640
        %v642 = vmul.f32 %v569, 1.442695
        %v643 = vpow.pop %v642
        %v644 = vmul.f32 %v574, 1.442695
        %v645 = vpow.pop %v644
        %v646 = vmul.f32 %v577, 1.442695
        %v647 = vpow.pop %v646
        %v648 = vmul.f32 %v582, 1.442695
        %v649 = vpow.pop %v648
        %v650 = vmul.f32 %v585, 1.442695
        %v651 = vpow.pop %v650
        %v652 = vsel %vm588, %v604, %v621
        %v653 = vsel %vm589, %v605, %v623
        %v654 = vsel %vm590, %v606, %v625
        %v655 = vsel %vm591, %v607, %v627
        %v656 = vsel %vm592, %v608, %v629
        %v657 = vsel %vm593, %v609, %v631
        %v658 = vsel %vm594, %v610, %v633
        %v659 = vsel %vm595, %v611, %v635
        %v660 = vsel %vm596, %v612, %v637
        %v661 = vsel %vm597, %v613, %v639
        %v662 = vsel %vm598, %v614, %v641
        %v663 = vsel %vm599, %v615, %v643
        %v664 = vsel %vm600, %v616, %v645
        %v665 = vsel %vm601, %v617, %v647
        %v666 = vsel %vm602, %v618, %v649
        %v667 = vsel %vm603, %v619, %v651
        %v668 = vld [vmem:[#allocation3] sm:$0xff]
        %v669 = vld [vmem:[#allocation3 + $0x8] sm:$0xff]
        %v670 = vld [vmem:[#allocation3 + $0x10] sm:$0xff]
        %v671 = vld [vmem:[#allocation3 + $0x18] sm:$0xff]
        %v672 = vpack.c.bf16 %v653, %v652
        %v673 = vpack.c.bf16 %v655, %v654
        %v674 = vpack.c.bf16 %v657, %v656
        %v675 = vpack.c.bf16 %v659, %v658
        %v676 = vpack.c.bf16 %v661, %v660
        %v677 = vpack.c.bf16 %v663, %v662
        %v678 = vpack.c.bf16 %v665, %v664
        %v679 = vpack.c.bf16 %v667, %v666
        %v680 = vpack.c.bf16 %v529, %v526
        %v681 = vpack.c.bf16 %v537, %v534
        %v682 = vpack.c.bf16 %v545, %v542
        %v683 = vpack.c.bf16 %v553, %v550
        %v684 = vpack.c.bf16 %v561, %v558
        %v685 = vpack.c.bf16 %v569, %v566
        %v686 = vpack.c.bf16 %v577, %v574
        %v687 = vpack.c.bf16 %v585, %v582
        %696 = vrot.lane.b32.xlu0 %v672, 96
        %v697 = vpop.permute.xlu0 %696
        %698 = vrot.lane.b32.xlu0 %v673, 96
        %v699 = vpop.permute.xlu0 %698
        %700 = vrot.lane.b32.xlu0 %v674, 96
        %v701 = vpop.permute.xlu0 %700
        %702 = vrot.lane.b32.xlu0 %v675, 96
        %v703 = vpop.permute.xlu0 %702
        %704 = vrot.lane.b32.xlu0 %v676, 96
        %v705 = vpop.permute.xlu0 %704
        %706 = vrot.lane.b32.xlu0 %v677, 96
        %v707 = vpop.permute.xlu0 %706
        %708 = vrot.lane.b32.xlu0 %v678, 96
        %v709 = vpop.permute.xlu0 %708
        %710 = vrot.lane.b32.xlu0 %v679, 96
        %v711 = vpop.permute.xlu0 %710
        %720 = vxpose.xlu0.c.b16.start [1/8] %v697, 128
        %721 = vxpose.xlu0.c.b16.cont [2/8] %v699, 128
        %722 = vxpose.xlu0.c.b16.cont [3/8] %v701, 128
        %723 = vxpose.xlu0.c.b16.cont [4/8] %v703, 128
        %724 = vxpose.xlu0.c.b16.cont [5/8] %v705, 128
        %725 = vxpose.xlu0.c.b16.cont [6/8] %v707, 128
        %726 = vxpose.xlu0.c.b16.cont [7/8] %v709, 128
        %727 = vxpose.xlu0.c.b16.end [8/8] %v711, 128
        %v728 = vpop.trf.xlu0
        %v729 = vpop.trf.xlu0
        %v730 = vpop.trf.xlu0
        %v731 = vpop.trf.xlu0
        %v732 = vpop.trf.xlu0
        %v733 = vpop.trf.xlu0
        %v734 = vpop.trf.xlu0
        %v735 = vpop.trf.xlu0
        %744 = vrot.lane.b32.xlu0 %v680, 64
        %v745 = vpop.permute.xlu0 %744
        %746 = vrot.lane.b32.xlu0 %v681, 64
        %v747 = vpop.permute.xlu0 %746
        %748 = vrot.lane.b32.xlu0 %v682, 64
        %v749 = vpop.permute.xlu0 %748
        %750 = vrot.lane.b32.xlu0 %v683, 64
        %v751 = vpop.permute.xlu0 %750
        %752 = vrot.lane.b32.xlu0 %v684, 64
        %v753 = vpop.permute.xlu0 %752
        %754 = vrot.lane.b32.xlu0 %v685, 64
        %v755 = vpop.permute.xlu0 %754
        %756 = vrot.lane.b32.xlu0 %v686, 64
        %v757 = vpop.permute.xlu0 %756
        %758 = vrot.lane.b32.xlu0 %v687, 64
        %v759 = vpop.permute.xlu0 %758
        %768 = vmatprep.subr.bf16.mxu0 0
        %769 = vmatpush1.bf16.msra.mxu0 %v745
        %770 = vmatprep.subr.bf16.mxu0 0
        %771 = vmatpush1.bf16.msra.mxu0 %v747
        %772 = vmatprep.subr.bf16.mxu0 0
        %773 = vmatpush1.bf16.msra.mxu0 %v749
        %774 = vmatprep.subr.bf16.mxu0 0
        %775 = vmatpush1.bf16.msra.mxu0 %v751
        %776 = vmatprep.subr.bf16.mxu0 0
        %777 = vmatpush1.bf16.msra.mxu0 %v753
        %778 = vmatprep.subr.bf16.mxu0 0
        %779 = vmatpush1.bf16.msra.mxu0 %v755
        %780 = vmatprep.subr.bf16.mxu0 0
        %781 = vmatpush1.bf16.msra.mxu0 %v757
        %782 = vmatprep.subr.bf16.mxu0 0
        %783 = vmatpush1.bf16.msra.mxu0 %v759
        %784 = vmatprep.subr.bf16.mxu0 0
        %785 = vmatpush1.bf16.msra.mxu0 0
        %786 = vmatprep.subr.bf16.mxu0 0
        %787 = vmatpush1.bf16.msra.mxu0 0
        %788 = vmatprep.subr.bf16.mxu0 0
        %789 = vmatpush1.bf16.msra.mxu0 0
        %790 = vmatprep.subr.bf16.mxu0 0
        %791 = vmatpush1.bf16.msra.mxu0 0
        %792 = vmatprep.subr.bf16.mxu0 0
        %793 = vmatpush1.bf16.msra.mxu0 0
        %794 = vmatprep.subr.bf16.mxu0 0
        %795 = vmatpush1.bf16.msra.mxu0 0
        %796 = vmatprep.subr.bf16.mxu0 0
        %797 = vmatpush1.bf16.msra.mxu0 0
        %798 = vmatprep.subr.bf16.mxu0 0
        %799 = vmatpush1.bf16.msra.mxu0 0
        %800 = vmatprep.mubr.bf16.mxu0 0
        %801 = vmatmul.mubr.bf16.gmra.mrb[0].mxu0 %v728
        %v802 = vpop.f32.mrb[0].mxu0
        %v803 = vadd.f32 0.0, %v802
        %v804 = vpop.f32.mrb[0].mxu0
        %v805 = vpop.f32.mrb[0].mxu0
        %v806 = vadd.f32 0.0, %v805
        %v807 = vpop.f32.mrb[0].mxu0
        %808 = vmatprep.mubr.bf16.mxu0 0
        %809 = vmatmul.mubr.bf16.gmra.mrb[0].mxu0 %v729
        %v810 = vpop.f32.mrb[0].mxu0
        %v811 = vadd.f32 0.0, %v810
        %v812 = vpop.f32.mrb[0].mxu0
        %v813 = vpop.f32.mrb[0].mxu0
        %v814 = vadd.f32 0.0, %v813
        %v815 = vpop.f32.mrb[0].mxu0
        %816 = vdwg.mxu0
        %v817 = vadd.f32 %v668, %v803
        %v818 = vadd.f32 %v669, %v806
        %v819 = vadd.f32 %v670, %v811
        %v820 = vadd.f32 %v671, %v814
        %821 = vst.msk [vmem:[#allocation3] sm:$0xff] %vm381, %v817
        %822 = vst.msk [vmem:[#allocation3 + $0x8] sm:$0xff] %vm381, %v818
        %823 = vst.msk [vmem:[#allocation3 + $0x10] sm:$0xff] %vm381, %v819
        %824 = vst.msk [vmem:[#allocation3 + $0x18] sm:$0xff] %vm381, %v820
        %v825 = vld [vmem:[#allocation5] sm:$0x1]
        %vm826 = vcmask 523520
        %v827 = vsel %vm826, %v652, 0.0
        %v828 = vsel %vm826, %v653, 0.0
        %v829 = vadd.f32 %v827, %v828
        %v830 = vsel %vm826, %v654, 0.0
        %v831 = vadd.f32 %v829, %v830
        %v832 = vsel %vm826, %v655, 0.0
        %v833 = vadd.f32 %v831, %v832
        %v834 = vsel %vm826, %v656, 0.0
        %v835 = vadd.f32 %v833, %v834
        %v836 = vsel %vm826, %v657, 0.0
        %v837 = vadd.f32 %v835, %v836
        %v838 = vsel %vm826, %v658, 0.0
        %v839 = vadd.f32 %v837, %v838
        %v840 = vsel %vm826, %v659, 0.0
        %v841 = vadd.f32 %v839, %v840
        %v842 = vsel %vm826, %v660, 0.0
        %v843 = vadd.f32 %v841, %v842
        %v844 = vsel %vm826, %v661, 0.0
        %v845 = vadd.f32 %v843, %v844
        %v846 = vsel %vm826, %v662, 0.0
        %v847 = vadd.f32 %v845, %v846
        %v848 = vsel %vm826, %v663, 0.0
        %v849 = vadd.f32 %v847, %v848
        %v850 = vsel %vm826, %v664, 0.0
        %v851 = vadd.f32 %v849, %v850
        %v852 = vsel %vm826, %v665, 0.0
        %v853 = vadd.f32 %v851, %v852
        %v854 = vsel %vm826, %v666, 0.0
        %v855 = vadd.f32 %v853, %v854
        %v856 = vsel %vm826, %v667, 0.0
        %v857 = vadd.f32 %v855, %v856
        %v858 = vrot.slane %v857, 4
        %v859 = vadd.f32 %v857, %v858
        %v860 = vrot.slane %v859, 2
        %v861 = vadd.f32 %v859, %v860
        %v862 = vrot.slane %v861, 1
        %v863 = vadd.f32 %v861, %v862
        %v866 = vunpack.c.l.s4 1966171168
        %v867 = vunpack.c.0.s8 %v866
        %v868 = vlaneseq
        %v869 = vshrl.u32 %v868, 7
        %v870 = vsub.s32 %v867, %v869
        %v871 = vrot.slane %v863, %v870
        %v873 = vunpack.c.l.s4 1966171168
        %v874 = vunpack.c.0.s8 %v873
        %v875 = vlaneseq
        %v876 = vshrl.u32 %v875, 7
        %v877 = vsub.s32 %v874, %v876
        %v878 = vrot.slane %v871, %v877
        %879 = vrot.lane.b32.xlu0 %v878, 96
        %v880 = vpop.permute.xlu0 %879
        %v882 = vadd.f32 %v825, %v880
        %883 = vst.msk [vmem:[#allocation5] sm:$0x1] %vm386, %v882
        %884 = vst.msk [vmem:[#allocation2] sm:$0xff] %vm381, %v672
        %885 = vst.msk [vmem:[#allocation2 + $0x8] sm:$0xff] %vm381, %v673
        %886 = vst.msk [vmem:[#allocation2 + $0x10] sm:$0xff] %vm381, %v674
        %887 = vst.msk [vmem:[#allocation2 + $0x18] sm:$0xff] %vm381, %v675
        %888 = vst.msk [vmem:[#allocation2 + $0x20] sm:$0xff] %vm381, %v676
        %889 = vst.msk [vmem:[#allocation2 + $0x28] sm:$0xff] %vm381, %v677
        %890 = vst.msk [vmem:[#allocation2 + $0x30] sm:$0xff] %vm381, %v678
        %891 = vst.msk [vmem:[#allocation2 + $0x38] sm:$0xff] %vm381, %v679
        %v892 = vld [vmem:[#allocation3] sm:$0xff]
        %v893 = vld [vmem:[#allocation3 + $0x8] sm:$0xff]
        %v894 = vld [vmem:[#allocation3 + $0x10] sm:$0xff]
        %v895 = vld [vmem:[#allocation3 + $0x18] sm:$0xff]
        %v896 = vld [vmem:[#allocation14] sm:$0xf]
        %v897 = vld [vmem:[#allocation14 + $0x4] sm:$0xf]
        %v898 = vld [vmem:[#allocation14 + $0x8] sm:$0xf]
        %v899 = vld [vmem:[#allocation14 + $0xc] sm:$0xf]
        %v900 = vunpack.c.l.bf16 %v896
        %v901 = vunpack.c.l.bf16 %v897
        %v902 = vunpack.c.l.bf16 %v898
        %v903 = vunpack.c.l.bf16 %v899
        %v904 = vmul.f32 %v892, %v900
        %v905 = vmul.f32 %v893, %v901
        %v906 = vmul.f32 %v894, %v902
        %v907 = vmul.f32 %v895, %v903
        %v908 = vpack.c.bf16 %v905, %v904
        %v909 = vpack.c.bf16 %v907, %v906
        %910 = vst.msk [vmem:[#allocation4] sm:$0xff] %vm381, %v908
        %911 = vst.msk [vmem:[#allocation4 + $0x8] sm:$0xff] %vm381, %v909
        %v912 = vld [vmem:[#allocation2] sm:$0xff]
        %v913 = vld [vmem:[#allocation2 + $0x8] sm:$0xff]
        %v914 = vld [vmem:[#allocation2 + $0x10] sm:$0xff]
        %v915 = vld [vmem:[#allocation2 + $0x18] sm:$0xff]
        %v916 = vld [vmem:[#allocation2 + $0x20] sm:$0xff]
        %v917 = vld [vmem:[#allocation2 + $0x28] sm:$0xff]
        %v918 = vld [vmem:[#allocation2 + $0x30] sm:$0xff]
        %v919 = vld [vmem:[#allocation2 + $0x38] sm:$0xff]
        %v920 = vld [vmem:[#allocation4] sm:$0xff]
        %v921 = vld [vmem:[#allocation4 + $0x8] sm:$0xff]
        %v923 = vsel %vm381, %v912, 0
        %v926 = vsel %vm381, %v913, 0
        %v929 = vsel %vm381, %v914, 0
        %v932 = vsel %vm381, %v915, 0
        %v935 = vsel %vm381, %v916, 0
        %v938 = vsel %vm381, %v917, 0
        %v941 = vsel %vm381, %v918, 0
        %v944 = vsel %vm381, %v919, 0
        %946 = vmatprep.subr.bf16.mxu0 0
        %947 = vmatpush1.bf16.msra.mxu0 %v920
        %948 = vmatprep.subr.bf16.mxu0 0
        %949 = vmatpush1.bf16.msra.mxu0 %v921
        %950 = vmatprep.subr.bf16.mxu0 0
        %951 = vmatpush1.bf16.msra.mxu0 0
        %952 = vmatprep.subr.bf16.mxu0 0
        %953 = vmatpush1.bf16.msra.mxu0 0
        %954 = vmatprep.subr.bf16.mxu0 0
        %955 = vmatpush1.bf16.msra.mxu0 0
        %956 = vmatprep.subr.bf16.mxu0 0
        %957 = vmatpush1.bf16.msra.mxu0 0
        %958 = vmatprep.subr.bf16.mxu0 0
        %959 = vmatpush1.bf16.msra.mxu0 0
        %960 = vmatprep.subr.bf16.mxu0 0
        %961 = vmatpush1.bf16.msra.mxu0 0
        %962 = vmatprep.subr.bf16.mxu0 0
        %963 = vmatpush1.bf16.msra.mxu0 0
        %964 = vmatprep.subr.bf16.mxu0 0
        %965 = vmatpush1.bf16.msra.mxu0 0
        %966 = vmatprep.subr.bf16.mxu0 0
        %967 = vmatpush1.bf16.msra.mxu0 0
        %968 = vmatprep.subr.bf16.mxu0 0
        %969 = vmatpush1.bf16.msra.mxu0 0
        %970 = vmatprep.subr.bf16.mxu0 0
        %971 = vmatpush1.bf16.msra.mxu0 0
        %972 = vmatprep.subr.bf16.mxu0 0
        %973 = vmatpush1.bf16.msra.mxu0 0
        %974 = vmatprep.subr.bf16.mxu0 0
        %975 = vmatpush1.bf16.msra.mxu0 0
        %976 = vmatprep.subr.bf16.mxu0 0
        %977 = vmatpush1.bf16.msra.mxu0 0
        %978 = vmatprep.mubr.bf16.mxu0 0
        %979 = vmatmul.mubr.bf16.gmra.mrb[0].mxu0 %v923
        %v980 = vpop.f32.mrb[0].mxu0
        %v981 = vadd.f32 0.0, %v980
        %v982 = vpop.f32.mrb[0].mxu0
        %v983 = vpop.f32.mrb[0].mxu0
        %v984 = vadd.f32 0.0, %v983
        %v985 = vpop.f32.mrb[0].mxu0
        %986 = vmatprep.mubr.bf16.mxu0 0
        %987 = vmatmul.mubr.bf16.gmra.mrb[0].mxu0 %v926
        %v988 = vpop.f32.mrb[0].mxu0
        %v989 = vadd.f32 0.0, %v988
        %v990 = vpop.f32.mrb[0].mxu0
        %v991 = vpop.f32.mrb[0].mxu0
        %v992 = vadd.f32 0.0, %v991
        %v993 = vpop.f32.mrb[0].mxu0
        %994 = vmatprep.mubr.bf16.mxu0 0
        %995 = vmatmul.mubr.bf16.gmra.mrb[0].mxu0 %v929
        %v996 = vpop.f32.mrb[0].mxu0
        %v997 = vadd.f32 0.0, %v996
        %v998 = vpop.f32.mrb[0].mxu0
        %v999 = vpop.f32.mrb[0].mxu0
        %v1000 = vadd.f32 0.0, %v999
        %v1001 = vpop.f32.mrb[0].mxu0
        %1002 = vmatprep.mubr.bf16.mxu0 0
        %1003 = vmatmul.mubr.bf16.gmra.mrb[0].mxu0 %v932
        %v1004 = vpop.f32.mrb[0].mxu0
        %v1005 = vadd.f32 0.0, %v1004
        %v1006 = vpop.f32.mrb[0].mxu0
        %v1007 = vpop.f32.mrb[0].mxu0
        %v1008 = vadd.f32 0.0, %v1007
        %v1009 = vpop.f32.mrb[0].mxu0
        %1010 = vmatprep.mubr.bf16.mxu0 0
        %1011 = vmatmul.mubr.bf16.gmra.mrb[0].mxu0 %v935
        %v1012 = vpop.f32.mrb[0].mxu0
        %v1013 = vadd.f32 0.0, %v1012
        %v1014 = vpop.f32.mrb[0].mxu0
        %v1015 = vpop.f32.mrb[0].mxu0
        %v1016 = vadd.f32 0.0, %v1015
        %v1017 = vpop.f32.mrb[0].mxu0
        %1018 = vmatprep.mubr.bf16.mxu0 0
        %1019 = vmatmul.mubr.bf16.gmra.mrb[0].mxu0 %v938
        %v1020 = vpop.f32.mrb[0].mxu0
        %v1021 = vadd.f32 0.0, %v1020
        %v1022 = vpop.f32.mrb[0].mxu0
        %v1023 = vpop.f32.mrb[0].mxu0
        %v1024 = vadd.f32 0.0, %v1023
        %v1025 = vpop.f32.mrb[0].mxu0
        %1026 = vmatprep.mubr.bf16.mxu0 0
        %1027 = vmatmul.mubr.bf16.gmra.mrb[0].mxu0 %v941
        %v1028 = vpop.f32.mrb[0].mxu0
        %v1029 = vadd.f32 0.0, %v1028
        %v1030 = vpop.f32.mrb[0].mxu0
        %v1031 = vpop.f32.mrb[0].mxu0
        %v1032 = vadd.f32 0.0, %v1031
        %v1033 = vpop.f32.mrb[0].mxu0
        %1034 = vmatprep.mubr.bf16.mxu0 0
        %1035 = vmatmul.mubr.bf16.gmra.mrb[0].mxu0 %v944
        %v1036 = vpop.f32.mrb[0].mxu0
        %v1037 = vadd.f32 0.0, %v1036
        %v1038 = vpop.f32.mrb[0].mxu0
        %v1039 = vpop.f32.mrb[0].mxu0
        %v1040 = vadd.f32 0.0, %v1039
        %v1041 = vpop.f32.mrb[0].mxu0
        %1042 = vdwg.mxu0
        %v1043 = vunpack.c.l.bf16 %v912
        %v1044 = vunpack.c.h.bf16 %v912
        %v1045 = vunpack.c.l.bf16 %v913
        %v1046 = vunpack.c.h.bf16 %v913
        %v1047 = vunpack.c.l.bf16 %v914
        %v1048 = vunpack.c.h.bf16 %v914
        %v1049 = vunpack.c.l.bf16 %v915
        %v1050 = vunpack.c.h.bf16 %v915
        %v1051 = vunpack.c.l.bf16 %v916
        %v1052 = vunpack.c.h.bf16 %v916
        %v1053 = vunpack.c.l.bf16 %v917
        %v1054 = vunpack.c.h.bf16 %v917
        %v1055 = vunpack.c.l.bf16 %v918
        %v1056 = vunpack.c.h.bf16 %v918
        %v1057 = vunpack.c.l.bf16 %v919
        %v1058 = vunpack.c.h.bf16 %v919
        %v1059 = vld [vmem:[#allocation5] sm:$0x1]
        %v1061 = vlaneseq
        %v1062 = vshrl.u32 %v1061, 7
        %v1063 = vsub.s32 0, %v1062
        %v1064 = vrot.slane %v1059, %v1063
        %v1066 = vmul.f32 %v1043, %v1064
        %v1067 = vmul.f32 %v1044, %v1064
        %v1068 = vmul.f32 %v1045, %v1064
        %v1069 = vmul.f32 %v1046, %v1064
        %v1070 = vmul.f32 %v1047, %v1064
        %v1071 = vmul.f32 %v1048, %v1064
        %v1072 = vmul.f32 %v1049, %v1064
        %v1073 = vmul.f32 %v1050, %v1064
        %v1074 = vmul.f32 %v1051, %v1064
        %v1075 = vmul.f32 %v1052, %v1064
        %v1076 = vmul.f32 %v1053, %v1064
        %v1077 = vmul.f32 %v1054, %v1064
        %v1078 = vmul.f32 %v1055, %v1064
        %v1079 = vmul.f32 %v1056, %v1064
        %v1080 = vmul.f32 %v1057, %v1064
        %v1081 = vmul.f32 %v1058, %v1064
        %v1082 = vpack.c.bf16 %v1067, %v1066
        %v1083 = vpack.c.bf16 %v1069, %v1068
        %v1084 = vpack.c.bf16 %v1071, %v1070
        %v1085 = vpack.c.bf16 %v1073, %v1072
        %v1086 = vpack.c.bf16 %v1075, %v1074
        %v1087 = vpack.c.bf16 %v1077, %v1076
        %v1088 = vpack.c.bf16 %v1079, %v1078
        %v1089 = vpack.c.bf16 %v1081, %v1080
        %v1090 = vld [vmem:[#allocation15] sm:$0xf]
        %v1091 = vld [vmem:[#allocation15 + $0x4] sm:$0xf]
        %v1092 = vld [vmem:[#allocation15 + $0x8] sm:$0xf]
        %v1093 = vld [vmem:[#allocation15 + $0xc] sm:$0xf]
        %v1098 = vunpack.c.l.b16 %v1090
        %v1099 = vunpack.c.l.b16 %v1091
        %v1100 = vunpack.c.l.b16 %v1092
        %v1101 = vunpack.c.l.b16 %v1093
        %v1102 = vpack.c.b16 %v1099, %v1098
        %v1103 = vpack.c.b16 %v1101, %v1100
        %v1107 = vsel %vm381, %v1082, 0
        %v1110 = vsel %vm381, %v1083, 0
        %v1113 = vsel %vm381, %v1084, 0
        %v1116 = vsel %vm381, %v1085, 0
        %v1119 = vsel %vm381, %v1086, 0
        %v1122 = vsel %vm381, %v1087, 0
        %v1125 = vsel %vm381, %v1088, 0
        %v1128 = vsel %vm381, %v1089, 0
        %1130 = vmatprep.subr.bf16.mxu0 0
        %1131 = vmatpush1.bf16.msra.mxu0 %v1102
        %1132 = vmatprep.subr.bf16.mxu0 0
        %1133 = vmatpush1.bf16.msra.mxu0 %v1103
        %1134 = vmatprep.subr.bf16.mxu0 0
        %1135 = vmatpush1.bf16.msra.mxu0 0
        %1136 = vmatprep.subr.bf16.mxu0 0
        %1137 = vmatpush1.bf16.msra.mxu0 0
        %1138 = vmatprep.subr.bf16.mxu0 0
        %1139 = vmatpush1.bf16.msra.mxu0 0
        %1140 = vmatprep.subr.bf16.mxu0 0
        %1141 = vmatpush1.bf16.msra.mxu0 0
        %1142 = vmatprep.subr.bf16.mxu0 0
        %1143 = vmatpush1.bf16.msra.mxu0 0
        %1144 = vmatprep.subr.bf16.mxu0 0
        %1145 = vmatpush1.bf16.msra.mxu0 0
        %1146 = vmatprep.subr.bf16.mxu0 0
        %1147 = vmatpush1.bf16.msra.mxu0 0
        %1148 = vmatprep.subr.bf16.mxu0 0
        %1149 = vmatpush1.bf16.msra.mxu0 0
        %1150 = vmatprep.subr.bf16.mxu0 0
        %1151 = vmatpush1.bf16.msra.mxu0 0
        %1152 = vmatprep.subr.bf16.mxu0 0
        %1153 = vmatpush1.bf16.msra.mxu0 0
        %1154 = vmatprep.subr.bf16.mxu0 0
        %1155 = vmatpush1.bf16.msra.mxu0 0
        %1156 = vmatprep.subr.bf16.mxu0 0
        %1157 = vmatpush1.bf16.msra.mxu0 0
        %1158 = vmatprep.subr.bf16.mxu0 0
        %1159 = vmatpush1.bf16.msra.mxu0 0
        %1160 = vmatprep.subr.bf16.mxu0 0
        %1161 = vmatpush1.bf16.msra.mxu0 0
        %1162 = vmatprep.mubr.bf16.mxu0 0
        %1163 = vmatmul.mubr.bf16.gmra.mrb[0].mxu0 %v1107
        %v1164 = vpop.f32.mrb[0].mxu0
        %v1165 = vadd.f32 0.0, %v1164
        %v1166 = vpop.f32.mrb[0].mxu0
        %v1167 = vpop.f32.mrb[0].mxu0
        %v1168 = vadd.f32 0.0, %v1167
        %v1169 = vpop.f32.mrb[0].mxu0
        %1170 = vmatprep.mubr.bf16.mxu0 0
        %1171 = vmatmul.mubr.bf16.gmra.mrb[0].mxu0 %v1110
        %v1172 = vpop.f32.mrb[0].mxu0
        %v1173 = vadd.f32 0.0, %v1172
        %v1174 = vpop.f32.mrb[0].mxu0
        %v1175 = vpop.f32.mrb[0].mxu0
        %v1176 = vadd.f32 0.0, %v1175
        %v1177 = vpop.f32.mrb[0].mxu0
        %1178 = vmatprep.mubr.bf16.mxu0 0
        %1179 = vmatmul.mubr.bf16.gmra.mrb[0].mxu0 %v1113
        %v1180 = vpop.f32.mrb[0].mxu0
        %v1181 = vadd.f32 0.0, %v1180
        %v1182 = vpop.f32.mrb[0].mxu0
        %v1183 = vpop.f32.mrb[0].mxu0
        %v1184 = vadd.f32 0.0, %v1183
        %v1185 = vpop.f32.mrb[0].mxu0
        %1186 = vmatprep.mubr.bf16.mxu0 0
        %1187 = vmatmul.mubr.bf16.gmra.mrb[0].mxu0 %v1116
        %v1188 = vpop.f32.mrb[0].mxu0
        %v1189 = vadd.f32 0.0, %v1188
        %v1190 = vpop.f32.mrb[0].mxu0
        %v1191 = vpop.f32.mrb[0].mxu0
        %v1192 = vadd.f32 0.0, %v1191
        %v1193 = vpop.f32.mrb[0].mxu0
        %1194 = vmatprep.mubr.bf16.mxu0 0
        %1195 = vmatmul.mubr.bf16.gmra.mrb[0].mxu0 %v1119
        %v1196 = vpop.f32.mrb[0].mxu0
        %v1197 = vadd.f32 0.0, %v1196
        %v1198 = vpop.f32.mrb[0].mxu0
        %v1199 = vpop.f32.mrb[0].mxu0
        %v1200 = vadd.f32 0.0, %v1199
        %v1201 = vpop.f32.mrb[0].mxu0
        %1202 = vmatprep.mubr.bf16.mxu0 0
        %1203 = vmatmul.mubr.bf16.gmra.mrb[0].mxu0 %v1122
        %v1204 = vpop.f32.mrb[0].mxu0
        %v1205 = vadd.f32 0.0, %v1204
        %v1206 = vpop.f32.mrb[0].mxu0
        %v1207 = vpop.f32.mrb[0].mxu0
        %v1208 = vadd.f32 0.0, %v1207
        %v1209 = vpop.f32.mrb[0].mxu0
        %1210 = vmatprep.mubr.bf16.mxu0 0
        %1211 = vmatmul.mubr.bf16.gmra.mrb[0].mxu0 %v1125
        %v1212 = vpop.f32.mrb[0].mxu0
        %v1213 = vadd.f32 0.0, %v1212
        %v1214 = vpop.f32.mrb[0].mxu0
        %v1215 = vpop.f32.mrb[0].mxu0
        %v1216 = vadd.f32 0.0, %v1215
        %v1217 = vpop.f32.mrb[0].mxu0
        %1218 = vmatprep.mubr.bf16.mxu0 0
        %1219 = vmatmul.mubr.bf16.gmra.mrb[0].mxu0 %v1128
        %v1220 = vpop.f32.mrb[0].mxu0
        %v1221 = vadd.f32 0.0, %v1220
        %v1222 = vpop.f32.mrb[0].mxu0
        %v1223 = vpop.f32.mrb[0].mxu0
        %v1224 = vadd.f32 0.0, %v1223
        %v1225 = vpop.f32.mrb[0].mxu0
        %1226 = vdwg.mxu0
        %v1227 = vpack.c.bf16 %v1168, %v1165
        %v1228 = vpack.c.bf16 %v1176, %v1173
        %v1229 = vpack.c.bf16 %v1184, %v1181
        %v1230 = vpack.c.bf16 %v1192, %v1189
        %v1231 = vpack.c.bf16 %v1200, %v1197
        %v1232 = vpack.c.bf16 %v1208, %v1205
        %v1233 = vpack.c.bf16 %v1216, %v1213
        %v1234 = vpack.c.bf16 %v1224, %v1221
        %v1235 = vld [vmem:[#allocation17] sm:$0x3]
        %vm1236 = vcmask 31744
        %v1238 = vsel %vm1236, %v1227, 0
        %v1241 = vsel %vm1236, %v1228, 0
        %v1244 = vsel %vm1236, %v1229, 0
        %v1247 = vsel %vm1236, %v1230, 0
        %v1250 = vsel %vm1236, %v1231, 0
        %v1253 = vsel %vm1236, %v1232, 0
        %v1256 = vsel %vm1236, %v1233, 0
        %v1259 = vsel %vm1236, %v1234, 0
        %vm1261 = vcmask 1041408
        %v1263 = vsel %vm1261, %v1235, 0
        %1265 = vmatprep.subr.bf16.mxu0 0
        %1266 = vmatpush1.bf16.msra.mxu0 %v1263
        %1267 = vmatprep.subr.bf16.mxu0 0
        %1268 = vmatpush1.bf16.msra.mxu0 0
        %1269 = vmatprep.subr.bf16.mxu0 0
        %1270 = vmatpush1.bf16.msra.mxu0 0
        %1271 = vmatprep.subr.bf16.mxu0 0
        %1272 = vmatpush1.bf16.msra.mxu0 0
        %1273 = vmatprep.subr.bf16.mxu0 0
        %1274 = vmatpush1.bf16.msra.mxu0 0
        %1275 = vmatprep.subr.bf16.mxu0 0
        %1276 = vmatpush1.bf16.msra.mxu0 0
        %1277 = vmatprep.subr.bf16.mxu0 0
        %1278 = vmatpush1.bf16.msra.mxu0 0
        %1279 = vmatprep.subr.bf16.mxu0 0
        %1280 = vmatpush1.bf16.msra.mxu0 0
        %1281 = vmatprep.subr.bf16.mxu0 0
        %1282 = vmatpush1.bf16.msra.mxu0 0
        %1283 = vmatprep.subr.bf16.mxu0 0
        %1284 = vmatpush1.bf16.msra.mxu0 0
        %1285 = vmatprep.subr.bf16.mxu0 0
        %1286 = vmatpush1.bf16.msra.mxu0 0
        %1287 = vmatprep.subr.bf16.mxu0 0
        %1288 = vmatpush1.bf16.msra.mxu0 0
        %1289 = vmatprep.subr.bf16.mxu0 0
        %1290 = vmatpush1.bf16.msra.mxu0 0
        %1291 = vmatprep.subr.bf16.mxu0 0
        %1292 = vmatpush1.bf16.msra.mxu0 0
        %1293 = vmatprep.subr.bf16.mxu0 0
        %1294 = vmatpush1.bf16.msra.mxu0 0
        %1295 = vmatprep.subr.bf16.mxu0 0
        %1296 = vmatpush1.bf16.msra.mxu0 0
        %1297 = vmatprep.mubr.bf16.mxu0 0
        %1298 = vmatmul.mubr.bf16.gmra.mrb[0].mxu0 %v1238
        %v1299 = vpop.f32.mrb[0].mxu0
        %v1300 = vadd.f32 1e-06, %v1299
        %v1301 = vpop.f32.mrb[0].mxu0
        %v1302 = vpop.f32.mrb[0].mxu0
        %v1303 = vadd.f32 1e-06, %v1302
        %v1304 = vpop.f32.mrb[0].mxu0
        %1305 = vmatprep.mubr.bf16.mxu0 0
        %1306 = vmatmul.mubr.bf16.gmra.mrb[0].mxu0 %v1241
        %v1307 = vpop.f32.mrb[0].mxu0
        %v1308 = vadd.f32 1e-06, %v1307
        %v1309 = vpop.f32.mrb[0].mxu0
        %v1310 = vpop.f32.mrb[0].mxu0
        %v1311 = vadd.f32 1e-06, %v1310
        %v1312 = vpop.f32.mrb[0].mxu0
        %1313 = vmatprep.mubr.bf16.mxu0 0
        %1314 = vmatmul.mubr.bf16.gmra.mrb[0].mxu0 %v1244
        %v1315 = vpop.f32.mrb[0].mxu0
        %v1316 = vadd.f32 1e-06, %v1315
        %v1317 = vpop.f32.mrb[0].mxu0
        %v1318 = vpop.f32.mrb[0].mxu0
        %v1319 = vadd.f32 1e-06, %v1318
        %v1320 = vpop.f32.mrb[0].mxu0
        %1321 = vmatprep.mubr.bf16.mxu0 0
        %1322 = vmatmul.mubr.bf16.gmra.mrb[0].mxu0 %v1247
        %v1323 = vpop.f32.mrb[0].mxu0
        %v1324 = vadd.f32 1e-06, %v1323
        %v1325 = vpop.f32.mrb[0].mxu0
        %v1326 = vpop.f32.mrb[0].mxu0
        %v1327 = vadd.f32 1e-06, %v1326
        %v1328 = vpop.f32.mrb[0].mxu0
        %1329 = vmatprep.mubr.bf16.mxu0 0
        %1330 = vmatmul.mubr.bf16.gmra.mrb[0].mxu0 %v1250
        %v1331 = vpop.f32.mrb[0].mxu0
        %v1332 = vadd.f32 1e-06, %v1331
        %v1333 = vpop.f32.mrb[0].mxu0
        %v1334 = vpop.f32.mrb[0].mxu0
        %v1335 = vadd.f32 1e-06, %v1334
        %v1336 = vpop.f32.mrb[0].mxu0
        %1337 = vmatprep.mubr.bf16.mxu0 0
        %1338 = vmatmul.mubr.bf16.gmra.mrb[0].mxu0 %v1253
        %v1339 = vpop.f32.mrb[0].mxu0
        %v1340 = vadd.f32 1e-06, %v1339
        %v1341 = vpop.f32.mrb[0].mxu0
        %v1342 = vpop.f32.mrb[0].mxu0
        %v1343 = vadd.f32 1e-06, %v1342
        %v1344 = vpop.f32.mrb[0].mxu0
        %1345 = vmatprep.mubr.bf16.mxu0 0
        %1346 = vmatmul.mubr.bf16.gmra.mrb[0].mxu0 %v1256
        %v1347 = vpop.f32.mrb[0].mxu0
        %v1348 = vadd.f32 1e-06, %v1347
        %v1349 = vpop.f32.mrb[0].mxu0
        %v1350 = vpop.f32.mrb[0].mxu0
        %v1351 = vadd.f32 1e-06, %v1350
        %v1352 = vpop.f32.mrb[0].mxu0
        %1353 = vmatprep.mubr.bf16.mxu0 0
        %1354 = vmatmul.mubr.bf16.gmra.mrb[0].mxu0 %v1259
        %v1355 = vpop.f32.mrb[0].mxu0
        %v1356 = vadd.f32 1e-06, %v1355
        %v1357 = vpop.f32.mrb[0].mxu0
        %v1358 = vpop.f32.mrb[0].mxu0
        %v1359 = vadd.f32 1e-06, %v1358
        %v1360 = vpop.f32.mrb[0].mxu0
        %1361 = vdwg.mxu0
        %v1362 = vrcp.pop %v1300
        %v1363 = vrcp.pop %v1303
        %v1364 = vrcp.pop %v1308
        %v1365 = vrcp.pop %v1311
        %v1366 = vrcp.pop %v1316
        %v1367 = vrcp.pop %v1319
        %v1368 = vrcp.pop %v1324
        %v1369 = vrcp.pop %v1327
        %v1370 = vrcp.pop %v1332
        %v1371 = vrcp.pop %v1335
        %v1372 = vrcp.pop %v1340
        %v1373 = vrcp.pop %v1343
        %v1374 = vrcp.pop %v1348
        %v1375 = vrcp.pop %v1351
        %v1376 = vrcp.pop %v1356
        %v1377 = vrcp.pop %v1359
        %v1378 = vmul.f32 %v981, %v1362
        %v1379 = vmul.f32 %v984, %v1363
        %v1380 = vmul.f32 %v989, %v1364
        %v1381 = vmul.f32 %v992, %v1365
        %v1382 = vmul.f32 %v997, %v1366
        %v1383 = vmul.f32 %v1000, %v1367
        %v1384 = vmul.f32 %v1005, %v1368
        %v1385 = vmul.f32 %v1008, %v1369
        %v1386 = vmul.f32 %v1013, %v1370
        %v1387 = vmul.f32 %v1016, %v1371
        %v1388 = vmul.f32 %v1021, %v1372
        %v1389 = vmul.f32 %v1024, %v1373
        %v1390 = vmul.f32 %v1029, %v1374
        %v1391 = vmul.f32 %v1032, %v1375
        %v1392 = vmul.f32 %v1037, %v1376
        %v1393 = vmul.f32 %v1040, %v1377
        %v1394 = vpack.c.bf16 %v1379, %v1378
        %v1395 = vpack.c.bf16 %v1381, %v1380
        %v1396 = vpack.c.bf16 %v1383, %v1382
        %v1397 = vpack.c.bf16 %v1385, %v1384
        %v1398 = vpack.c.bf16 %v1387, %v1386
        %v1399 = vpack.c.bf16 %v1389, %v1388
        %v1400 = vpack.c.bf16 %v1391, %v1390
        %v1401 = vpack.c.bf16 %v1393, %v1392
        %v1402 = vld [vmem:[#allocation12] sm:$0xf]
        %v1403 = vld [vmem:[#allocation12 + $0x4] sm:$0xf]
        %v1404 = vld [vmem:[#allocation12 + $0x8] sm:$0xf]
        %v1405 = vld [vmem:[#allocation12 + $0xc] sm:$0xf]
        %v1410 = vunpack.c.l.b16 %v1402
        %v1411 = vunpack.c.l.b16 %v1403
        %v1412 = vunpack.c.l.b16 %v1404
        %v1413 = vunpack.c.l.b16 %v1405
        %v1414 = vpack.c.b16 %v1411, %v1410
        %v1415 = vpack.c.b16 %v1413, %v1412
        %v1419 = vsel %vm381, %v1394, 0
        %v1422 = vsel %vm381, %v1395, 0
        %v1425 = vsel %vm381, %v1396, 0
        %v1428 = vsel %vm381, %v1397, 0
        %v1431 = vsel %vm381, %v1398, 0
        %v1434 = vsel %vm381, %v1399, 0
        %v1437 = vsel %vm381, %v1400, 0
        %v1440 = vsel %vm381, %v1401, 0
        %1442 = vmatprep.subr.bf16.mxu0 0
        %1443 = vmatpush1.bf16.msra.mxu0 %v1414
        %1444 = vmatprep.subr.bf16.mxu0 0
        %1445 = vmatpush1.bf16.msra.mxu0 %v1415
        %1446 = vmatprep.subr.bf16.mxu0 0
        %1447 = vmatpush1.bf16.msra.mxu0 0
        %1448 = vmatprep.subr.bf16.mxu0 0
        %1449 = vmatpush1.bf16.msra.mxu0 0
        %1450 = vmatprep.subr.bf16.mxu0 0
        %1451 = vmatpush1.bf16.msra.mxu0 0
        %1452 = vmatprep.subr.bf16.mxu0 0
        %1453 = vmatpush1.bf16.msra.mxu0 0
        %1454 = vmatprep.subr.bf16.mxu0 0
        %1455 = vmatpush1.bf16.msra.mxu0 0
        %1456 = vmatprep.subr.bf16.mxu0 0
        %1457 = vmatpush1.bf16.msra.mxu0 0
        %1458 = vmatprep.subr.bf16.mxu0 0
        %1459 = vmatpush1.bf16.msra.mxu0 0
        %1460 = vmatprep.subr.bf16.mxu0 0
        %1461 = vmatpush1.bf16.msra.mxu0 0
        %1462 = vmatprep.subr.bf16.mxu0 0
        %1463 = vmatpush1.bf16.msra.mxu0 0
        %1464 = vmatprep.subr.bf16.mxu0 0
        %1465 = vmatpush1.bf16.msra.mxu0 0
        %1466 = vmatprep.subr.bf16.mxu0 0
        %1467 = vmatpush1.bf16.msra.mxu0 0
        %1468 = vmatprep.subr.bf16.mxu0 0
        %1469 = vmatpush1.bf16.msra.mxu0 0
        %1470 = vmatprep.subr.bf16.mxu0 0
        %1471 = vmatpush1.bf16.msra.mxu0 0
        %1472 = vmatprep.subr.bf16.mxu0 0
        %1473 = vmatpush1.bf16.msra.mxu0 0
        %1474 = vmatprep.mubr.bf16.mxu0 0
        %1475 = vmatmul.mubr.bf16.gmra.mrb[0].mxu0 %v1419
        %v1476 = vpop.f32.mrb[0].mxu0
        %v1477 = vadd.f32 0.0, %v1476
        %v1478 = vpop.f32.mrb[0].mxu0
        %v1479 = vpop.f32.mrb[0].mxu0
        %v1480 = vadd.f32 0.0, %v1479
        %v1481 = vpop.f32.mrb[0].mxu0
        %1482 = vmatprep.mubr.bf16.mxu0 0
        %1483 = vmatmul.mubr.bf16.gmra.mrb[0].mxu0 %v1422
        %v1484 = vpop.f32.mrb[0].mxu0
        %v1485 = vadd.f32 0.0, %v1484
        %v1486 = vpop.f32.mrb[0].mxu0
        %v1487 = vpop.f32.mrb[0].mxu0
        %v1488 = vadd.f32 0.0, %v1487
        %v1489 = vpop.f32.mrb[0].mxu0
        %1490 = vmatprep.mubr.bf16.mxu0 0
        %1491 = vmatmul.mubr.bf16.gmra.mrb[0].mxu0 %v1425
        %v1492 = vpop.f32.mrb[0].mxu0
        %v1493 = vadd.f32 0.0, %v1492
        %v1494 = vpop.f32.mrb[0].mxu0
        %v1495 = vpop.f32.mrb[0].mxu0
        %v1496 = vadd.f32 0.0, %v1495
        %v1497 = vpop.f32.mrb[0].mxu0
        %1498 = vmatprep.mubr.bf16.mxu0 0
        %1499 = vmatmul.mubr.bf16.gmra.mrb[0].mxu0 %v1428
        %v1500 = vpop.f32.mrb[0].mxu0
        %v1501 = vadd.f32 0.0, %v1500
        %v1502 = vpop.f32.mrb[0].mxu0
        %v1503 = vpop.f32.mrb[0].mxu0
        %v1504 = vadd.f32 0.0, %v1503
        %v1505 = vpop.f32.mrb[0].mxu0
        %1506 = vmatprep.mubr.bf16.mxu0 0
        %1507 = vmatmul.mubr.bf16.gmra.mrb[0].mxu0 %v1431
        %v1508 = vpop.f32.mrb[0].mxu0
        %v1509 = vadd.f32 0.0, %v1508
        %v1510 = vpop.f32.mrb[0].mxu0
        %v1511 = vpop.f32.mrb[0].mxu0
        %v1512 = vadd.f32 0.0, %v1511
        %v1513 = vpop.f32.mrb[0].mxu0
        %1514 = vmatprep.mubr.bf16.mxu0 0
        %1515 = vmatmul.mubr.bf16.gmra.mrb[0].mxu0 %v1434
        %v1516 = vpop.f32.mrb[0].mxu0
        %v1517 = vadd.f32 0.0, %v1516
        %v1518 = vpop.f32.mrb[0].mxu0
        %v1519 = vpop.f32.mrb[0].mxu0
        %v1520 = vadd.f32 0.0, %v1519
        %v1521 = vpop.f32.mrb[0].mxu0
        %1522 = vmatprep.mubr.bf16.mxu0 0
        %1523 = vmatmul.mubr.bf16.gmra.mrb[0].mxu0 %v1437
        %v1524 = vpop.f32.mrb[0].mxu0
        %v1525 = vadd.f32 0.0, %v1524
        %v1526 = vpop.f32.mrb[0].mxu0
        %v1527 = vpop.f32.mrb[0].mxu0
        %v1528 = vadd.f32 0.0, %v1527
        %v1529 = vpop.f32.mrb[0].mxu0
        %1530 = vmatprep.mubr.bf16.mxu0 0
        %1531 = vmatmul.mubr.bf16.gmra.mrb[0].mxu0 %v1440
        %v1532 = vpop.f32.mrb[0].mxu0
        %v1533 = vadd.f32 0.0, %v1532
        %v1534 = vpop.f32.mrb[0].mxu0
        %v1535 = vpop.f32.mrb[0].mxu0
        %v1536 = vadd.f32 0.0, %v1535
        %v1537 = vpop.f32.mrb[0].mxu0
        %1538 = vdwg.mxu0
        %v1539 = vpack.c.bf16 %v1480, %v1477
        %v1540 = vpack.c.bf16 %v1488, %v1485
        %v1541 = vpack.c.bf16 %v1496, %v1493
        %v1542 = vpack.c.bf16 %v1504, %v1501
        %v1543 = vpack.c.bf16 %v1512, %v1509
        %v1544 = vpack.c.bf16 %v1520, %v1517
        %v1545 = vpack.c.bf16 %v1528, %v1525
        %v1546 = vpack.c.bf16 %v1536, %v1533
        %v1555 = vunpack.c.l.b16 %v1539
        %v1556 = vunpack.c.h.b16 %v1539
        %v1557 = vunpack.c.l.b16 %v1540
        %v1558 = vunpack.c.h.b16 %v1540
        %v1559 = vunpack.c.l.b16 %v1541
        %v1560 = vunpack.c.h.b16 %v1541
        %v1561 = vunpack.c.l.b16 %v1542
        %v1562 = vunpack.c.h.b16 %v1542
        %v1563 = vunpack.c.l.b16 %v1543
        %v1564 = vunpack.c.h.b16 %v1543
        %v1565 = vunpack.c.l.b16 %v1544
        %v1566 = vunpack.c.h.b16 %v1544
        %v1567 = vunpack.c.l.b16 %v1545
        %v1568 = vunpack.c.h.b16 %v1545
        %v1569 = vunpack.c.l.b16 %v1546
        %v1570 = vunpack.c.h.b16 %v1546
        %v1571 = vpack.c.b16 %v1555, %v1555
        %v1572 = vpack.c.b16 %v1556, %v1556
        %v1573 = vpack.c.b16 %v1557, %v1557
        %v1574 = vpack.c.b16 %v1558, %v1558
        %v1575 = vpack.c.b16 %v1559, %v1559
        %v1576 = vpack.c.b16 %v1560, %v1560
        %v1577 = vpack.c.b16 %v1561, %v1561
        %v1578 = vpack.c.b16 %v1562, %v1562
        %v1579 = vpack.c.b16 %v1563, %v1563
        %v1580 = vpack.c.b16 %v1564, %v1564
        %v1581 = vpack.c.b16 %v1565, %v1565
        %v1582 = vpack.c.b16 %v1566, %v1566
        %v1583 = vpack.c.b16 %v1567, %v1567
        %v1584 = vpack.c.b16 %v1568, %v1568
        %v1585 = vpack.c.b16 %v1569, %v1569
        %v1586 = vpack.c.b16 %v1570, %v1570
        %vm1603 = vcmask 257024
        %1604 = vst.msk [vmem:[%s379] sm:$0xf] %vm1603, %v1571
        %1605 = vst.msk [vmem:[%s379 + $0x4] sm:$0xf] %vm1603, %v1572
        %1606 = vst.msk [vmem:[%s379 + $0x8] sm:$0xf] %vm1603, %v1573
        %1607 = vst.msk [vmem:[%s379 + $0xc] sm:$0xf] %vm1603, %v1574
        %1608 = vst.msk [vmem:[%s379 + $0x10] sm:$0xf] %vm1603, %v1575
        %1609 = vst.msk [vmem:[%s379 + $0x14] sm:$0xf] %vm1603, %v1576
        %1610 = vst.msk [vmem:[%s379 + $0x18] sm:$0xf] %vm1603, %v1577
        %1611 = vst.msk [vmem:[%s379 + $0x1c] sm:$0xf] %vm1603, %v1578
        %1612 = vst.msk [vmem:[%s379 + $0x20] sm:$0xf] %vm1603, %v1579
        %1613 = vst.msk [vmem:[%s379 + $0x24] sm:$0xf] %vm1603, %v1580
        %1614 = vst.msk [vmem:[%s379 + $0x28] sm:$0xf] %vm1603, %v1581
        %1615 = vst.msk [vmem:[%s379 + $0x2c] sm:$0xf] %vm1603, %v1582
        %1616 = vst.msk [vmem:[%s379 + $0x30] sm:$0xf] %vm1603, %v1583
        %1617 = vst.msk [vmem:[%s379 + $0x34] sm:$0xf] %vm1603, %v1584
        %1618 = vst.msk [vmem:[%s379 + $0x38] sm:$0xf] %vm1603, %v1585
        %1619 = vst.msk [vmem:[%s379 + $0x3c] sm:$0xf] %vm1603, %v1586
        %s1620 = sand.u32 %s187, 1
        %s1621 = scalar_lea.sflag [#allocation8], %s1620
        %s1622 = sand.u32 %s187, 1
        %s1623 = smul.addr %s1622, 64
        %s1624 = scalar_lea.vmem [#allocation18], %s1623
        // Predicated region
        $region77: #{polla_gcn_forward.15} parent=47 // pred_check
          %p1625 = pneg %p197
        $region78: #{polla_gcn_forward.15} parent=47 // pred_check_branch
          %1627 = sbr.rel (%p1625) target = $region80
        $region79: #{polla_gcn_forward.15} parent=47 // pred_region
          %s1629 = ssub.s32 1024, 1024
          %1630 = vsyncadd %s1621, %s1629
          %s1631 = smul.addr %s27, 16
          %s1632 = smul.addr %s1631, 64
          %s1633 = scalar_lea.hbm %s7, %s1632
          %s1634 = sshll.u32 %s1624, 4
          %s1635 = int_to_ptr.vmem [resolvable:$true] %s1634
          %1640 = dma.vmem_to_hbm [thread:$0]  %s1635, 1024, %s1633, %s1621, 64, 64, 4
        $region80: #{polla_gcn_forward.15} parent=47 // pred_fallthru
          _
      $region48: #{polla_gcn_forward.15} parent=5 // pred_fallthru
        _
      %p1641 = scmp.le.s32.totalorder 2, %s22
      // Predicated region
      $region81: #{polla_gcn_forward.15} parent=5 // pred_check
        %p1642 = pneg %p1641
      $region82: #{polla_gcn_forward.15} parent=5 // pred_check_branch
        %1644 = sbr.rel (%p1642) target = $region84
      $region83: #{polla_gcn_forward.15} parent=5 // pred_region
        %s1645 = ssub.s32 %s22, 2
        // Predicated region
        $region85: #{polla_gcn_forward.15} parent=83 // pred_check
          %p1646 = pneg %p203
        $region86: #{polla_gcn_forward.15} parent=83 // pred_check_branch
          %1648 = sbr.rel (%p1646) target = $region88
        $region87: #{polla_gcn_forward.15} parent=83 // pred_region
          %s1649 = sand.u32 %s188, 1
          %s1650 = scalar_lea.sflag [#allocation8], %s1649
          %s1651 = sand.u32 %s188, 1
          %s1652 = smul.addr %s1651, 64
          %s1653 = scalar_lea.vmem [#allocation18], %s1652
          %1654 = dma.done %s1650, 1024
        $region88: #{polla_gcn_forward.15} parent=83 // pred_fallthru
          _
      $region84: #{polla_gcn_forward.15} parent=5 // pred_fallthru
        _
    $region6: #{polla_gcn_forward.15} parent=1 // loop_footer
      %s26 = sadd.s32 1, %s22
    $region7: #{polla_gcn_forward.15} parent=1 // loop_footer_branch
      %21 = sbr.rel target = $region3
    $region8: #{polla_gcn_forward.15} parent=1 // loop_exit
      _
    %1655 = vsyncpa [#allocation7], 1
    %s1656 = scalar_lea.sflag [#allocation7], 1
    %1657 = vsyncpa %s1656, 1
    %1658 = vsyncpa [#allocation10], 1
    %1659 = vsyncpa [#allocation13], 1
    %1660 = vsyncpa [#allocation16], 1
    %1661 = vsyncpa [#allocation8], 1
    %s1662 = scalar_lea.sflag [#allocation8], 1
    %1663 = vsyncpa %s1662, 1

// kernel: polla_gcn_forward.17
$region0: #{polla_gcn_forward.17}
  #allocation0 [shape = 'u32[]', space=smem, size = 0x4, offset = 0x4, fixed_abs, tag = 'smem constant byte address 0x4 - core index']
  #allocation1 [shape = 'u32[144,128]{1,0:T(1,128)}', space=vmem, size = 0x12000, scoped, tag = 'internal scratch']
  %s0 = inlined_call_operand.hbm [shape: bf16[256,32], index: 0, kind: input, shape index: {}]
  %s1 = inlined_call_operand.hbm [shape: bf16[32,16], index: 1, kind: input, shape index: {}]
  %s2 = inlined_call_operand.hbm [shape: f32[1,16], index: 2, kind: input, shape index: {}]
  %s3 = inlined_call_operand.hbm [shape: bf16[16,32], index: 3, kind: input, shape index: {}]
  %s4 = inlined_call_operand.hbm [shape: f32[1,32], index: 4, kind: input, shape index: {}]
  %s5 = inlined_call_operand.hbm [shape: f32[1,32], index: 5, kind: input, shape index: {}]
  %s6 = inlined_call_operand.hbm [shape: f32[1,32], index: 6, kind: input, shape index: {}]
  %s7 = inlined_call_operand.hbm [shape: bf16[256,32], index: 7, kind: output, shape index: {}]
  %s8 = sld [smem:[#allocation0]]
  $region66: #{polla_gcn_forward.17} parent=0
    _
  %s10 = ssub.s32 1, %s8
  %s11 = scalar_select 0, %s10, %s8
  $region1: #{polla_gcn_forward.17} parent=0
    #allocation2 [shape = 'u8[65536]{0}', space=vmem, size = 0x10000, scoped, tag = 'input window, operand 0, single buffered']
    #allocation3 [shape = 's32[1]{0}', space=sflag, size = 0x4, scoped, tag = 'scoped memory for polla_gcn_forward.17']
    #allocation4 [shape = 's32[1]{0}', space=sflag, size = 0x4, scoped, tag = 'scoped memory for polla_gcn_forward.17']
    #allocation5 [shape = 'u8[8192]{0}', space=vmem, size = 0x2000, scoped, tag = 'input window, operand 1, single buffered']
    #allocation6 [shape = 's32[1]{0}', space=sflag, size = 0x4, scoped, tag = 'scoped memory for polla_gcn_forward.17']
    #allocation7 [shape = 'u8[512]{0}', space=vmem, size = 0x400, scoped, tag = 'input window, operand 2, single buffered']
    #allocation8 [shape = 'u8[4096]{0}', space=vmem, size = 0x1000, scoped, tag = 'input window, operand 3, single buffered']
    #allocation9 [shape = 's32[1]{0}', space=sflag, size = 0x4, scoped, tag = 'scoped memory for polla_gcn_forward.17']
    #allocation10 [shape = 'u8[512]{0}', space=vmem, size = 0x400, scoped, tag = 'input window, operand 4, single buffered']
    #allocation11 [shape = 'u8[512]{0}', space=vmem, size = 0x400, scoped, tag = 'input window, operand 5, single buffered']
    #allocation12 [shape = 's32[1]{0}', space=sflag, size = 0x4, scoped, tag = 'scoped memory for polla_gcn_forward.17']
    #allocation13 [shape = 'u8[512]{0}', space=vmem, size = 0x400, scoped, tag = 'input window, operand 6, single buffered']
    #allocation14 [shape = 'u8[65536]{0}', space=vmem, size = 0x10000, scoped, tag = 'output window, operand 0, single buffered']
    %12 = vsyncpa [#allocation3], 0
    %13 = vsyncpa [#allocation6], 0
    %14 = vsyncpa [#allocation9], 0
    %15 = vsyncpa [#allocation12], 0
    %16 = vsyncpa [#allocation4], 0
    // Predicated region
    $region2: #{polla_gcn_forward.17} parent=1 // pred_check
      _
    $region3: #{polla_gcn_forward.17} parent=1 // pred_check_branch
      %18 = sbr.rel (0) target = $region5
    $region4: #{polla_gcn_forward.17} parent=1 // pred_region
      %s20 = ssub.s32 2048, 2048
      %21 = vsyncadd [#allocation3], %s20
      %s22 = sshll.u32 [#allocation2], 4
      %s23 = int_to_ptr.vmem [resolvable:$true] %s22
      %28 = dma.hbm_to_vmem [thread:$0]  %s0, 2048, %s23, [#allocation3], 64, 64, 4
    $region5: #{polla_gcn_forward.17} parent=1 // pred_fallthru
      _
    // Predicated region
    $region6: #{polla_gcn_forward.17} parent=1 // pred_check
      _
    $region7: #{polla_gcn_forward.17} parent=1 // pred_check_branch
      %30 = sbr.rel (0) target = $region9
    $region8: #{polla_gcn_forward.17} parent=1 // pred_region
      %s32 = ssub.s32 256, 256
      %33 = vsyncadd [#allocation6], %s32
      %s34 = sshll.u32 [#allocation5], 4
      %s35 = int_to_ptr.vmem [resolvable:$true] %s34
      %40 = dma.hbm_to_vmem [thread:$0]  %s1, 256, %s35, [#allocation6], 64, 64, 4
    $region9: #{polla_gcn_forward.17} parent=1 // pred_fallthru
      _
    // Predicated region
    $region10: #{polla_gcn_forward.17} parent=1 // pred_check
      _
    $region11: #{polla_gcn_forward.17} parent=1 // pred_check_branch
      %42 = sbr.rel (0) target = $region13
    $region12: #{polla_gcn_forward.17} parent=1 // pred_region
      %s44 = ssub.s32 16, 16
      %45 = vsyncadd [#allocation6], %s44
      %s47 = sshll.u32 [#allocation7], 4
      %s48 = int_to_ptr.vmem [resolvable:$true] %s47
      %50 = dma.hbm_to_vmem [thread:$0]  %s2, 16, %s48, [#allocation6]
    $region13: #{polla_gcn_forward.17} parent=1 // pred_fallthru
      _
    // Predicated region
    $region14: #{polla_gcn_forward.17} parent=1 // pred_check
      _
    $region15: #{polla_gcn_forward.17} parent=1 // pred_check_branch
      %52 = sbr.rel (0) target = $region17
    $region16: #{polla_gcn_forward.17} parent=1 // pred_region
      %s54 = ssub.s32 128, 128
      %55 = vsyncadd [#allocation9], %s54
      %s56 = sshll.u32 [#allocation8], 4
      %s57 = int_to_ptr.vmem [resolvable:$true] %s56
      %62 = dma.hbm_to_vmem [thread:$0]  %s3, 128, %s57, [#allocation9], 64, 64, 4
    $region17: #{polla_gcn_forward.17} parent=1 // pred_fallthru
      _
    // Predicated region
    $region18: #{polla_gcn_forward.17} parent=1 // pred_check
      _
    $region19: #{polla_gcn_forward.17} parent=1 // pred_check_branch
      %64 = sbr.rel (0) target = $region21
    $region20: #{polla_gcn_forward.17} parent=1 // pred_region
      %s66 = ssub.s32 16, 16
      %67 = vsyncadd [#allocation9], %s66
      %s69 = sshll.u32 [#allocation10], 4
      %s70 = int_to_ptr.vmem [resolvable:$true] %s69
      %72 = dma.hbm_to_vmem [thread:$0]  %s4, 16, %s70, [#allocation9]
    $region21: #{polla_gcn_forward.17} parent=1 // pred_fallthru
      _
    // Predicated region
    $region22: #{polla_gcn_forward.17} parent=1 // pred_check
      _
    $region23: #{polla_gcn_forward.17} parent=1 // pred_check_branch
      %74 = sbr.rel (0) target = $region25
    $region24: #{polla_gcn_forward.17} parent=1 // pred_region
      %s76 = ssub.s32 16, 16
      %77 = vsyncadd [#allocation12], %s76
      %s79 = sshll.u32 [#allocation11], 4
      %s80 = int_to_ptr.vmem [resolvable:$true] %s79
      %82 = dma.hbm_to_vmem [thread:$0]  %s5, 16, %s80, [#allocation12]
    $region25: #{polla_gcn_forward.17} parent=1 // pred_fallthru
      _
    // Predicated region
    $region26: #{polla_gcn_forward.17} parent=1 // pred_check
      _
    $region27: #{polla_gcn_forward.17} parent=1 // pred_check_branch
      %84 = sbr.rel (0) target = $region29
    $region28: #{polla_gcn_forward.17} parent=1 // pred_region
      %s86 = ssub.s32 16, 16
      %87 = vsyncadd [#allocation12], %s86
      %s89 = sshll.u32 [#allocation13], 4
      %s90 = int_to_ptr.vmem [resolvable:$true] %s89
      %92 = dma.hbm_to_vmem [thread:$0]  %s6, 16, %s90, [#allocation12]
    $region29: #{polla_gcn_forward.17} parent=1 // pred_fallthru
      _
    // Predicated region
    $region30: #{polla_gcn_forward.17} parent=1 // pred_check
      _
    $region31: #{polla_gcn_forward.17} parent=1 // pred_check_branch
      %94 = sbr.rel (0) target = $region33
    $region32: #{polla_gcn_forward.17} parent=1 // pred_region
      %95 = dma.done [#allocation3], 2048
    $region33: #{polla_gcn_forward.17} parent=1 // pred_fallthru
      _
    // Predicated region
    $region34: #{polla_gcn_forward.17} parent=1 // pred_check
      _
    $region35: #{polla_gcn_forward.17} parent=1 // pred_check_branch
      %97 = sbr.rel (0) target = $region37
    $region36: #{polla_gcn_forward.17} parent=1 // pred_region
      %98 = dma.done [#allocation6], 256
    $region37: #{polla_gcn_forward.17} parent=1 // pred_fallthru
      _
    // Predicated region
    $region38: #{polla_gcn_forward.17} parent=1 // pred_check
      _
    $region39: #{polla_gcn_forward.17} parent=1 // pred_check_branch
      %100 = sbr.rel (0) target = $region41
    $region40: #{polla_gcn_forward.17} parent=1 // pred_region
      %101 = dma.done [#allocation6], 16
    $region41: #{polla_gcn_forward.17} parent=1 // pred_fallthru
      _
    // Predicated region
    $region42: #{polla_gcn_forward.17} parent=1 // pred_check
      _
    $region43: #{polla_gcn_forward.17} parent=1 // pred_check_branch
      %103 = sbr.rel (0) target = $region45
    $region44: #{polla_gcn_forward.17} parent=1 // pred_region
      %104 = dma.done [#allocation9], 128
    $region45: #{polla_gcn_forward.17} parent=1 // pred_fallthru
      _
    // Predicated region
    $region46: #{polla_gcn_forward.17} parent=1 // pred_check
      _
    $region47: #{polla_gcn_forward.17} parent=1 // pred_check_branch
      %106 = sbr.rel (0) target = $region49
    $region48: #{polla_gcn_forward.17} parent=1 // pred_region
      %107 = dma.done [#allocation9], 16
    $region49: #{polla_gcn_forward.17} parent=1 // pred_fallthru
      _
    // Predicated region
    $region50: #{polla_gcn_forward.17} parent=1 // pred_check
      _
    $region51: #{polla_gcn_forward.17} parent=1 // pred_check_branch
      %109 = sbr.rel (0) target = $region53
    $region52: #{polla_gcn_forward.17} parent=1 // pred_region
      %110 = dma.done [#allocation12], 16
    $region53: #{polla_gcn_forward.17} parent=1 // pred_fallthru
      _
    // Predicated region
    $region54: #{polla_gcn_forward.17} parent=1 // pred_check
      _
    $region55: #{polla_gcn_forward.17} parent=1 // pred_check_branch
      %112 = sbr.rel (0) target = $region57
    $region56: #{polla_gcn_forward.17} parent=1 // pred_region
      %113 = dma.done [#allocation12], 16
    $region57: #{polla_gcn_forward.17} parent=1 // pred_fallthru
      _
    %v115 = vld [vmem:[#allocation2] sm:$0xf]
    %v116 = vld [vmem:[#allocation2 + $0x4] sm:$0xf]
    %v117 = vld [vmem:[#allocation2 + $0x8] sm:$0xf]
    %v118 = vld [vmem:[#allocation2 + $0xc] sm:$0xf]
    %v119 = vld [vmem:[#allocation2 + $0x10] sm:$0xf]
    %v120 = vld [vmem:[#allocation2 + $0x14] sm:$0xf]
    %v121 = vld [vmem:[#allocation2 + $0x18] sm:$0xf]
    %v122 = vld [vmem:[#allocation2 + $0x1c] sm:$0xf]
    %v123 = vld [vmem:[#allocation2 + $0x20] sm:$0xf]
    %v124 = vld [vmem:[#allocation2 + $0x24] sm:$0xf]
    %v125 = vld [vmem:[#allocation2 + $0x28] sm:$0xf]
    %v126 = vld [vmem:[#allocation2 + $0x2c] sm:$0xf]
    %v127 = vld [vmem:[#allocation2 + $0x30] sm:$0xf]
    %v128 = vld [vmem:[#allocation2 + $0x34] sm:$0xf]
    %v129 = vld [vmem:[#allocation2 + $0x38] sm:$0xf]
    %v130 = vld [vmem:[#allocation2 + $0x3c] sm:$0xf]
    %v131 = vld [vmem:[#allocation2 + $0x40] sm:$0xf]
    %v132 = vld [vmem:[#allocation2 + $0x44] sm:$0xf]
    %v133 = vld [vmem:[#allocation2 + $0x48] sm:$0xf]
    %v134 = vld [vmem:[#allocation2 + $0x4c] sm:$0xf]
    %v135 = vld [vmem:[#allocation2 + $0x50] sm:$0xf]
    %v136 = vld [vmem:[#allocation2 + $0x54] sm:$0xf]
    %v137 = vld [vmem:[#allocation2 + $0x58] sm:$0xf]
    %v138 = vld [vmem:[#allocation2 + $0x5c] sm:$0xf]
    %v139 = vld [vmem:[#allocation2 + $0x60] sm:$0xf]
    %v140 = vld [vmem:[#allocation2 + $0x64] sm:$0xf]
    %v141 = vld [vmem:[#allocation2 + $0x68] sm:$0xf]
    %v142 = vld [vmem:[#allocation2 + $0x6c] sm:$0xf]
    %v143 = vld [vmem:[#allocation2 + $0x70] sm:$0xf]
    %v144 = vld [vmem:[#allocation2 + $0x74] sm:$0xf]
    %v145 = vld [vmem:[#allocation2 + $0x78] sm:$0xf]
    %v146 = vld [vmem:[#allocation2 + $0x7c] sm:$0xf]
    %v147 = vld [vmem:[#allocation5] sm:$0xf]
    %v148 = vld [vmem:[#allocation5 + $0x4] sm:$0xf]
    %v149 = vld [vmem:[#allocation5 + $0x8] sm:$0xf]
    %v150 = vld [vmem:[#allocation5 + $0xc] sm:$0xf]
    %v151 = vld [vmem:[#allocation7] sm:$0x1]
    %v153 = vlaneseq
    %v154 = vshrl.u32 %v153, 7
    %v155 = vsub.s32 0, %v154
    %v156 = vrot.slane %v151, %v155
    %v190 = vunpack.c.l.b16 %v115
    %v191 = vunpack.c.l.b16 %v116
    %v192 = vunpack.c.l.b16 %v117
    %v193 = vunpack.c.l.b16 %v118
    %v194 = vunpack.c.l.b16 %v119
    %v195 = vunpack.c.l.b16 %v120
    %v196 = vunpack.c.l.b16 %v121
    %v197 = vunpack.c.l.b16 %v122
    %v198 = vunpack.c.l.b16 %v123
    %v199 = vunpack.c.l.b16 %v124
    %v200 = vunpack.c.l.b16 %v125
    %v201 = vunpack.c.l.b16 %v126
    %v202 = vunpack.c.l.b16 %v127
    %v203 = vunpack.c.l.b16 %v128
    %v204 = vunpack.c.l.b16 %v129
    %v205 = vunpack.c.l.b16 %v130
    %v206 = vunpack.c.l.b16 %v131
    %v207 = vunpack.c.l.b16 %v132
    %v208 = vunpack.c.l.b16 %v133
    %v209 = vunpack.c.l.b16 %v134
    %v210 = vunpack.c.l.b16 %v135
    %v211 = vunpack.c.l.b16 %v136
    %v212 = vunpack.c.l.b16 %v137
    %v213 = vunpack.c.l.b16 %v138
    %v214 = vunpack.c.l.b16 %v139
    %v215 = vunpack.c.l.b16 %v140
    %v216 = vunpack.c.l.b16 %v141
    %v217 = vunpack.c.l.b16 %v142
    %v218 = vunpack.c.l.b16 %v143
    %v219 = vunpack.c.l.b16 %v144
    %v220 = vunpack.c.l.b16 %v145
    %v221 = vunpack.c.l.b16 %v146
    %v222 = vpack.c.b16 %v191, %v190
    %v223 = vpack.c.b16 %v193, %v192
    %v224 = vpack.c.b16 %v195, %v194
    %v225 = vpack.c.b16 %v197, %v196
    %v226 = vpack.c.b16 %v199, %v198
    %v227 = vpack.c.b16 %v201, %v200
    %v228 = vpack.c.b16 %v203, %v202
    %v229 = vpack.c.b16 %v205, %v204
    %v230 = vpack.c.b16 %v207, %v206
    %v231 = vpack.c.b16 %v209, %v208
    %v232 = vpack.c.b16 %v211, %v210
    %v233 = vpack.c.b16 %v213, %v212
    %v234 = vpack.c.b16 %v215, %v214
    %v235 = vpack.c.b16 %v217, %v216
    %v236 = vpack.c.b16 %v219, %v218
    %v237 = vpack.c.b16 %v221, %v220
    %v242 = vunpack.c.l.b16 %v147
    %v243 = vunpack.c.l.b16 %v148
    %v244 = vunpack.c.l.b16 %v149
    %v245 = vunpack.c.l.b16 %v150
    %v246 = vpack.c.b16 %v243, %v242
    %v247 = vpack.c.b16 %v245, %v244
    %vm250 = vcmask 261120
    %v252 = vsel %vm250, %v222, 0
    %v255 = vsel %vm250, %v223, 0
    %v258 = vsel %vm250, %v224, 0
    %v261 = vsel %vm250, %v225, 0
    %v264 = vsel %vm250, %v226, 0
    %v267 = vsel %vm250, %v227, 0
    %v270 = vsel %vm250, %v228, 0
    %v273 = vsel %vm250, %v229, 0
    %v276 = vsel %vm250, %v230, 0
    %v279 = vsel %vm250, %v231, 0
    %v282 = vsel %vm250, %v232, 0
    %v285 = vsel %vm250, %v233, 0
    %v288 = vsel %vm250, %v234, 0
    %v291 = vsel %vm250, %v235, 0
    %v294 = vsel %vm250, %v236, 0
    %v297 = vsel %vm250, %v237, 0
    %299 = vmatprep.subr.bf16.mxu0 0
    %300 = vmatpush1.bf16.msra.mxu0 %v246
    %301 = vmatprep.subr.bf16.mxu0 0
    %302 = vmatpush1.bf16.msra.mxu0 %v247
    %303 = vmatprep.subr.bf16.mxu0 0
    %304 = vmatpush1.bf16.msra.mxu0 0
    %305 = vmatprep.subr.bf16.mxu0 0
    %306 = vmatpush1.bf16.msra.mxu0 0
    %307 = vmatprep.subr.bf16.mxu0 0
    %308 = vmatpush1.bf16.msra.mxu0 0
    %309 = vmatprep.subr.bf16.mxu0 0
    %310 = vmatpush1.bf16.msra.mxu0 0
    %311 = vmatprep.subr.bf16.mxu0 0
    %312 = vmatpush1.bf16.msra.mxu0 0
    %313 = vmatprep.subr.bf16.mxu0 0
    %314 = vmatpush1.bf16.msra.mxu0 0
    %315 = vmatprep.subr.bf16.mxu0 0
    %316 = vmatpush1.bf16.msra.mxu0 0
    %317 = vmatprep.subr.bf16.mxu0 0
    %318 = vmatpush1.bf16.msra.mxu0 0
    %319 = vmatprep.subr.bf16.mxu0 0
    %320 = vmatpush1.bf16.msra.mxu0 0
    %321 = vmatprep.subr.bf16.mxu0 0
    %322 = vmatpush1.bf16.msra.mxu0 0
    %323 = vmatprep.subr.bf16.mxu0 0
    %324 = vmatpush1.bf16.msra.mxu0 0
    %325 = vmatprep.subr.bf16.mxu0 0
    %326 = vmatpush1.bf16.msra.mxu0 0
    %327 = vmatprep.subr.bf16.mxu0 0
    %328 = vmatpush1.bf16.msra.mxu0 0
    %329 = vmatprep.subr.bf16.mxu0 0
    %330 = vmatpush1.bf16.msra.mxu0 0
    %331 = vmatprep.mubr.bf16.mxu0 0
    %332 = vmatmul.mubr.bf16.gmra.mrb[0].mxu0 %v252
    %v333 = vpop.f32.mrb[0].mxu0
    %v334 = vadd.f32 %v156, %v333
    %v335 = vpop.f32.mrb[0].mxu0
    %v336 = vpop.f32.mrb[0].mxu0
    %v337 = vadd.f32 %v156, %v336
    %v338 = vpop.f32.mrb[0].mxu0
    %339 = vmatprep.mubr.bf16.mxu0 0
    %340 = vmatmul.mubr.bf16.gmra.mrb[0].mxu0 %v255
    %v341 = vpop.f32.mrb[0].mxu0
    %v342 = vadd.f32 %v156, %v341
    %v343 = vpop.f32.mrb[0].mxu0
    %v344 = vpop.f32.mrb[0].mxu0
    %v345 = vadd.f32 %v156, %v344
    %v346 = vpop.f32.mrb[0].mxu0
    %347 = vmatprep.mubr.bf16.mxu0 0
    %348 = vmatmul.mubr.bf16.gmra.mrb[0].mxu0 %v258
    %v349 = vpop.f32.mrb[0].mxu0
    %v350 = vadd.f32 %v156, %v349
    %v351 = vpop.f32.mrb[0].mxu0
    %v352 = vpop.f32.mrb[0].mxu0
    %v353 = vadd.f32 %v156, %v352
    %v354 = vpop.f32.mrb[0].mxu0
    %355 = vmatprep.mubr.bf16.mxu0 0
    %356 = vmatmul.mubr.bf16.gmra.mrb[0].mxu0 %v261
    %v357 = vpop.f32.mrb[0].mxu0
    %v358 = vadd.f32 %v156, %v357
    %v359 = vpop.f32.mrb[0].mxu0
    %v360 = vpop.f32.mrb[0].mxu0
    %v361 = vadd.f32 %v156, %v360
    %v362 = vpop.f32.mrb[0].mxu0
    %363 = vmatprep.mubr.bf16.mxu0 0
    %364 = vmatmul.mubr.bf16.gmra.mrb[0].mxu0 %v264
    %v365 = vpop.f32.mrb[0].mxu0
    %v366 = vadd.f32 %v156, %v365
    %v367 = vpop.f32.mrb[0].mxu0
    %v368 = vpop.f32.mrb[0].mxu0
    %v369 = vadd.f32 %v156, %v368
    %v370 = vpop.f32.mrb[0].mxu0
    %371 = vmatprep.mubr.bf16.mxu0 0
    %372 = vmatmul.mubr.bf16.gmra.mrb[0].mxu0 %v267
    %v373 = vpop.f32.mrb[0].mxu0
    %v374 = vadd.f32 %v156, %v373
    %v375 = vpop.f32.mrb[0].mxu0
    %v376 = vpop.f32.mrb[0].mxu0
    %v377 = vadd.f32 %v156, %v376
    %v378 = vpop.f32.mrb[0].mxu0
    %379 = vmatprep.mubr.bf16.mxu0 0
    %380 = vmatmul.mubr.bf16.gmra.mrb[0].mxu0 %v270
    %v381 = vpop.f32.mrb[0].mxu0
    %v382 = vadd.f32 %v156, %v381
    %v383 = vpop.f32.mrb[0].mxu0
    %v384 = vpop.f32.mrb[0].mxu0
    %v385 = vadd.f32 %v156, %v384
    %v386 = vpop.f32.mrb[0].mxu0
    %387 = vmatprep.mubr.bf16.mxu0 0
    %388 = vmatmul.mubr.bf16.gmra.mrb[0].mxu0 %v273
    %v389 = vpop.f32.mrb[0].mxu0
    %v390 = vadd.f32 %v156, %v389
    %v391 = vpop.f32.mrb[0].mxu0
    %v392 = vpop.f32.mrb[0].mxu0
    %v393 = vadd.f32 %v156, %v392
    %v394 = vpop.f32.mrb[0].mxu0
    %395 = vmatprep.mubr.bf16.mxu0 0
    %396 = vmatmul.mubr.bf16.gmra.mrb[0].mxu0 %v276
    %v397 = vpop.f32.mrb[0].mxu0
    %v398 = vadd.f32 %v156, %v397
    %v399 = vpop.f32.mrb[0].mxu0
    %v400 = vpop.f32.mrb[0].mxu0
    %v401 = vadd.f32 %v156, %v400
    %v402 = vpop.f32.mrb[0].mxu0
    %403 = vmatprep.mubr.bf16.mxu0 0
    %404 = vmatmul.mubr.bf16.gmra.mrb[0].mxu0 %v279
    %v405 = vpop.f32.mrb[0].mxu0
    %v406 = vadd.f32 %v156, %v405
    %v407 = vpop.f32.mrb[0].mxu0
    %v408 = vpop.f32.mrb[0].mxu0
    %v409 = vadd.f32 %v156, %v408
    %v410 = vpop.f32.mrb[0].mxu0
    %411 = vmatprep.mubr.bf16.mxu0 0
    %412 = vmatmul.mubr.bf16.gmra.mrb[0].mxu0 %v282
    %v413 = vpop.f32.mrb[0].mxu0
    %v414 = vadd.f32 %v156, %v413
    %v415 = vpop.f32.mrb[0].mxu0
    %v416 = vpop.f32.mrb[0].mxu0
    %v417 = vadd.f32 %v156, %v416
    %v418 = vpop.f32.mrb[0].mxu0
    %419 = vmatprep.mubr.bf16.mxu0 0
    %420 = vmatmul.mubr.bf16.gmra.mrb[0].mxu0 %v285
    %v421 = vpop.f32.mrb[0].mxu0
    %v422 = vadd.f32 %v156, %v421
    %v423 = vpop.f32.mrb[0].mxu0
    %v424 = vpop.f32.mrb[0].mxu0
    %v425 = vadd.f32 %v156, %v424
    %v426 = vpop.f32.mrb[0].mxu0
    %427 = vmatprep.mubr.bf16.mxu0 0
    %428 = vmatmul.mubr.bf16.gmra.mrb[0].mxu0 %v288
    %v429 = vpop.f32.mrb[0].mxu0
    %v430 = vadd.f32 %v156, %v429
    %v431 = vpop.f32.mrb[0].mxu0
    %v432 = vpop.f32.mrb[0].mxu0
    %v433 = vadd.f32 %v156, %v432
    %v434 = vpop.f32.mrb[0].mxu0
    %435 = vmatprep.mubr.bf16.mxu0 0
    %436 = vmatmul.mubr.bf16.gmra.mrb[0].mxu0 %v291
    %v437 = vpop.f32.mrb[0].mxu0
    %v438 = vadd.f32 %v156, %v437
    %v439 = vpop.f32.mrb[0].mxu0
    %v440 = vpop.f32.mrb[0].mxu0
    %v441 = vadd.f32 %v156, %v440
    %v442 = vpop.f32.mrb[0].mxu0
    %443 = vmatprep.mubr.bf16.mxu0 0
    %444 = vmatmul.mubr.bf16.gmra.mrb[0].mxu0 %v294
    %v445 = vpop.f32.mrb[0].mxu0
    %v446 = vadd.f32 %v156, %v445
    %v447 = vpop.f32.mrb[0].mxu0
    %v448 = vpop.f32.mrb[0].mxu0
    %v449 = vadd.f32 %v156, %v448
    %v450 = vpop.f32.mrb[0].mxu0
    %451 = vmatprep.mubr.bf16.mxu0 0
    %452 = vmatmul.mubr.bf16.gmra.mrb[0].mxu0 %v297
    %v453 = vpop.f32.mrb[0].mxu0
    %v454 = vadd.f32 %v156, %v453
    %v455 = vpop.f32.mrb[0].mxu0
    %v456 = vpop.f32.mrb[0].mxu0
    %v457 = vadd.f32 %v156, %v456
    %v458 = vpop.f32.mrb[0].mxu0
    %459 = vdwg.mxu0
    %v460 = vmul.f32 %v334, %v334
    %v461 = vmul.f32 %v337, %v337
    %v462 = vmul.f32 %v342, %v342
    %v463 = vmul.f32 %v345, %v345
    %v464 = vmul.f32 %v350, %v350
    %v465 = vmul.f32 %v353, %v353
    %v466 = vmul.f32 %v358, %v358
    %v467 = vmul.f32 %v361, %v361
    %v468 = vmul.f32 %v366, %v366
    %v469 = vmul.f32 %v369, %v369
    %v470 = vmul.f32 %v374, %v374
    %v471 = vmul.f32 %v377, %v377
    %v472 = vmul.f32 %v382, %v382
    %v473 = vmul.f32 %v385, %v385
    %v474 = vmul.f32 %v390, %v390
    %v475 = vmul.f32 %v393, %v393
    %v476 = vmul.f32 %v398, %v398
    %v477 = vmul.f32 %v401, %v401
    %v478 = vmul.f32 %v406, %v406
    %v479 = vmul.f32 %v409, %v409
    %v480 = vmul.f32 %v414, %v414
    %v481 = vmul.f32 %v417, %v417
    %v482 = vmul.f32 %v422, %v422
    %v483 = vmul.f32 %v425, %v425
    %v484 = vmul.f32 %v430, %v430
    %v485 = vmul.f32 %v433, %v433
    %v486 = vmul.f32 %v438, %v438
    %v487 = vmul.f32 %v441, %v441
    %v488 = vmul.f32 %v446, %v446
    %v489 = vmul.f32 %v449, %v449
    %v490 = vmul.f32 %v454, %v454
    %v491 = vmul.f32 %v457, %v457
    %v492 = vmul.f32 %v334, %v460
    %v493 = vmul.f32 %v337, %v461
    %v494 = vmul.f32 %v342, %v462
    %v495 = vmul.f32 %v345, %v463
    %v496 = vmul.f32 %v350, %v464
    %v497 = vmul.f32 %v353, %v465
    %v498 = vmul.f32 %v358, %v466
    %v499 = vmul.f32 %v361, %v467
    %v500 = vmul.f32 %v366, %v468
    %v501 = vmul.f32 %v369, %v469
    %v502 = vmul.f32 %v374, %v470
    %v503 = vmul.f32 %v377, %v471
    %v504 = vmul.f32 %v382, %v472
    %v505 = vmul.f32 %v385, %v473
    %v506 = vmul.f32 %v390, %v474
    %v507 = vmul.f32 %v393, %v475
    %v508 = vmul.f32 %v398, %v476
    %v509 = vmul.f32 %v401, %v477
    %v510 = vmul.f32 %v406, %v478
    %v511 = vmul.f32 %v409, %v479
    %v512 = vmul.f32 %v414, %v480
    %v513 = vmul.f32 %v417, %v481
    %v514 = vmul.f32 %v422, %v482
    %v515 = vmul.f32 %v425, %v483
    %v516 = vmul.f32 %v430, %v484
    %v517 = vmul.f32 %v433, %v485
    %v518 = vmul.f32 %v438, %v486
    %v519 = vmul.f32 %v441, %v487
    %v520 = vmul.f32 %v446, %v488
    %v521 = vmul.f32 %v449, %v489
    %v522 = vmul.f32 %v454, %v490
    %v523 = vmul.f32 %v457, %v491
    %v524 = vmul.f32 %v492, 0.044715
    %v525 = vmul.f32 %v493, 0.044715
    %v526 = vmul.f32 %v494, 0.044715
    %v527 = vmul.f32 %v495, 0.044715
    %v528 = vmul.f32 %v496, 0.044715
    %v529 = vmul.f32 %v497, 0.044715
    %v530 = vmul.f32 %v498, 0.044715
    %v531 = vmul.f32 %v499, 0.044715
    %v532 = vmul.f32 %v500, 0.044715
    %v533 = vmul.f32 %v501, 0.044715
    %v534 = vmul.f32 %v502, 0.044715
    %v535 = vmul.f32 %v503, 0.044715
    %v536 = vmul.f32 %v504, 0.044715
    %v537 = vmul.f32 %v505, 0.044715
    %v538 = vmul.f32 %v506, 0.044715
    %v539 = vmul.f32 %v507, 0.044715
    %v540 = vmul.f32 %v508, 0.044715
    %v541 = vmul.f32 %v509, 0.044715
    %v542 = vmul.f32 %v510, 0.044715
    %v543 = vmul.f32 %v511, 0.044715
    %v544 = vmul.f32 %v512, 0.044715
    %v545 = vmul.f32 %v513, 0.044715
    %v546 = vmul.f32 %v514, 0.044715
    %v547 = vmul.f32 %v515, 0.044715
    %v548 = vmul.f32 %v516, 0.044715
    %v549 = vmul.f32 %v517, 0.044715
    %v550 = vmul.f32 %v518, 0.044715
    %v551 = vmul.f32 %v519, 0.044715
    %v552 = vmul.f32 %v520, 0.044715
    %v553 = vmul.f32 %v521, 0.044715
    %v554 = vmul.f32 %v522, 0.044715
    %v555 = vmul.f32 %v523, 0.044715
    %v556 = vadd.f32 %v334, %v524
    %v557 = vadd.f32 %v337, %v525
    %v558 = vadd.f32 %v342, %v526
    %v559 = vadd.f32 %v345, %v527
    %v560 = vadd.f32 %v350, %v528
    %v561 = vadd.f32 %v353, %v529
    %v562 = vadd.f32 %v358, %v530
    %v563 = vadd.f32 %v361, %v531
    %v564 = vadd.f32 %v366, %v532
    %v565 = vadd.f32 %v369, %v533
    %v566 = vadd.f32 %v374, %v534
    %v567 = vadd.f32 %v377, %v535
    %v568 = vadd.f32 %v382, %v536
    %v569 = vadd.f32 %v385, %v537
    %v570 = vadd.f32 %v390, %v538
    %v571 = vadd.f32 %v393, %v539
    %v572 = vadd.f32 %v398, %v540
    %v573 = vadd.f32 %v401, %v541
    %v574 = vadd.f32 %v406, %v542
    %v575 = vadd.f32 %v409, %v543
    %v576 = vadd.f32 %v414, %v544
    %v577 = vadd.f32 %v417, %v545
    %v578 = vadd.f32 %v422, %v546
    %v579 = vadd.f32 %v425, %v547
    %v580 = vadd.f32 %v430, %v548
    %v581 = vadd.f32 %v433, %v549
    %v582 = vadd.f32 %v438, %v550
    %v583 = vadd.f32 %v441, %v551
    %v584 = vadd.f32 %v446, %v552
    %v585 = vadd.f32 %v449, %v553
    %v586 = vadd.f32 %v454, %v554
    %v587 = vadd.f32 %v457, %v555
    %v588 = vmul.f32 %v556, 0.7978846
    %v589 = vmul.f32 %v557, 0.7978846
    %v590 = vmul.f32 %v558, 0.7978846
    %v591 = vmul.f32 %v559, 0.7978846
    %v592 = vmul.f32 %v560, 0.7978846
    %v593 = vmul.f32 %v561, 0.7978846
    %v594 = vmul.f32 %v562, 0.7978846
    %v595 = vmul.f32 %v563, 0.7978846
    %v596 = vmul.f32 %v564, 0.7978846
    %v597 = vmul.f32 %v565, 0.7978846
    %v598 = vmul.f32 %v566, 0.7978846
    %v599 = vmul.f32 %v567, 0.7978846
    %v600 = vmul.f32 %v568, 0.7978846
    %v601 = vmul.f32 %v569, 0.7978846
    %v602 = vmul.f32 %v570, 0.7978846
    %v603 = vmul.f32 %v571, 0.7978846
    %v604 = vmul.f32 %v572, 0.7978846
    %v605 = vmul.f32 %v573, 0.7978846
    %v606 = vmul.f32 %v574, 0.7978846
    %v607 = vmul.f32 %v575, 0.7978846
    %v608 = vmul.f32 %v576, 0.7978846
    %v609 = vmul.f32 %v577, 0.7978846
    %v610 = vmul.f32 %v578, 0.7978846
    %v611 = vmul.f32 %v579, 0.7978846
    %v612 = vmul.f32 %v580, 0.7978846
    %v613 = vmul.f32 %v581, 0.7978846
    %v614 = vmul.f32 %v582, 0.7978846
    %v615 = vmul.f32 %v583, 0.7978846
    %v616 = vmul.f32 %v584, 0.7978846
    %v617 = vmul.f32 %v585, 0.7978846
    %v618 = vmul.f32 %v586, 0.7978846
    %v619 = vmul.f32 %v587, 0.7978846
    %v620 = vtanh.pop %v588
    %v621 = vtanh.pop %v589
    %v622 = vtanh.pop %v590
    %v623 = vtanh.pop %v591
    %v624 = vtanh.pop %v592
    %v625 = vtanh.pop %v593
    %v626 = vtanh.pop %v594
    %v627 = vtanh.pop %v595
    %v628 = vtanh.pop %v596
    %v629 = vtanh.pop %v597
    %v630 = vtanh.pop %v598
    %v631 = vtanh.pop %v599
    %v632 = vtanh.pop %v600
    %v633 = vtanh.pop %v601
    %v634 = vtanh.pop %v602
    %v635 = vtanh.pop %v603
    %v636 = vtanh.pop %v604
    %v637 = vtanh.pop %v605
    %v638 = vtanh.pop %v606
    %v639 = vtanh.pop %v607
    %v640 = vtanh.pop %v608
    %v641 = vtanh.pop %v609
    %v642 = vtanh.pop %v610
    %v643 = vtanh.pop %v611
    %v644 = vtanh.pop %v612
    %v645 = vtanh.pop %v613
    %v646 = vtanh.pop %v614
    %v647 = vtanh.pop %v615
    %v648 = vtanh.pop %v616
    %v649 = vtanh.pop %v617
    %v650 = vtanh.pop %v618
    %v651 = vtanh.pop %v619
    %v652 = vadd.f32 %v620, 1.0
    %v653 = vadd.f32 %v621, 1.0
    %v654 = vadd.f32 %v622, 1.0
    %v655 = vadd.f32 %v623, 1.0
    %v656 = vadd.f32 %v624, 1.0
    %v657 = vadd.f32 %v625, 1.0
    %v658 = vadd.f32 %v626, 1.0
    %v659 = vadd.f32 %v627, 1.0
    %v660 = vadd.f32 %v628, 1.0
    %v661 = vadd.f32 %v629, 1.0
    %v662 = vadd.f32 %v630, 1.0
    %v663 = vadd.f32 %v631, 1.0
    %v664 = vadd.f32 %v632, 1.0
    %v665 = vadd.f32 %v633, 1.0
    %v666 = vadd.f32 %v634, 1.0
    %v667 = vadd.f32 %v635, 1.0
    %v668 = vadd.f32 %v636, 1.0
    %v669 = vadd.f32 %v637, 1.0
    %v670 = vadd.f32 %v638, 1.0
    %v671 = vadd.f32 %v639, 1.0
    %v672 = vadd.f32 %v640, 1.0
    %v673 = vadd.f32 %v641, 1.0
    %v674 = vadd.f32 %v642, 1.0
    %v675 = vadd.f32 %v643, 1.0
    %v676 = vadd.f32 %v644, 1.0
    %v677 = vadd.f32 %v645, 1.0
    %v678 = vadd.f32 %v646, 1.0
    %v679 = vadd.f32 %v647, 1.0
    %v680 = vadd.f32 %v648, 1.0
    %v681 = vadd.f32 %v649, 1.0
    %v682 = vadd.f32 %v650, 1.0
    %v683 = vadd.f32 %v651, 1.0
    %v684 = vmul.f32 %v652, 0.5
    %v685 = vmul.f32 %v653, 0.5
    %v686 = vmul.f32 %v654, 0.5
    %v687 = vmul.f32 %v655, 0.5
    %v688 = vmul.f32 %v656, 0.5
    %v689 = vmul.f32 %v657, 0.5
    %v690 = vmul.f32 %v658, 0.5
    %v691 = vmul.f32 %v659, 0.5
    %v692 = vmul.f32 %v660, 0.5
    %v693 = vmul.f32 %v661, 0.5
    %v694 = vmul.f32 %v662, 0.5
    %v695 = vmul.f32 %v663, 0.5
    %v696 = vmul.f32 %v664, 0.5
    %v697 = vmul.f32 %v665, 0.5
    %v698 = vmul.f32 %v666, 0.5
    %v699 = vmul.f32 %v667, 0.5
    %v700 = vmul.f32 %v668, 0.5
    %v701 = vmul.f32 %v669, 0.5
    %v702 = vmul.f32 %v670, 0.5
    %v703 = vmul.f32 %v671, 0.5
    %v704 = vmul.f32 %v672, 0.5
    %v705 = vmul.f32 %v673, 0.5
    %v706 = vmul.f32 %v674, 0.5
    %v707 = vmul.f32 %v675, 0.5
    %v708 = vmul.f32 %v676, 0.5
    %v709 = vmul.f32 %v677, 0.5
    %v710 = vmul.f32 %v678, 0.5
    %v711 = vmul.f32 %v679, 0.5
    %v712 = vmul.f32 %v680, 0.5
    %v713 = vmul.f32 %v681, 0.5
    %v714 = vmul.f32 %v682, 0.5
    %v715 = vmul.f32 %v683, 0.5
    %v716 = vmul.f32 %v334, %v684
    %v717 = vmul.f32 %v337, %v685
    %v718 = vmul.f32 %v342, %v686
    %v719 = vmul.f32 %v345, %v687
    %v720 = vmul.f32 %v350, %v688
    %v721 = vmul.f32 %v353, %v689
    %v722 = vmul.f32 %v358, %v690
    %v723 = vmul.f32 %v361, %v691
    %v724 = vmul.f32 %v366, %v692
    %v725 = vmul.f32 %v369, %v693
    %v726 = vmul.f32 %v374, %v694
    %v727 = vmul.f32 %v377, %v695
    %v728 = vmul.f32 %v382, %v696
    %v729 = vmul.f32 %v385, %v697
    %v730 = vmul.f32 %v390, %v698
    %v731 = vmul.f32 %v393, %v699
    %v732 = vmul.f32 %v398, %v700
    %v733 = vmul.f32 %v401, %v701
    %v734 = vmul.f32 %v406, %v702
    %v735 = vmul.f32 %v409, %v703
    %v736 = vmul.f32 %v414, %v704
    %v737 = vmul.f32 %v417, %v705
    %v738 = vmul.f32 %v422, %v706
    %v739 = vmul.f32 %v425, %v707
    %v740 = vmul.f32 %v430, %v708
    %v741 = vmul.f32 %v433, %v709
    %v742 = vmul.f32 %v438, %v710
    %v743 = vmul.f32 %v441, %v711
    %v744 = vmul.f32 %v446, %v712
    %v745 = vmul.f32 %v449, %v713
    %v746 = vmul.f32 %v454, %v714
    %v747 = vmul.f32 %v457, %v715
    %v748 = vpack.c.bf16 %v717, %v716
    %v749 = vpack.c.bf16 %v719, %v718
    %v750 = vpack.c.bf16 %v721, %v720
    %v751 = vpack.c.bf16 %v723, %v722
    %v752 = vpack.c.bf16 %v725, %v724
    %v753 = vpack.c.bf16 %v727, %v726
    %v754 = vpack.c.bf16 %v729, %v728
    %v755 = vpack.c.bf16 %v731, %v730
    %v756 = vpack.c.bf16 %v733, %v732
    %v757 = vpack.c.bf16 %v735, %v734
    %v758 = vpack.c.bf16 %v737, %v736
    %v759 = vpack.c.bf16 %v739, %v738
    %v760 = vpack.c.bf16 %v741, %v740
    %v761 = vpack.c.bf16 %v743, %v742
    %v762 = vpack.c.bf16 %v745, %v744
    %v763 = vpack.c.bf16 %v747, %v746
    %v764 = vld [vmem:[#allocation8] sm:$0xf]
    %v765 = vld [vmem:[#allocation8 + $0x4] sm:$0xf]
    %v766 = vld [vmem:[#allocation10] sm:$0x1]
    %v768 = vlaneseq
    %v769 = vshrl.u32 %v768, 7
    %v770 = vsub.s32 0, %v769
    %v771 = vrot.slane %v766, %v770
    %v775 = vunpack.c.l.b16 %v764
    %v776 = vunpack.c.l.b16 %v765
    %v777 = vpack.c.b16 %v776, %v775
    %vm779 = vcmask 130048
    %v781 = vsel %vm779, %v748, 0
    %v784 = vsel %vm779, %v749, 0
    %v787 = vsel %vm779, %v750, 0
    %v790 = vsel %vm779, %v751, 0
    %v793 = vsel %vm779, %v752, 0
    %v796 = vsel %vm779, %v753, 0
    %v799 = vsel %vm779, %v754, 0
    %v802 = vsel %vm779, %v755, 0
    %v805 = vsel %vm779, %v756, 0
    %v808 = vsel %vm779, %v757, 0
    %v811 = vsel %vm779, %v758, 0
    %v814 = vsel %vm779, %v759, 0
    %v817 = vsel %vm779, %v760, 0
    %v820 = vsel %vm779, %v761, 0
    %v823 = vsel %vm779, %v762, 0
    %v826 = vsel %vm779, %v763, 0
    %828 = vmatprep.subr.bf16.mxu0 0
    %829 = vmatpush1.bf16.msra.mxu0 %v777
    %830 = vmatprep.subr.bf16.mxu0 0
    %831 = vmatpush1.bf16.msra.mxu0 0
    %832 = vmatprep.subr.bf16.mxu0 0
    %833 = vmatpush1.bf16.msra.mxu0 0
    %834 = vmatprep.subr.bf16.mxu0 0
    %835 = vmatpush1.bf16.msra.mxu0 0
    %836 = vmatprep.subr.bf16.mxu0 0
    %837 = vmatpush1.bf16.msra.mxu0 0
    %838 = vmatprep.subr.bf16.mxu0 0
    %839 = vmatpush1.bf16.msra.mxu0 0
    %840 = vmatprep.subr.bf16.mxu0 0
    %841 = vmatpush1.bf16.msra.mxu0 0
    %842 = vmatprep.subr.bf16.mxu0 0
    %843 = vmatpush1.bf16.msra.mxu0 0
    %844 = vmatprep.subr.bf16.mxu0 0
    %845 = vmatpush1.bf16.msra.mxu0 0
    %846 = vmatprep.subr.bf16.mxu0 0
    %847 = vmatpush1.bf16.msra.mxu0 0
    %848 = vmatprep.subr.bf16.mxu0 0
    %849 = vmatpush1.bf16.msra.mxu0 0
    %850 = vmatprep.subr.bf16.mxu0 0
    %851 = vmatpush1.bf16.msra.mxu0 0
    %852 = vmatprep.subr.bf16.mxu0 0
    %853 = vmatpush1.bf16.msra.mxu0 0
    %854 = vmatprep.subr.bf16.mxu0 0
    %855 = vmatpush1.bf16.msra.mxu0 0
    %856 = vmatprep.subr.bf16.mxu0 0
    %857 = vmatpush1.bf16.msra.mxu0 0
    %858 = vmatprep.subr.bf16.mxu0 0
    %859 = vmatpush1.bf16.msra.mxu0 0
    %860 = vmatprep.mubr.bf16.mxu0 0
    %861 = vmatmul.mubr.bf16.gmra.mrb[0].mxu0 %v781
    %v862 = vpop.f32.mrb[0].mxu0
    %v863 = vadd.f32 %v771, %v862
    %v864 = vpop.f32.mrb[0].mxu0
    %v865 = vpop.f32.mrb[0].mxu0
    %v866 = vadd.f32 %v771, %v865
    %v867 = vpop.f32.mrb[0].mxu0
    %868 = vmatprep.mubr.bf16.mxu0 0
    %869 = vmatmul.mubr.bf16.gmra.mrb[0].mxu0 %v784
    %v870 = vpop.f32.mrb[0].mxu0
    %v871 = vadd.f32 %v771, %v870
    %v872 = vpop.f32.mrb[0].mxu0
    %v873 = vpop.f32.mrb[0].mxu0
    %v874 = vadd.f32 %v771, %v873
    %v875 = vpop.f32.mrb[0].mxu0
    %876 = vmatprep.mubr.bf16.mxu0 0
    %877 = vmatmul.mubr.bf16.gmra.mrb[0].mxu0 %v787
    %v878 = vpop.f32.mrb[0].mxu0
    %v879 = vadd.f32 %v771, %v878
    %v880 = vpop.f32.mrb[0].mxu0
    %v881 = vpop.f32.mrb[0].mxu0
    %v882 = vadd.f32 %v771, %v881
    %v883 = vpop.f32.mrb[0].mxu0
    %884 = vmatprep.mubr.bf16.mxu0 0
    %885 = vmatmul.mubr.bf16.gmra.mrb[0].mxu0 %v790
    %v886 = vpop.f32.mrb[0].mxu0
    %v887 = vadd.f32 %v771, %v886
    %v888 = vpop.f32.mrb[0].mxu0
    %v889 = vpop.f32.mrb[0].mxu0
    %v890 = vadd.f32 %v771, %v889
    %v891 = vpop.f32.mrb[0].mxu0
    %892 = vmatprep.mubr.bf16.mxu0 0
    %893 = vmatmul.mubr.bf16.gmra.mrb[0].mxu0 %v793
    %v894 = vpop.f32.mrb[0].mxu0
    %v895 = vadd.f32 %v771, %v894
    %v896 = vpop.f32.mrb[0].mxu0
    %v897 = vpop.f32.mrb[0].mxu0
    %v898 = vadd.f32 %v771, %v897
    %v899 = vpop.f32.mrb[0].mxu0
    %900 = vmatprep.mubr.bf16.mxu0 0
    %901 = vmatmul.mubr.bf16.gmra.mrb[0].mxu0 %v796
    %v902 = vpop.f32.mrb[0].mxu0
    %v903 = vadd.f32 %v771, %v902
    %v904 = vpop.f32.mrb[0].mxu0
    %v905 = vpop.f32.mrb[0].mxu0
    %v906 = vadd.f32 %v771, %v905
    %v907 = vpop.f32.mrb[0].mxu0
    %908 = vmatprep.mubr.bf16.mxu0 0
    %909 = vmatmul.mubr.bf16.gmra.mrb[0].mxu0 %v799
    %v910 = vpop.f32.mrb[0].mxu0
    %v911 = vadd.f32 %v771, %v910
    %v912 = vpop.f32.mrb[0].mxu0
    %v913 = vpop.f32.mrb[0].mxu0
    %v914 = vadd.f32 %v771, %v913
    %v915 = vpop.f32.mrb[0].mxu0
    %916 = vmatprep.mubr.bf16.mxu0 0
    %917 = vmatmul.mubr.bf16.gmra.mrb[0].mxu0 %v802
    %v918 = vpop.f32.mrb[0].mxu0
    %v919 = vadd.f32 %v771, %v918
    %v920 = vpop.f32.mrb[0].mxu0
    %v921 = vpop.f32.mrb[0].mxu0
    %v922 = vadd.f32 %v771, %v921
    %v923 = vpop.f32.mrb[0].mxu0
    %924 = vmatprep.mubr.bf16.mxu0 0
    %925 = vmatmul.mubr.bf16.gmra.mrb[0].mxu0 %v805
    %v926 = vpop.f32.mrb[0].mxu0
    %v927 = vadd.f32 %v771, %v926
    %v928 = vpop.f32.mrb[0].mxu0
    %v929 = vpop.f32.mrb[0].mxu0
    %v930 = vadd.f32 %v771, %v929
    %v931 = vpop.f32.mrb[0].mxu0
    %932 = vmatprep.mubr.bf16.mxu0 0
    %933 = vmatmul.mubr.bf16.gmra.mrb[0].mxu0 %v808
    %v934 = vpop.f32.mrb[0].mxu0
    %v935 = vadd.f32 %v771, %v934
    %v936 = vpop.f32.mrb[0].mxu0
    %v937 = vpop.f32.mrb[0].mxu0
    %v938 = vadd.f32 %v771, %v937
    %v939 = vpop.f32.mrb[0].mxu0
    %940 = vmatprep.mubr.bf16.mxu0 0
    %941 = vmatmul.mubr.bf16.gmra.mrb[0].mxu0 %v811
    %v942 = vpop.f32.mrb[0].mxu0
    %v943 = vadd.f32 %v771, %v942
    %v944 = vpop.f32.mrb[0].mxu0
    %v945 = vpop.f32.mrb[0].mxu0
    %v946 = vadd.f32 %v771, %v945
    %v947 = vpop.f32.mrb[0].mxu0
    %948 = vmatprep.mubr.bf16.mxu0 0
    %949 = vmatmul.mubr.bf16.gmra.mrb[0].mxu0 %v814
    %v950 = vpop.f32.mrb[0].mxu0
    %v951 = vadd.f32 %v771, %v950
    %v952 = vpop.f32.mrb[0].mxu0
    %v953 = vpop.f32.mrb[0].mxu0
    %v954 = vadd.f32 %v771, %v953
    %v955 = vpop.f32.mrb[0].mxu0
    %956 = vmatprep.mubr.bf16.mxu0 0
    %957 = vmatmul.mubr.bf16.gmra.mrb[0].mxu0 %v817
    %v958 = vpop.f32.mrb[0].mxu0
    %v959 = vadd.f32 %v771, %v958
    %v960 = vpop.f32.mrb[0].mxu0
    %v961 = vpop.f32.mrb[0].mxu0
    %v962 = vadd.f32 %v771, %v961
    %v963 = vpop.f32.mrb[0].mxu0
    %964 = vmatprep.mubr.bf16.mxu0 0
    %965 = vmatmul.mubr.bf16.gmra.mrb[0].mxu0 %v820
    %v966 = vpop.f32.mrb[0].mxu0
    %v967 = vadd.f32 %v771, %v966
    %v968 = vpop.f32.mrb[0].mxu0
    %v969 = vpop.f32.mrb[0].mxu0
    %v970 = vadd.f32 %v771, %v969
    %v971 = vpop.f32.mrb[0].mxu0
    %972 = vmatprep.mubr.bf16.mxu0 0
    %973 = vmatmul.mubr.bf16.gmra.mrb[0].mxu0 %v823
    %v974 = vpop.f32.mrb[0].mxu0
    %v975 = vadd.f32 %v771, %v974
    %v976 = vpop.f32.mrb[0].mxu0
    %v977 = vpop.f32.mrb[0].mxu0
    %v978 = vadd.f32 %v771, %v977
    %v979 = vpop.f32.mrb[0].mxu0
    %980 = vmatprep.mubr.bf16.mxu0 0
    %981 = vmatmul.mubr.bf16.gmra.mrb[0].mxu0 %v826
    %v982 = vpop.f32.mrb[0].mxu0
    %v983 = vadd.f32 %v771, %v982
    %v984 = vpop.f32.mrb[0].mxu0
    %v985 = vpop.f32.mrb[0].mxu0
    %v986 = vadd.f32 %v771, %v985
    %v987 = vpop.f32.mrb[0].mxu0
    %988 = vdwg.mxu0
    %v989 = vunpack.c.l.bf16 %v115
    %v990 = vunpack.c.l.bf16 %v116
    %v991 = vunpack.c.l.bf16 %v117
    %v992 = vunpack.c.l.bf16 %v118
    %v993 = vunpack.c.l.bf16 %v119
    %v994 = vunpack.c.l.bf16 %v120
    %v995 = vunpack.c.l.bf16 %v121
    %v996 = vunpack.c.l.bf16 %v122
    %v997 = vunpack.c.l.bf16 %v123
    %v998 = vunpack.c.l.bf16 %v124
    %v999 = vunpack.c.l.bf16 %v125
    %v1000 = vunpack.c.l.bf16 %v126
    %v1001 = vunpack.c.l.bf16 %v127
    %v1002 = vunpack.c.l.bf16 %v128
    %v1003 = vunpack.c.l.bf16 %v129
    %v1004 = vunpack.c.l.bf16 %v130
    %v1005 = vunpack.c.l.bf16 %v131
    %v1006 = vunpack.c.l.bf16 %v132
    %v1007 = vunpack.c.l.bf16 %v133
    %v1008 = vunpack.c.l.bf16 %v134
    %v1009 = vunpack.c.l.bf16 %v135
    %v1010 = vunpack.c.l.bf16 %v136
    %v1011 = vunpack.c.l.bf16 %v137
    %v1012 = vunpack.c.l.bf16 %v138
    %v1013 = vunpack.c.l.bf16 %v139
    %v1014 = vunpack.c.l.bf16 %v140
    %v1015 = vunpack.c.l.bf16 %v141
    %v1016 = vunpack.c.l.bf16 %v142
    %v1017 = vunpack.c.l.bf16 %v143
    %v1018 = vunpack.c.l.bf16 %v144
    %v1019 = vunpack.c.l.bf16 %v145
    %v1020 = vunpack.c.l.bf16 %v146
    %v1021 = vadd.f32 %v989, %v863
    %v1022 = vadd.f32 %v990, %v866
    %v1023 = vadd.f32 %v991, %v871
    %v1024 = vadd.f32 %v992, %v874
    %v1025 = vadd.f32 %v993, %v879
    %v1026 = vadd.f32 %v994, %v882
    %v1027 = vadd.f32 %v995, %v887
    %v1028 = vadd.f32 %v996, %v890
    %v1029 = vadd.f32 %v997, %v895
    %v1030 = vadd.f32 %v998, %v898
    %v1031 = vadd.f32 %v999, %v903
    %v1032 = vadd.f32 %v1000, %v906
    %v1033 = vadd.f32 %v1001, %v911
    %v1034 = vadd.f32 %v1002, %v914
    %v1035 = vadd.f32 %v1003, %v919
    %v1036 = vadd.f32 %v1004, %v922
    %v1037 = vadd.f32 %v1005, %v927
    %v1038 = vadd.f32 %v1006, %v930
    %v1039 = vadd.f32 %v1007, %v935
    %v1040 = vadd.f32 %v1008, %v938
    %v1041 = vadd.f32 %v1009, %v943
    %v1042 = vadd.f32 %v1010, %v946
    %v1043 = vadd.f32 %v1011, %v951
    %v1044 = vadd.f32 %v1012, %v954
    %v1045 = vadd.f32 %v1013, %v959
    %v1046 = vadd.f32 %v1014, %v962
    %v1047 = vadd.f32 %v1015, %v967
    %v1048 = vadd.f32 %v1016, %v970
    %v1049 = vadd.f32 %v1017, %v975
    %v1050 = vadd.f32 %v1018, %v978
    %v1051 = vadd.f32 %v1019, %v983
    %v1052 = vadd.f32 %v1020, %v986
    %v1053 = vsel %vm250, %v1021, 0.0
    %1054 = vadd.xlane.f32.xlu0 %v1053
    %v1055 = vpop.xlane.xlu0 %1054
    %v1056 = vsel %vm250, %v1022, 0.0
    %1057 = vadd.xlane.f32.xlu0 %v1056
    %v1058 = vpop.xlane.xlu0 %1057
    %v1059 = vsel %vm250, %v1023, 0.0
    %1060 = vadd.xlane.f32.xlu0 %v1059
    %v1061 = vpop.xlane.xlu0 %1060
    %v1062 = vsel %vm250, %v1024, 0.0
    %1063 = vadd.xlane.f32.xlu0 %v1062
    %v1064 = vpop.xlane.xlu0 %1063
    %v1065 = vsel %vm250, %v1025, 0.0
    %1066 = vadd.xlane.f32.xlu0 %v1065
    %v1067 = vpop.xlane.xlu0 %1066
    %v1068 = vsel %vm250, %v1026, 0.0
    %1069 = vadd.xlane.f32.xlu0 %v1068
    %v1070 = vpop.xlane.xlu0 %1069
    %v1071 = vsel %vm250, %v1027, 0.0
    %1072 = vadd.xlane.f32.xlu0 %v1071
    %v1073 = vpop.xlane.xlu0 %1072
    %v1074 = vsel %vm250, %v1028, 0.0
    %1075 = vadd.xlane.f32.xlu0 %v1074
    %v1076 = vpop.xlane.xlu0 %1075
    %v1077 = vsel %vm250, %v1029, 0.0
    %1078 = vadd.xlane.f32.xlu0 %v1077
    %v1079 = vpop.xlane.xlu0 %1078
    %v1080 = vsel %vm250, %v1030, 0.0
    %1081 = vadd.xlane.f32.xlu0 %v1080
    %v1082 = vpop.xlane.xlu0 %1081
    %v1083 = vsel %vm250, %v1031, 0.0
    %1084 = vadd.xlane.f32.xlu0 %v1083
    %v1085 = vpop.xlane.xlu0 %1084
    %v1086 = vsel %vm250, %v1032, 0.0
    %1087 = vadd.xlane.f32.xlu0 %v1086
    %v1088 = vpop.xlane.xlu0 %1087
    %v1089 = vsel %vm250, %v1033, 0.0
    %1090 = vadd.xlane.f32.xlu0 %v1089
    %v1091 = vpop.xlane.xlu0 %1090
    %v1092 = vsel %vm250, %v1034, 0.0
    %1093 = vadd.xlane.f32.xlu0 %v1092
    %v1094 = vpop.xlane.xlu0 %1093
    %v1095 = vsel %vm250, %v1035, 0.0
    %1096 = vadd.xlane.f32.xlu0 %v1095
    %v1097 = vpop.xlane.xlu0 %1096
    %v1098 = vsel %vm250, %v1036, 0.0
    %1099 = vadd.xlane.f32.xlu0 %v1098
    %v1100 = vpop.xlane.xlu0 %1099
    %v1101 = vsel %vm250, %v1037, 0.0
    %1102 = vadd.xlane.f32.xlu0 %v1101
    %v1103 = vpop.xlane.xlu0 %1102
    %v1104 = vsel %vm250, %v1038, 0.0
    %1105 = vadd.xlane.f32.xlu0 %v1104
    %v1106 = vpop.xlane.xlu0 %1105
    %v1107 = vsel %vm250, %v1039, 0.0
    %1108 = vadd.xlane.f32.xlu0 %v1107
    %v1109 = vpop.xlane.xlu0 %1108
    %v1110 = vsel %vm250, %v1040, 0.0
    %1111 = vadd.xlane.f32.xlu0 %v1110
    %v1112 = vpop.xlane.xlu0 %1111
    %v1113 = vsel %vm250, %v1041, 0.0
    %1114 = vadd.xlane.f32.xlu0 %v1113
    %v1115 = vpop.xlane.xlu0 %1114
    %v1116 = vsel %vm250, %v1042, 0.0
    %1117 = vadd.xlane.f32.xlu0 %v1116
    %v1118 = vpop.xlane.xlu0 %1117
    %v1119 = vsel %vm250, %v1043, 0.0
    %1120 = vadd.xlane.f32.xlu0 %v1119
    %v1121 = vpop.xlane.xlu0 %1120
    %v1122 = vsel %vm250, %v1044, 0.0
    %1123 = vadd.xlane.f32.xlu0 %v1122
    %v1124 = vpop.xlane.xlu0 %1123
    %v1125 = vsel %vm250, %v1045, 0.0
    %1126 = vadd.xlane.f32.xlu0 %v1125
    %v1127 = vpop.xlane.xlu0 %1126
    %v1128 = vsel %vm250, %v1046, 0.0
    %1129 = vadd.xlane.f32.xlu0 %v1128
    %v1130 = vpop.xlane.xlu0 %1129
    %v1131 = vsel %vm250, %v1047, 0.0
    %1132 = vadd.xlane.f32.xlu0 %v1131
    %v1133 = vpop.xlane.xlu0 %1132
    %v1134 = vsel %vm250, %v1048, 0.0
    %1135 = vadd.xlane.f32.xlu0 %v1134
    %v1136 = vpop.xlane.xlu0 %1135
    %v1137 = vsel %vm250, %v1049, 0.0
    %1138 = vadd.xlane.f32.xlu0 %v1137
    %v1139 = vpop.xlane.xlu0 %1138
    %v1140 = vsel %vm250, %v1050, 0.0
    %1141 = vadd.xlane.f32.xlu0 %v1140
    %v1142 = vpop.xlane.xlu0 %1141
    %v1143 = vsel %vm250, %v1051, 0.0
    %1144 = vadd.xlane.f32.xlu0 %v1143
    %v1145 = vpop.xlane.xlu0 %1144
    %v1146 = vsel %vm250, %v1052, 0.0
    %1147 = vadd.xlane.f32.xlu0 %v1146
    %v1148 = vpop.xlane.xlu0 %1147
    %v1149 = vrcp.pop 32.0
    %v1150 = vmul.f32 %v1055, %v1149
    %v1151 = vmul.f32 %v1058, %v1149
    %v1152 = vmul.f32 %v1061, %v1149
    %v1153 = vmul.f32 %v1064, %v1149
    %v1154 = vmul.f32 %v1067, %v1149
    %v1155 = vmul.f32 %v1070, %v1149
    %v1156 = vmul.f32 %v1073, %v1149
    %v1157 = vmul.f32 %v1076, %v1149
    %v1158 = vmul.f32 %v1079, %v1149
    %v1159 = vmul.f32 %v1082, %v1149
    %v1160 = vmul.f32 %v1085, %v1149
    %v1161 = vmul.f32 %v1088, %v1149
    %v1162 = vmul.f32 %v1091, %v1149
    %v1163 = vmul.f32 %v1094, %v1149
    %v1164 = vmul.f32 %v1097, %v1149
    %v1165 = vmul.f32 %v1100, %v1149
    %v1166 = vmul.f32 %v1103, %v1149
    %v1167 = vmul.f32 %v1106, %v1149
    %v1168 = vmul.f32 %v1109, %v1149
    %v1169 = vmul.f32 %v1112, %v1149
    %v1170 = vmul.f32 %v1115, %v1149
    %v1171 = vmul.f32 %v1118, %v1149
    %v1172 = vmul.f32 %v1121, %v1149
    %v1173 = vmul.f32 %v1124, %v1149
    %v1174 = vmul.f32 %v1127, %v1149
    %v1175 = vmul.f32 %v1130, %v1149
    %v1176 = vmul.f32 %v1133, %v1149
    %v1177 = vmul.f32 %v1136, %v1149
    %v1178 = vmul.f32 %v1139, %v1149
    %v1179 = vmul.f32 %v1142, %v1149
    %v1180 = vmul.f32 %v1145, %v1149
    %v1181 = vmul.f32 %v1148, %v1149
    %v1182 = vsub.f32 %v1021, %v1150
    %v1183 = vsub.f32 %v1022, %v1151
    %v1184 = vsub.f32 %v1023, %v1152
    %v1185 = vsub.f32 %v1024, %v1153
    %v1186 = vsub.f32 %v1025, %v1154
    %v1187 = vsub.f32 %v1026, %v1155
    %v1188 = vsub.f32 %v1027, %v1156
    %v1189 = vsub.f32 %v1028, %v1157
    %v1190 = vsub.f32 %v1029, %v1158
    %v1191 = vsub.f32 %v1030, %v1159
    %v1192 = vsub.f32 %v1031, %v1160
    %v1193 = vsub.f32 %v1032, %v1161
    %v1194 = vsub.f32 %v1033, %v1162
    %v1195 = vsub.f32 %v1034, %v1163
    %v1196 = vsub.f32 %v1035, %v1164
    %v1197 = vsub.f32 %v1036, %v1165
    %v1198 = vsub.f32 %v1037, %v1166
    %v1199 = vsub.f32 %v1038, %v1167
    %v1200 = vsub.f32 %v1039, %v1168
    %v1201 = vsub.f32 %v1040, %v1169
    %v1202 = vsub.f32 %v1041, %v1170
    %v1203 = vsub.f32 %v1042, %v1171
    %v1204 = vsub.f32 %v1043, %v1172
    %v1205 = vsub.f32 %v1044, %v1173
    %v1206 = vsub.f32 %v1045, %v1174
    %v1207 = vsub.f32 %v1046, %v1175
    %v1208 = vsub.f32 %v1047, %v1176
    %v1209 = vsub.f32 %v1048, %v1177
    %v1210 = vsub.f32 %v1049, %v1178
    %v1211 = vsub.f32 %v1050, %v1179
    %v1212 = vsub.f32 %v1051, %v1180
    %v1213 = vsub.f32 %v1052, %v1181
    %v1214 = vmul.f32 %v1182, %v1182
    %v1215 = vmul.f32 %v1183, %v1183
    %v1216 = vmul.f32 %v1184, %v1184
    %v1217 = vmul.f32 %v1185, %v1185
    %v1218 = vmul.f32 %v1186, %v1186
    %v1219 = vmul.f32 %v1187, %v1187
    %v1220 = vmul.f32 %v1188, %v1188
    %v1221 = vmul.f32 %v1189, %v1189
    %v1222 = vmul.f32 %v1190, %v1190
    %v1223 = vmul.f32 %v1191, %v1191
    %v1224 = vmul.f32 %v1192, %v1192
    %v1225 = vmul.f32 %v1193, %v1193
    %v1226 = vmul.f32 %v1194, %v1194
    %v1227 = vmul.f32 %v1195, %v1195
    %v1228 = vmul.f32 %v1196, %v1196
    %v1229 = vmul.f32 %v1197, %v1197
    %v1230 = vmul.f32 %v1198, %v1198
    %v1231 = vmul.f32 %v1199, %v1199
    %v1232 = vmul.f32 %v1200, %v1200
    %v1233 = vmul.f32 %v1201, %v1201
    %v1234 = vmul.f32 %v1202, %v1202
    %v1235 = vmul.f32 %v1203, %v1203
    %v1236 = vmul.f32 %v1204, %v1204
    %v1237 = vmul.f32 %v1205, %v1205
    %v1238 = vmul.f32 %v1206, %v1206
    %v1239 = vmul.f32 %v1207, %v1207
    %v1240 = vmul.f32 %v1208, %v1208
    %v1241 = vmul.f32 %v1209, %v1209
    %v1242 = vmul.f32 %v1210, %v1210
    %v1243 = vmul.f32 %v1211, %v1211
    %v1244 = vmul.f32 %v1212, %v1212
    %v1245 = vmul.f32 %v1213, %v1213
    %v1246 = vsel %vm250, %v1214, 0.0
    %1247 = vadd.xlane.f32.xlu0 %v1246
    %v1248 = vpop.xlane.xlu0 %1247
    %v1249 = vsel %vm250, %v1215, 0.0
    %1250 = vadd.xlane.f32.xlu0 %v1249
    %v1251 = vpop.xlane.xlu0 %1250
    %v1252 = vsel %vm250, %v1216, 0.0
    %1253 = vadd.xlane.f32.xlu0 %v1252
    %v1254 = vpop.xlane.xlu0 %1253
    %v1255 = vsel %vm250, %v1217, 0.0
    %1256 = vadd.xlane.f32.xlu0 %v1255
    %v1257 = vpop.xlane.xlu0 %1256
    %v1258 = vsel %vm250, %v1218, 0.0
    %1259 = vadd.xlane.f32.xlu0 %v1258
    %v1260 = vpop.xlane.xlu0 %1259
    %v1261 = vsel %vm250, %v1219, 0.0
    %1262 = vadd.xlane.f32.xlu0 %v1261
    %v1263 = vpop.xlane.xlu0 %1262
    %v1264 = vsel %vm250, %v1220, 0.0
    %1265 = vadd.xlane.f32.xlu0 %v1264
    %v1266 = vpop.xlane.xlu0 %1265
    %v1267 = vsel %vm250, %v1221, 0.0
    %1268 = vadd.xlane.f32.xlu0 %v1267
    %v1269 = vpop.xlane.xlu0 %1268
    %v1270 = vsel %vm250, %v1222, 0.0
    %1271 = vadd.xlane.f32.xlu0 %v1270
    %v1272 = vpop.xlane.xlu0 %1271
    %v1273 = vsel %vm250, %v1223, 0.0
    %1274 = vadd.xlane.f32.xlu0 %v1273
    %v1275 = vpop.xlane.xlu0 %1274
    %v1276 = vsel %vm250, %v1224, 0.0
    %1277 = vadd.xlane.f32.xlu0 %v1276
    %v1278 = vpop.xlane.xlu0 %1277
    %v1279 = vsel %vm250, %v1225, 0.0
    %1280 = vadd.xlane.f32.xlu0 %v1279
    %v1281 = vpop.xlane.xlu0 %1280
    %v1282 = vsel %vm250, %v1226, 0.0
    %1283 = vadd.xlane.f32.xlu0 %v1282
    %v1284 = vpop.xlane.xlu0 %1283
    %v1285 = vsel %vm250, %v1227, 0.0
    %1286 = vadd.xlane.f32.xlu0 %v1285
    %v1287 = vpop.xlane.xlu0 %1286
    %v1288 = vsel %vm250, %v1228, 0.0
    %1289 = vadd.xlane.f32.xlu0 %v1288
    %v1290 = vpop.xlane.xlu0 %1289
    %v1291 = vsel %vm250, %v1229, 0.0
    %1292 = vadd.xlane.f32.xlu0 %v1291
    %v1293 = vpop.xlane.xlu0 %1292
    %v1294 = vsel %vm250, %v1230, 0.0
    %1295 = vadd.xlane.f32.xlu0 %v1294
    %v1296 = vpop.xlane.xlu0 %1295
    %v1297 = vsel %vm250, %v1231, 0.0
    %1298 = vadd.xlane.f32.xlu0 %v1297
    %v1299 = vpop.xlane.xlu0 %1298
    %v1300 = vsel %vm250, %v1232, 0.0
    %1301 = vadd.xlane.f32.xlu0 %v1300
    %v1302 = vpop.xlane.xlu0 %1301
    %v1303 = vsel %vm250, %v1233, 0.0
    %1304 = vadd.xlane.f32.xlu0 %v1303
    %v1305 = vpop.xlane.xlu0 %1304
    %v1306 = vsel %vm250, %v1234, 0.0
    %1307 = vadd.xlane.f32.xlu0 %v1306
    %v1308 = vpop.xlane.xlu0 %1307
    %v1309 = vsel %vm250, %v1235, 0.0
    %1310 = vadd.xlane.f32.xlu0 %v1309
    %v1311 = vpop.xlane.xlu0 %1310
    %v1312 = vsel %vm250, %v1236, 0.0
    %1313 = vadd.xlane.f32.xlu0 %v1312
    %v1314 = vpop.xlane.xlu0 %1313
    %v1315 = vsel %vm250, %v1237, 0.0
    %1316 = vadd.xlane.f32.xlu0 %v1315
    %v1317 = vpop.xlane.xlu0 %1316
    %v1318 = vsel %vm250, %v1238, 0.0
    %1319 = vadd.xlane.f32.xlu0 %v1318
    %v1320 = vpop.xlane.xlu0 %1319
    %v1321 = vsel %vm250, %v1239, 0.0
    %1322 = vadd.xlane.f32.xlu0 %v1321
    %v1323 = vpop.xlane.xlu0 %1322
    %v1324 = vsel %vm250, %v1240, 0.0
    %1325 = vadd.xlane.f32.xlu0 %v1324
    %v1326 = vpop.xlane.xlu0 %1325
    %v1327 = vsel %vm250, %v1241, 0.0
    %1328 = vadd.xlane.f32.xlu0 %v1327
    %v1329 = vpop.xlane.xlu0 %1328
    %v1330 = vsel %vm250, %v1242, 0.0
    %1331 = vadd.xlane.f32.xlu0 %v1330
    %v1332 = vpop.xlane.xlu0 %1331
    %v1333 = vsel %vm250, %v1243, 0.0
    %1334 = vadd.xlane.f32.xlu0 %v1333
    %v1335 = vpop.xlane.xlu0 %1334
    %v1336 = vsel %vm250, %v1244, 0.0
    %1337 = vadd.xlane.f32.xlu0 %v1336
    %v1338 = vpop.xlane.xlu0 %1337
    %v1339 = vsel %vm250, %v1245, 0.0
    %1340 = vadd.xlane.f32.xlu0 %v1339
    %v1341 = vpop.xlane.xlu0 %1340
    %v1342 = vmul.f32 %v1248, %v1149
    %v1343 = vmul.f32 %v1251, %v1149
    %v1344 = vmul.f32 %v1254, %v1149
    %v1345 = vmul.f32 %v1257, %v1149
    %v1346 = vmul.f32 %v1260, %v1149
    %v1347 = vmul.f32 %v1263, %v1149
    %v1348 = vmul.f32 %v1266, %v1149
    %v1349 = vmul.f32 %v1269, %v1149
    %v1350 = vmul.f32 %v1272, %v1149
    %v1351 = vmul.f32 %v1275, %v1149
    %v1352 = vmul.f32 %v1278, %v1149
    %v1353 = vmul.f32 %v1281, %v1149
    %v1354 = vmul.f32 %v1284, %v1149
    %v1355 = vmul.f32 %v1287, %v1149
    %v1356 = vmul.f32 %v1290, %v1149
    %v1357 = vmul.f32 %v1293, %v1149
    %v1358 = vmul.f32 %v1296, %v1149
    %v1359 = vmul.f32 %v1299, %v1149
    %v1360 = vmul.f32 %v1302, %v1149
    %v1361 = vmul.f32 %v1305, %v1149
    %v1362 = vmul.f32 %v1308, %v1149
    %v1363 = vmul.f32 %v1311, %v1149
    %v1364 = vmul.f32 %v1314, %v1149
    %v1365 = vmul.f32 %v1317, %v1149
    %v1366 = vmul.f32 %v1320, %v1149
    %v1367 = vmul.f32 %v1323, %v1149
    %v1368 = vmul.f32 %v1326, %v1149
    %v1369 = vmul.f32 %v1329, %v1149
    %v1370 = vmul.f32 %v1332, %v1149
    %v1371 = vmul.f32 %v1335, %v1149
    %v1372 = vmul.f32 %v1338, %v1149
    %v1373 = vmul.f32 %v1341, %v1149
    %v1374 = vadd.f32 %v1342, 1e-05
    %v1375 = vadd.f32 %v1343, 1e-05
    %v1376 = vadd.f32 %v1344, 1e-05
    %v1377 = vadd.f32 %v1345, 1e-05
    %v1378 = vadd.f32 %v1346, 1e-05
    %v1379 = vadd.f32 %v1347, 1e-05
    %v1380 = vadd.f32 %v1348, 1e-05
    %v1381 = vadd.f32 %v1349, 1e-05
    %v1382 = vadd.f32 %v1350, 1e-05
    %v1383 = vadd.f32 %v1351, 1e-05
    %v1384 = vadd.f32 %v1352, 1e-05
    %v1385 = vadd.f32 %v1353, 1e-05
    %v1386 = vadd.f32 %v1354, 1e-05
    %v1387 = vadd.f32 %v1355, 1e-05
    %v1388 = vadd.f32 %v1356, 1e-05
    %v1389 = vadd.f32 %v1357, 1e-05
    %v1390 = vadd.f32 %v1358, 1e-05
    %v1391 = vadd.f32 %v1359, 1e-05
    %v1392 = vadd.f32 %v1360, 1e-05
    %v1393 = vadd.f32 %v1361, 1e-05
    %v1394 = vadd.f32 %v1362, 1e-05
    %v1395 = vadd.f32 %v1363, 1e-05
    %v1396 = vadd.f32 %v1364, 1e-05
    %v1397 = vadd.f32 %v1365, 1e-05
    %v1398 = vadd.f32 %v1366, 1e-05
    %v1399 = vadd.f32 %v1367, 1e-05
    %v1400 = vadd.f32 %v1368, 1e-05
    %v1401 = vadd.f32 %v1369, 1e-05
    %v1402 = vadd.f32 %v1370, 1e-05
    %v1403 = vadd.f32 %v1371, 1e-05
    %v1404 = vadd.f32 %v1372, 1e-05
    %v1405 = vadd.f32 %v1373, 1e-05
    %v1406 = vrsqrt.pop %v1374
    %v1407 = vrsqrt.pop %v1375
    %v1408 = vrsqrt.pop %v1376
    %v1409 = vrsqrt.pop %v1377
    %v1410 = vrsqrt.pop %v1378
    %v1411 = vrsqrt.pop %v1379
    %v1412 = vrsqrt.pop %v1380
    %v1413 = vrsqrt.pop %v1381
    %v1414 = vrsqrt.pop %v1382
    %v1415 = vrsqrt.pop %v1383
    %v1416 = vrsqrt.pop %v1384
    %v1417 = vrsqrt.pop %v1385
    %v1418 = vrsqrt.pop %v1386
    %v1419 = vrsqrt.pop %v1387
    %v1420 = vrsqrt.pop %v1388
    %v1421 = vrsqrt.pop %v1389
    %v1422 = vrsqrt.pop %v1390
    %v1423 = vrsqrt.pop %v1391
    %v1424 = vrsqrt.pop %v1392
    %v1425 = vrsqrt.pop %v1393
    %v1426 = vrsqrt.pop %v1394
    %v1427 = vrsqrt.pop %v1395
    %v1428 = vrsqrt.pop %v1396
    %v1429 = vrsqrt.pop %v1397
    %v1430 = vrsqrt.pop %v1398
    %v1431 = vrsqrt.pop %v1399
    %v1432 = vrsqrt.pop %v1400
    %v1433 = vrsqrt.pop %v1401
    %v1434 = vrsqrt.pop %v1402
    %v1435 = vrsqrt.pop %v1403
    %v1436 = vrsqrt.pop %v1404
    %v1437 = vrsqrt.pop %v1405
    %v1438 = vmul.f32 %v1182, %v1406
    %v1439 = vmul.f32 %v1183, %v1407
    %v1440 = vmul.f32 %v1184, %v1408
    %v1441 = vmul.f32 %v1185, %v1409
    %v1442 = vmul.f32 %v1186, %v1410
    %v1443 = vmul.f32 %v1187, %v1411
    %v1444 = vmul.f32 %v1188, %v1412
    %v1445 = vmul.f32 %v1189, %v1413
    %v1446 = vmul.f32 %v1190, %v1414
    %v1447 = vmul.f32 %v1191, %v1415
    %v1448 = vmul.f32 %v1192, %v1416
    %v1449 = vmul.f32 %v1193, %v1417
    %v1450 = vmul.f32 %v1194, %v1418
    %v1451 = vmul.f32 %v1195, %v1419
    %v1452 = vmul.f32 %v1196, %v1420
    %v1453 = vmul.f32 %v1197, %v1421
    %v1454 = vmul.f32 %v1198, %v1422
    %v1455 = vmul.f32 %v1199, %v1423
    %v1456 = vmul.f32 %v1200, %v1424
    %v1457 = vmul.f32 %v1201, %v1425
    %v1458 = vmul.f32 %v1202, %v1426
    %v1459 = vmul.f32 %v1203, %v1427
    %v1460 = vmul.f32 %v1204, %v1428
    %v1461 = vmul.f32 %v1205, %v1429
    %v1462 = vmul.f32 %v1206, %v1430
    %v1463 = vmul.f32 %v1207, %v1431
    %v1464 = vmul.f32 %v1208, %v1432
    %v1465 = vmul.f32 %v1209, %v1433
    %v1466 = vmul.f32 %v1210, %v1434
    %v1467 = vmul.f32 %v1211, %v1435
    %v1468 = vmul.f32 %v1212, %v1436
    %v1469 = vmul.f32 %v1213, %v1437
    %v1470 = vld [vmem:[#allocation11] sm:$0x1]
    %v1472 = vlaneseq
    %v1473 = vshrl.u32 %v1472, 7
    %v1474 = vsub.s32 0, %v1473
    %v1475 = vrot.slane %v1470, %v1474
    %v1477 = vmul.f32 %v1438, %v1475
    %v1478 = vmul.f32 %v1439, %v1475
    %v1479 = vmul.f32 %v1440, %v1475
    %v1480 = vmul.f32 %v1441, %v1475
    %v1481 = vmul.f32 %v1442, %v1475
    %v1482 = vmul.f32 %v1443, %v1475
    %v1483 = vmul.f32 %v1444, %v1475
    %v1484 = vmul.f32 %v1445, %v1475
    %v1485 = vmul.f32 %v1446, %v1475
    %v1486 = vmul.f32 %v1447, %v1475
    %v1487 = vmul.f32 %v1448, %v1475
    %v1488 = vmul.f32 %v1449, %v1475
    %v1489 = vmul.f32 %v1450, %v1475
    %v1490 = vmul.f32 %v1451, %v1475
    %v1491 = vmul.f32 %v1452, %v1475
    %v1492 = vmul.f32 %v1453, %v1475
    %v1493 = vmul.f32 %v1454, %v1475
    %v1494 = vmul.f32 %v1455, %v1475
    %v1495 = vmul.f32 %v1456, %v1475
    %v1496 = vmul.f32 %v1457, %v1475
    %v1497 = vmul.f32 %v1458, %v1475
    %v1498 = vmul.f32 %v1459, %v1475
    %v1499 = vmul.f32 %v1460, %v1475
    %v1500 = vmul.f32 %v1461, %v1475
    %v1501 = vmul.f32 %v1462, %v1475
    %v1502 = vmul.f32 %v1463, %v1475
    %v1503 = vmul.f32 %v1464, %v1475
    %v1504 = vmul.f32 %v1465, %v1475
    %v1505 = vmul.f32 %v1466, %v1475
    %v1506 = vmul.f32 %v1467, %v1475
    %v1507 = vmul.f32 %v1468, %v1475
    %v1508 = vmul.f32 %v1469, %v1475
    %v1509 = vld [vmem:[#allocation13] sm:$0x1]
    %v1511 = vlaneseq
    %v1512 = vshrl.u32 %v1511, 7
    %v1513 = vsub.s32 0, %v1512
    %v1514 = vrot.slane %v1509, %v1513
    %v1516 = vadd.f32 %v1477, %v1514
    %v1517 = vadd.f32 %v1478, %v1514
    %v1518 = vadd.f32 %v1479, %v1514
    %v1519 = vadd.f32 %v1480, %v1514
    %v1520 = vadd.f32 %v1481, %v1514
    %v1521 = vadd.f32 %v1482, %v1514
    %v1522 = vadd.f32 %v1483, %v1514
    %v1523 = vadd.f32 %v1484, %v1514
    %v1524 = vadd.f32 %v1485, %v1514
    %v1525 = vadd.f32 %v1486, %v1514
    %v1526 = vadd.f32 %v1487, %v1514
    %v1527 = vadd.f32 %v1488, %v1514
    %v1528 = vadd.f32 %v1489, %v1514
    %v1529 = vadd.f32 %v1490, %v1514
    %v1530 = vadd.f32 %v1491, %v1514
    %v1531 = vadd.f32 %v1492, %v1514
    %v1532 = vadd.f32 %v1493, %v1514
    %v1533 = vadd.f32 %v1494, %v1514
    %v1534 = vadd.f32 %v1495, %v1514
    %v1535 = vadd.f32 %v1496, %v1514
    %v1536 = vadd.f32 %v1497, %v1514
    %v1537 = vadd.f32 %v1498, %v1514
    %v1538 = vadd.f32 %v1499, %v1514
    %v1539 = vadd.f32 %v1500, %v1514
    %v1540 = vadd.f32 %v1501, %v1514
    %v1541 = vadd.f32 %v1502, %v1514
    %v1542 = vadd.f32 %v1503, %v1514
    %v1543 = vadd.f32 %v1504, %v1514
    %v1544 = vadd.f32 %v1505, %v1514
    %v1545 = vadd.f32 %v1506, %v1514
    %v1546 = vadd.f32 %v1507, %v1514
    %v1547 = vadd.f32 %v1508, %v1514
    %v1548 = vpack.c.bf16 %v1517, %v1516
    %v1549 = vpack.c.bf16 %v1519, %v1518
    %v1550 = vpack.c.bf16 %v1521, %v1520
    %v1551 = vpack.c.bf16 %v1523, %v1522
    %v1552 = vpack.c.bf16 %v1525, %v1524
    %v1553 = vpack.c.bf16 %v1527, %v1526
    %v1554 = vpack.c.bf16 %v1529, %v1528
    %v1555 = vpack.c.bf16 %v1531, %v1530
    %v1556 = vpack.c.bf16 %v1533, %v1532
    %v1557 = vpack.c.bf16 %v1535, %v1534
    %v1558 = vpack.c.bf16 %v1537, %v1536
    %v1559 = vpack.c.bf16 %v1539, %v1538
    %v1560 = vpack.c.bf16 %v1541, %v1540
    %v1561 = vpack.c.bf16 %v1543, %v1542
    %v1562 = vpack.c.bf16 %v1545, %v1544
    %v1563 = vpack.c.bf16 %v1547, %v1546
    %v1580 = vunpack.c.l.b16 %v1548
    %v1581 = vunpack.c.h.b16 %v1548
    %v1582 = vunpack.c.l.b16 %v1549
    %v1583 = vunpack.c.h.b16 %v1549
    %v1584 = vunpack.c.l.b16 %v1550
    %v1585 = vunpack.c.h.b16 %v1550
    %v1586 = vunpack.c.l.b16 %v1551
    %v1587 = vunpack.c.h.b16 %v1551
    %v1588 = vunpack.c.l.b16 %v1552
    %v1589 = vunpack.c.h.b16 %v1552
    %v1590 = vunpack.c.l.b16 %v1553
    %v1591 = vunpack.c.h.b16 %v1553
    %v1592 = vunpack.c.l.b16 %v1554
    %v1593 = vunpack.c.h.b16 %v1554
    %v1594 = vunpack.c.l.b16 %v1555
    %v1595 = vunpack.c.h.b16 %v1555
    %v1596 = vunpack.c.l.b16 %v1556
    %v1597 = vunpack.c.h.b16 %v1556
    %v1598 = vunpack.c.l.b16 %v1557
    %v1599 = vunpack.c.h.b16 %v1557
    %v1600 = vunpack.c.l.b16 %v1558
    %v1601 = vunpack.c.h.b16 %v1558
    %v1602 = vunpack.c.l.b16 %v1559
    %v1603 = vunpack.c.h.b16 %v1559
    %v1604 = vunpack.c.l.b16 %v1560
    %v1605 = vunpack.c.h.b16 %v1560
    %v1606 = vunpack.c.l.b16 %v1561
    %v1607 = vunpack.c.h.b16 %v1561
    %v1608 = vunpack.c.l.b16 %v1562
    %v1609 = vunpack.c.h.b16 %v1562
    %v1610 = vunpack.c.l.b16 %v1563
    %v1611 = vunpack.c.h.b16 %v1563
    %v1612 = vpack.c.b16 %v1580, %v1580
    %v1613 = vpack.c.b16 %v1581, %v1581
    %v1614 = vpack.c.b16 %v1582, %v1582
    %v1615 = vpack.c.b16 %v1583, %v1583
    %v1616 = vpack.c.b16 %v1584, %v1584
    %v1617 = vpack.c.b16 %v1585, %v1585
    %v1618 = vpack.c.b16 %v1586, %v1586
    %v1619 = vpack.c.b16 %v1587, %v1587
    %v1620 = vpack.c.b16 %v1588, %v1588
    %v1621 = vpack.c.b16 %v1589, %v1589
    %v1622 = vpack.c.b16 %v1590, %v1590
    %v1623 = vpack.c.b16 %v1591, %v1591
    %v1624 = vpack.c.b16 %v1592, %v1592
    %v1625 = vpack.c.b16 %v1593, %v1593
    %v1626 = vpack.c.b16 %v1594, %v1594
    %v1627 = vpack.c.b16 %v1595, %v1595
    %v1628 = vpack.c.b16 %v1596, %v1596
    %v1629 = vpack.c.b16 %v1597, %v1597
    %v1630 = vpack.c.b16 %v1598, %v1598
    %v1631 = vpack.c.b16 %v1599, %v1599
    %v1632 = vpack.c.b16 %v1600, %v1600
    %v1633 = vpack.c.b16 %v1601, %v1601
    %v1634 = vpack.c.b16 %v1602, %v1602
    %v1635 = vpack.c.b16 %v1603, %v1603
    %v1636 = vpack.c.b16 %v1604, %v1604
    %v1637 = vpack.c.b16 %v1605, %v1605
    %v1638 = vpack.c.b16 %v1606, %v1606
    %v1639 = vpack.c.b16 %v1607, %v1607
    %v1640 = vpack.c.b16 %v1608, %v1608
    %v1641 = vpack.c.b16 %v1609, %v1609
    %v1642 = vpack.c.b16 %v1610, %v1610
    %v1643 = vpack.c.b16 %v1611, %v1611
    %vm1676 = vcmask 257024
    %1677 = vst.msk [vmem:[#allocation14] sm:$0xf] %vm1676, %v1612
    %1678 = vst.msk [vmem:[#allocation14 + $0x4] sm:$0xf] %vm1676, %v1613
    %1679 = vst.msk [vmem:[#allocation14 + $0x8] sm:$0xf] %vm1676, %v1614
    %1680 = vst.msk [vmem:[#allocation14 + $0xc] sm:$0xf] %vm1676, %v1615
    %1681 = vst.msk [vmem:[#allocation14 + $0x10] sm:$0xf] %vm1676, %v1616
    %1682 = vst.msk [vmem:[#allocation14 + $0x14] sm:$0xf] %vm1676, %v1617
    %1683 = vst.msk [vmem:[#allocation14 + $0x18] sm:$0xf] %vm1676, %v1618
    %1684 = vst.msk [vmem:[#allocation14 + $0x1c] sm:$0xf] %vm1676, %v1619
    %1685 = vst.msk [vmem:[#allocation14 + $0x20] sm:$0xf] %vm1676, %v1620
    %1686 = vst.msk [vmem:[#allocation14 + $0x24] sm:$0xf] %vm1676, %v1621
    %1687 = vst.msk [vmem:[#allocation14 + $0x28] sm:$0xf] %vm1676, %v1622
    %1688 = vst.msk [vmem:[#allocation14 + $0x2c] sm:$0xf] %vm1676, %v1623
    %1689 = vst.msk [vmem:[#allocation14 + $0x30] sm:$0xf] %vm1676, %v1624
    %1690 = vst.msk [vmem:[#allocation14 + $0x34] sm:$0xf] %vm1676, %v1625
    %1691 = vst.msk [vmem:[#allocation14 + $0x38] sm:$0xf] %vm1676, %v1626
    %1692 = vst.msk [vmem:[#allocation14 + $0x3c] sm:$0xf] %vm1676, %v1627
    %1693 = vst.msk [vmem:[#allocation14 + $0x40] sm:$0xf] %vm1676, %v1628
    %1694 = vst.msk [vmem:[#allocation14 + $0x44] sm:$0xf] %vm1676, %v1629
    %1695 = vst.msk [vmem:[#allocation14 + $0x48] sm:$0xf] %vm1676, %v1630
    %1696 = vst.msk [vmem:[#allocation14 + $0x4c] sm:$0xf] %vm1676, %v1631
    %1697 = vst.msk [vmem:[#allocation14 + $0x50] sm:$0xf] %vm1676, %v1632
    %1698 = vst.msk [vmem:[#allocation14 + $0x54] sm:$0xf] %vm1676, %v1633
    %1699 = vst.msk [vmem:[#allocation14 + $0x58] sm:$0xf] %vm1676, %v1634
    %1700 = vst.msk [vmem:[#allocation14 + $0x5c] sm:$0xf] %vm1676, %v1635
    %1701 = vst.msk [vmem:[#allocation14 + $0x60] sm:$0xf] %vm1676, %v1636
    %1702 = vst.msk [vmem:[#allocation14 + $0x64] sm:$0xf] %vm1676, %v1637
    %1703 = vst.msk [vmem:[#allocation14 + $0x68] sm:$0xf] %vm1676, %v1638
    %1704 = vst.msk [vmem:[#allocation14 + $0x6c] sm:$0xf] %vm1676, %v1639
    %1705 = vst.msk [vmem:[#allocation14 + $0x70] sm:$0xf] %vm1676, %v1640
    %1706 = vst.msk [vmem:[#allocation14 + $0x74] sm:$0xf] %vm1676, %v1641
    %1707 = vst.msk [vmem:[#allocation14 + $0x78] sm:$0xf] %vm1676, %v1642
    %1708 = vst.msk [vmem:[#allocation14 + $0x7c] sm:$0xf] %vm1676, %v1643
    // Predicated region
    $region58: #{polla_gcn_forward.17} parent=1 // pred_check
      _
    $region59: #{polla_gcn_forward.17} parent=1 // pred_check_branch
      %1710 = sbr.rel (0) target = $region61
    $region60: #{polla_gcn_forward.17} parent=1 // pred_region
      %s1712 = ssub.s32 2048, 2048
      %1713 = vsyncadd [#allocation4], %s1712
      %s1714 = sshll.u32 [#allocation14], 4
      %s1715 = int_to_ptr.vmem [resolvable:$true] %s1714
      %1720 = dma.vmem_to_hbm [thread:$0]  %s1715, 2048, %s7, [#allocation4], 64, 64, 4
    $region61: #{polla_gcn_forward.17} parent=1 // pred_fallthru
      _
    // Predicated region
    $region62: #{polla_gcn_forward.17} parent=1 // pred_check
      _
    $region63: #{polla_gcn_forward.17} parent=1 // pred_check_branch
      %1722 = sbr.rel (0) target = $region65
    $region64: #{polla_gcn_forward.17} parent=1 // pred_region
      %1723 = dma.done [#allocation4], 2048
    $region65: #{polla_gcn_forward.17} parent=1 // pred_fallthru
      _
    %1724 = vsyncpa [#allocation3], 1
    %1725 = vsyncpa [#allocation6], 1
    %1726 = vsyncpa [#allocation9], 1
    %1727 = vsyncpa [#allocation12], 1
    %1728 = vsyncpa [#allocation4], 1

// kernel: polla_gcn_forward.22
$region0: #{polla_gcn_forward.22}
  #allocation0 [shape = 'u32[]', space=smem, size = 0x4, offset = 0x4, fixed_abs, tag = 'smem constant byte address 0x4 - core index']
  #allocation1 [shape = 'u32[144,128]{1,0:T(1,128)}', space=vmem, size = 0x12000, scoped, tag = 'internal scratch']
  %s0 = inlined_call_operand.hbm [shape: bf16[2,8,512], index: 0, kind: input, shape index: {}]
  %s1 = inlined_call_operand.hbm [shape: bf16[4,8], index: 1, kind: input, shape index: {}]
  %s2 = inlined_call_operand.hbm [shape: f32[4,1], index: 2, kind: input, shape index: {}]
  %s3 = inlined_call_operand.hbm [shape: bf16[2,4,512], index: 3, kind: output, shape index: {}]
  %s4 = sld [smem:[#allocation0]]
  $region57: #{polla_gcn_forward.22} parent=0
    _
  %s6 = ssub.s32 1, %s4
  %s7 = scalar_select 0, %s6, %s4
  $region1: #{polla_gcn_forward.22} parent=0
    #allocation2 [shape = 'u8[16384]{0}', space=vmem, size = 0x4000, scoped, tag = 'input window, operand 0']
    #allocation3 [shape = 's32[2]{0}', space=sflag, size = 0x8, scoped, tag = 'scoped memory for polla_gcn_forward.22']
    #allocation4 [shape = 's32[2]{0}', space=sflag, size = 0x8, scoped, tag = 'scoped memory for polla_gcn_forward.22']
    #allocation5 [shape = 'u8[1024]{0}', space=vmem, size = 0x400, scoped, tag = 'input window, operand 1, single buffered']
    #allocation6 [shape = 's32[1]{0}', space=sflag, size = 0x4, scoped, tag = 'scoped memory for polla_gcn_forward.22']
    #allocation7 [shape = 'u8[2048]{0}', space=vmem, size = 0x800, scoped, tag = 'input window, operand 2, single buffered']
    #allocation8 [shape = 'u8[8192]{0}', space=vmem, size = 0x2000, scoped, tag = 'output window, operand 0']
    %8 = vsyncpa [#allocation3], 0
    %s9 = scalar_lea.sflag [#allocation3], 1
    %10 = vsyncpa %s9, 0
    %11 = vsyncpa [#allocation6], 0
    %12 = vsyncpa [#allocation4], 0
    %s13 = scalar_lea.sflag [#allocation4], 1
    %14 = vsyncpa %s13, 0
    loop: start=0, step=1, limit=4
    $region2: #{polla_gcn_forward.22} parent=1 // loop_pre_header
      _
    $region3: #{polla_gcn_forward.22} parent=1 // loop_header
      %s16 = sphi 0, %s20
      %p17 = scmp.ge.s32.totalorder %s16, 4
      %s26 = sphi 0, %s28
      %s29 = sphi 0, %s26
      %s30 = sphi 0, %s29
      %s46 = sphi 0, %s30
      %s50 = sphi 0, %s50
      %s52 = sphi 0, %s50
      %s53 = sphi 0, %s52
      %s67 = sphi 0, %s53
      %s71 = sphi 0, %s71
      %s73 = sphi 0, %s71
      %s74 = sphi 0, %s73
      %s88 = sphi 0, %s74
      %s94 = sphi 0, %s96
      %s97 = sphi 0, %s94
      %s98 = sphi 0, %s97
      %s114 = sphi 0, %s98
    $region4: #{polla_gcn_forward.22} parent=1 // loop_header_branch
      %19 = sbr.rel (%p17) target = $region8
    $region5: #{polla_gcn_forward.22} parent=1 // loop_body
      %s21 = ssub.s32 %s16, 1
      %s22 = ssub.s32 %s16, 2
      %s23 = sadd.s32 %s16, 1
      %s24 = ssub.s32 %s16, %s23
      %p25 = scmp.eq.s32.totalorder %s24, 0
      %s27 = sadd.s32 %s26, 1
      %s28 = scalar_select %p25, %s26, %s27
      %p31 = pneg %p25
      %p32 = scmp.eq.s32.totalorder %s16, 1
      %p33 = por %p31, %p32
      %p34 = scmp.ne.s32.totalorder %s26, %s29
      %p35 = scmp.eq.s32.totalorder %s16, 0
      %p36 = por %p34, %p35
      %p37 = scmp.ne.s32.totalorder %s26, %s29
      %p38 = scmp.eq.s32.totalorder %s21, 1
      %p39 = por %p37, %p38
      %p40 = scmp.ne.s32.totalorder %s29, %s30
      %p41 = scmp.eq.s32.totalorder %s21, 0
      %p42 = por %p40, %p41
      %p43 = scmp.ne.s32.totalorder %s29, %s30
      %p44 = scmp.eq.s32.totalorder %s22, 1
      %p45 = por %p43, %p44
      %p47 = scmp.ne.s32.totalorder %s30, %s46
      %p48 = scmp.eq.s32.totalorder %s22, 0
      %p49 = por %p47, %p48
      %s51 = sadd.s32 %s50, 1
      %p54 = scmp.eq.s32.totalorder %s16, 1
      %p55 = scmp.ne.s32.totalorder %s50, %s52
      %p56 = scmp.eq.s32.totalorder %s16, 0
      %p57 = por %p55, %p56
      %p58 = scmp.ne.s32.totalorder %s50, %s52
      %p59 = scmp.eq.s32.totalorder %s21, 1
      %p60 = por %p58, %p59
      %p61 = scmp.ne.s32.totalorder %s52, %s53
      %p62 = scmp.eq.s32.totalorder %s21, 0
      %p63 = por %p61, %p62
      %p64 = scmp.ne.s32.totalorder %s52, %s53
      %p65 = scmp.eq.s32.totalorder %s22, 1
      %p66 = por %p64, %p65
      %p68 = scmp.ne.s32.totalorder %s53, %s67
      %p69 = scmp.eq.s32.totalorder %s22, 0
      %p70 = por %p68, %p69
      %s72 = sadd.s32 %s71, 1
      %p75 = scmp.eq.s32.totalorder %s16, 1
      %p76 = scmp.ne.s32.totalorder %s71, %s73
      %p77 = scmp.eq.s32.totalorder %s16, 0
      %p78 = por %p76, %p77
      %p79 = scmp.ne.s32.totalorder %s71, %s73
      %p80 = scmp.eq.s32.totalorder %s21, 1
      %p81 = por %p79, %p80
      %p82 = scmp.ne.s32.totalorder %s73, %s74
      %p83 = scmp.eq.s32.totalorder %s21, 0
      %p84 = por %p82, %p83
      %p85 = scmp.ne.s32.totalorder %s73, %s74
      %p86 = scmp.eq.s32.totalorder %s22, 1
      %p87 = por %p85, %p86
      %p89 = scmp.ne.s32.totalorder %s74, %s88
      %p90 = scmp.eq.s32.totalorder %s22, 0
      %p91 = por %p89, %p90
      %s92 = ssub.s32 %s16, %s23
      %p93 = scmp.eq.s32.totalorder %s92, 0
      %s95 = sadd.s32 %s94, 1
      %s96 = scalar_select %p93, %s94, %s95
      %p99 = pneg %p93
      %p100 = scmp.eq.s32.totalorder %s16, 1
      %p101 = por %p99, %p100
      %p102 = scmp.ne.s32.totalorder %s94, %s97
      %p103 = scmp.eq.s32.totalorder %s16, 0
      %p104 = por %p102, %p103
      %p105 = scmp.ne.s32.totalorder %s94, %s97
      %p106 = scmp.eq.s32.totalorder %s21, 1
      %p107 = por %p105, %p106
      %p108 = scmp.ne.s32.totalorder %s97, %s98
      %p109 = scmp.eq.s32.totalorder %s21, 0
      %p110 = por %p108, %p109
      %p111 = scmp.ne.s32.totalorder %s97, %s98
      %p112 = scmp.eq.s32.totalorder %s22, 1
      %p113 = por %p111, %p112
      %p115 = scmp.ne.s32.totalorder %s98, %s114
      %p116 = scmp.eq.s32.totalorder %s22, 0
      %p117 = por %p115, %p116
      %p118 = scmp.le.s32.totalorder 1, %s16
      %p119 = scmp.lt.s32.totalorder %s16, 3
      %p120 = pnand %p118, %p119
      %p121 = pneg %p120
      // Predicated region
      $region9: #{polla_gcn_forward.22} parent=5 // pred_check
        _
      $region10: #{polla_gcn_forward.22} parent=5 // pred_check_branch
        %123 = sbr.rel (%p120) target = $region12
      $region11: #{polla_gcn_forward.22} parent=5 // pred_region
        %s124 = ssub.s32 %s16, 1
        // Predicated region
        $region13: #{polla_gcn_forward.22} parent=11 // pred_check
          %p125 = pneg %p63
        $region14: #{polla_gcn_forward.22} parent=11 // pred_check_branch
          %127 = sbr.rel (%p125) target = $region16
        $region15: #{polla_gcn_forward.22} parent=11 // pred_region
          %s129 = ssub.s32 32, 32
          %130 = vsyncadd [#allocation6], %s129
          %s132 = sshll.u32 [#allocation5], 4
          %s133 = int_to_ptr.vmem [resolvable:$true] %s132
          %135 = dma.hbm_to_vmem [thread:$0]  %s1, 32, %s133, [#allocation6]
        $region16: #{polla_gcn_forward.22} parent=11 // pred_fallthru
          _
        // Predicated region
        $region17: #{polla_gcn_forward.22} parent=11 // pred_check
          %p136 = pneg %p84
        $region18: #{polla_gcn_forward.22} parent=11 // pred_check_branch
          %138 = sbr.rel (%p136) target = $region20
        $region19: #{polla_gcn_forward.22} parent=11 // pred_region
          %s140 = ssub.s32 64, 64
          %141 = vsyncadd [#allocation6], %s140
          %s143 = sshll.u32 [#allocation7], 4
          %s144 = int_to_ptr.vmem [resolvable:$true] %s143
          %146 = dma.hbm_to_vmem [thread:$0]  %s2, 64, %s144, [#allocation6]
        $region20: #{polla_gcn_forward.22} parent=11 // pred_fallthru
          _
      $region12: #{polla_gcn_forward.22} parent=5 // pred_fallthru
        _
      %p147 = scmp.lt.s32.totalorder %s16, 2
      // Predicated region
      $region21: #{polla_gcn_forward.22} parent=5 // pred_check
        %p148 = pneg %p147
      $region22: #{polla_gcn_forward.22} parent=5 // pred_check_branch
        %150 = sbr.rel (%p148) target = $region24
      $region23: #{polla_gcn_forward.22} parent=5 // pred_region
        // Predicated region
        $region25: #{polla_gcn_forward.22} parent=23 // pred_check
          %p151 = pneg %p36
        $region26: #{polla_gcn_forward.22} parent=23 // pred_check_branch
          %153 = sbr.rel (%p151) target = $region28
        $region27: #{polla_gcn_forward.22} parent=23 // pred_region
          %s154 = sand.u32 %s26, 1
          %s155 = scalar_lea.sflag [#allocation3], %s154
          %s156 = sand.u32 %s26, 1
          %s157 = smul.addr %s156, 16
          %s158 = scalar_lea.vmem [#allocation2], %s157
          %s160 = ssub.s32 256, 256
          %161 = vsyncadd %s155, %s160
          %s162 = smul.addr %s16, 4
          %s163 = smul.addr %s162, 64
          %s164 = scalar_lea.hbm %s0, %s163
          %s166 = sshll.u32 %s158, 4
          %s167 = int_to_ptr.vmem [resolvable:$true] %s166
          %169 = dma.hbm_to_vmem [thread:$0]  %s164, 256, %s167, %s155
        $region28: #{polla_gcn_forward.22} parent=23 // pred_fallthru
          _
      $region24: #{polla_gcn_forward.22} parent=5 // pred_fallthru
        _
      %p170 = scmp.le.s32.totalorder 1, %s16
      %p171 = scmp.lt.s32.totalorder %s16, 3
      %p172 = pnand %p170, %p171
      %p173 = pneg %p172
      // Predicated region
      $region29: #{polla_gcn_forward.22} parent=5 // pred_check
        _
      $region30: #{polla_gcn_forward.22} parent=5 // pred_check_branch
        %175 = sbr.rel (%p172) target = $region32
      $region31: #{polla_gcn_forward.22} parent=5 // pred_region
        %s176 = ssub.s32 %s16, 1
        %s177 = sand.u32 %s29, 1
        %s178 = scalar_lea.sflag [#allocation3], %s177
        %s179 = sand.u32 %s29, 1
        %s180 = smul.addr %s179, 16
        %s181 = scalar_lea.vmem [#allocation2], %s180
        // Predicated region
        $region33: #{polla_gcn_forward.22} parent=31 // pred_check
          %p182 = pneg %p42
        $region34: #{polla_gcn_forward.22} parent=31 // pred_check_branch
          %184 = sbr.rel (%p182) target = $region36
        $region35: #{polla_gcn_forward.22} parent=31 // pred_region
          %185 = dma.done %s178, 256
        $region36: #{polla_gcn_forward.22} parent=31 // pred_fallthru
          _
        // Predicated region
        $region37: #{polla_gcn_forward.22} parent=31 // pred_check
          %p186 = pneg %p63
        $region38: #{polla_gcn_forward.22} parent=31 // pred_check_branch
          %188 = sbr.rel (%p186) target = $region40
        $region39: #{polla_gcn_forward.22} parent=31 // pred_region
          %189 = dma.done [#allocation6], 32
        $region40: #{polla_gcn_forward.22} parent=31 // pred_fallthru
          _
        // Predicated region
        $region41: #{polla_gcn_forward.22} parent=31 // pred_check
          %p190 = pneg %p84
        $region42: #{polla_gcn_forward.22} parent=31 // pred_check_branch
          %192 = sbr.rel (%p190) target = $region44
        $region43: #{polla_gcn_forward.22} parent=31 // pred_region
          %193 = dma.done [#allocation6], 64
        $region44: #{polla_gcn_forward.22} parent=31 // pred_fallthru
          _
        %s194 = sand.u32 %s29, 1
        %s195 = scalar_lea.sflag [#allocation3], %s194
        %s196 = sand.u32 %s29, 1
        %s197 = smul.addr %s196, 16
        %s198 = scalar_lea.vmem [#allocation2], %s197
        %p199 = pneg %p42
        %p200 = pneg %p39
        %p201 = pneg %p63
        %p202 = pneg %p60
        %p203 = pneg %p84
        %p204 = pneg %p81
        %p205 = pneg %p110
        %p206 = pneg %p107
        %s207 = sand.u32 %s97, 1
        %s208 = scalar_lea.sflag [#allocation4], %s207
        %s209 = sand.u32 %s97, 1
        %s210 = smul.addr %s209, 8
        %s211 = scalar_lea.vmem [#allocation8], %s210
        %v213 = vld [vmem:[#allocation5] sm:$0x3]
        %v214 = vld [vmem:[%s181] sm:$0xff]
        %v215 = vld [vmem:[%s181 + $0x8] sm:$0xff]
        %v216 = vld [vmem:[#allocation7] sm:$0xf]
        %218 = vset.pattern.permute.xlu0 0
        %219 = vperm.xlu0 %218, %v216
        %v220 = vpop.permute.xlu0 %219
        %v224 = vunpack.c.l.b16 %v214
        %v225 = vunpack.c.h.b16 %v214
        %v226 = vunpack.c.l.b16 %v215
        %v227 = vunpack.c.h.b16 %v215
        %v228 = vpack.c.b16 %v224, %v224
        %v229 = vpack.c.b16 %v225, %v225
        %v230 = vpack.c.b16 %v226, %v226
        %v231 = vpack.c.b16 %v227, %v227
        %vm232 = vcmask 64512
        %v234 = vsel %vm232, %v213, 0
        %vm236 = vcmask 1043456
        %v238 = vsel %vm236, %v228, 0
        %v241 = vsel %vm236, %v229, 0
        %v244 = vsel %vm236, %v230, 0
        %v247 = vsel %vm236, %v231, 0
        %249 = vmatprep.subr.bf16.mxu0 %v241
        %250 = vmatpush1.bf16.msra.mxu0 %v238
        %251 = vmatprep.subr.bf16.mxu0 0
        %252 = vmatpush1.bf16.msra.mxu0 0
        %253 = vmatprep.subr.bf16.mxu0 0
        %254 = vmatpush1.bf16.msra.mxu0 0
        %255 = vmatprep.subr.bf16.mxu0 0
        %256 = vmatpush1.bf16.msra.mxu0 0
        %257 = vmatprep.subr.bf16.mxu0 0
        %258 = vmatpush1.bf16.msra.mxu0 0
        %259 = vmatprep.subr.bf16.mxu0 0
        %260 = vmatpush1.bf16.msra.mxu0 0
        %261 = vmatprep.subr.bf16.mxu0 0
        %262 = vmatpush1.bf16.msra.mxu0 0
        %263 = vmatprep.subr.bf16.mxu0 0
        %264 = vmatpush1.bf16.msra.mxu0 0
        %265 = vmatprep.subr.bf16.mxu0 0
        %266 = vmatpush1.bf16.msra.mxu0 0
        %267 = vmatprep.subr.bf16.mxu0 0
        %268 = vmatpush1.bf16.msra.mxu0 0
        %269 = vmatprep.subr.bf16.mxu0 0
        %270 = vmatpush1.bf16.msra.mxu0 0
        %271 = vmatprep.subr.bf16.mxu0 0
        %272 = vmatpush1.bf16.msra.mxu0 0
        %273 = vmatprep.subr.bf16.mxu0 0
        %274 = vmatpush1.bf16.msra.mxu0 0
        %275 = vmatprep.subr.bf16.mxu0 0
        %276 = vmatpush1.bf16.msra.mxu0 0
        %277 = vmatprep.subr.bf16.mxu0 0
        %278 = vmatpush1.bf16.msra.mxu0 0
        %279 = vmatprep.subr.bf16.mxu0 0
        %280 = vmatpush1.bf16.msra.mxu0 0
        %281 = vmatprep.mubr.bf16.mxu0 0
        %282 = vmatmul.mubr.bf16.gmra.mrb[0].mxu0 %v234
        %v283 = vpop.f32.mrb[0].mxu0
        %v284 = vadd.f32 %v220, %v283
        %v285 = vpop.f32.mrb[0].mxu0
        %v286 = vadd.f32 %v220, %v285
        %v287 = vpop.f32.mrb[0].mxu0
        %v288 = vpop.f32.mrb[0].mxu0
        %289 = vdwg.mxu0
        %290 = vmatprep.subr.bf16.mxu0 %v247
        %291 = vmatpush1.bf16.msra.mxu0 %v244
        %292 = vmatprep.subr.bf16.mxu0 0
        %293 = vmatpush1.bf16.msra.mxu0 0
        %294 = vmatprep.subr.bf16.mxu0 0
        %295 = vmatpush1.bf16.msra.mxu0 0
        %296 = vmatprep.subr.bf16.mxu0 0
        %297 = vmatpush1.bf16.msra.mxu0 0
        %298 = vmatprep.subr.bf16.mxu0 0
        %299 = vmatpush1.bf16.msra.mxu0 0
        %300 = vmatprep.subr.bf16.mxu0 0
        %301 = vmatpush1.bf16.msra.mxu0 0
        %302 = vmatprep.subr.bf16.mxu0 0
        %303 = vmatpush1.bf16.msra.mxu0 0
        %304 = vmatprep.subr.bf16.mxu0 0
        %305 = vmatpush1.bf16.msra.mxu0 0
        %306 = vmatprep.subr.bf16.mxu0 0
        %307 = vmatpush1.bf16.msra.mxu0 0
        %308 = vmatprep.subr.bf16.mxu0 0
        %309 = vmatpush1.bf16.msra.mxu0 0
        %310 = vmatprep.subr.bf16.mxu0 0
        %311 = vmatpush1.bf16.msra.mxu0 0
        %312 = vmatprep.subr.bf16.mxu0 0
        %313 = vmatpush1.bf16.msra.mxu0 0
        %314 = vmatprep.subr.bf16.mxu0 0
        %315 = vmatpush1.bf16.msra.mxu0 0
        %316 = vmatprep.subr.bf16.mxu0 0
        %317 = vmatpush1.bf16.msra.mxu0 0
        %318 = vmatprep.subr.bf16.mxu0 0
        %319 = vmatpush1.bf16.msra.mxu0 0
        %320 = vmatprep.subr.bf16.mxu0 0
        %321 = vmatpush1.bf16.msra.mxu0 0
        %322 = vmatprep.mubr.bf16.mxu0 0
        %323 = vmatmul.mubr.bf16.gmra.mrb[0].mxu0 %v234
        %v324 = vpop.f32.mrb[0].mxu0
        %v325 = vadd.f32 %v220, %v324
        %v326 = vpop.f32.mrb[0].mxu0
        %v327 = vadd.f32 %v220, %v326
        %v328 = vpop.f32.mrb[0].mxu0
        %v329 = vpop.f32.mrb[0].mxu0
        %330 = vdwg.mxu0
        %v331 = vmax.f32 %v284, 0.0
        %v332 = vmax.f32 %v286, 0.0
        %v333 = vmax.f32 %v325, 0.0
        %v334 = vmax.f32 %v327, 0.0
        %v335 = vpack.c.bf16 %v331, %v331
        %v336 = vpack.c.bf16 %v332, %v332
        %v337 = vpack.c.bf16 %v333, %v333
        %v338 = vpack.c.bf16 %v334, %v334
        %v343 = vcombine.low %v335, %v336
        %v344 = vcombine.low %v337, %v338
        %v346 = vunpack.c.l.s4 1983009808
        %v347 = vunpack.c.0.s8 %v346
        %v348 = vlaneseq
        %v349 = vshrl.u32 %v348, 7
        %v350 = vsub.s32 %v347, %v349
        %v351 = vrot.slane %v343, %v350
        %v353 = vunpack.c.l.s4 1983009808
        %v354 = vunpack.c.0.s8 %v353
        %v355 = vlaneseq
        %v356 = vshrl.u32 %v355, 7
        %v357 = vsub.s32 %v354, %v356
        %v358 = vrot.slane %v344, %v357
        %v359 = vcombine.low %v351, %v358
        %361 = vst [vmem:[%s211] sm:$0xff] %v359
        %s362 = sand.u32 %s97, 1
        %s363 = scalar_lea.sflag [#allocation4], %s362
        %s364 = sand.u32 %s97, 1
        %s365 = smul.addr %s364, 8
        %s366 = scalar_lea.vmem [#allocation8], %s365
        // Predicated region
        $region45: #{polla_gcn_forward.22} parent=31 // pred_check
          %p367 = pneg %p107
        $region46: #{polla_gcn_forward.22} parent=31 // pred_check_branch
          %369 = sbr.rel (%p367) target = $region48
        $region47: #{polla_gcn_forward.22} parent=31 // pred_region
          %s371 = ssub.s32 128, 128
          %372 = vsyncadd %s363, %s371
          %s373 = smul.addr %s21, 4
          %s374 = smul.addr %s373, 32
          %s375 = scalar_lea.hbm %s3, %s374
          %s377 = sshll.u32 %s366, 4
          %s378 = int_to_ptr.vmem [resolvable:$true] %s377
          %380 = dma.vmem_to_hbm [thread:$0]  %s378, 128, %s375, %s363
        $region48: #{polla_gcn_forward.22} parent=31 // pred_fallthru
          _
      $region32: #{polla_gcn_forward.22} parent=5 // pred_fallthru
        _
      %p381 = scmp.le.s32.totalorder 2, %s16
      // Predicated region
      $region49: #{polla_gcn_forward.22} parent=5 // pred_check
        %p382 = pneg %p381
      $region50: #{polla_gcn_forward.22} parent=5 // pred_check_branch
        %384 = sbr.rel (%p382) target = $region52
      $region51: #{polla_gcn_forward.22} parent=5 // pred_region
        %s385 = ssub.s32 %s16, 2
        // Predicated region
        $region53: #{polla_gcn_forward.22} parent=51 // pred_check
          %p386 = pneg %p113
        $region54: #{polla_gcn_forward.22} parent=51 // pred_check_branch
          %388 = sbr.rel (%p386) target = $region56
        $region55: #{polla_gcn_forward.22} parent=51 // pred_region
          %s389 = sand.u32 %s98, 1
          %s390 = scalar_lea.sflag [#allocation4], %s389
          %s391 = sand.u32 %s98, 1
          %s392 = smul.addr %s391, 8
          %s393 = scalar_lea.vmem [#allocation8], %s392
          %394 = dma.done %s390, 128
        $region56: #{polla_gcn_forward.22} parent=51 // pred_fallthru
          _
      $region52: #{polla_gcn_forward.22} parent=5 // pred_fallthru
        _
    $region6: #{polla_gcn_forward.22} parent=1 // loop_footer
      %s20 = sadd.s32 1, %s16
    $region7: #{polla_gcn_forward.22} parent=1 // loop_footer_branch
      %15 = sbr.rel target = $region3
    $region8: #{polla_gcn_forward.22} parent=1 // loop_exit
      _
    %395 = vsyncpa [#allocation3], 1
    %s396 = scalar_lea.sflag [#allocation3], 1
    %397 = vsyncpa %s396, 1
    %398 = vsyncpa [#allocation6], 1
    %399 = vsyncpa [#allocation4], 1
    %s400 = scalar_lea.sflag [#allocation4], 1
    %401 = vsyncpa %s400, 1

// kernel: polla_gcn_forward.23
$region0: #{polla_gcn_forward.23}
  #allocation0 [shape = 'u32[]', space=smem, size = 0x4, offset = 0x4, fixed_abs, tag = 'smem constant byte address 0x4 - core index']
  #allocation1 [shape = 'u32[144,128]{1,0:T(1,128)}', space=vmem, size = 0x12000, scoped, tag = 'internal scratch']
  %s0 = inlined_call_operand.hbm [shape: bf16[128,32], index: 0, kind: input, shape index: {}]
  %s1 = inlined_call_operand.hbm [shape: bf16[32,2], index: 1, kind: input, shape index: {}]
  %s2 = inlined_call_operand.hbm [shape: f32[1,2], index: 2, kind: input, shape index: {}]
  %s3 = inlined_call_operand.hbm [shape: f32[128,2], index: 3, kind: output, shape index: {}]
  %s4 = sld [smem:[#allocation0]]
  $region34: #{polla_gcn_forward.23} parent=0
    _
  %s6 = ssub.s32 1, %s4
  %s7 = scalar_select 0, %s6, %s4
  $region1: #{polla_gcn_forward.23} parent=0
    #allocation2 [shape = 'u8[32768]{0}', space=vmem, size = 0x8000, scoped, tag = 'input window, operand 0, single buffered']
    #allocation3 [shape = 's32[1]{0}', space=sflag, size = 0x4, scoped, tag = 'scoped memory for polla_gcn_forward.23']
    #allocation4 [shape = 's32[1]{0}', space=sflag, size = 0x4, scoped, tag = 'scoped memory for polla_gcn_forward.23']
    #allocation5 [shape = 'u8[8192]{0}', space=vmem, size = 0x2000, scoped, tag = 'input window, operand 1, single buffered']
    #allocation6 [shape = 's32[1]{0}', space=sflag, size = 0x4, scoped, tag = 'scoped memory for polla_gcn_forward.23']
    #allocation7 [shape = 'u8[512]{0}', space=vmem, size = 0x400, scoped, tag = 'input window, operand 2, single buffered']
    #allocation8 [shape = 'u8[65536]{0}', space=vmem, size = 0x10000, scoped, tag = 'output window, operand 0, single buffered']
    %8 = vsyncpa [#allocation3], 0
    %9 = vsyncpa [#allocation6], 0
    %10 = vsyncpa [#allocation4], 0
    // Predicated region
    $region2: #{polla_gcn_forward.23} parent=1 // pred_check
      _
    $region3: #{polla_gcn_forward.23} parent=1 // pred_check_branch
      %12 = sbr.rel (0) target = $region5
    $region4: #{polla_gcn_forward.23} parent=1 // pred_region
      %s14 = ssub.s32 1024, 1024
      %15 = vsyncadd [#allocation3], %s14
      %s16 = sshll.u32 [#allocation2], 4
      %s17 = int_to_ptr.vmem [resolvable:$true] %s16
      %22 = dma.hbm_to_vmem [thread:$0]  %s0, 1024, %s17, [#allocation3], 64, 64, 4
    $region5: #{polla_gcn_forward.23} parent=1 // pred_fallthru
      _
    // Predicated region
    $region6: #{polla_gcn_forward.23} parent=1 // pred_check
      _
    $region7: #{polla_gcn_forward.23} parent=1 // pred_check_branch
      %24 = sbr.rel (0) target = $region9
    $region8: #{polla_gcn_forward.23} parent=1 // pred_region
      %s26 = ssub.s32 256, 256
      %27 = vsyncadd [#allocation6], %s26
      %s28 = sshll.u32 [#allocation5], 4
      %s29 = int_to_ptr.vmem [resolvable:$true] %s28
      %34 = dma.hbm_to_vmem [thread:$0]  %s1, 256, %s29, [#allocation6], 64, 64, 4
    $region9: #{polla_gcn_forward.23} parent=1 // pred_fallthru
      _
    // Predicated region
    $region10: #{polla_gcn_forward.23} parent=1 // pred_check
      _
    $region11: #{polla_gcn_forward.23} parent=1 // pred_check_branch
      %36 = sbr.rel (0) target = $region13
    $region12: #{polla_gcn_forward.23} parent=1 // pred_region
      %s38 = ssub.s32 16, 16
      %39 = vsyncadd [#allocation6], %s38
      %s41 = sshll.u32 [#allocation7], 4
      %s42 = int_to_ptr.vmem [resolvable:$true] %s41
      %44 = dma.hbm_to_vmem [thread:$0]  %s2, 16, %s42, [#allocation6]
    $region13: #{polla_gcn_forward.23} parent=1 // pred_fallthru
      _
    // Predicated region
    $region14: #{polla_gcn_forward.23} parent=1 // pred_check
      _
    $region15: #{polla_gcn_forward.23} parent=1 // pred_check_branch
      %46 = sbr.rel (0) target = $region17
    $region16: #{polla_gcn_forward.23} parent=1 // pred_region
      %47 = dma.done [#allocation3], 1024
    $region17: #{polla_gcn_forward.23} parent=1 // pred_fallthru
      _
    // Predicated region
    $region18: #{polla_gcn_forward.23} parent=1 // pred_check
      _
    $region19: #{polla_gcn_forward.23} parent=1 // pred_check_branch
      %49 = sbr.rel (0) target = $region21
    $region20: #{polla_gcn_forward.23} parent=1 // pred_region
      %50 = dma.done [#allocation6], 256
    $region21: #{polla_gcn_forward.23} parent=1 // pred_fallthru
      _
    // Predicated region
    $region22: #{polla_gcn_forward.23} parent=1 // pred_check
      _
    $region23: #{polla_gcn_forward.23} parent=1 // pred_check_branch
      %52 = sbr.rel (0) target = $region25
    $region24: #{polla_gcn_forward.23} parent=1 // pred_region
      %53 = dma.done [#allocation6], 16
    $region25: #{polla_gcn_forward.23} parent=1 // pred_fallthru
      _
    %v55 = vld [vmem:[#allocation2] sm:$0xf]
    %v56 = vld [vmem:[#allocation2 + $0x4] sm:$0xf]
    %v57 = vld [vmem:[#allocation2 + $0x8] sm:$0xf]
    %v58 = vld [vmem:[#allocation2 + $0xc] sm:$0xf]
    %v59 = vld [vmem:[#allocation2 + $0x10] sm:$0xf]
    %v60 = vld [vmem:[#allocation2 + $0x14] sm:$0xf]
    %v61 = vld [vmem:[#allocation2 + $0x18] sm:$0xf]
    %v62 = vld [vmem:[#allocation2 + $0x1c] sm:$0xf]
    %v63 = vld [vmem:[#allocation2 + $0x20] sm:$0xf]
    %v64 = vld [vmem:[#allocation2 + $0x24] sm:$0xf]
    %v65 = vld [vmem:[#allocation2 + $0x28] sm:$0xf]
    %v66 = vld [vmem:[#allocation2 + $0x2c] sm:$0xf]
    %v67 = vld [vmem:[#allocation2 + $0x30] sm:$0xf]
    %v68 = vld [vmem:[#allocation2 + $0x34] sm:$0xf]
    %v69 = vld [vmem:[#allocation2 + $0x38] sm:$0xf]
    %v70 = vld [vmem:[#allocation2 + $0x3c] sm:$0xf]
    %v71 = vld [vmem:[#allocation5] sm:$0xf]
    %v72 = vld [vmem:[#allocation5 + $0x4] sm:$0xf]
    %v73 = vld [vmem:[#allocation5 + $0x8] sm:$0xf]
    %v74 = vld [vmem:[#allocation5 + $0xc] sm:$0xf]
    %v75 = vld [vmem:[#allocation7] sm:$0x1]
    %v77 = vlaneseq
    %v78 = vshrl.u32 %v77, 7
    %v79 = vsub.s32 0, %v78
    %v80 = vrot.slane %v75, %v79
    %v98 = vunpack.c.l.b16 %v55
    %v99 = vunpack.c.l.b16 %v56
    %v100 = vunpack.c.l.b16 %v57
    %v101 = vunpack.c.l.b16 %v58
    %v102 = vunpack.c.l.b16 %v59
    %v103 = vunpack.c.l.b16 %v60
    %v104 = vunpack.c.l.b16 %v61
    %v105 = vunpack.c.l.b16 %v62
    %v106 = vunpack.c.l.b16 %v63
    %v107 = vunpack.c.l.b16 %v64
    %v108 = vunpack.c.l.b16 %v65
    %v109 = vunpack.c.l.b16 %v66
    %v110 = vunpack.c.l.b16 %v67
    %v111 = vunpack.c.l.b16 %v68
    %v112 = vunpack.c.l.b16 %v69
    %v113 = vunpack.c.l.b16 %v70
    %v114 = vpack.c.b16 %v99, %v98
    %v115 = vpack.c.b16 %v101, %v100
    %v116 = vpack.c.b16 %v103, %v102
    %v117 = vpack.c.b16 %v105, %v104
    %v118 = vpack.c.b16 %v107, %v106
    %v119 = vpack.c.b16 %v109, %v108
    %v120 = vpack.c.b16 %v111, %v110
    %v121 = vpack.c.b16 %v113, %v112
    %v126 = vunpack.c.l.b16 %v71
    %v127 = vunpack.c.l.b16 %v72
    %v128 = vunpack.c.l.b16 %v73
    %v129 = vunpack.c.l.b16 %v74
    %v130 = vpack.c.b16 %v127, %v126
    %v131 = vpack.c.b16 %v129, %v128
    %vm134 = vcmask 261120
    %v136 = vsel %vm134, %v114, 0
    %v139 = vsel %vm134, %v115, 0
    %v142 = vsel %vm134, %v116, 0
    %v145 = vsel %vm134, %v117, 0
    %v148 = vsel %vm134, %v118, 0
    %v151 = vsel %vm134, %v119, 0
    %v154 = vsel %vm134, %v120, 0
    %v157 = vsel %vm134, %v121, 0
    %159 = vmatprep.subr.bf16.mxu0 0
    %160 = vmatpush1.bf16.msra.mxu0 %v130
    %161 = vmatprep.subr.bf16.mxu0 0
    %162 = vmatpush1.bf16.msra.mxu0 %v131
    %163 = vmatprep.subr.bf16.mxu0 0
    %164 = vmatpush1.bf16.msra.mxu0 0
    %165 = vmatprep.subr.bf16.mxu0 0
    %166 = vmatpush1.bf16.msra.mxu0 0
    %167 = vmatprep.subr.bf16.mxu0 0
    %168 = vmatpush1.bf16.msra.mxu0 0
    %169 = vmatprep.subr.bf16.mxu0 0
    %170 = vmatpush1.bf16.msra.mxu0 0
    %171 = vmatprep.subr.bf16.mxu0 0
    %172 = vmatpush1.bf16.msra.mxu0 0
    %173 = vmatprep.subr.bf16.mxu0 0
    %174 = vmatpush1.bf16.msra.mxu0 0
    %175 = vmatprep.subr.bf16.mxu0 0
    %176 = vmatpush1.bf16.msra.mxu0 0
    %177 = vmatprep.subr.bf16.mxu0 0
    %178 = vmatpush1.bf16.msra.mxu0 0
    %179 = vmatprep.subr.bf16.mxu0 0
    %180 = vmatpush1.bf16.msra.mxu0 0
    %181 = vmatprep.subr.bf16.mxu0 0
    %182 = vmatpush1.bf16.msra.mxu0 0
    %183 = vmatprep.subr.bf16.mxu0 0
    %184 = vmatpush1.bf16.msra.mxu0 0
    %185 = vmatprep.subr.bf16.mxu0 0
    %186 = vmatpush1.bf16.msra.mxu0 0
    %187 = vmatprep.subr.bf16.mxu0 0
    %188 = vmatpush1.bf16.msra.mxu0 0
    %189 = vmatprep.subr.bf16.mxu0 0
    %190 = vmatpush1.bf16.msra.mxu0 0
    %191 = vmatprep.mubr.bf16.mxu0 0
    %192 = vmatmul.mubr.bf16.gmra.mrb[0].mxu0 %v136
    %v193 = vpop.f32.mrb[0].mxu0
    %v194 = vadd.f32 %v80, %v193
    %v195 = vpop.f32.mrb[0].mxu0
    %v196 = vpop.f32.mrb[0].mxu0
    %v197 = vadd.f32 %v80, %v196
    %v198 = vpop.f32.mrb[0].mxu0
    %199 = vmatprep.mubr.bf16.mxu0 0
    %200 = vmatmul.mubr.bf16.gmra.mrb[0].mxu0 %v139
    %v201 = vpop.f32.mrb[0].mxu0
    %v202 = vadd.f32 %v80, %v201
    %v203 = vpop.f32.mrb[0].mxu0
    %v204 = vpop.f32.mrb[0].mxu0
    %v205 = vadd.f32 %v80, %v204
    %v206 = vpop.f32.mrb[0].mxu0
    %207 = vmatprep.mubr.bf16.mxu0 0
    %208 = vmatmul.mubr.bf16.gmra.mrb[0].mxu0 %v142
    %v209 = vpop.f32.mrb[0].mxu0
    %v210 = vadd.f32 %v80, %v209
    %v211 = vpop.f32.mrb[0].mxu0
    %v212 = vpop.f32.mrb[0].mxu0
    %v213 = vadd.f32 %v80, %v212
    %v214 = vpop.f32.mrb[0].mxu0
    %215 = vmatprep.mubr.bf16.mxu0 0
    %216 = vmatmul.mubr.bf16.gmra.mrb[0].mxu0 %v145
    %v217 = vpop.f32.mrb[0].mxu0
    %v218 = vadd.f32 %v80, %v217
    %v219 = vpop.f32.mrb[0].mxu0
    %v220 = vpop.f32.mrb[0].mxu0
    %v221 = vadd.f32 %v80, %v220
    %v222 = vpop.f32.mrb[0].mxu0
    %223 = vmatprep.mubr.bf16.mxu0 0
    %224 = vmatmul.mubr.bf16.gmra.mrb[0].mxu0 %v148
    %v225 = vpop.f32.mrb[0].mxu0
    %v226 = vadd.f32 %v80, %v225
    %v227 = vpop.f32.mrb[0].mxu0
    %v228 = vpop.f32.mrb[0].mxu0
    %v229 = vadd.f32 %v80, %v228
    %v230 = vpop.f32.mrb[0].mxu0
    %231 = vmatprep.mubr.bf16.mxu0 0
    %232 = vmatmul.mubr.bf16.gmra.mrb[0].mxu0 %v151
    %v233 = vpop.f32.mrb[0].mxu0
    %v234 = vadd.f32 %v80, %v233
    %v235 = vpop.f32.mrb[0].mxu0
    %v236 = vpop.f32.mrb[0].mxu0
    %v237 = vadd.f32 %v80, %v236
    %v238 = vpop.f32.mrb[0].mxu0
    %239 = vmatprep.mubr.bf16.mxu0 0
    %240 = vmatmul.mubr.bf16.gmra.mrb[0].mxu0 %v154
    %v241 = vpop.f32.mrb[0].mxu0
    %v242 = vadd.f32 %v80, %v241
    %v243 = vpop.f32.mrb[0].mxu0
    %v244 = vpop.f32.mrb[0].mxu0
    %v245 = vadd.f32 %v80, %v244
    %v246 = vpop.f32.mrb[0].mxu0
    %247 = vmatprep.mubr.bf16.mxu0 0
    %248 = vmatmul.mubr.bf16.gmra.mrb[0].mxu0 %v157
    %v249 = vpop.f32.mrb[0].mxu0
    %v250 = vadd.f32 %v80, %v249
    %v251 = vpop.f32.mrb[0].mxu0
    %v252 = vpop.f32.mrb[0].mxu0
    %v253 = vadd.f32 %v80, %v252
    %v254 = vpop.f32.mrb[0].mxu0
    %255 = vdwg.mxu0
    %vm256 = vcmask 15360
    %257 = vst.msk [vmem:[#allocation8] sm:$0xff] %vm256, %v194
    %258 = vst.msk [vmem:[#allocation8 + $0x8] sm:$0xff] %vm256, %v197
    %259 = vst.msk [vmem:[#allocation8 + $0x10] sm:$0xff] %vm256, %v202
    %260 = vst.msk [vmem:[#allocation8 + $0x18] sm:$0xff] %vm256, %v205
    %261 = vst.msk [vmem:[#allocation8 + $0x20] sm:$0xff] %vm256, %v210
    %262 = vst.msk [vmem:[#allocation8 + $0x28] sm:$0xff] %vm256, %v213
    %263 = vst.msk [vmem:[#allocation8 + $0x30] sm:$0xff] %vm256, %v218
    %264 = vst.msk [vmem:[#allocation8 + $0x38] sm:$0xff] %vm256, %v221
    %265 = vst.msk [vmem:[#allocation8 + $0x40] sm:$0xff] %vm256, %v226
    %266 = vst.msk [vmem:[#allocation8 + $0x48] sm:$0xff] %vm256, %v229
    %267 = vst.msk [vmem:[#allocation8 + $0x50] sm:$0xff] %vm256, %v234
    %268 = vst.msk [vmem:[#allocation8 + $0x58] sm:$0xff] %vm256, %v237
    %269 = vst.msk [vmem:[#allocation8 + $0x60] sm:$0xff] %vm256, %v242
    %270 = vst.msk [vmem:[#allocation8 + $0x68] sm:$0xff] %vm256, %v245
    %271 = vst.msk [vmem:[#allocation8 + $0x70] sm:$0xff] %vm256, %v250
    %272 = vst.msk [vmem:[#allocation8 + $0x78] sm:$0xff] %vm256, %v253
    // Predicated region
    $region26: #{polla_gcn_forward.23} parent=1 // pred_check
      _
    $region27: #{polla_gcn_forward.23} parent=1 // pred_check_branch
      %274 = sbr.rel (0) target = $region29
    $region28: #{polla_gcn_forward.23} parent=1 // pred_region
      %s276 = ssub.s32 2048, 2048
      %277 = vsyncadd [#allocation4], %s276
      %s278 = sshll.u32 [#allocation8], 4
      %s279 = int_to_ptr.vmem [resolvable:$true] %s278
      %284 = dma.vmem_to_hbm [thread:$0]  %s279, 2048, %s3, [#allocation4], 128, 128, 8
    $region29: #{polla_gcn_forward.23} parent=1 // pred_fallthru
      _
    // Predicated region
    $region30: #{polla_gcn_forward.23} parent=1 // pred_check
      _
    $region31: #{polla_gcn_forward.23} parent=1 // pred_check_branch
      %286 = sbr.rel (0) target = $region33
    $region32: #{polla_gcn_forward.23} parent=1 // pred_region
      %287 = dma.done [#allocation4], 2048
    $region33: #{polla_gcn_forward.23} parent=1 // pred_fallthru
      _
    %288 = vsyncpa [#allocation3], 1
    %289 = vsyncpa [#allocation6], 1
    %290 = vsyncpa [#allocation4], 1

</llo_original>
